<compile_context>
chip_gen: v6e
topology: v6e:2x2x1
jax: 0.10.0
libtpu: 0.0.40
codegen_flags: <defaults>
</compile_context>

<pallas_src>
import jax
import jax.numpy as jnp
import numpy as np
from jax.experimental import pallas as pl
from jax.experimental.pallas import tpu as pltpu


# ----------------------------------------------------------------------------
# One-time parameter preparation (hoisted out of the traced forward)
# ----------------------------------------------------------------------------
def _deconv_dense(w_pt, H, W):
    """Dense matrix for ConvTranspose2d(kernel=4, stride=2, padding=1).

    Returns D of shape (H*W*Cin, 2H*2W*Cout) with NHWC-flat ordering on both
    sides: row = (iy*W + ix)*Cin + ci, col = (oy*2W + ox)*Cout + co, using the
    PyTorch transposed-conv formula  oy = 2*iy - 1 + ky,  ox = 2*ix - 1 + kx.
    """
    w = np.asarray(w_pt, np.float32)                    # (Cin, Cout, 4, 4)
    cin, cout = w.shape[0], w.shape[1]
    OH, OW = 2 * H, 2 * W
    D = np.zeros((H * W * cin, OH * OW * cout), np.float32)
    for iy in range(H):
        for ix in range(W):
            r0 = (iy * W + ix) * cin
            for ky in range(4):
                oy = 2 * iy - 1 + ky
                if not (0 <= oy < OH):
                    continue
                for kx in range(4):
                    ox = 2 * ix - 1 + kx
                    if not (0 <= ox < OW):
                        continue
                    c0 = (oy * OW + ox) * cout
                    D[r0:r0 + cin, c0:c0 + cout] += w[:, :, ky, kx]
    return D


def _pick_batch_block(B):
    # Keep the (divisible-by-8 | full-dim) BlockSpec rule: bblk == B or bblk % 8 == 0.
    if B > 8 and B % 8 == 0:
        return 8
    return B


def prepare_params(params, img_size, batch):
    """One-time prep: dense per-layer matrices, fc fusion, bf16 casts, lane pad."""
    h = img_size // 8
    hh = h * h
    bblk = _pick_batch_block(batch)
    bf = jnp.bfloat16

    fc_w = np.asarray(params["fc_w"], np.float32)       # (128*hh, L)
    fc_b = np.asarray(params["fc_b"], np.float32)       # (128*hh,)
    L = fc_w.shape[1]
    # PyTorch views the fc output as NCHW (c, y, x); permute rows to NHWC-flat
    # ((y*h + x)*128 + c) so it composes with the dense deconv matrices.
    fc_w_hwc = fc_w.reshape(128, h, h, L).transpose(1, 2, 0, 3).reshape(hh * 128, L)
    fc_b_hwc = fc_b.reshape(128, h, h).transpose(1, 2, 0).reshape(1, hh * 128)

    D1 = _deconv_dense(params["w1"], h, h)              # (hh*128, 4hh*64)
    D2 = _deconv_dense(params["w2"], 2 * h, 2 * h)      # (4hh*64, 16hh*32)
    D3 = _deconv_dense(params["w3"], 4 * h, 4 * h)      # (16hh*32, 64hh*1)

    # Bias layout matches the NHWC-flat columns (channel fastest).
    b1 = np.tile(np.asarray(params["b1"], np.float32), 4 * hh)[None, :]
    b2 = np.tile(np.asarray(params["b2"], np.float32), 16 * hh)[None, :]
    b3 = np.tile(np.asarray(params["b3"], np.float32), 64 * hh)[None, :]

    # fc is affine and feeds straight into deconv1 (affine) before the first
    # ReLU, so fuse them (in f32, on host):  y1 = relu(z @ Wa + ba).
    Wa = fc_w_hwc.T @ D1                                 # (L, 4hh*64)
    ba = fc_b_hwc @ D1 + b1                              # (1, 4hh*64)

    # Lane-dense final store: pad output width (img*img, Cout=1) to >=128 and a
    # multiple of 128 with zero columns.
    d_out = D3.shape[1]
    d_pad = max(128, ((d_out + 127) // 128) * 128)
    D3p = np.zeros((D3.shape[0], d_pad), np.float32)
    D3p[:, :d_out] = D3
    b3p = np.zeros((1, d_pad), np.float32)
    b3p[:, :d_out] = b3

    return dict(
        img_size=img_size, bblk=bblk, d_out=d_out, d_pad=d_pad,
        Wa=jnp.asarray(Wa, bf), ba=jnp.asarray(ba, jnp.float32),
        Wb=jnp.asarray(D2, bf), b2=jnp.asarray(b2, jnp.float32),
        Wc=jnp.asarray(D3p, bf), b3=jnp.asarray(b3p, jnp.float32),
    )


# ----------------------------------------------------------------------------
# Fully fused generator kernel: 3 MXU matmuls + bias + ReLU/tanh
# ----------------------------------------------------------------------------
def _generator_kernel(z_ref, wa_ref, ba_ref, wb_ref, b2_ref, wc_ref, b3_ref,
                      o_ref):
    bf16, f32 = jnp.bfloat16, jnp.float32

    def mm(a, w_ref):  # bf16 operands, f32 accumulation on the MXU
        return jnp.dot(a.astype(bf16), w_ref[...], preferred_element_type=f32)

    y1 = jnp.maximum(mm(z_ref[...], wa_ref) + ba_ref[...], 0.0)   # fc + deconv1 + ReLU
    y2 = jnp.maximum(mm(y1, wb_ref) + b2_ref[...], 0.0)           # deconv2 + ReLU
    o_ref[...] = jnp.tanh(mm(y2, wc_ref) + b3_ref[...])           # deconv3 + tanh


def generator_forward(prep, z):
    B, L = z.shape
    bblk = prep["bblk"]
    assert B % bblk == 0
    nb = B // bblk
    img = prep["img_size"]
    d_out, d_pad = prep["d_out"], prep["d_pad"]

    consts = [prep[n] for n in ("Wa", "ba", "Wb", "b2", "Wc", "b3")]

    def const_spec(a):  # VMEM-resident, same block every grid step (no re-DMA)
        return pl.BlockSpec(a.shape, lambda i: (0, 0))

    out = pl.pallas_call(
        _generator_kernel,
        out_shape=jax.ShapeDtypeStruct((B, d_pad), jnp.float32),
        grid=(nb,),
        in_specs=[pl.BlockSpec((bblk, L), lambda i: (i, 0))]
                 + [const_spec(a) for a in consts],
        out_specs=pl.BlockSpec((bblk, d_pad), lambda i: (i, 0)),
        compiler_params=pltpu.CompilerParams(
            dimension_semantics=("parallel",),
            vmem_limit_bytes=32 * 1024 * 1024),
    )(z, *consts)

    # Tiny epilogue: drop the lane padding and view the NHWC-flat (Cout=1) slab
    # as NCHW, matching the PyTorch module's output layout.
    return out[:, :d_out].reshape(B, 1, img, img)


# ------------------------------- parameters ----------------------------------
def init_params(key, latent_dim, img_size):
    h = img_size // 8
    ks = jax.random.split(key, 8)
    s = 0.05
    return dict(
        fc_w=jax.random.normal(ks[0], (128 * h * h, latent_dim), jnp.float32) * s,
        fc_b=jax.random.normal(ks[1], (128 * h * h,), jnp.float32) * s,
        w1=jax.random.normal(ks[2], (128, 64, 4, 4), jnp.float32) * s,
        b1=jax.random.normal(ks[3], (64,), jnp.float32) * s,
        w2=jax.random.normal(ks[4], (64, 32, 4, 4), jnp.float32) * s,
        b2=jax.random.normal(ks[5], (32,), jnp.float32) * s,
        w3=jax.random.normal(ks[6], (32, 1, 4, 4), jnp.float32) * s,
        b3=jax.random.normal(ks[7], (1,), jnp.float32) * s,
    )


# --------------------------- pure-JAX reference ------------------------------
def _deconv_ref(x_nchw, w_pt, bias):
    wf = jnp.transpose(w_pt, (1, 0, 2, 3))[:, :, ::-1, ::-1]
    y = jax.lax.conv_general_dilated(
        x_nchw, wf, window_strides=(1, 1), padding=((2, 2), (2, 2)),
        lhs_dilation=(2, 2), dimension_numbers=("NCHW", "OIHW", "NCHW"))
    return y + bias[None, :, None, None]


def generator_ref(params, z, img_size):
    B = z.shape[0]
    h = img_size // 8
    feat = z @ params["fc_w"].T + params["fc_b"]
    x = feat.reshape(B, 128, h, h)
    x = jax.nn.relu(_deconv_ref(x, params["w1"], params["b1"]))
    x = jax.nn.relu(_deconv_ref(x, params["w2"], params["b2"]))
    x = jnp.tanh(_deconv_ref(x, params["w3"], params["b3"]))
    return x


# ----------------------------------- main ------------------------------------
if __name__ == "__main__":
    import functools

    latent_dim, img_size, batch = 32, 16, 2
    key = jax.random.PRNGKey(0)
    pkey, zkey = jax.random.split(key)
    params = init_params(pkey, latent_dim, img_size)
    z = jax.random.normal(zkey, (batch, latent_dim), jnp.float32)

    prep = prepare_params(params, img_size, batch)       # one-time, hoisted
    fwd = jax.jit(functools.partial(generator_forward, prep))

    out = jax.block_until_ready(fwd(z))
    assert out.shape == (batch, 1, img_size, img_size), out.shape

    ref = jax.block_until_ready(generator_ref(params, z, img_size))
    err = float(jnp.max(jnp.abs(out - ref)))
    assert err < 2e-2, f"mismatch vs reference: max abs diff = {err}"

    print("KERNEL_OK")
</pallas_src>

<mosaic_0001>
module attributes {stable_mosaic.version = 11 : i64} {
  func.func @_generator_kernel(%arg0: i32, %arg1: memref<2x32xf32, #tpu.memory_space<vmem>>, %arg2: memref<32x1024xbf16, #tpu.memory_space<vmem>>, %arg3: memref<1x1024xf32, #tpu.memory_space<vmem>>, %arg4: memref<1024x2048xbf16, #tpu.memory_space<vmem>>, %arg5: memref<1x2048xf32, #tpu.memory_space<vmem>>, %arg6: memref<2048x256xbf16, #tpu.memory_space<vmem>>, %arg7: memref<1x256xf32, #tpu.memory_space<vmem>>, %arg8: memref<2x256xf32, #tpu.memory_space<vmem>>) attributes {dimension_semantics = [#tpu.dimension_semantics<parallel>], iteration_bounds = array<i64: 1>, scalar_prefetch = 0 : i64, scratch_operands = 0 : i64, tpu.core_type = #tpu.core_type<tc>, window_params = [{transform_indices = @transform_0, window_bounds = array<i64: 2, 32>}, {pipeline_mode = #tpu.pipeline_mode<synchronous>, transform_indices = @transform_1, window_bounds = array<i64: 32, 1024>}, {pipeline_mode = #tpu.pipeline_mode<synchronous>, transform_indices = @transform_2, window_bounds = array<i64: 1, 1024>}, {pipeline_mode = #tpu.pipeline_mode<synchronous>, transform_indices = @transform_3, window_bounds = array<i64: 1024, 2048>}, {pipeline_mode = #tpu.pipeline_mode<synchronous>, transform_indices = @transform_4, window_bounds = array<i64: 1, 2048>}, {pipeline_mode = #tpu.pipeline_mode<synchronous>, transform_indices = @transform_5, window_bounds = array<i64: 2048, 256>}, {pipeline_mode = #tpu.pipeline_mode<synchronous>, transform_indices = @transform_6, window_bounds = array<i64: 1, 256>}, {transform_indices = @transform_7, window_bounds = array<i64: 2, 256>}]} {
    %c0 = arith.constant 0 : index
    %c0_0 = arith.constant 0 : index
    %0 = vector.load %arg1[%c0, %c0_0] : memref<2x32xf32, #tpu.memory_space<vmem>>, vector<2x32xf32>
    %1 = arith.truncf %0 : vector<2x32xf32> to vector<2x32xbf16>
    %c0_1 = arith.constant 0 : index
    %c0_2 = arith.constant 0 : index
    %2 = vector.load %arg2[%c0_1, %c0_2] : memref<32x1024xbf16, #tpu.memory_space<vmem>>, vector<32x1024xbf16>
    %cst = arith.constant dense<0.000000e+00> : vector<2x1024xf32>
    %3 = tpu.matmul %1, %2, %cst {dimension_numbers = #tpu.dot_dimension_numbers<[1], [0], [0], [1], [0, 0, 1, 1], [], []>} : vector<2x32xbf16>, vector<32x1024xbf16>, vector<2x1024xf32> -> vector<2x1024xf32>
    %c0_3 = arith.constant 0 : index
    %c0_4 = arith.constant 0 : index
    %4 = vector.load %arg3[%c0_3, %c0_4] : memref<1x1024xf32, #tpu.memory_space<vmem>>, vector<1x1024xf32>
    %5 = vector.broadcast %4 : vector<1x1024xf32> to vector<2x1024xf32>
    %6 = arith.addf %3, %5 : vector<2x1024xf32>
    %cst_5 = arith.constant 0.000000e+00 : f32
    %7 = vector.broadcast %cst_5 : f32 to vector<2x1024xf32>
    %8 = arith.maximumf %6, %7 : vector<2x1024xf32>
    %9 = arith.truncf %8 : vector<2x1024xf32> to vector<2x1024xbf16>
    %c0_6 = arith.constant 0 : index
    %c0_7 = arith.constant 0 : index
    %10 = vector.load %arg4[%c0_6, %c0_7] : memref<1024x2048xbf16, #tpu.memory_space<vmem>>, vector<1024x2048xbf16>
    %cst_8 = arith.constant dense<0.000000e+00> : vector<2x2048xf32>
    %11 = tpu.matmul %9, %10, %cst_8 {dimension_numbers = #tpu.dot_dimension_numbers<[1], [0], [0], [1], [0, 0, 1, 1], [], []>} : vector<2x1024xbf16>, vector<1024x2048xbf16>, vector<2x2048xf32> -> vector<2x2048xf32>
    %c0_9 = arith.constant 0 : index
    %c0_10 = arith.constant 0 : index
    %12 = vector.load %arg5[%c0_9, %c0_10] : memref<1x2048xf32, #tpu.memory_space<vmem>>, vector<1x2048xf32>
    %13 = vector.broadcast %12 : vector<1x2048xf32> to vector<2x2048xf32>
    %14 = arith.addf %11, %13 : vector<2x2048xf32>
    %cst_11 = arith.constant 0.000000e+00 : f32
    %15 = vector.broadcast %cst_11 : f32 to vector<2x2048xf32>
    %16 = arith.maximumf %14, %15 : vector<2x2048xf32>
    %17 = arith.truncf %16 : vector<2x2048xf32> to vector<2x2048xbf16>
    %c0_12 = arith.constant 0 : index
    %c0_13 = arith.constant 0 : index
    %18 = vector.load %arg6[%c0_12, %c0_13] : memref<2048x256xbf16, #tpu.memory_space<vmem>>, vector<2048x256xbf16>
    %cst_14 = arith.constant dense<0.000000e+00> : vector<2x256xf32>
    %19 = tpu.matmul %17, %18, %cst_14 {dimension_numbers = #tpu.dot_dimension_numbers<[1], [0], [0], [1], [0, 0, 1, 1], [], []>} : vector<2x2048xbf16>, vector<2048x256xbf16>, vector<2x256xf32> -> vector<2x256xf32>
    %c0_15 = arith.constant 0 : index
    %c0_16 = arith.constant 0 : index
    %20 = vector.load %arg7[%c0_15, %c0_16] : memref<1x256xf32, #tpu.memory_space<vmem>>, vector<1x256xf32>
    %21 = vector.broadcast %20 : vector<1x256xf32> to vector<2x256xf32>
    %22 = arith.addf %19, %21 : vector<2x256xf32>
    %23 = math.tanh %22 : vector<2x256xf32>
    %c0_17 = arith.constant 0 : index
    %c0_18 = arith.constant 0 : index
    %24 = vector.load %arg8[%c0_17, %c0_18] : memref<2x256xf32, #tpu.memory_space<vmem>>, vector<2x256xf32>
    tpu.vector_store %arg8[%c0_17, %c0_18], %23 {strides = array<i32>} : memref<2x256xf32, #tpu.memory_space<vmem>>, vector<2x256xf32>,
    return
  }
  func.func @transform_0(%arg0: i32) -> (i32, i32) {
    %c0_i32 = arith.constant 0 : i32
    %c0_i32_0 = arith.constant 0 : i32
    return %arg0, %c0_i32 : i32, i32
  }
  func.func @transform_1(%arg0: i32) -> (i32, i32) {
    %c0_i32 = arith.constant 0 : i32
    %c0_i32_0 = arith.constant 0 : i32
    %c0_i32_1 = arith.constant 0 : i32
    return %c0_i32, %c0_i32_0 : i32, i32
  }
  func.func @transform_2(%arg0: i32) -> (i32, i32) {
    %c0_i32 = arith.constant 0 : i32
    %c0_i32_0 = arith.constant 0 : i32
    %c0_i32_1 = arith.constant 0 : i32
    return %c0_i32, %c0_i32_0 : i32, i32
  }
  func.func @transform_3(%arg0: i32) -> (i32, i32) {
    %c0_i32 = arith.constant 0 : i32
    %c0_i32_0 = arith.constant 0 : i32
    %c0_i32_1 = arith.constant 0 : i32
    return %c0_i32, %c0_i32_0 : i32, i32
  }
  func.func @transform_4(%arg0: i32) -> (i32, i32) {
    %c0_i32 = arith.constant 0 : i32
    %c0_i32_0 = arith.constant 0 : i32
    %c0_i32_1 = arith.constant 0 : i32
    return %c0_i32, %c0_i32_0 : i32, i32
  }
  func.func @transform_5(%arg0: i32) -> (i32, i32) {
    %c0_i32 = arith.constant 0 : i32
    %c0_i32_0 = arith.constant 0 : i32
    %c0_i32_1 = arith.constant 0 : i32
    return %c0_i32, %c0_i32_0 : i32, i32
  }
  func.func @transform_6(%arg0: i32) -> (i32, i32) {
    %c0_i32 = arith.constant 0 : i32
    %c0_i32_0 = arith.constant 0 : i32
    %c0_i32_1 = arith.constant 0 : i32
    return %c0_i32, %c0_i32_0 : i32, i32
  }
  func.func @transform_7(%arg0: i32) -> (i32, i32) {
    %c0_i32 = arith.constant 0 : i32
    %c0_i32_0 = arith.constant 0 : i32
    return %arg0, %c0_i32 : i32, i32
  }
}

</mosaic_0001>

<llo_original>
// kernel: generator_forward.1
$region0: #{generator_forward.1}
  #allocation0 [shape = 'u32[]', space=smem, size = 0x4, offset = 0x4, fixed_abs, tag = 'smem constant byte address 0x4 - core index']
  #allocation1 [shape = 'u32[144,128]{1,0:T(1,128)}', space=vmem, size = 0x12000, scoped, tag = 'internal scratch']
  %s0 = inlined_call_operand.hbm [shape: f32[2,32], index: 0, kind: input, shape index: {}]
  %s1 = inlined_call_operand.hbm [shape: bf16[32,1024], index: 1, kind: input, shape index: {}]
  %s2 = inlined_call_operand.hbm [shape: f32[1,1024], index: 2, kind: input, shape index: {}]
  %s3 = inlined_call_operand.hbm [shape: bf16[1024,2048], index: 3, kind: input, shape index: {}]
  %s4 = inlined_call_operand.hbm [shape: f32[1,2048], index: 4, kind: input, shape index: {}]
  %s5 = inlined_call_operand.hbm [shape: bf16[2048,256], index: 5, kind: input, shape index: {}]
  %s6 = inlined_call_operand.vmem [shape: f32[1,256], index: 6, kind: input, shape index: {}]
  %s7 = inlined_call_operand.vmem [shape: f32[2,256], index: 7, kind: output, shape index: {}]
  %s8 = sld [smem:[#allocation0]]
  $region62: #{generator_forward.1} parent=0
    _
  %s10 = ssub.s32 1, %s8
  %s11 = scalar_select 0, %s10, %s8
  $region1: #{generator_forward.1} parent=0
    #allocation2 [shape = 'u8[1024]{0}', space=vmem, size = 0x400, scoped, tag = 'input window, operand 0, single buffered']
    #allocation3 [shape = 's32[1]{0}', space=sflag, size = 0x4, scoped, tag = 'scoped memory for generator_forward.1']
    #allocation4 [shape = 'u8[65536]{0}', space=vmem, size = 0x10000, scoped, tag = 'input window, operand 1, single buffered']
    #allocation5 [shape = 's32[1]{0}', space=sflag, size = 0x4, scoped, tag = 'scoped memory for generator_forward.1']
    #allocation6 [shape = 'u8[4096]{0}', space=vmem, size = 0x1000, scoped, tag = 'input window, operand 2, single buffered']
    #allocation7 [shape = 'u8[4194304]{0}', space=vmem, size = 0x400000, scoped, tag = 'input window, operand 3, single buffered']
    #allocation8 [shape = 's32[1]{0}', space=sflag, size = 0x4, scoped, tag = 'scoped memory for generator_forward.1']
    #allocation9 [shape = 'u8[8192]{0}', space=vmem, size = 0x2000, scoped, tag = 'input window, operand 4, single buffered']
    #allocation10 [shape = 'u8[1048576]{0}', space=vmem, size = 0x100000, scoped, tag = 'input window, operand 5, single buffered']
    #allocation11 [shape = 's32[1]{0}', space=sflag, size = 0x4, scoped, tag = 'scoped memory for generator_forward.1']
    %12 = vsyncpa [#allocation3], 0
    %13 = vsyncpa [#allocation5], 0
    %14 = vsyncpa [#allocation8], 0
    %15 = vsyncpa [#allocation11], 0
    // Predicated region
    $region2: #{generator_forward.1} parent=1 // pred_check
      _
    $region3: #{generator_forward.1} parent=1 // pred_check_branch
      %17 = sbr.rel (0) target = $region5
    $region4: #{generator_forward.1} parent=1 // pred_region
      %s19 = ssub.s32 32, 32
      %20 = vsyncadd [#allocation3], %s19
      %s22 = sshll.u32 [#allocation2], 4
      %s23 = int_to_ptr.vmem [resolvable:$true] %s22
      %25 = dma.hbm_to_vmem [thread:$0]  %s0, 32, %s23, [#allocation3]
    $region5: #{generator_forward.1} parent=1 // pred_fallthru
      _
    // Predicated region
    $region6: #{generator_forward.1} parent=1 // pred_check
      _
    $region7: #{generator_forward.1} parent=1 // pred_check_branch
      %27 = sbr.rel (0) target = $region9
    $region8: #{generator_forward.1} parent=1 // pred_region
      %s29 = ssub.s32 2048, 2048
      %30 = vsyncadd [#allocation5], %s29
      %s31 = sshll.u32 [#allocation4], 4
      %s32 = int_to_ptr.vmem [resolvable:$true] %s31
      %37 = dma.hbm_to_vmem [thread:$0]  %s1, 2048, %s32, [#allocation5], 512, 512, 32
    $region9: #{generator_forward.1} parent=1 // pred_fallthru
      _
    // Predicated region
    $region10: #{generator_forward.1} parent=1 // pred_check
      _
    $region11: #{generator_forward.1} parent=1 // pred_check_branch
      %39 = sbr.rel (0) target = $region13
    $region12: #{generator_forward.1} parent=1 // pred_region
      %s41 = ssub.s32 128, 128
      %42 = vsyncadd [#allocation5], %s41
      %s44 = sshll.u32 [#allocation6], 4
      %s45 = int_to_ptr.vmem [resolvable:$true] %s44
      %47 = dma.hbm_to_vmem [thread:$0]  %s2, 128, %s45, [#allocation5]
    $region13: #{generator_forward.1} parent=1 // pred_fallthru
      _
    // Predicated region
    $region14: #{generator_forward.1} parent=1 // pred_check
      _
    $region15: #{generator_forward.1} parent=1 // pred_check_branch
      %49 = sbr.rel (0) target = $region17
    $region16: #{generator_forward.1} parent=1 // pred_region
      %s51 = ssub.s32 131072, 131072
      %52 = vsyncadd [#allocation8], %s51
      %s53 = sshll.u32 [#allocation7], 4
      %s54 = int_to_ptr.vmem [resolvable:$true] %s53
      %59 = dma.hbm_to_vmem [thread:$0]  %s3, 131072, %s54, [#allocation8], 1024, 1024, 64
    $region17: #{generator_forward.1} parent=1 // pred_fallthru
      _
    // Predicated region
    $region18: #{generator_forward.1} parent=1 // pred_check
      _
    $region19: #{generator_forward.1} parent=1 // pred_check_branch
      %61 = sbr.rel (0) target = $region21
    $region20: #{generator_forward.1} parent=1 // pred_region
      %s63 = ssub.s32 256, 256
      %64 = vsyncadd [#allocation8], %s63
      %s66 = sshll.u32 [#allocation9], 4
      %s67 = int_to_ptr.vmem [resolvable:$true] %s66
      %69 = dma.hbm_to_vmem [thread:$0]  %s4, 256, %s67, [#allocation8]
    $region21: #{generator_forward.1} parent=1 // pred_fallthru
      _
    // Predicated region
    $region22: #{generator_forward.1} parent=1 // pred_check
      _
    $region23: #{generator_forward.1} parent=1 // pred_check_branch
      %71 = sbr.rel (0) target = $region25
    $region24: #{generator_forward.1} parent=1 // pred_region
      %s73 = ssub.s32 32768, 32768
      %74 = vsyncadd [#allocation11], %s73
      %s75 = sshll.u32 [#allocation10], 4
      %s76 = int_to_ptr.vmem [resolvable:$true] %s75
      %81 = dma.hbm_to_vmem [thread:$0]  %s5, 32768, %s76, [#allocation11], 128, 128, 8
    $region25: #{generator_forward.1} parent=1 // pred_fallthru
      _
    // Predicated region
    $region26: #{generator_forward.1} parent=1 // pred_check
      _
    $region27: #{generator_forward.1} parent=1 // pred_check_branch
      %83 = sbr.rel (0) target = $region29
    $region28: #{generator_forward.1} parent=1 // pred_region
      _
    $region29: #{generator_forward.1} parent=1 // pred_fallthru
      _
    // Predicated region
    $region30: #{generator_forward.1} parent=1 // pred_check
      _
    $region31: #{generator_forward.1} parent=1 // pred_check_branch
      %85 = sbr.rel (0) target = $region33
    $region32: #{generator_forward.1} parent=1 // pred_region
      %86 = dma.done [#allocation3], 32
    $region33: #{generator_forward.1} parent=1 // pred_fallthru
      _
    // Predicated region
    $region34: #{generator_forward.1} parent=1 // pred_check
      _
    $region35: #{generator_forward.1} parent=1 // pred_check_branch
      %88 = sbr.rel (0) target = $region37
    $region36: #{generator_forward.1} parent=1 // pred_region
      %89 = dma.done [#allocation5], 2048
    $region37: #{generator_forward.1} parent=1 // pred_fallthru
      _
    // Predicated region
    $region38: #{generator_forward.1} parent=1 // pred_check
      _
    $region39: #{generator_forward.1} parent=1 // pred_check_branch
      %91 = sbr.rel (0) target = $region41
    $region40: #{generator_forward.1} parent=1 // pred_region
      %92 = dma.done [#allocation5], 128
    $region41: #{generator_forward.1} parent=1 // pred_fallthru
      _
    // Predicated region
    $region42: #{generator_forward.1} parent=1 // pred_check
      _
    $region43: #{generator_forward.1} parent=1 // pred_check_branch
      %94 = sbr.rel (0) target = $region45
    $region44: #{generator_forward.1} parent=1 // pred_region
      %95 = dma.done [#allocation8], 131072
    $region45: #{generator_forward.1} parent=1 // pred_fallthru
      _
    // Predicated region
    $region46: #{generator_forward.1} parent=1 // pred_check
      _
    $region47: #{generator_forward.1} parent=1 // pred_check_branch
      %97 = sbr.rel (0) target = $region49
    $region48: #{generator_forward.1} parent=1 // pred_region
      %98 = dma.done [#allocation8], 256
    $region49: #{generator_forward.1} parent=1 // pred_fallthru
      _
    // Predicated region
    $region50: #{generator_forward.1} parent=1 // pred_check
      _
    $region51: #{generator_forward.1} parent=1 // pred_check_branch
      %100 = sbr.rel (0) target = $region53
    $region52: #{generator_forward.1} parent=1 // pred_region
      %101 = dma.done [#allocation11], 32768
    $region53: #{generator_forward.1} parent=1 // pred_fallthru
      _
    %v103 = vld [vmem:[#allocation2] sm:$0x3]
    %v104 = vpack.c.bf16 %v103, %v103
    %v105 = vld [vmem:[#allocation4] sm:$0xff]
    %v106 = vld [vmem:[#allocation4 + $0x8] sm:$0xff]
    %v107 = vld [vmem:[#allocation4 + $0x10] sm:$0xff]
    %v108 = vld [vmem:[#allocation4 + $0x18] sm:$0xff]
    %v109 = vld [vmem:[#allocation4 + $0x20] sm:$0xff]
    %v110 = vld [vmem:[#allocation4 + $0x28] sm:$0xff]
    %v111 = vld [vmem:[#allocation4 + $0x30] sm:$0xff]
    %v112 = vld [vmem:[#allocation4 + $0x38] sm:$0xff]
    %v113 = vld [vmem:[#allocation4 + $0x40] sm:$0xff]
    %v114 = vld [vmem:[#allocation4 + $0x48] sm:$0xff]
    %v115 = vld [vmem:[#allocation4 + $0x50] sm:$0xff]
    %v116 = vld [vmem:[#allocation4 + $0x58] sm:$0xff]
    %v117 = vld [vmem:[#allocation4 + $0x60] sm:$0xff]
    %v118 = vld [vmem:[#allocation4 + $0x68] sm:$0xff]
    %v119 = vld [vmem:[#allocation4 + $0x70] sm:$0xff]
    %v120 = vld [vmem:[#allocation4 + $0x78] sm:$0xff]
    %v121 = vld [vmem:[#allocation6] sm:$0xff]
    %v123 = vlaneseq
    %v124 = vshrl.u32 %v123, 7
    %v125 = vsub.s32 0, %v124
    %v126 = vrot.slane %v121, %v125
    %v127 = vlaneseq
    %v128 = vshrl.u32 %v127, 7
    %v129 = vsub.s32 1, %v128
    %v130 = vrot.slane %v121, %v129
    %v131 = vlaneseq
    %v132 = vshrl.u32 %v131, 7
    %v133 = vsub.s32 2, %v132
    %v134 = vrot.slane %v121, %v133
    %v135 = vlaneseq
    %v136 = vshrl.u32 %v135, 7
    %v137 = vsub.s32 3, %v136
    %v138 = vrot.slane %v121, %v137
    %v139 = vlaneseq
    %v140 = vshrl.u32 %v139, 7
    %v141 = vsub.s32 4, %v140
    %v142 = vrot.slane %v121, %v141
    %v143 = vlaneseq
    %v144 = vshrl.u32 %v143, 7
    %v145 = vsub.s32 5, %v144
    %v146 = vrot.slane %v121, %v145
    %v147 = vlaneseq
    %v148 = vshrl.u32 %v147, 7
    %v149 = vsub.s32 6, %v148
    %v150 = vrot.slane %v121, %v149
    %v151 = vlaneseq
    %v152 = vshrl.u32 %v151, 7
    %v153 = vsub.s32 7, %v152
    %v154 = vrot.slane %v121, %v153
    %v179 = vunpack.c.l.b16 %v105
    %v180 = vunpack.c.h.b16 %v105
    %v181 = vunpack.c.l.b16 %v106
    %v182 = vunpack.c.h.b16 %v106
    %v183 = vunpack.c.l.b16 %v107
    %v184 = vunpack.c.h.b16 %v107
    %v185 = vunpack.c.l.b16 %v108
    %v186 = vunpack.c.h.b16 %v108
    %v187 = vunpack.c.l.b16 %v109
    %v188 = vunpack.c.h.b16 %v109
    %v189 = vunpack.c.l.b16 %v110
    %v190 = vunpack.c.h.b16 %v110
    %v191 = vunpack.c.l.b16 %v111
    %v192 = vunpack.c.h.b16 %v111
    %v193 = vunpack.c.l.b16 %v112
    %v194 = vunpack.c.h.b16 %v112
    %v195 = vunpack.c.l.b16 %v113
    %v196 = vunpack.c.h.b16 %v113
    %v197 = vunpack.c.l.b16 %v114
    %v198 = vunpack.c.h.b16 %v114
    %v199 = vunpack.c.l.b16 %v115
    %v200 = vunpack.c.h.b16 %v115
    %v201 = vunpack.c.l.b16 %v116
    %v202 = vunpack.c.h.b16 %v116
    %v203 = vunpack.c.l.b16 %v117
    %v204 = vunpack.c.h.b16 %v117
    %v205 = vunpack.c.l.b16 %v118
    %v206 = vunpack.c.h.b16 %v118
    %v207 = vunpack.c.l.b16 %v119
    %v208 = vunpack.c.h.b16 %v119
    %v209 = vunpack.c.l.b16 %v120
    %v210 = vunpack.c.h.b16 %v120
    %v211 = vpack.c.b16 %v187, %v179
    %v212 = vpack.c.b16 %v188, %v180
    %v213 = vpack.c.b16 %v189, %v181
    %v214 = vpack.c.b16 %v190, %v182
    %v215 = vpack.c.b16 %v191, %v183
    %v216 = vpack.c.b16 %v192, %v184
    %v217 = vpack.c.b16 %v193, %v185
    %v218 = vpack.c.b16 %v194, %v186
    %v219 = vpack.c.b16 %v203, %v195
    %v220 = vpack.c.b16 %v204, %v196
    %v221 = vpack.c.b16 %v205, %v197
    %v222 = vpack.c.b16 %v206, %v198
    %v223 = vpack.c.b16 %v207, %v199
    %v224 = vpack.c.b16 %v208, %v200
    %v225 = vpack.c.b16 %v209, %v201
    %v226 = vpack.c.b16 %v210, %v202
    %vm243 = vcmask 261120
    %v245 = vsel %vm243, %v104, 0
    %247 = vmatprep.subr.bf16.mxu0 0
    %248 = vmatpush1.bf16.msra.mxu0 0
    %249 = vmatprep.subr.bf16.mxu0 0
    %250 = vmatpush1.bf16.msra.mxu0 0
    %251 = vmatprep.subr.bf16.mxu0 0
    %252 = vmatpush1.bf16.msra.mxu0 0
    %253 = vmatprep.subr.bf16.mxu0 0
    %254 = vmatpush1.bf16.msra.mxu0 0
    %255 = vmatprep.subr.bf16.mxu0 0
    %256 = vmatpush1.bf16.msra.mxu0 0
    %257 = vmatprep.subr.bf16.mxu0 0
    %258 = vmatpush1.bf16.msra.mxu0 0
    %259 = vmatprep.subr.bf16.mxu0 %v220
    %260 = vmatpush1.bf16.msra.mxu0 %v219
    %261 = vmatprep.subr.bf16.mxu0 %v212
    %262 = vmatpush1.bf16.msra.mxu0 %v211
    %263 = vmatprep.subr.bf16.mxu0 0
    %264 = vmatpush2.bf16.msra.mxu0 0
    %265 = vmatprep.subr.bf16.mxu0 0
    %266 = vmatpush2.bf16.msra.mxu0 0
    %267 = vmatprep.subr.bf16.mxu0 0
    %268 = vmatpush2.bf16.msra.mxu0 0
    %269 = vmatprep.subr.bf16.mxu0 0
    %270 = vmatpush2.bf16.msra.mxu0 0
    %271 = vmatprep.subr.bf16.mxu0 0
    %272 = vmatpush2.bf16.msra.mxu0 0
    %273 = vmatprep.subr.bf16.mxu0 0
    %274 = vmatpush2.bf16.msra.mxu0 0
    %275 = vmatprep.subr.bf16.mxu0 0
    %276 = vmatpush2.bf16.msra.mxu0 0
    %277 = vmatprep.subr.bf16.mxu0 0
    %278 = vmatpush2.bf16.msra.mxu0 0
    %279 = vmatprep.mubr.bf16.mxu0 0
    %280 = vmatmul.mubr.bf16.gmra.mxu0 %v245
    %v281 = vpop.f32.mrf.mxu0
    %v282 = vadd.f32 %v126, %v281
    %v283 = vpop.f32.mrf.mxu0
    %v284 = vadd.f32 %v130, %v283
    %v285 = vpop.f32.mrf.mxu0
    %v286 = vpop.f32.mrf.mxu0
    %287 = vdwg.mxu0
    %288 = vmatprep.subr.bf16.mxu0 0
    %289 = vmatpush1.bf16.msra.mxu0 0
    %290 = vmatprep.subr.bf16.mxu0 0
    %291 = vmatpush1.bf16.msra.mxu0 0
    %292 = vmatprep.subr.bf16.mxu0 0
    %293 = vmatpush1.bf16.msra.mxu0 0
    %294 = vmatprep.subr.bf16.mxu0 0
    %295 = vmatpush1.bf16.msra.mxu0 0
    %296 = vmatprep.subr.bf16.mxu0 0
    %297 = vmatpush1.bf16.msra.mxu0 0
    %298 = vmatprep.subr.bf16.mxu0 0
    %299 = vmatpush1.bf16.msra.mxu0 0
    %300 = vmatprep.subr.bf16.mxu0 %v222
    %301 = vmatpush1.bf16.msra.mxu0 %v221
    %302 = vmatprep.subr.bf16.mxu0 %v214
    %303 = vmatpush1.bf16.msra.mxu0 %v213
    %304 = vmatprep.subr.bf16.mxu0 0
    %305 = vmatpush2.bf16.msra.mxu0 0
    %306 = vmatprep.subr.bf16.mxu0 0
    %307 = vmatpush2.bf16.msra.mxu0 0
    %308 = vmatprep.subr.bf16.mxu0 0
    %309 = vmatpush2.bf16.msra.mxu0 0
    %310 = vmatprep.subr.bf16.mxu0 0
    %311 = vmatpush2.bf16.msra.mxu0 0
    %312 = vmatprep.subr.bf16.mxu0 0
    %313 = vmatpush2.bf16.msra.mxu0 0
    %314 = vmatprep.subr.bf16.mxu0 0
    %315 = vmatpush2.bf16.msra.mxu0 0
    %316 = vmatprep.subr.bf16.mxu0 0
    %317 = vmatpush2.bf16.msra.mxu0 0
    %318 = vmatprep.subr.bf16.mxu0 0
    %319 = vmatpush2.bf16.msra.mxu0 0
    %320 = vmatprep.mubr.bf16.mxu0 0
    %321 = vmatmul.mubr.bf16.gmra.mxu0 %v245
    %v322 = vpop.f32.mrf.mxu0
    %v323 = vadd.f32 %v134, %v322
    %v324 = vpop.f32.mrf.mxu0
    %v325 = vadd.f32 %v138, %v324
    %v326 = vpop.f32.mrf.mxu0
    %v327 = vpop.f32.mrf.mxu0
    %328 = vdwg.mxu0
    %329 = vmatprep.subr.bf16.mxu0 0
    %330 = vmatpush1.bf16.msra.mxu0 0
    %331 = vmatprep.subr.bf16.mxu0 0
    %332 = vmatpush1.bf16.msra.mxu0 0
    %333 = vmatprep.subr.bf16.mxu0 0
    %334 = vmatpush1.bf16.msra.mxu0 0
    %335 = vmatprep.subr.bf16.mxu0 0
    %336 = vmatpush1.bf16.msra.mxu0 0
    %337 = vmatprep.subr.bf16.mxu0 0
    %338 = vmatpush1.bf16.msra.mxu0 0
    %339 = vmatprep.subr.bf16.mxu0 0
    %340 = vmatpush1.bf16.msra.mxu0 0
    %341 = vmatprep.subr.bf16.mxu0 %v224
    %342 = vmatpush1.bf16.msra.mxu0 %v223
    %343 = vmatprep.subr.bf16.mxu0 %v216
    %344 = vmatpush1.bf16.msra.mxu0 %v215
    %345 = vmatprep.subr.bf16.mxu0 0
    %346 = vmatpush2.bf16.msra.mxu0 0
    %347 = vmatprep.subr.bf16.mxu0 0
    %348 = vmatpush2.bf16.msra.mxu0 0
    %349 = vmatprep.subr.bf16.mxu0 0
    %350 = vmatpush2.bf16.msra.mxu0 0
    %351 = vmatprep.subr.bf16.mxu0 0
    %352 = vmatpush2.bf16.msra.mxu0 0
    %353 = vmatprep.subr.bf16.mxu0 0
    %354 = vmatpush2.bf16.msra.mxu0 0
    %355 = vmatprep.subr.bf16.mxu0 0
    %356 = vmatpush2.bf16.msra.mxu0 0
    %357 = vmatprep.subr.bf16.mxu0 0
    %358 = vmatpush2.bf16.msra.mxu0 0
    %359 = vmatprep.subr.bf16.mxu0 0
    %360 = vmatpush2.bf16.msra.mxu0 0
    %361 = vmatprep.mubr.bf16.mxu0 0
    %362 = vmatmul.mubr.bf16.gmra.mxu0 %v245
    %v363 = vpop.f32.mrf.mxu0
    %v364 = vadd.f32 %v142, %v363
    %v365 = vpop.f32.mrf.mxu0
    %v366 = vadd.f32 %v146, %v365
    %v367 = vpop.f32.mrf.mxu0
    %v368 = vpop.f32.mrf.mxu0
    %369 = vdwg.mxu0
    %370 = vmatprep.subr.bf16.mxu0 0
    %371 = vmatpush1.bf16.msra.mxu0 0
    %372 = vmatprep.subr.bf16.mxu0 0
    %373 = vmatpush1.bf16.msra.mxu0 0
    %374 = vmatprep.subr.bf16.mxu0 0
    %375 = vmatpush1.bf16.msra.mxu0 0
    %376 = vmatprep.subr.bf16.mxu0 0
    %377 = vmatpush1.bf16.msra.mxu0 0
    %378 = vmatprep.subr.bf16.mxu0 0
    %379 = vmatpush1.bf16.msra.mxu0 0
    %380 = vmatprep.subr.bf16.mxu0 0
    %381 = vmatpush1.bf16.msra.mxu0 0
    %382 = vmatprep.subr.bf16.mxu0 %v226
    %383 = vmatpush1.bf16.msra.mxu0 %v225
    %384 = vmatprep.subr.bf16.mxu0 %v218
    %385 = vmatpush1.bf16.msra.mxu0 %v217
    %386 = vmatprep.subr.bf16.mxu0 0
    %387 = vmatpush2.bf16.msra.mxu0 0
    %388 = vmatprep.subr.bf16.mxu0 0
    %389 = vmatpush2.bf16.msra.mxu0 0
    %390 = vmatprep.subr.bf16.mxu0 0
    %391 = vmatpush2.bf16.msra.mxu0 0
    %392 = vmatprep.subr.bf16.mxu0 0
    %393 = vmatpush2.bf16.msra.mxu0 0
    %394 = vmatprep.subr.bf16.mxu0 0
    %395 = vmatpush2.bf16.msra.mxu0 0
    %396 = vmatprep.subr.bf16.mxu0 0
    %397 = vmatpush2.bf16.msra.mxu0 0
    %398 = vmatprep.subr.bf16.mxu0 0
    %399 = vmatpush2.bf16.msra.mxu0 0
    %400 = vmatprep.subr.bf16.mxu0 0
    %401 = vmatpush2.bf16.msra.mxu0 0
    %402 = vmatprep.mubr.bf16.mxu0 0
    %403 = vmatmul.mubr.bf16.gmra.mxu0 %v245
    %v404 = vpop.f32.mrf.mxu0
    %v405 = vadd.f32 %v150, %v404
    %v406 = vpop.f32.mrf.mxu0
    %v407 = vadd.f32 %v154, %v406
    %v408 = vpop.f32.mrf.mxu0
    %v409 = vpop.f32.mrf.mxu0
    %410 = vdwg.mxu0
    %v411 = vmax.f32 %v282, 0.0
    %v412 = vmax.f32 %v284, 0.0
    %v413 = vmax.f32 %v323, 0.0
    %v414 = vmax.f32 %v325, 0.0
    %v415 = vmax.f32 %v364, 0.0
    %v416 = vmax.f32 %v366, 0.0
    %v417 = vmax.f32 %v405, 0.0
    %v418 = vmax.f32 %v407, 0.0
    %v419 = vpack.c.bf16 %v411, %v411
    %v420 = vpack.c.bf16 %v412, %v412
    %v421 = vpack.c.bf16 %v413, %v413
    %v422 = vpack.c.bf16 %v414, %v414
    %v423 = vpack.c.bf16 %v415, %v415
    %v424 = vpack.c.bf16 %v416, %v416
    %v425 = vpack.c.bf16 %v417, %v417
    %v426 = vpack.c.bf16 %v418, %v418
    %v427 = vld [vmem:[#allocation7] sm:$0xff]
    %v428 = vld [vmem:[#allocation7 + $0x8] sm:$0xff]
    %v429 = vld [vmem:[#allocation7 + $0x10] sm:$0xff]
    %v430 = vld [vmem:[#allocation7 + $0x18] sm:$0xff]
    %v431 = vld [vmem:[#allocation7 + $0x20] sm:$0xff]
    %v432 = vld [vmem:[#allocation7 + $0x28] sm:$0xff]
    %v433 = vld [vmem:[#allocation7 + $0x30] sm:$0xff]
    %v434 = vld [vmem:[#allocation7 + $0x38] sm:$0xff]
    %v435 = vld [vmem:[#allocation7 + $0x40] sm:$0xff]
    %v436 = vld [vmem:[#allocation7 + $0x48] sm:$0xff]
    %v437 = vld [vmem:[#allocation7 + $0x50] sm:$0xff]
    %v438 = vld [vmem:[#allocation7 + $0x58] sm:$0xff]
    %v439 = vld [vmem:[#allocation7 + $0x60] sm:$0xff]
    %v440 = vld [vmem:[#allocation7 + $0x68] sm:$0xff]
    %v441 = vld [vmem:[#allocation7 + $0x70] sm:$0xff]
    %v442 = vld [vmem:[#allocation7 + $0x78] sm:$0xff]
    %v443 = vld [vmem:[#allocation7 + $0x80] sm:$0xff]
    %v444 = vld [vmem:[#allocation7 + $0x88] sm:$0xff]
    %v445 = vld [vmem:[#allocation7 + $0x90] sm:$0xff]
    %v446 = vld [vmem:[#allocation7 + $0x98] sm:$0xff]
    %v447 = vld [vmem:[#allocation7 + $0xa0] sm:$0xff]
    %v448 = vld [vmem:[#allocation7 + $0xa8] sm:$0xff]
    %v449 = vld [vmem:[#allocation7 + $0xb0] sm:$0xff]
    %v450 = vld [vmem:[#allocation7 + $0xb8] sm:$0xff]
    %v451 = vld [vmem:[#allocation7 + $0xc0] sm:$0xff]
    %v452 = vld [vmem:[#allocation7 + $0xc8] sm:$0xff]
    %v453 = vld [vmem:[#allocation7 + $0xd0] sm:$0xff]
    %v454 = vld [vmem:[#allocation7 + $0xd8] sm:$0xff]
    %v455 = vld [vmem:[#allocation7 + $0xe0] sm:$0xff]
    %v456 = vld [vmem:[#allocation7 + $0xe8] sm:$0xff]
    %v457 = vld [vmem:[#allocation7 + $0xf0] sm:$0xff]
    %v458 = vld [vmem:[#allocation7 + $0xf8] sm:$0xff]
    %v459 = vld [vmem:[#allocation7 + $0x100] sm:$0xff]
    %v460 = vld [vmem:[#allocation7 + $0x108] sm:$0xff]
    %v461 = vld [vmem:[#allocation7 + $0x110] sm:$0xff]
    %v462 = vld [vmem:[#allocation7 + $0x118] sm:$0xff]
    %v463 = vld [vmem:[#allocation7 + $0x120] sm:$0xff]
    %v464 = vld [vmem:[#allocation7 + $0x128] sm:$0xff]
    %v465 = vld [vmem:[#allocation7 + $0x130] sm:$0xff]
    %v466 = vld [vmem:[#allocation7 + $0x138] sm:$0xff]
    %v467 = vld [vmem:[#allocation7 + $0x140] sm:$0xff]
    %v468 = vld [vmem:[#allocation7 + $0x148] sm:$0xff]
    %v469 = vld [vmem:[#allocation7 + $0x150] sm:$0xff]
    %v470 = vld [vmem:[#allocation7 + $0x158] sm:$0xff]
    %v471 = vld [vmem:[#allocation7 + $0x160] sm:$0xff]
    %v472 = vld [vmem:[#allocation7 + $0x168] sm:$0xff]
    %v473 = vld [vmem:[#allocation7 + $0x170] sm:$0xff]
    %v474 = vld [vmem:[#allocation7 + $0x178] sm:$0xff]
    %v475 = vld [vmem:[#allocation7 + $0x180] sm:$0xff]
    %v476 = vld [vmem:[#allocation7 + $0x188] sm:$0xff]
    %v477 = vld [vmem:[#allocation7 + $0x190] sm:$0xff]
    %v478 = vld [vmem:[#allocation7 + $0x198] sm:$0xff]
    %v479 = vld [vmem:[#allocation7 + $0x1a0] sm:$0xff]
    %v480 = vld [vmem:[#allocation7 + $0x1a8] sm:$0xff]
    %v481 = vld [vmem:[#allocation7 + $0x1b0] sm:$0xff]
    %v482 = vld [vmem:[#allocation7 + $0x1b8] sm:$0xff]
    %v483 = vld [vmem:[#allocation7 + $0x1c0] sm:$0xff]
    %v484 = vld [vmem:[#allocation7 + $0x1c8] sm:$0xff]
    %v485 = vld [vmem:[#allocation7 + $0x1d0] sm:$0xff]
    %v486 = vld [vmem:[#allocation7 + $0x1d8] sm:$0xff]
    %v487 = vld [vmem:[#allocation7 + $0x1e0] sm:$0xff]
    %v488 = vld [vmem:[#allocation7 + $0x1e8] sm:$0xff]
    %v489 = vld [vmem:[#allocation7 + $0x1f0] sm:$0xff]
    %v490 = vld [vmem:[#allocation7 + $0x1f8] sm:$0xff]
    %v491 = vld [vmem:[#allocation7 + $0x200] sm:$0xff]
    %v492 = vld [vmem:[#allocation7 + $0x208] sm:$0xff]
    %v493 = vld [vmem:[#allocation7 + $0x210] sm:$0xff]
    %v494 = vld [vmem:[#allocation7 + $0x218] sm:$0xff]
    %v495 = vld [vmem:[#allocation7 + $0x220] sm:$0xff]
    %v496 = vld [vmem:[#allocation7 + $0x228] sm:$0xff]
    %v497 = vld [vmem:[#allocation7 + $0x230] sm:$0xff]
    %v498 = vld [vmem:[#allocation7 + $0x238] sm:$0xff]
    %v499 = vld [vmem:[#allocation7 + $0x240] sm:$0xff]
    %v500 = vld [vmem:[#allocation7 + $0x248] sm:$0xff]
    %v501 = vld [vmem:[#allocation7 + $0x250] sm:$0xff]
    %v502 = vld [vmem:[#allocation7 + $0x258] sm:$0xff]
    %v503 = vld [vmem:[#allocation7 + $0x260] sm:$0xff]
    %v504 = vld [vmem:[#allocation7 + $0x268] sm:$0xff]
    %v505 = vld [vmem:[#allocation7 + $0x270] sm:$0xff]
    %v506 = vld [vmem:[#allocation7 + $0x278] sm:$0xff]
    %v507 = vld [vmem:[#allocation7 + $0x280] sm:$0xff]
    %v508 = vld [vmem:[#allocation7 + $0x288] sm:$0xff]
    %v509 = vld [vmem:[#allocation7 + $0x290] sm:$0xff]
    %v510 = vld [vmem:[#allocation7 + $0x298] sm:$0xff]
    %v511 = vld [vmem:[#allocation7 + $0x2a0] sm:$0xff]
    %v512 = vld [vmem:[#allocation7 + $0x2a8] sm:$0xff]
    %v513 = vld [vmem:[#allocation7 + $0x2b0] sm:$0xff]
    %v514 = vld [vmem:[#allocation7 + $0x2b8] sm:$0xff]
    %v515 = vld [vmem:[#allocation7 + $0x2c0] sm:$0xff]
    %v516 = vld [vmem:[#allocation7 + $0x2c8] sm:$0xff]
    %v517 = vld [vmem:[#allocation7 + $0x2d0] sm:$0xff]
    %v518 = vld [vmem:[#allocation7 + $0x2d8] sm:$0xff]
    %v519 = vld [vmem:[#allocation7 + $0x2e0] sm:$0xff]
    %v520 = vld [vmem:[#allocation7 + $0x2e8] sm:$0xff]
    %v521 = vld [vmem:[#allocation7 + $0x2f0] sm:$0xff]
    %v522 = vld [vmem:[#allocation7 + $0x2f8] sm:$0xff]
    %v523 = vld [vmem:[#allocation7 + $0x300] sm:$0xff]
    %v524 = vld [vmem:[#allocation7 + $0x308] sm:$0xff]
    %v525 = vld [vmem:[#allocation7 + $0x310] sm:$0xff]
    %v526 = vld [vmem:[#allocation7 + $0x318] sm:$0xff]
    %v527 = vld [vmem:[#allocation7 + $0x320] sm:$0xff]
    %v528 = vld [vmem:[#allocation7 + $0x328] sm:$0xff]
    %v529 = vld [vmem:[#allocation7 + $0x330] sm:$0xff]
    %v530 = vld [vmem:[#allocation7 + $0x338] sm:$0xff]
    %v531 = vld [vmem:[#allocation7 + $0x340] sm:$0xff]
    %v532 = vld [vmem:[#allocation7 + $0x348] sm:$0xff]
    %v533 = vld [vmem:[#allocation7 + $0x350] sm:$0xff]
    %v534 = vld [vmem:[#allocation7 + $0x358] sm:$0xff]
    %v535 = vld [vmem:[#allocation7 + $0x360] sm:$0xff]
    %v536 = vld [vmem:[#allocation7 + $0x368] sm:$0xff]
    %v537 = vld [vmem:[#allocation7 + $0x370] sm:$0xff]
    %v538 = vld [vmem:[#allocation7 + $0x378] sm:$0xff]
    %v539 = vld [vmem:[#allocation7 + $0x380] sm:$0xff]
    %v540 = vld [vmem:[#allocation7 + $0x388] sm:$0xff]
    %v541 = vld [vmem:[#allocation7 + $0x390] sm:$0xff]
    %v542 = vld [vmem:[#allocation7 + $0x398] sm:$0xff]
    %v543 = vld [vmem:[#allocation7 + $0x3a0] sm:$0xff]
    %v544 = vld [vmem:[#allocation7 + $0x3a8] sm:$0xff]
    %v545 = vld [vmem:[#allocation7 + $0x3b0] sm:$0xff]
    %v546 = vld [vmem:[#allocation7 + $0x3b8] sm:$0xff]
    %v547 = vld [vmem:[#allocation7 + $0x3c0] sm:$0xff]
    %v548 = vld [vmem:[#allocation7 + $0x3c8] sm:$0xff]
    %v549 = vld [vmem:[#allocation7 + $0x3d0] sm:$0xff]
    %v550 = vld [vmem:[#allocation7 + $0x3d8] sm:$0xff]
    %v551 = vld [vmem:[#allocation7 + $0x3e0] sm:$0xff]
    %v552 = vld [vmem:[#allocation7 + $0x3e8] sm:$0xff]
    %v553 = vld [vmem:[#allocation7 + $0x3f0] sm:$0xff]
    %v554 = vld [vmem:[#allocation7 + $0x3f8] sm:$0xff]
    %v555 = vld [vmem:[#allocation7 + $0x400] sm:$0xff]
    %v556 = vld [vmem:[#allocation7 + $0x408] sm:$0xff]
    %v557 = vld [vmem:[#allocation7 + $0x410] sm:$0xff]
    %v558 = vld [vmem:[#allocation7 + $0x418] sm:$0xff]
    %v559 = vld [vmem:[#allocation7 + $0x420] sm:$0xff]
    %v560 = vld [vmem:[#allocation7 + $0x428] sm:$0xff]
    %v561 = vld [vmem:[#allocation7 + $0x430] sm:$0xff]
    %v562 = vld [vmem:[#allocation7 + $0x438] sm:$0xff]
    %v563 = vld [vmem:[#allocation7 + $0x440] sm:$0xff]
    %v564 = vld [vmem:[#allocation7 + $0x448] sm:$0xff]
    %v565 = vld [vmem:[#allocation7 + $0x450] sm:$0xff]
    %v566 = vld [vmem:[#allocation7 + $0x458] sm:$0xff]
    %v567 = vld [vmem:[#allocation7 + $0x460] sm:$0xff]
    %v568 = vld [vmem:[#allocation7 + $0x468] sm:$0xff]
    %v569 = vld [vmem:[#allocation7 + $0x470] sm:$0xff]
    %v570 = vld [vmem:[#allocation7 + $0x478] sm:$0xff]
    %v571 = vld [vmem:[#allocation7 + $0x480] sm:$0xff]
    %v572 = vld [vmem:[#allocation7 + $0x488] sm:$0xff]
    %v573 = vld [vmem:[#allocation7 + $0x490] sm:$0xff]
    %v574 = vld [vmem:[#allocation7 + $0x498] sm:$0xff]
    %v575 = vld [vmem:[#allocation7 + $0x4a0] sm:$0xff]
    %v576 = vld [vmem:[#allocation7 + $0x4a8] sm:$0xff]
    %v577 = vld [vmem:[#allocation7 + $0x4b0] sm:$0xff]
    %v578 = vld [vmem:[#allocation7 + $0x4b8] sm:$0xff]
    %v579 = vld [vmem:[#allocation7 + $0x4c0] sm:$0xff]
    %v580 = vld [vmem:[#allocation7 + $0x4c8] sm:$0xff]
    %v581 = vld [vmem:[#allocation7 + $0x4d0] sm:$0xff]
    %v582 = vld [vmem:[#allocation7 + $0x4d8] sm:$0xff]
    %v583 = vld [vmem:[#allocation7 + $0x4e0] sm:$0xff]
    %v584 = vld [vmem:[#allocation7 + $0x4e8] sm:$0xff]
    %v585 = vld [vmem:[#allocation7 + $0x4f0] sm:$0xff]
    %v586 = vld [vmem:[#allocation7 + $0x4f8] sm:$0xff]
    %v587 = vld [vmem:[#allocation7 + $0x500] sm:$0xff]
    %v588 = vld [vmem:[#allocation7 + $0x508] sm:$0xff]
    %v589 = vld [vmem:[#allocation7 + $0x510] sm:$0xff]
    %v590 = vld [vmem:[#allocation7 + $0x518] sm:$0xff]
    %v591 = vld [vmem:[#allocation7 + $0x520] sm:$0xff]
    %v592 = vld [vmem:[#allocation7 + $0x528] sm:$0xff]
    %v593 = vld [vmem:[#allocation7 + $0x530] sm:$0xff]
    %v594 = vld [vmem:[#allocation7 + $0x538] sm:$0xff]
    %v595 = vld [vmem:[#allocation7 + $0x540] sm:$0xff]
    %v596 = vld [vmem:[#allocation7 + $0x548] sm:$0xff]
    %v597 = vld [vmem:[#allocation7 + $0x550] sm:$0xff]
    %v598 = vld [vmem:[#allocation7 + $0x558] sm:$0xff]
    %v599 = vld [vmem:[#allocation7 + $0x560] sm:$0xff]
    %v600 = vld [vmem:[#allocation7 + $0x568] sm:$0xff]
    %v601 = vld [vmem:[#allocation7 + $0x570] sm:$0xff]
    %v602 = vld [vmem:[#allocation7 + $0x578] sm:$0xff]
    %v603 = vld [vmem:[#allocation7 + $0x580] sm:$0xff]
    %v604 = vld [vmem:[#allocation7 + $0x588] sm:$0xff]
    %v605 = vld [vmem:[#allocation7 + $0x590] sm:$0xff]
    %v606 = vld [vmem:[#allocation7 + $0x598] sm:$0xff]
    %v607 = vld [vmem:[#allocation7 + $0x5a0] sm:$0xff]
    %v608 = vld [vmem:[#allocation7 + $0x5a8] sm:$0xff]
    %v609 = vld [vmem:[#allocation7 + $0x5b0] sm:$0xff]
    %v610 = vld [vmem:[#allocation7 + $0x5b8] sm:$0xff]
    %v611 = vld [vmem:[#allocation7 + $0x5c0] sm:$0xff]
    %v612 = vld [vmem:[#allocation7 + $0x5c8] sm:$0xff]
    %v613 = vld [vmem:[#allocation7 + $0x5d0] sm:$0xff]
    %v614 = vld [vmem:[#allocation7 + $0x5d8] sm:$0xff]
    %v615 = vld [vmem:[#allocation7 + $0x5e0] sm:$0xff]
    %v616 = vld [vmem:[#allocation7 + $0x5e8] sm:$0xff]
    %v617 = vld [vmem:[#allocation7 + $0x5f0] sm:$0xff]
    %v618 = vld [vmem:[#allocation7 + $0x5f8] sm:$0xff]
    %v619 = vld [vmem:[#allocation7 + $0x600] sm:$0xff]
    %v620 = vld [vmem:[#allocation7 + $0x608] sm:$0xff]
    %v621 = vld [vmem:[#allocation7 + $0x610] sm:$0xff]
    %v622 = vld [vmem:[#allocation7 + $0x618] sm:$0xff]
    %v623 = vld [vmem:[#allocation7 + $0x620] sm:$0xff]
    %v624 = vld [vmem:[#allocation7 + $0x628] sm:$0xff]
    %v625 = vld [vmem:[#allocation7 + $0x630] sm:$0xff]
    %v626 = vld [vmem:[#allocation7 + $0x638] sm:$0xff]
    %v627 = vld [vmem:[#allocation7 + $0x640] sm:$0xff]
    %v628 = vld [vmem:[#allocation7 + $0x648] sm:$0xff]
    %v629 = vld [vmem:[#allocation7 + $0x650] sm:$0xff]
    %v630 = vld [vmem:[#allocation7 + $0x658] sm:$0xff]
    %v631 = vld [vmem:[#allocation7 + $0x660] sm:$0xff]
    %v632 = vld [vmem:[#allocation7 + $0x668] sm:$0xff]
    %v633 = vld [vmem:[#allocation7 + $0x670] sm:$0xff]
    %v634 = vld [vmem:[#allocation7 + $0x678] sm:$0xff]
    %v635 = vld [vmem:[#allocation7 + $0x680] sm:$0xff]
    %v636 = vld [vmem:[#allocation7 + $0x688] sm:$0xff]
    %v637 = vld [vmem:[#allocation7 + $0x690] sm:$0xff]
    %v638 = vld [vmem:[#allocation7 + $0x698] sm:$0xff]
    %v639 = vld [vmem:[#allocation7 + $0x6a0] sm:$0xff]
    %v640 = vld [vmem:[#allocation7 + $0x6a8] sm:$0xff]
    %v641 = vld [vmem:[#allocation7 + $0x6b0] sm:$0xff]
    %v642 = vld [vmem:[#allocation7 + $0x6b8] sm:$0xff]
    %v643 = vld [vmem:[#allocation7 + $0x6c0] sm:$0xff]
    %v644 = vld [vmem:[#allocation7 + $0x6c8] sm:$0xff]
    %v645 = vld [vmem:[#allocation7 + $0x6d0] sm:$0xff]
    %v646 = vld [vmem:[#allocation7 + $0x6d8] sm:$0xff]
    %v647 = vld [vmem:[#allocation7 + $0x6e0] sm:$0xff]
    %v648 = vld [vmem:[#allocation7 + $0x6e8] sm:$0xff]
    %v649 = vld [vmem:[#allocation7 + $0x6f0] sm:$0xff]
    %v650 = vld [vmem:[#allocation7 + $0x6f8] sm:$0xff]
    %v651 = vld [vmem:[#allocation7 + $0x700] sm:$0xff]
    %v652 = vld [vmem:[#allocation7 + $0x708] sm:$0xff]
    %v653 = vld [vmem:[#allocation7 + $0x710] sm:$0xff]
    %v654 = vld [vmem:[#allocation7 + $0x718] sm:$0xff]
    %v655 = vld [vmem:[#allocation7 + $0x720] sm:$0xff]
    %v656 = vld [vmem:[#allocation7 + $0x728] sm:$0xff]
    %v657 = vld [vmem:[#allocation7 + $0x730] sm:$0xff]
    %v658 = vld [vmem:[#allocation7 + $0x738] sm:$0xff]
    %v659 = vld [vmem:[#allocation7 + $0x740] sm:$0xff]
    %v660 = vld [vmem:[#allocation7 + $0x748] sm:$0xff]
    %v661 = vld [vmem:[#allocation7 + $0x750] sm:$0xff]
    %v662 = vld [vmem:[#allocation7 + $0x758] sm:$0xff]
    %v663 = vld [vmem:[#allocation7 + $0x760] sm:$0xff]
    %v664 = vld [vmem:[#allocation7 + $0x768] sm:$0xff]
    %v665 = vld [vmem:[#allocation7 + $0x770] sm:$0xff]
    %v666 = vld [vmem:[#allocation7 + $0x778] sm:$0xff]
    %v667 = vld [vmem:[#allocation7 + $0x780] sm:$0xff]
    %v668 = vld [vmem:[#allocation7 + $0x788] sm:$0xff]
    %v669 = vld [vmem:[#allocation7 + $0x790] sm:$0xff]
    %v670 = vld [vmem:[#allocation7 + $0x798] sm:$0xff]
    %v671 = vld [vmem:[#allocation7 + $0x7a0] sm:$0xff]
    %v672 = vld [vmem:[#allocation7 + $0x7a8] sm:$0xff]
    %v673 = vld [vmem:[#allocation7 + $0x7b0] sm:$0xff]
    %v674 = vld [vmem:[#allocation7 + $0x7b8] sm:$0xff]
    %v675 = vld [vmem:[#allocation7 + $0x7c0] sm:$0xff]
    %v676 = vld [vmem:[#allocation7 + $0x7c8] sm:$0xff]
    %v677 = vld [vmem:[#allocation7 + $0x7d0] sm:$0xff]
    %v678 = vld [vmem:[#allocation7 + $0x7d8] sm:$0xff]
    %v679 = vld [vmem:[#allocation7 + $0x7e0] sm:$0xff]
    %v680 = vld [vmem:[#allocation7 + $0x7e8] sm:$0xff]
    %v681 = vld [vmem:[#allocation7 + $0x7f0] sm:$0xff]
    %v682 = vld [vmem:[#allocation7 + $0x7f8] sm:$0xff]
    %v683 = vld [vmem:[#allocation7 + $0x800] sm:$0xff]
    %v684 = vld [vmem:[#allocation7 + $0x808] sm:$0xff]
    %v685 = vld [vmem:[#allocation7 + $0x810] sm:$0xff]
    %v686 = vld [vmem:[#allocation7 + $0x818] sm:$0xff]
    %v687 = vld [vmem:[#allocation7 + $0x820] sm:$0xff]
    %v688 = vld [vmem:[#allocation7 + $0x828] sm:$0xff]
    %v689 = vld [vmem:[#allocation7 + $0x830] sm:$0xff]
    %v690 = vld [vmem:[#allocation7 + $0x838] sm:$0xff]
    %v691 = vld [vmem:[#allocation7 + $0x840] sm:$0xff]
    %v692 = vld [vmem:[#allocation7 + $0x848] sm:$0xff]
    %v693 = vld [vmem:[#allocation7 + $0x850] sm:$0xff]
    %v694 = vld [vmem:[#allocation7 + $0x858] sm:$0xff]
    %v695 = vld [vmem:[#allocation7 + $0x860] sm:$0xff]
    %v696 = vld [vmem:[#allocation7 + $0x868] sm:$0xff]
    %v697 = vld [vmem:[#allocation7 + $0x870] sm:$0xff]
    %v698 = vld [vmem:[#allocation7 + $0x878] sm:$0xff]
    %v699 = vld [vmem:[#allocation7 + $0x880] sm:$0xff]
    %v700 = vld [vmem:[#allocation7 + $0x888] sm:$0xff]
    %v701 = vld [vmem:[#allocation7 + $0x890] sm:$0xff]
    %v702 = vld [vmem:[#allocation7 + $0x898] sm:$0xff]
    %v703 = vld [vmem:[#allocation7 + $0x8a0] sm:$0xff]
    %v704 = vld [vmem:[#allocation7 + $0x8a8] sm:$0xff]
    %v705 = vld [vmem:[#allocation7 + $0x8b0] sm:$0xff]
    %v706 = vld [vmem:[#allocation7 + $0x8b8] sm:$0xff]
    %v707 = vld [vmem:[#allocation7 + $0x8c0] sm:$0xff]
    %v708 = vld [vmem:[#allocation7 + $0x8c8] sm:$0xff]
    %v709 = vld [vmem:[#allocation7 + $0x8d0] sm:$0xff]
    %v710 = vld [vmem:[#allocation7 + $0x8d8] sm:$0xff]
    %v711 = vld [vmem:[#allocation7 + $0x8e0] sm:$0xff]
    %v712 = vld [vmem:[#allocation7 + $0x8e8] sm:$0xff]
    %v713 = vld [vmem:[#allocation7 + $0x8f0] sm:$0xff]
    %v714 = vld [vmem:[#allocation7 + $0x8f8] sm:$0xff]
    %v715 = vld [vmem:[#allocation7 + $0x900] sm:$0xff]
    %v716 = vld [vmem:[#allocation7 + $0x908] sm:$0xff]
    %v717 = vld [vmem:[#allocation7 + $0x910] sm:$0xff]
    %v718 = vld [vmem:[#allocation7 + $0x918] sm:$0xff]
    %v719 = vld [vmem:[#allocation7 + $0x920] sm:$0xff]
    %v720 = vld [vmem:[#allocation7 + $0x928] sm:$0xff]
    %v721 = vld [vmem:[#allocation7 + $0x930] sm:$0xff]
    %v722 = vld [vmem:[#allocation7 + $0x938] sm:$0xff]
    %v723 = vld [vmem:[#allocation7 + $0x940] sm:$0xff]
    %v724 = vld [vmem:[#allocation7 + $0x948] sm:$0xff]
    %v725 = vld [vmem:[#allocation7 + $0x950] sm:$0xff]
    %v726 = vld [vmem:[#allocation7 + $0x958] sm:$0xff]
    %v727 = vld [vmem:[#allocation7 + $0x960] sm:$0xff]
    %v728 = vld [vmem:[#allocation7 + $0x968] sm:$0xff]
    %v729 = vld [vmem:[#allocation7 + $0x970] sm:$0xff]
    %v730 = vld [vmem:[#allocation7 + $0x978] sm:$0xff]
    %v731 = vld [vmem:[#allocation7 + $0x980] sm:$0xff]
    %v732 = vld [vmem:[#allocation7 + $0x988] sm:$0xff]
    %v733 = vld [vmem:[#allocation7 + $0x990] sm:$0xff]
    %v734 = vld [vmem:[#allocation7 + $0x998] sm:$0xff]
    %v735 = vld [vmem:[#allocation7 + $0x9a0] sm:$0xff]
    %v736 = vld [vmem:[#allocation7 + $0x9a8] sm:$0xff]
    %v737 = vld [vmem:[#allocation7 + $0x9b0] sm:$0xff]
    %v738 = vld [vmem:[#allocation7 + $0x9b8] sm:$0xff]
    %v739 = vld [vmem:[#allocation7 + $0x9c0] sm:$0xff]
    %v740 = vld [vmem:[#allocation7 + $0x9c8] sm:$0xff]
    %v741 = vld [vmem:[#allocation7 + $0x9d0] sm:$0xff]
    %v742 = vld [vmem:[#allocation7 + $0x9d8] sm:$0xff]
    %v743 = vld [vmem:[#allocation7 + $0x9e0] sm:$0xff]
    %v744 = vld [vmem:[#allocation7 + $0x9e8] sm:$0xff]
    %v745 = vld [vmem:[#allocation7 + $0x9f0] sm:$0xff]
    %v746 = vld [vmem:[#allocation7 + $0x9f8] sm:$0xff]
    %v747 = vld [vmem:[#allocation7 + $0xa00] sm:$0xff]
    %v748 = vld [vmem:[#allocation7 + $0xa08] sm:$0xff]
    %v749 = vld [vmem:[#allocation7 + $0xa10] sm:$0xff]
    %v750 = vld [vmem:[#allocation7 + $0xa18] sm:$0xff]
    %v751 = vld [vmem:[#allocation7 + $0xa20] sm:$0xff]
    %v752 = vld [vmem:[#allocation7 + $0xa28] sm:$0xff]
    %v753 = vld [vmem:[#allocation7 + $0xa30] sm:$0xff]
    %v754 = vld [vmem:[#allocation7 + $0xa38] sm:$0xff]
    %v755 = vld [vmem:[#allocation7 + $0xa40] sm:$0xff]
    %v756 = vld [vmem:[#allocation7 + $0xa48] sm:$0xff]
    %v757 = vld [vmem:[#allocation7 + $0xa50] sm:$0xff]
    %v758 = vld [vmem:[#allocation7 + $0xa58] sm:$0xff]
    %v759 = vld [vmem:[#allocation7 + $0xa60] sm:$0xff]
    %v760 = vld [vmem:[#allocation7 + $0xa68] sm:$0xff]
    %v761 = vld [vmem:[#allocation7 + $0xa70] sm:$0xff]
    %v762 = vld [vmem:[#allocation7 + $0xa78] sm:$0xff]
    %v763 = vld [vmem:[#allocation7 + $0xa80] sm:$0xff]
    %v764 = vld [vmem:[#allocation7 + $0xa88] sm:$0xff]
    %v765 = vld [vmem:[#allocation7 + $0xa90] sm:$0xff]
    %v766 = vld [vmem:[#allocation7 + $0xa98] sm:$0xff]
    %v767 = vld [vmem:[#allocation7 + $0xaa0] sm:$0xff]
    %v768 = vld [vmem:[#allocation7 + $0xaa8] sm:$0xff]
    %v769 = vld [vmem:[#allocation7 + $0xab0] sm:$0xff]
    %v770 = vld [vmem:[#allocation7 + $0xab8] sm:$0xff]
    %v771 = vld [vmem:[#allocation7 + $0xac0] sm:$0xff]
    %v772 = vld [vmem:[#allocation7 + $0xac8] sm:$0xff]
    %v773 = vld [vmem:[#allocation7 + $0xad0] sm:$0xff]
    %v774 = vld [vmem:[#allocation7 + $0xad8] sm:$0xff]
    %v775 = vld [vmem:[#allocation7 + $0xae0] sm:$0xff]
    %v776 = vld [vmem:[#allocation7 + $0xae8] sm:$0xff]
    %v777 = vld [vmem:[#allocation7 + $0xaf0] sm:$0xff]
    %v778 = vld [vmem:[#allocation7 + $0xaf8] sm:$0xff]
    %v779 = vld [vmem:[#allocation7 + $0xb00] sm:$0xff]
    %v780 = vld [vmem:[#allocation7 + $0xb08] sm:$0xff]
    %v781 = vld [vmem:[#allocation7 + $0xb10] sm:$0xff]
    %v782 = vld [vmem:[#allocation7 + $0xb18] sm:$0xff]
    %v783 = vld [vmem:[#allocation7 + $0xb20] sm:$0xff]
    %v784 = vld [vmem:[#allocation7 + $0xb28] sm:$0xff]
    %v785 = vld [vmem:[#allocation7 + $0xb30] sm:$0xff]
    %v786 = vld [vmem:[#allocation7 + $0xb38] sm:$0xff]
    %v787 = vld [vmem:[#allocation7 + $0xb40] sm:$0xff]
    %v788 = vld [vmem:[#allocation7 + $0xb48] sm:$0xff]
    %v789 = vld [vmem:[#allocation7 + $0xb50] sm:$0xff]
    %v790 = vld [vmem:[#allocation7 + $0xb58] sm:$0xff]
    %v791 = vld [vmem:[#allocation7 + $0xb60] sm:$0xff]
    %v792 = vld [vmem:[#allocation7 + $0xb68] sm:$0xff]
    %v793 = vld [vmem:[#allocation7 + $0xb70] sm:$0xff]
    %v794 = vld [vmem:[#allocation7 + $0xb78] sm:$0xff]
    %v795 = vld [vmem:[#allocation7 + $0xb80] sm:$0xff]
    %v796 = vld [vmem:[#allocation7 + $0xb88] sm:$0xff]
    %v797 = vld [vmem:[#allocation7 + $0xb90] sm:$0xff]
    %v798 = vld [vmem:[#allocation7 + $0xb98] sm:$0xff]
    %v799 = vld [vmem:[#allocation7 + $0xba0] sm:$0xff]
    %v800 = vld [vmem:[#allocation7 + $0xba8] sm:$0xff]
    %v801 = vld [vmem:[#allocation7 + $0xbb0] sm:$0xff]
    %v802 = vld [vmem:[#allocation7 + $0xbb8] sm:$0xff]
    %v803 = vld [vmem:[#allocation7 + $0xbc0] sm:$0xff]
    %v804 = vld [vmem:[#allocation7 + $0xbc8] sm:$0xff]
    %v805 = vld [vmem:[#allocation7 + $0xbd0] sm:$0xff]
    %v806 = vld [vmem:[#allocation7 + $0xbd8] sm:$0xff]
    %v807 = vld [vmem:[#allocation7 + $0xbe0] sm:$0xff]
    %v808 = vld [vmem:[#allocation7 + $0xbe8] sm:$0xff]
    %v809 = vld [vmem:[#allocation7 + $0xbf0] sm:$0xff]
    %v810 = vld [vmem:[#allocation7 + $0xbf8] sm:$0xff]
    %v811 = vld [vmem:[#allocation7 + $0xc00] sm:$0xff]
    %v812 = vld [vmem:[#allocation7 + $0xc08] sm:$0xff]
    %v813 = vld [vmem:[#allocation7 + $0xc10] sm:$0xff]
    %v814 = vld [vmem:[#allocation7 + $0xc18] sm:$0xff]
    %v815 = vld [vmem:[#allocation7 + $0xc20] sm:$0xff]
    %v816 = vld [vmem:[#allocation7 + $0xc28] sm:$0xff]
    %v817 = vld [vmem:[#allocation7 + $0xc30] sm:$0xff]
    %v818 = vld [vmem:[#allocation7 + $0xc38] sm:$0xff]
    %v819 = vld [vmem:[#allocation7 + $0xc40] sm:$0xff]
    %v820 = vld [vmem:[#allocation7 + $0xc48] sm:$0xff]
    %v821 = vld [vmem:[#allocation7 + $0xc50] sm:$0xff]
    %v822 = vld [vmem:[#allocation7 + $0xc58] sm:$0xff]
    %v823 = vld [vmem:[#allocation7 + $0xc60] sm:$0xff]
    %v824 = vld [vmem:[#allocation7 + $0xc68] sm:$0xff]
    %v825 = vld [vmem:[#allocation7 + $0xc70] sm:$0xff]
    %v826 = vld [vmem:[#allocation7 + $0xc78] sm:$0xff]
    %v827 = vld [vmem:[#allocation7 + $0xc80] sm:$0xff]
    %v828 = vld [vmem:[#allocation7 + $0xc88] sm:$0xff]
    %v829 = vld [vmem:[#allocation7 + $0xc90] sm:$0xff]
    %v830 = vld [vmem:[#allocation7 + $0xc98] sm:$0xff]
    %v831 = vld [vmem:[#allocation7 + $0xca0] sm:$0xff]
    %v832 = vld [vmem:[#allocation7 + $0xca8] sm:$0xff]
    %v833 = vld [vmem:[#allocation7 + $0xcb0] sm:$0xff]
    %v834 = vld [vmem:[#allocation7 + $0xcb8] sm:$0xff]
    %v835 = vld [vmem:[#allocation7 + $0xcc0] sm:$0xff]
    %v836 = vld [vmem:[#allocation7 + $0xcc8] sm:$0xff]
    %v837 = vld [vmem:[#allocation7 + $0xcd0] sm:$0xff]
    %v838 = vld [vmem:[#allocation7 + $0xcd8] sm:$0xff]
    %v839 = vld [vmem:[#allocation7 + $0xce0] sm:$0xff]
    %v840 = vld [vmem:[#allocation7 + $0xce8] sm:$0xff]
    %v841 = vld [vmem:[#allocation7 + $0xcf0] sm:$0xff]
    %v842 = vld [vmem:[#allocation7 + $0xcf8] sm:$0xff]
    %v843 = vld [vmem:[#allocation7 + $0xd00] sm:$0xff]
    %v844 = vld [vmem:[#allocation7 + $0xd08] sm:$0xff]
    %v845 = vld [vmem:[#allocation7 + $0xd10] sm:$0xff]
    %v846 = vld [vmem:[#allocation7 + $0xd18] sm:$0xff]
    %v847 = vld [vmem:[#allocation7 + $0xd20] sm:$0xff]
    %v848 = vld [vmem:[#allocation7 + $0xd28] sm:$0xff]
    %v849 = vld [vmem:[#allocation7 + $0xd30] sm:$0xff]
    %v850 = vld [vmem:[#allocation7 + $0xd38] sm:$0xff]
    %v851 = vld [vmem:[#allocation7 + $0xd40] sm:$0xff]
    %v852 = vld [vmem:[#allocation7 + $0xd48] sm:$0xff]
    %v853 = vld [vmem:[#allocation7 + $0xd50] sm:$0xff]
    %v854 = vld [vmem:[#allocation7 + $0xd58] sm:$0xff]
    %v855 = vld [vmem:[#allocation7 + $0xd60] sm:$0xff]
    %v856 = vld [vmem:[#allocation7 + $0xd68] sm:$0xff]
    %v857 = vld [vmem:[#allocation7 + $0xd70] sm:$0xff]
    %v858 = vld [vmem:[#allocation7 + $0xd78] sm:$0xff]
    %v859 = vld [vmem:[#allocation7 + $0xd80] sm:$0xff]
    %v860 = vld [vmem:[#allocation7 + $0xd88] sm:$0xff]
    %v861 = vld [vmem:[#allocation7 + $0xd90] sm:$0xff]
    %v862 = vld [vmem:[#allocation7 + $0xd98] sm:$0xff]
    %v863 = vld [vmem:[#allocation7 + $0xda0] sm:$0xff]
    %v864 = vld [vmem:[#allocation7 + $0xda8] sm:$0xff]
    %v865 = vld [vmem:[#allocation7 + $0xdb0] sm:$0xff]
    %v866 = vld [vmem:[#allocation7 + $0xdb8] sm:$0xff]
    %v867 = vld [vmem:[#allocation7 + $0xdc0] sm:$0xff]
    %v868 = vld [vmem:[#allocation7 + $0xdc8] sm:$0xff]
    %v869 = vld [vmem:[#allocation7 + $0xdd0] sm:$0xff]
    %v870 = vld [vmem:[#allocation7 + $0xdd8] sm:$0xff]
    %v871 = vld [vmem:[#allocation7 + $0xde0] sm:$0xff]
    %v872 = vld [vmem:[#allocation7 + $0xde8] sm:$0xff]
    %v873 = vld [vmem:[#allocation7 + $0xdf0] sm:$0xff]
    %v874 = vld [vmem:[#allocation7 + $0xdf8] sm:$0xff]
    %v875 = vld [vmem:[#allocation7 + $0xe00] sm:$0xff]
    %v876 = vld [vmem:[#allocation7 + $0xe08] sm:$0xff]
    %v877 = vld [vmem:[#allocation7 + $0xe10] sm:$0xff]
    %v878 = vld [vmem:[#allocation7 + $0xe18] sm:$0xff]
    %v879 = vld [vmem:[#allocation7 + $0xe20] sm:$0xff]
    %v880 = vld [vmem:[#allocation7 + $0xe28] sm:$0xff]
    %v881 = vld [vmem:[#allocation7 + $0xe30] sm:$0xff]
    %v882 = vld [vmem:[#allocation7 + $0xe38] sm:$0xff]
    %v883 = vld [vmem:[#allocation7 + $0xe40] sm:$0xff]
    %v884 = vld [vmem:[#allocation7 + $0xe48] sm:$0xff]
    %v885 = vld [vmem:[#allocation7 + $0xe50] sm:$0xff]
    %v886 = vld [vmem:[#allocation7 + $0xe58] sm:$0xff]
    %v887 = vld [vmem:[#allocation7 + $0xe60] sm:$0xff]
    %v888 = vld [vmem:[#allocation7 + $0xe68] sm:$0xff]
    %v889 = vld [vmem:[#allocation7 + $0xe70] sm:$0xff]
    %v890 = vld [vmem:[#allocation7 + $0xe78] sm:$0xff]
    %v891 = vld [vmem:[#allocation7 + $0xe80] sm:$0xff]
    %v892 = vld [vmem:[#allocation7 + $0xe88] sm:$0xff]
    %v893 = vld [vmem:[#allocation7 + $0xe90] sm:$0xff]
    %v894 = vld [vmem:[#allocation7 + $0xe98] sm:$0xff]
    %v895 = vld [vmem:[#allocation7 + $0xea0] sm:$0xff]
    %v896 = vld [vmem:[#allocation7 + $0xea8] sm:$0xff]
    %v897 = vld [vmem:[#allocation7 + $0xeb0] sm:$0xff]
    %v898 = vld [vmem:[#allocation7 + $0xeb8] sm:$0xff]
    %v899 = vld [vmem:[#allocation7 + $0xec0] sm:$0xff]
    %v900 = vld [vmem:[#allocation7 + $0xec8] sm:$0xff]
    %v901 = vld [vmem:[#allocation7 + $0xed0] sm:$0xff]
    %v902 = vld [vmem:[#allocation7 + $0xed8] sm:$0xff]
    %v903 = vld [vmem:[#allocation7 + $0xee0] sm:$0xff]
    %v904 = vld [vmem:[#allocation7 + $0xee8] sm:$0xff]
    %v905 = vld [vmem:[#allocation7 + $0xef0] sm:$0xff]
    %v906 = vld [vmem:[#allocation7 + $0xef8] sm:$0xff]
    %v907 = vld [vmem:[#allocation7 + $0xf00] sm:$0xff]
    %v908 = vld [vmem:[#allocation7 + $0xf08] sm:$0xff]
    %v909 = vld [vmem:[#allocation7 + $0xf10] sm:$0xff]
    %v910 = vld [vmem:[#allocation7 + $0xf18] sm:$0xff]
    %v911 = vld [vmem:[#allocation7 + $0xf20] sm:$0xff]
    %v912 = vld [vmem:[#allocation7 + $0xf28] sm:$0xff]
    %v913 = vld [vmem:[#allocation7 + $0xf30] sm:$0xff]
    %v914 = vld [vmem:[#allocation7 + $0xf38] sm:$0xff]
    %v915 = vld [vmem:[#allocation7 + $0xf40] sm:$0xff]
    %v916 = vld [vmem:[#allocation7 + $0xf48] sm:$0xff]
    %v917 = vld [vmem:[#allocation7 + $0xf50] sm:$0xff]
    %v918 = vld [vmem:[#allocation7 + $0xf58] sm:$0xff]
    %v919 = vld [vmem:[#allocation7 + $0xf60] sm:$0xff]
    %v920 = vld [vmem:[#allocation7 + $0xf68] sm:$0xff]
    %v921 = vld [vmem:[#allocation7 + $0xf70] sm:$0xff]
    %v922 = vld [vmem:[#allocation7 + $0xf78] sm:$0xff]
    %v923 = vld [vmem:[#allocation7 + $0xf80] sm:$0xff]
    %v924 = vld [vmem:[#allocation7 + $0xf88] sm:$0xff]
    %v925 = vld [vmem:[#allocation7 + $0xf90] sm:$0xff]
    %v926 = vld [vmem:[#allocation7 + $0xf98] sm:$0xff]
    %v927 = vld [vmem:[#allocation7 + $0xfa0] sm:$0xff]
    %v928 = vld [vmem:[#allocation7 + $0xfa8] sm:$0xff]
    %v929 = vld [vmem:[#allocation7 + $0xfb0] sm:$0xff]
    %v930 = vld [vmem:[#allocation7 + $0xfb8] sm:$0xff]
    %v931 = vld [vmem:[#allocation7 + $0xfc0] sm:$0xff]
    %v932 = vld [vmem:[#allocation7 + $0xfc8] sm:$0xff]
    %v933 = vld [vmem:[#allocation7 + $0xfd0] sm:$0xff]
    %v934 = vld [vmem:[#allocation7 + $0xfd8] sm:$0xff]
    %v935 = vld [vmem:[#allocation7 + $0xfe0] sm:$0xff]
    %v936 = vld [vmem:[#allocation7 + $0xfe8] sm:$0xff]
    %v937 = vld [vmem:[#allocation7 + $0xff0] sm:$0xff]
    %v938 = vld [vmem:[#allocation7 + $0xff8] sm:$0xff]
    %v939 = vld [vmem:[#allocation7 + $0x1000] sm:$0xff]
    %v940 = vld [vmem:[#allocation7 + $0x1008] sm:$0xff]
    %v941 = vld [vmem:[#allocation7 + $0x1010] sm:$0xff]
    %v942 = vld [vmem:[#allocation7 + $0x1018] sm:$0xff]
    %v943 = vld [vmem:[#allocation7 + $0x1020] sm:$0xff]
    %v944 = vld [vmem:[#allocation7 + $0x1028] sm:$0xff]
    %v945 = vld [vmem:[#allocation7 + $0x1030] sm:$0xff]
    %v946 = vld [vmem:[#allocation7 + $0x1038] sm:$0xff]
    %v947 = vld [vmem:[#allocation7 + $0x1040] sm:$0xff]
    %v948 = vld [vmem:[#allocation7 + $0x1048] sm:$0xff]
    %v949 = vld [vmem:[#allocation7 + $0x1050] sm:$0xff]
    %v950 = vld [vmem:[#allocation7 + $0x1058] sm:$0xff]
    %v951 = vld [vmem:[#allocation7 + $0x1060] sm:$0xff]
    %v952 = vld [vmem:[#allocation7 + $0x1068] sm:$0xff]
    %v953 = vld [vmem:[#allocation7 + $0x1070] sm:$0xff]
    %v954 = vld [vmem:[#allocation7 + $0x1078] sm:$0xff]
    %v955 = vld [vmem:[#allocation7 + $0x1080] sm:$0xff]
    %v956 = vld [vmem:[#allocation7 + $0x1088] sm:$0xff]
    %v957 = vld [vmem:[#allocation7 + $0x1090] sm:$0xff]
    %v958 = vld [vmem:[#allocation7 + $0x1098] sm:$0xff]
    %v959 = vld [vmem:[#allocation7 + $0x10a0] sm:$0xff]
    %v960 = vld [vmem:[#allocation7 + $0x10a8] sm:$0xff]
    %v961 = vld [vmem:[#allocation7 + $0x10b0] sm:$0xff]
    %v962 = vld [vmem:[#allocation7 + $0x10b8] sm:$0xff]
    %v963 = vld [vmem:[#allocation7 + $0x10c0] sm:$0xff]
    %v964 = vld [vmem:[#allocation7 + $0x10c8] sm:$0xff]
    %v965 = vld [vmem:[#allocation7 + $0x10d0] sm:$0xff]
    %v966 = vld [vmem:[#allocation7 + $0x10d8] sm:$0xff]
    %v967 = vld [vmem:[#allocation7 + $0x10e0] sm:$0xff]
    %v968 = vld [vmem:[#allocation7 + $0x10e8] sm:$0xff]
    %v969 = vld [vmem:[#allocation7 + $0x10f0] sm:$0xff]
    %v970 = vld [vmem:[#allocation7 + $0x10f8] sm:$0xff]
    %v971 = vld [vmem:[#allocation7 + $0x1100] sm:$0xff]
    %v972 = vld [vmem:[#allocation7 + $0x1108] sm:$0xff]
    %v973 = vld [vmem:[#allocation7 + $0x1110] sm:$0xff]
    %v974 = vld [vmem:[#allocation7 + $0x1118] sm:$0xff]
    %v975 = vld [vmem:[#allocation7 + $0x1120] sm:$0xff]
    %v976 = vld [vmem:[#allocation7 + $0x1128] sm:$0xff]
    %v977 = vld [vmem:[#allocation7 + $0x1130] sm:$0xff]
    %v978 = vld [vmem:[#allocation7 + $0x1138] sm:$0xff]
    %v979 = vld [vmem:[#allocation7 + $0x1140] sm:$0xff]
    %v980 = vld [vmem:[#allocation7 + $0x1148] sm:$0xff]
    %v981 = vld [vmem:[#allocation7 + $0x1150] sm:$0xff]
    %v982 = vld [vmem:[#allocation7 + $0x1158] sm:$0xff]
    %v983 = vld [vmem:[#allocation7 + $0x1160] sm:$0xff]
    %v984 = vld [vmem:[#allocation7 + $0x1168] sm:$0xff]
    %v985 = vld [vmem:[#allocation7 + $0x1170] sm:$0xff]
    %v986 = vld [vmem:[#allocation7 + $0x1178] sm:$0xff]
    %v987 = vld [vmem:[#allocation7 + $0x1180] sm:$0xff]
    %v988 = vld [vmem:[#allocation7 + $0x1188] sm:$0xff]
    %v989 = vld [vmem:[#allocation7 + $0x1190] sm:$0xff]
    %v990 = vld [vmem:[#allocation7 + $0x1198] sm:$0xff]
    %v991 = vld [vmem:[#allocation7 + $0x11a0] sm:$0xff]
    %v992 = vld [vmem:[#allocation7 + $0x11a8] sm:$0xff]
    %v993 = vld [vmem:[#allocation7 + $0x11b0] sm:$0xff]
    %v994 = vld [vmem:[#allocation7 + $0x11b8] sm:$0xff]
    %v995 = vld [vmem:[#allocation7 + $0x11c0] sm:$0xff]
    %v996 = vld [vmem:[#allocation7 + $0x11c8] sm:$0xff]
    %v997 = vld [vmem:[#allocation7 + $0x11d0] sm:$0xff]
    %v998 = vld [vmem:[#allocation7 + $0x11d8] sm:$0xff]
    %v999 = vld [vmem:[#allocation7 + $0x11e0] sm:$0xff]
    %v1000 = vld [vmem:[#allocation7 + $0x11e8] sm:$0xff]
    %v1001 = vld [vmem:[#allocation7 + $0x11f0] sm:$0xff]
    %v1002 = vld [vmem:[#allocation7 + $0x11f8] sm:$0xff]
    %v1003 = vld [vmem:[#allocation7 + $0x1200] sm:$0xff]
    %v1004 = vld [vmem:[#allocation7 + $0x1208] sm:$0xff]
    %v1005 = vld [vmem:[#allocation7 + $0x1210] sm:$0xff]
    %v1006 = vld [vmem:[#allocation7 + $0x1218] sm:$0xff]
    %v1007 = vld [vmem:[#allocation7 + $0x1220] sm:$0xff]
    %v1008 = vld [vmem:[#allocation7 + $0x1228] sm:$0xff]
    %v1009 = vld [vmem:[#allocation7 + $0x1230] sm:$0xff]
    %v1010 = vld [vmem:[#allocation7 + $0x1238] sm:$0xff]
    %v1011 = vld [vmem:[#allocation7 + $0x1240] sm:$0xff]
    %v1012 = vld [vmem:[#allocation7 + $0x1248] sm:$0xff]
    %v1013 = vld [vmem:[#allocation7 + $0x1250] sm:$0xff]
    %v1014 = vld [vmem:[#allocation7 + $0x1258] sm:$0xff]
    %v1015 = vld [vmem:[#allocation7 + $0x1260] sm:$0xff]
    %v1016 = vld [vmem:[#allocation7 + $0x1268] sm:$0xff]
    %v1017 = vld [vmem:[#allocation7 + $0x1270] sm:$0xff]
    %v1018 = vld [vmem:[#allocation7 + $0x1278] sm:$0xff]
    %v1019 = vld [vmem:[#allocation7 + $0x1280] sm:$0xff]
    %v1020 = vld [vmem:[#allocation7 + $0x1288] sm:$0xff]
    %v1021 = vld [vmem:[#allocation7 + $0x1290] sm:$0xff]
    %v1022 = vld [vmem:[#allocation7 + $0x1298] sm:$0xff]
    %v1023 = vld [vmem:[#allocation7 + $0x12a0] sm:$0xff]
    %v1024 = vld [vmem:[#allocation7 + $0x12a8] sm:$0xff]
    %v1025 = vld [vmem:[#allocation7 + $0x12b0] sm:$0xff]
    %v1026 = vld [vmem:[#allocation7 + $0x12b8] sm:$0xff]
    %v1027 = vld [vmem:[#allocation7 + $0x12c0] sm:$0xff]
    %v1028 = vld [vmem:[#allocation7 + $0x12c8] sm:$0xff]
    %v1029 = vld [vmem:[#allocation7 + $0x12d0] sm:$0xff]
    %v1030 = vld [vmem:[#allocation7 + $0x12d8] sm:$0xff]
    %v1031 = vld [vmem:[#allocation7 + $0x12e0] sm:$0xff]
    %v1032 = vld [vmem:[#allocation7 + $0x12e8] sm:$0xff]
    %v1033 = vld [vmem:[#allocation7 + $0x12f0] sm:$0xff]
    %v1034 = vld [vmem:[#allocation7 + $0x12f8] sm:$0xff]
    %v1035 = vld [vmem:[#allocation7 + $0x1300] sm:$0xff]
    %v1036 = vld [vmem:[#allocation7 + $0x1308] sm:$0xff]
    %v1037 = vld [vmem:[#allocation7 + $0x1310] sm:$0xff]
    %v1038 = vld [vmem:[#allocation7 + $0x1318] sm:$0xff]
    %v1039 = vld [vmem:[#allocation7 + $0x1320] sm:$0xff]
    %v1040 = vld [vmem:[#allocation7 + $0x1328] sm:$0xff]
    %v1041 = vld [vmem:[#allocation7 + $0x1330] sm:$0xff]
    %v1042 = vld [vmem:[#allocation7 + $0x1338] sm:$0xff]
    %v1043 = vld [vmem:[#allocation7 + $0x1340] sm:$0xff]
    %v1044 = vld [vmem:[#allocation7 + $0x1348] sm:$0xff]
    %v1045 = vld [vmem:[#allocation7 + $0x1350] sm:$0xff]
    %v1046 = vld [vmem:[#allocation7 + $0x1358] sm:$0xff]
    %v1047 = vld [vmem:[#allocation7 + $0x1360] sm:$0xff]
    %v1048 = vld [vmem:[#allocation7 + $0x1368] sm:$0xff]
    %v1049 = vld [vmem:[#allocation7 + $0x1370] sm:$0xff]
    %v1050 = vld [vmem:[#allocation7 + $0x1378] sm:$0xff]
    %v1051 = vld [vmem:[#allocation7 + $0x1380] sm:$0xff]
    %v1052 = vld [vmem:[#allocation7 + $0x1388] sm:$0xff]
    %v1053 = vld [vmem:[#allocation7 + $0x1390] sm:$0xff]
    %v1054 = vld [vmem:[#allocation7 + $0x1398] sm:$0xff]
    %v1055 = vld [vmem:[#allocation7 + $0x13a0] sm:$0xff]
    %v1056 = vld [vmem:[#allocation7 + $0x13a8] sm:$0xff]
    %v1057 = vld [vmem:[#allocation7 + $0x13b0] sm:$0xff]
    %v1058 = vld [vmem:[#allocation7 + $0x13b8] sm:$0xff]
    %v1059 = vld [vmem:[#allocation7 + $0x13c0] sm:$0xff]
    %v1060 = vld [vmem:[#allocation7 + $0x13c8] sm:$0xff]
    %v1061 = vld [vmem:[#allocation7 + $0x13d0] sm:$0xff]
    %v1062 = vld [vmem:[#allocation7 + $0x13d8] sm:$0xff]
    %v1063 = vld [vmem:[#allocation7 + $0x13e0] sm:$0xff]
    %v1064 = vld [vmem:[#allocation7 + $0x13e8] sm:$0xff]
    %v1065 = vld [vmem:[#allocation7 + $0x13f0] sm:$0xff]
    %v1066 = vld [vmem:[#allocation7 + $0x13f8] sm:$0xff]
    %v1067 = vld [vmem:[#allocation7 + $0x1400] sm:$0xff]
    %v1068 = vld [vmem:[#allocation7 + $0x1408] sm:$0xff]
    %v1069 = vld [vmem:[#allocation7 + $0x1410] sm:$0xff]
    %v1070 = vld [vmem:[#allocation7 + $0x1418] sm:$0xff]
    %v1071 = vld [vmem:[#allocation7 + $0x1420] sm:$0xff]
    %v1072 = vld [vmem:[#allocation7 + $0x1428] sm:$0xff]
    %v1073 = vld [vmem:[#allocation7 + $0x1430] sm:$0xff]
    %v1074 = vld [vmem:[#allocation7 + $0x1438] sm:$0xff]
    %v1075 = vld [vmem:[#allocation7 + $0x1440] sm:$0xff]
    %v1076 = vld [vmem:[#allocation7 + $0x1448] sm:$0xff]
    %v1077 = vld [vmem:[#allocation7 + $0x1450] sm:$0xff]
    %v1078 = vld [vmem:[#allocation7 + $0x1458] sm:$0xff]
    %v1079 = vld [vmem:[#allocation7 + $0x1460] sm:$0xff]
    %v1080 = vld [vmem:[#allocation7 + $0x1468] sm:$0xff]
    %v1081 = vld [vmem:[#allocation7 + $0x1470] sm:$0xff]
    %v1082 = vld [vmem:[#allocation7 + $0x1478] sm:$0xff]
    %v1083 = vld [vmem:[#allocation7 + $0x1480] sm:$0xff]
    %v1084 = vld [vmem:[#allocation7 + $0x1488] sm:$0xff]
    %v1085 = vld [vmem:[#allocation7 + $0x1490] sm:$0xff]
    %v1086 = vld [vmem:[#allocation7 + $0x1498] sm:$0xff]
    %v1087 = vld [vmem:[#allocation7 + $0x14a0] sm:$0xff]
    %v1088 = vld [vmem:[#allocation7 + $0x14a8] sm:$0xff]
    %v1089 = vld [vmem:[#allocation7 + $0x14b0] sm:$0xff]
    %v1090 = vld [vmem:[#allocation7 + $0x14b8] sm:$0xff]
    %v1091 = vld [vmem:[#allocation7 + $0x14c0] sm:$0xff]
    %v1092 = vld [vmem:[#allocation7 + $0x14c8] sm:$0xff]
    %v1093 = vld [vmem:[#allocation7 + $0x14d0] sm:$0xff]
    %v1094 = vld [vmem:[#allocation7 + $0x14d8] sm:$0xff]
    %v1095 = vld [vmem:[#allocation7 + $0x14e0] sm:$0xff]
    %v1096 = vld [vmem:[#allocation7 + $0x14e8] sm:$0xff]
    %v1097 = vld [vmem:[#allocation7 + $0x14f0] sm:$0xff]
    %v1098 = vld [vmem:[#allocation7 + $0x14f8] sm:$0xff]
    %v1099 = vld [vmem:[#allocation7 + $0x1500] sm:$0xff]
    %v1100 = vld [vmem:[#allocation7 + $0x1508] sm:$0xff]
    %v1101 = vld [vmem:[#allocation7 + $0x1510] sm:$0xff]
    %v1102 = vld [vmem:[#allocation7 + $0x1518] sm:$0xff]
    %v1103 = vld [vmem:[#allocation7 + $0x1520] sm:$0xff]
    %v1104 = vld [vmem:[#allocation7 + $0x1528] sm:$0xff]
    %v1105 = vld [vmem:[#allocation7 + $0x1530] sm:$0xff]
    %v1106 = vld [vmem:[#allocation7 + $0x1538] sm:$0xff]
    %v1107 = vld [vmem:[#allocation7 + $0x1540] sm:$0xff]
    %v1108 = vld [vmem:[#allocation7 + $0x1548] sm:$0xff]
    %v1109 = vld [vmem:[#allocation7 + $0x1550] sm:$0xff]
    %v1110 = vld [vmem:[#allocation7 + $0x1558] sm:$0xff]
    %v1111 = vld [vmem:[#allocation7 + $0x1560] sm:$0xff]
    %v1112 = vld [vmem:[#allocation7 + $0x1568] sm:$0xff]
    %v1113 = vld [vmem:[#allocation7 + $0x1570] sm:$0xff]
    %v1114 = vld [vmem:[#allocation7 + $0x1578] sm:$0xff]
    %v1115 = vld [vmem:[#allocation7 + $0x1580] sm:$0xff]
    %v1116 = vld [vmem:[#allocation7 + $0x1588] sm:$0xff]
    %v1117 = vld [vmem:[#allocation7 + $0x1590] sm:$0xff]
    %v1118 = vld [vmem:[#allocation7 + $0x1598] sm:$0xff]
    %v1119 = vld [vmem:[#allocation7 + $0x15a0] sm:$0xff]
    %v1120 = vld [vmem:[#allocation7 + $0x15a8] sm:$0xff]
    %v1121 = vld [vmem:[#allocation7 + $0x15b0] sm:$0xff]
    %v1122 = vld [vmem:[#allocation7 + $0x15b8] sm:$0xff]
    %v1123 = vld [vmem:[#allocation7 + $0x15c0] sm:$0xff]
    %v1124 = vld [vmem:[#allocation7 + $0x15c8] sm:$0xff]
    %v1125 = vld [vmem:[#allocation7 + $0x15d0] sm:$0xff]
    %v1126 = vld [vmem:[#allocation7 + $0x15d8] sm:$0xff]
    %v1127 = vld [vmem:[#allocation7 + $0x15e0] sm:$0xff]
    %v1128 = vld [vmem:[#allocation7 + $0x15e8] sm:$0xff]
    %v1129 = vld [vmem:[#allocation7 + $0x15f0] sm:$0xff]
    %v1130 = vld [vmem:[#allocation7 + $0x15f8] sm:$0xff]
    %v1131 = vld [vmem:[#allocation7 + $0x1600] sm:$0xff]
    %v1132 = vld [vmem:[#allocation7 + $0x1608] sm:$0xff]
    %v1133 = vld [vmem:[#allocation7 + $0x1610] sm:$0xff]
    %v1134 = vld [vmem:[#allocation7 + $0x1618] sm:$0xff]
    %v1135 = vld [vmem:[#allocation7 + $0x1620] sm:$0xff]
    %v1136 = vld [vmem:[#allocation7 + $0x1628] sm:$0xff]
    %v1137 = vld [vmem:[#allocation7 + $0x1630] sm:$0xff]
    %v1138 = vld [vmem:[#allocation7 + $0x1638] sm:$0xff]
    %v1139 = vld [vmem:[#allocation7 + $0x1640] sm:$0xff]
    %v1140 = vld [vmem:[#allocation7 + $0x1648] sm:$0xff]
    %v1141 = vld [vmem:[#allocation7 + $0x1650] sm:$0xff]
    %v1142 = vld [vmem:[#allocation7 + $0x1658] sm:$0xff]
    %v1143 = vld [vmem:[#allocation7 + $0x1660] sm:$0xff]
    %v1144 = vld [vmem:[#allocation7 + $0x1668] sm:$0xff]
    %v1145 = vld [vmem:[#allocation7 + $0x1670] sm:$0xff]
    %v1146 = vld [vmem:[#allocation7 + $0x1678] sm:$0xff]
    %v1147 = vld [vmem:[#allocation7 + $0x1680] sm:$0xff]
    %v1148 = vld [vmem:[#allocation7 + $0x1688] sm:$0xff]
    %v1149 = vld [vmem:[#allocation7 + $0x1690] sm:$0xff]
    %v1150 = vld [vmem:[#allocation7 + $0x1698] sm:$0xff]
    %v1151 = vld [vmem:[#allocation7 + $0x16a0] sm:$0xff]
    %v1152 = vld [vmem:[#allocation7 + $0x16a8] sm:$0xff]
    %v1153 = vld [vmem:[#allocation7 + $0x16b0] sm:$0xff]
    %v1154 = vld [vmem:[#allocation7 + $0x16b8] sm:$0xff]
    %v1155 = vld [vmem:[#allocation7 + $0x16c0] sm:$0xff]
    %v1156 = vld [vmem:[#allocation7 + $0x16c8] sm:$0xff]
    %v1157 = vld [vmem:[#allocation7 + $0x16d0] sm:$0xff]
    %v1158 = vld [vmem:[#allocation7 + $0x16d8] sm:$0xff]
    %v1159 = vld [vmem:[#allocation7 + $0x16e0] sm:$0xff]
    %v1160 = vld [vmem:[#allocation7 + $0x16e8] sm:$0xff]
    %v1161 = vld [vmem:[#allocation7 + $0x16f0] sm:$0xff]
    %v1162 = vld [vmem:[#allocation7 + $0x16f8] sm:$0xff]
    %v1163 = vld [vmem:[#allocation7 + $0x1700] sm:$0xff]
    %v1164 = vld [vmem:[#allocation7 + $0x1708] sm:$0xff]
    %v1165 = vld [vmem:[#allocation7 + $0x1710] sm:$0xff]
    %v1166 = vld [vmem:[#allocation7 + $0x1718] sm:$0xff]
    %v1167 = vld [vmem:[#allocation7 + $0x1720] sm:$0xff]
    %v1168 = vld [vmem:[#allocation7 + $0x1728] sm:$0xff]
    %v1169 = vld [vmem:[#allocation7 + $0x1730] sm:$0xff]
    %v1170 = vld [vmem:[#allocation7 + $0x1738] sm:$0xff]
    %v1171 = vld [vmem:[#allocation7 + $0x1740] sm:$0xff]
    %v1172 = vld [vmem:[#allocation7 + $0x1748] sm:$0xff]
    %v1173 = vld [vmem:[#allocation7 + $0x1750] sm:$0xff]
    %v1174 = vld [vmem:[#allocation7 + $0x1758] sm:$0xff]
    %v1175 = vld [vmem:[#allocation7 + $0x1760] sm:$0xff]
    %v1176 = vld [vmem:[#allocation7 + $0x1768] sm:$0xff]
    %v1177 = vld [vmem:[#allocation7 + $0x1770] sm:$0xff]
    %v1178 = vld [vmem:[#allocation7 + $0x1778] sm:$0xff]
    %v1179 = vld [vmem:[#allocation7 + $0x1780] sm:$0xff]
    %v1180 = vld [vmem:[#allocation7 + $0x1788] sm:$0xff]
    %v1181 = vld [vmem:[#allocation7 + $0x1790] sm:$0xff]
    %v1182 = vld [vmem:[#allocation7 + $0x1798] sm:$0xff]
    %v1183 = vld [vmem:[#allocation7 + $0x17a0] sm:$0xff]
    %v1184 = vld [vmem:[#allocation7 + $0x17a8] sm:$0xff]
    %v1185 = vld [vmem:[#allocation7 + $0x17b0] sm:$0xff]
    %v1186 = vld [vmem:[#allocation7 + $0x17b8] sm:$0xff]
    %v1187 = vld [vmem:[#allocation7 + $0x17c0] sm:$0xff]
    %v1188 = vld [vmem:[#allocation7 + $0x17c8] sm:$0xff]
    %v1189 = vld [vmem:[#allocation7 + $0x17d0] sm:$0xff]
    %v1190 = vld [vmem:[#allocation7 + $0x17d8] sm:$0xff]
    %v1191 = vld [vmem:[#allocation7 + $0x17e0] sm:$0xff]
    %v1192 = vld [vmem:[#allocation7 + $0x17e8] sm:$0xff]
    %v1193 = vld [vmem:[#allocation7 + $0x17f0] sm:$0xff]
    %v1194 = vld [vmem:[#allocation7 + $0x17f8] sm:$0xff]
    %v1195 = vld [vmem:[#allocation7 + $0x1800] sm:$0xff]
    %v1196 = vld [vmem:[#allocation7 + $0x1808] sm:$0xff]
    %v1197 = vld [vmem:[#allocation7 + $0x1810] sm:$0xff]
    %v1198 = vld [vmem:[#allocation7 + $0x1818] sm:$0xff]
    %v1199 = vld [vmem:[#allocation7 + $0x1820] sm:$0xff]
    %v1200 = vld [vmem:[#allocation7 + $0x1828] sm:$0xff]
    %v1201 = vld [vmem:[#allocation7 + $0x1830] sm:$0xff]
    %v1202 = vld [vmem:[#allocation7 + $0x1838] sm:$0xff]
    %v1203 = vld [vmem:[#allocation7 + $0x1840] sm:$0xff]
    %v1204 = vld [vmem:[#allocation7 + $0x1848] sm:$0xff]
    %v1205 = vld [vmem:[#allocation7 + $0x1850] sm:$0xff]
    %v1206 = vld [vmem:[#allocation7 + $0x1858] sm:$0xff]
    %v1207 = vld [vmem:[#allocation7 + $0x1860] sm:$0xff]
    %v1208 = vld [vmem:[#allocation7 + $0x1868] sm:$0xff]
    %v1209 = vld [vmem:[#allocation7 + $0x1870] sm:$0xff]
    %v1210 = vld [vmem:[#allocation7 + $0x1878] sm:$0xff]
    %v1211 = vld [vmem:[#allocation7 + $0x1880] sm:$0xff]
    %v1212 = vld [vmem:[#allocation7 + $0x1888] sm:$0xff]
    %v1213 = vld [vmem:[#allocation7 + $0x1890] sm:$0xff]
    %v1214 = vld [vmem:[#allocation7 + $0x1898] sm:$0xff]
    %v1215 = vld [vmem:[#allocation7 + $0x18a0] sm:$0xff]
    %v1216 = vld [vmem:[#allocation7 + $0x18a8] sm:$0xff]
    %v1217 = vld [vmem:[#allocation7 + $0x18b0] sm:$0xff]
    %v1218 = vld [vmem:[#allocation7 + $0x18b8] sm:$0xff]
    %v1219 = vld [vmem:[#allocation7 + $0x18c0] sm:$0xff]
    %v1220 = vld [vmem:[#allocation7 + $0x18c8] sm:$0xff]
    %v1221 = vld [vmem:[#allocation7 + $0x18d0] sm:$0xff]
    %v1222 = vld [vmem:[#allocation7 + $0x18d8] sm:$0xff]
    %v1223 = vld [vmem:[#allocation7 + $0x18e0] sm:$0xff]
    %v1224 = vld [vmem:[#allocation7 + $0x18e8] sm:$0xff]
    %v1225 = vld [vmem:[#allocation7 + $0x18f0] sm:$0xff]
    %v1226 = vld [vmem:[#allocation7 + $0x18f8] sm:$0xff]
    %v1227 = vld [vmem:[#allocation7 + $0x1900] sm:$0xff]
    %v1228 = vld [vmem:[#allocation7 + $0x1908] sm:$0xff]
    %v1229 = vld [vmem:[#allocation7 + $0x1910] sm:$0xff]
    %v1230 = vld [vmem:[#allocation7 + $0x1918] sm:$0xff]
    %v1231 = vld [vmem:[#allocation7 + $0x1920] sm:$0xff]
    %v1232 = vld [vmem:[#allocation7 + $0x1928] sm:$0xff]
    %v1233 = vld [vmem:[#allocation7 + $0x1930] sm:$0xff]
    %v1234 = vld [vmem:[#allocation7 + $0x1938] sm:$0xff]
    %v1235 = vld [vmem:[#allocation7 + $0x1940] sm:$0xff]
    %v1236 = vld [vmem:[#allocation7 + $0x1948] sm:$0xff]
    %v1237 = vld [vmem:[#allocation7 + $0x1950] sm:$0xff]
    %v1238 = vld [vmem:[#allocation7 + $0x1958] sm:$0xff]
    %v1239 = vld [vmem:[#allocation7 + $0x1960] sm:$0xff]
    %v1240 = vld [vmem:[#allocation7 + $0x1968] sm:$0xff]
    %v1241 = vld [vmem:[#allocation7 + $0x1970] sm:$0xff]
    %v1242 = vld [vmem:[#allocation7 + $0x1978] sm:$0xff]
    %v1243 = vld [vmem:[#allocation7 + $0x1980] sm:$0xff]
    %v1244 = vld [vmem:[#allocation7 + $0x1988] sm:$0xff]
    %v1245 = vld [vmem:[#allocation7 + $0x1990] sm:$0xff]
    %v1246 = vld [vmem:[#allocation7 + $0x1998] sm:$0xff]
    %v1247 = vld [vmem:[#allocation7 + $0x19a0] sm:$0xff]
    %v1248 = vld [vmem:[#allocation7 + $0x19a8] sm:$0xff]
    %v1249 = vld [vmem:[#allocation7 + $0x19b0] sm:$0xff]
    %v1250 = vld [vmem:[#allocation7 + $0x19b8] sm:$0xff]
    %v1251 = vld [vmem:[#allocation7 + $0x19c0] sm:$0xff]
    %v1252 = vld [vmem:[#allocation7 + $0x19c8] sm:$0xff]
    %v1253 = vld [vmem:[#allocation7 + $0x19d0] sm:$0xff]
    %v1254 = vld [vmem:[#allocation7 + $0x19d8] sm:$0xff]
    %v1255 = vld [vmem:[#allocation7 + $0x19e0] sm:$0xff]
    %v1256 = vld [vmem:[#allocation7 + $0x19e8] sm:$0xff]
    %v1257 = vld [vmem:[#allocation7 + $0x19f0] sm:$0xff]
    %v1258 = vld [vmem:[#allocation7 + $0x19f8] sm:$0xff]
    %v1259 = vld [vmem:[#allocation7 + $0x1a00] sm:$0xff]
    %v1260 = vld [vmem:[#allocation7 + $0x1a08] sm:$0xff]
    %v1261 = vld [vmem:[#allocation7 + $0x1a10] sm:$0xff]
    %v1262 = vld [vmem:[#allocation7 + $0x1a18] sm:$0xff]
    %v1263 = vld [vmem:[#allocation7 + $0x1a20] sm:$0xff]
    %v1264 = vld [vmem:[#allocation7 + $0x1a28] sm:$0xff]
    %v1265 = vld [vmem:[#allocation7 + $0x1a30] sm:$0xff]
    %v1266 = vld [vmem:[#allocation7 + $0x1a38] sm:$0xff]
    %v1267 = vld [vmem:[#allocation7 + $0x1a40] sm:$0xff]
    %v1268 = vld [vmem:[#allocation7 + $0x1a48] sm:$0xff]
    %v1269 = vld [vmem:[#allocation7 + $0x1a50] sm:$0xff]
    %v1270 = vld [vmem:[#allocation7 + $0x1a58] sm:$0xff]
    %v1271 = vld [vmem:[#allocation7 + $0x1a60] sm:$0xff]
    %v1272 = vld [vmem:[#allocation7 + $0x1a68] sm:$0xff]
    %v1273 = vld [vmem:[#allocation7 + $0x1a70] sm:$0xff]
    %v1274 = vld [vmem:[#allocation7 + $0x1a78] sm:$0xff]
    %v1275 = vld [vmem:[#allocation7 + $0x1a80] sm:$0xff]
    %v1276 = vld [vmem:[#allocation7 + $0x1a88] sm:$0xff]
    %v1277 = vld [vmem:[#allocation7 + $0x1a90] sm:$0xff]
    %v1278 = vld [vmem:[#allocation7 + $0x1a98] sm:$0xff]
    %v1279 = vld [vmem:[#allocation7 + $0x1aa0] sm:$0xff]
    %v1280 = vld [vmem:[#allocation7 + $0x1aa8] sm:$0xff]
    %v1281 = vld [vmem:[#allocation7 + $0x1ab0] sm:$0xff]
    %v1282 = vld [vmem:[#allocation7 + $0x1ab8] sm:$0xff]
    %v1283 = vld [vmem:[#allocation7 + $0x1ac0] sm:$0xff]
    %v1284 = vld [vmem:[#allocation7 + $0x1ac8] sm:$0xff]
    %v1285 = vld [vmem:[#allocation7 + $0x1ad0] sm:$0xff]
    %v1286 = vld [vmem:[#allocation7 + $0x1ad8] sm:$0xff]
    %v1287 = vld [vmem:[#allocation7 + $0x1ae0] sm:$0xff]
    %v1288 = vld [vmem:[#allocation7 + $0x1ae8] sm:$0xff]
    %v1289 = vld [vmem:[#allocation7 + $0x1af0] sm:$0xff]
    %v1290 = vld [vmem:[#allocation7 + $0x1af8] sm:$0xff]
    %v1291 = vld [vmem:[#allocation7 + $0x1b00] sm:$0xff]
    %v1292 = vld [vmem:[#allocation7 + $0x1b08] sm:$0xff]
    %v1293 = vld [vmem:[#allocation7 + $0x1b10] sm:$0xff]
    %v1294 = vld [vmem:[#allocation7 + $0x1b18] sm:$0xff]
    %v1295 = vld [vmem:[#allocation7 + $0x1b20] sm:$0xff]
    %v1296 = vld [vmem:[#allocation7 + $0x1b28] sm:$0xff]
    %v1297 = vld [vmem:[#allocation7 + $0x1b30] sm:$0xff]
    %v1298 = vld [vmem:[#allocation7 + $0x1b38] sm:$0xff]
    %v1299 = vld [vmem:[#allocation7 + $0x1b40] sm:$0xff]
    %v1300 = vld [vmem:[#allocation7 + $0x1b48] sm:$0xff]
    %v1301 = vld [vmem:[#allocation7 + $0x1b50] sm:$0xff]
    %v1302 = vld [vmem:[#allocation7 + $0x1b58] sm:$0xff]
    %v1303 = vld [vmem:[#allocation7 + $0x1b60] sm:$0xff]
    %v1304 = vld [vmem:[#allocation7 + $0x1b68] sm:$0xff]
    %v1305 = vld [vmem:[#allocation7 + $0x1b70] sm:$0xff]
    %v1306 = vld [vmem:[#allocation7 + $0x1b78] sm:$0xff]
    %v1307 = vld [vmem:[#allocation7 + $0x1b80] sm:$0xff]
    %v1308 = vld [vmem:[#allocation7 + $0x1b88] sm:$0xff]
    %v1309 = vld [vmem:[#allocation7 + $0x1b90] sm:$0xff]
    %v1310 = vld [vmem:[#allocation7 + $0x1b98] sm:$0xff]
    %v1311 = vld [vmem:[#allocation7 + $0x1ba0] sm:$0xff]
    %v1312 = vld [vmem:[#allocation7 + $0x1ba8] sm:$0xff]
    %v1313 = vld [vmem:[#allocation7 + $0x1bb0] sm:$0xff]
    %v1314 = vld [vmem:[#allocation7 + $0x1bb8] sm:$0xff]
    %v1315 = vld [vmem:[#allocation7 + $0x1bc0] sm:$0xff]
    %v1316 = vld [vmem:[#allocation7 + $0x1bc8] sm:$0xff]
    %v1317 = vld [vmem:[#allocation7 + $0x1bd0] sm:$0xff]
    %v1318 = vld [vmem:[#allocation7 + $0x1bd8] sm:$0xff]
    %v1319 = vld [vmem:[#allocation7 + $0x1be0] sm:$0xff]
    %v1320 = vld [vmem:[#allocation7 + $0x1be8] sm:$0xff]
    %v1321 = vld [vmem:[#allocation7 + $0x1bf0] sm:$0xff]
    %v1322 = vld [vmem:[#allocation7 + $0x1bf8] sm:$0xff]
    %v1323 = vld [vmem:[#allocation7 + $0x1c00] sm:$0xff]
    %v1324 = vld [vmem:[#allocation7 + $0x1c08] sm:$0xff]
    %v1325 = vld [vmem:[#allocation7 + $0x1c10] sm:$0xff]
    %v1326 = vld [vmem:[#allocation7 + $0x1c18] sm:$0xff]
    %v1327 = vld [vmem:[#allocation7 + $0x1c20] sm:$0xff]
    %v1328 = vld [vmem:[#allocation7 + $0x1c28] sm:$0xff]
    %v1329 = vld [vmem:[#allocation7 + $0x1c30] sm:$0xff]
    %v1330 = vld [vmem:[#allocation7 + $0x1c38] sm:$0xff]
    %v1331 = vld [vmem:[#allocation7 + $0x1c40] sm:$0xff]
    %v1332 = vld [vmem:[#allocation7 + $0x1c48] sm:$0xff]
    %v1333 = vld [vmem:[#allocation7 + $0x1c50] sm:$0xff]
    %v1334 = vld [vmem:[#allocation7 + $0x1c58] sm:$0xff]
    %v1335 = vld [vmem:[#allocation7 + $0x1c60] sm:$0xff]
    %v1336 = vld [vmem:[#allocation7 + $0x1c68] sm:$0xff]
    %v1337 = vld [vmem:[#allocation7 + $0x1c70] sm:$0xff]
    %v1338 = vld [vmem:[#allocation7 + $0x1c78] sm:$0xff]
    %v1339 = vld [vmem:[#allocation7 + $0x1c80] sm:$0xff]
    %v1340 = vld [vmem:[#allocation7 + $0x1c88] sm:$0xff]
    %v1341 = vld [vmem:[#allocation7 + $0x1c90] sm:$0xff]
    %v1342 = vld [vmem:[#allocation7 + $0x1c98] sm:$0xff]
    %v1343 = vld [vmem:[#allocation7 + $0x1ca0] sm:$0xff]
    %v1344 = vld [vmem:[#allocation7 + $0x1ca8] sm:$0xff]
    %v1345 = vld [vmem:[#allocation7 + $0x1cb0] sm:$0xff]
    %v1346 = vld [vmem:[#allocation7 + $0x1cb8] sm:$0xff]
    %v1347 = vld [vmem:[#allocation7 + $0x1cc0] sm:$0xff]
    %v1348 = vld [vmem:[#allocation7 + $0x1cc8] sm:$0xff]
    %v1349 = vld [vmem:[#allocation7 + $0x1cd0] sm:$0xff]
    %v1350 = vld [vmem:[#allocation7 + $0x1cd8] sm:$0xff]
    %v1351 = vld [vmem:[#allocation7 + $0x1ce0] sm:$0xff]
    %v1352 = vld [vmem:[#allocation7 + $0x1ce8] sm:$0xff]
    %v1353 = vld [vmem:[#allocation7 + $0x1cf0] sm:$0xff]
    %v1354 = vld [vmem:[#allocation7 + $0x1cf8] sm:$0xff]
    %v1355 = vld [vmem:[#allocation7 + $0x1d00] sm:$0xff]
    %v1356 = vld [vmem:[#allocation7 + $0x1d08] sm:$0xff]
    %v1357 = vld [vmem:[#allocation7 + $0x1d10] sm:$0xff]
    %v1358 = vld [vmem:[#allocation7 + $0x1d18] sm:$0xff]
    %v1359 = vld [vmem:[#allocation7 + $0x1d20] sm:$0xff]
    %v1360 = vld [vmem:[#allocation7 + $0x1d28] sm:$0xff]
    %v1361 = vld [vmem:[#allocation7 + $0x1d30] sm:$0xff]
    %v1362 = vld [vmem:[#allocation7 + $0x1d38] sm:$0xff]
    %v1363 = vld [vmem:[#allocation7 + $0x1d40] sm:$0xff]
    %v1364 = vld [vmem:[#allocation7 + $0x1d48] sm:$0xff]
    %v1365 = vld [vmem:[#allocation7 + $0x1d50] sm:$0xff]
    %v1366 = vld [vmem:[#allocation7 + $0x1d58] sm:$0xff]
    %v1367 = vld [vmem:[#allocation7 + $0x1d60] sm:$0xff]
    %v1368 = vld [vmem:[#allocation7 + $0x1d68] sm:$0xff]
    %v1369 = vld [vmem:[#allocation7 + $0x1d70] sm:$0xff]
    %v1370 = vld [vmem:[#allocation7 + $0x1d78] sm:$0xff]
    %v1371 = vld [vmem:[#allocation7 + $0x1d80] sm:$0xff]
    %v1372 = vld [vmem:[#allocation7 + $0x1d88] sm:$0xff]
    %v1373 = vld [vmem:[#allocation7 + $0x1d90] sm:$0xff]
    %v1374 = vld [vmem:[#allocation7 + $0x1d98] sm:$0xff]
    %v1375 = vld [vmem:[#allocation7 + $0x1da0] sm:$0xff]
    %v1376 = vld [vmem:[#allocation7 + $0x1da8] sm:$0xff]
    %v1377 = vld [vmem:[#allocation7 + $0x1db0] sm:$0xff]
    %v1378 = vld [vmem:[#allocation7 + $0x1db8] sm:$0xff]
    %v1379 = vld [vmem:[#allocation7 + $0x1dc0] sm:$0xff]
    %v1380 = vld [vmem:[#allocation7 + $0x1dc8] sm:$0xff]
    %v1381 = vld [vmem:[#allocation7 + $0x1dd0] sm:$0xff]
    %v1382 = vld [vmem:[#allocation7 + $0x1dd8] sm:$0xff]
    %v1383 = vld [vmem:[#allocation7 + $0x1de0] sm:$0xff]
    %v1384 = vld [vmem:[#allocation7 + $0x1de8] sm:$0xff]
    %v1385 = vld [vmem:[#allocation7 + $0x1df0] sm:$0xff]
    %v1386 = vld [vmem:[#allocation7 + $0x1df8] sm:$0xff]
    %v1387 = vld [vmem:[#allocation7 + $0x1e00] sm:$0xff]
    %v1388 = vld [vmem:[#allocation7 + $0x1e08] sm:$0xff]
    %v1389 = vld [vmem:[#allocation7 + $0x1e10] sm:$0xff]
    %v1390 = vld [vmem:[#allocation7 + $0x1e18] sm:$0xff]
    %v1391 = vld [vmem:[#allocation7 + $0x1e20] sm:$0xff]
    %v1392 = vld [vmem:[#allocation7 + $0x1e28] sm:$0xff]
    %v1393 = vld [vmem:[#allocation7 + $0x1e30] sm:$0xff]
    %v1394 = vld [vmem:[#allocation7 + $0x1e38] sm:$0xff]
    %v1395 = vld [vmem:[#allocation7 + $0x1e40] sm:$0xff]
    %v1396 = vld [vmem:[#allocation7 + $0x1e48] sm:$0xff]
    %v1397 = vld [vmem:[#allocation7 + $0x1e50] sm:$0xff]
    %v1398 = vld [vmem:[#allocation7 + $0x1e58] sm:$0xff]
    %v1399 = vld [vmem:[#allocation7 + $0x1e60] sm:$0xff]
    %v1400 = vld [vmem:[#allocation7 + $0x1e68] sm:$0xff]
    %v1401 = vld [vmem:[#allocation7 + $0x1e70] sm:$0xff]
    %v1402 = vld [vmem:[#allocation7 + $0x1e78] sm:$0xff]
    %v1403 = vld [vmem:[#allocation7 + $0x1e80] sm:$0xff]
    %v1404 = vld [vmem:[#allocation7 + $0x1e88] sm:$0xff]
    %v1405 = vld [vmem:[#allocation7 + $0x1e90] sm:$0xff]
    %v1406 = vld [vmem:[#allocation7 + $0x1e98] sm:$0xff]
    %v1407 = vld [vmem:[#allocation7 + $0x1ea0] sm:$0xff]
    %v1408 = vld [vmem:[#allocation7 + $0x1ea8] sm:$0xff]
    %v1409 = vld [vmem:[#allocation7 + $0x1eb0] sm:$0xff]
    %v1410 = vld [vmem:[#allocation7 + $0x1eb8] sm:$0xff]
    %v1411 = vld [vmem:[#allocation7 + $0x1ec0] sm:$0xff]
    %v1412 = vld [vmem:[#allocation7 + $0x1ec8] sm:$0xff]
    %v1413 = vld [vmem:[#allocation7 + $0x1ed0] sm:$0xff]
    %v1414 = vld [vmem:[#allocation7 + $0x1ed8] sm:$0xff]
    %v1415 = vld [vmem:[#allocation7 + $0x1ee0] sm:$0xff]
    %v1416 = vld [vmem:[#allocation7 + $0x1ee8] sm:$0xff]
    %v1417 = vld [vmem:[#allocation7 + $0x1ef0] sm:$0xff]
    %v1418 = vld [vmem:[#allocation7 + $0x1ef8] sm:$0xff]
    %v1419 = vld [vmem:[#allocation7 + $0x1f00] sm:$0xff]
    %v1420 = vld [vmem:[#allocation7 + $0x1f08] sm:$0xff]
    %v1421 = vld [vmem:[#allocation7 + $0x1f10] sm:$0xff]
    %v1422 = vld [vmem:[#allocation7 + $0x1f18] sm:$0xff]
    %v1423 = vld [vmem:[#allocation7 + $0x1f20] sm:$0xff]
    %v1424 = vld [vmem:[#allocation7 + $0x1f28] sm:$0xff]
    %v1425 = vld [vmem:[#allocation7 + $0x1f30] sm:$0xff]
    %v1426 = vld [vmem:[#allocation7 + $0x1f38] sm:$0xff]
    %v1427 = vld [vmem:[#allocation7 + $0x1f40] sm:$0xff]
    %v1428 = vld [vmem:[#allocation7 + $0x1f48] sm:$0xff]
    %v1429 = vld [vmem:[#allocation7 + $0x1f50] sm:$0xff]
    %v1430 = vld [vmem:[#allocation7 + $0x1f58] sm:$0xff]
    %v1431 = vld [vmem:[#allocation7 + $0x1f60] sm:$0xff]
    %v1432 = vld [vmem:[#allocation7 + $0x1f68] sm:$0xff]
    %v1433 = vld [vmem:[#allocation7 + $0x1f70] sm:$0xff]
    %v1434 = vld [vmem:[#allocation7 + $0x1f78] sm:$0xff]
    %v1435 = vld [vmem:[#allocation7 + $0x1f80] sm:$0xff]
    %v1436 = vld [vmem:[#allocation7 + $0x1f88] sm:$0xff]
    %v1437 = vld [vmem:[#allocation7 + $0x1f90] sm:$0xff]
    %v1438 = vld [vmem:[#allocation7 + $0x1f98] sm:$0xff]
    %v1439 = vld [vmem:[#allocation7 + $0x1fa0] sm:$0xff]
    %v1440 = vld [vmem:[#allocation7 + $0x1fa8] sm:$0xff]
    %v1441 = vld [vmem:[#allocation7 + $0x1fb0] sm:$0xff]
    %v1442 = vld [vmem:[#allocation7 + $0x1fb8] sm:$0xff]
    %v1443 = vld [vmem:[#allocation7 + $0x1fc0] sm:$0xff]
    %v1444 = vld [vmem:[#allocation7 + $0x1fc8] sm:$0xff]
    %v1445 = vld [vmem:[#allocation7 + $0x1fd0] sm:$0xff]
    %v1446 = vld [vmem:[#allocation7 + $0x1fd8] sm:$0xff]
    %v1447 = vld [vmem:[#allocation7 + $0x1fe0] sm:$0xff]
    %v1448 = vld [vmem:[#allocation7 + $0x1fe8] sm:$0xff]
    %v1449 = vld [vmem:[#allocation7 + $0x1ff0] sm:$0xff]
    %v1450 = vld [vmem:[#allocation7 + $0x1ff8] sm:$0xff]
    %v1451 = vld [vmem:[#allocation9] sm:$0xff]
    %v1452 = vld [vmem:[#allocation9 + $0x8] sm:$0xff]
    %v1455 = vlaneseq
    %v1456 = vshrl.u32 %v1455, 7
    %v1457 = vsub.s32 0, %v1456
    %v1458 = vrot.slane %v1451, %v1457
    %v1459 = vlaneseq
    %v1460 = vshrl.u32 %v1459, 7
    %v1461 = vsub.s32 1, %v1460
    %v1462 = vrot.slane %v1451, %v1461
    %v1463 = vlaneseq
    %v1464 = vshrl.u32 %v1463, 7
    %v1465 = vsub.s32 2, %v1464
    %v1466 = vrot.slane %v1451, %v1465
    %v1467 = vlaneseq
    %v1468 = vshrl.u32 %v1467, 7
    %v1469 = vsub.s32 3, %v1468
    %v1470 = vrot.slane %v1451, %v1469
    %v1471 = vlaneseq
    %v1472 = vshrl.u32 %v1471, 7
    %v1473 = vsub.s32 4, %v1472
    %v1474 = vrot.slane %v1451, %v1473
    %v1475 = vlaneseq
    %v1476 = vshrl.u32 %v1475, 7
    %v1477 = vsub.s32 5, %v1476
    %v1478 = vrot.slane %v1451, %v1477
    %v1479 = vlaneseq
    %v1480 = vshrl.u32 %v1479, 7
    %v1481 = vsub.s32 6, %v1480
    %v1482 = vrot.slane %v1451, %v1481
    %v1483 = vlaneseq
    %v1484 = vshrl.u32 %v1483, 7
    %v1485 = vsub.s32 7, %v1484
    %v1486 = vrot.slane %v1451, %v1485
    %v1487 = vlaneseq
    %v1488 = vshrl.u32 %v1487, 7
    %v1489 = vsub.s32 0, %v1488
    %v1490 = vrot.slane %v1452, %v1489
    %v1491 = vlaneseq
    %v1492 = vshrl.u32 %v1491, 7
    %v1493 = vsub.s32 1, %v1492
    %v1494 = vrot.slane %v1452, %v1493
    %v1495 = vlaneseq
    %v1496 = vshrl.u32 %v1495, 7
    %v1497 = vsub.s32 2, %v1496
    %v1498 = vrot.slane %v1452, %v1497
    %v1499 = vlaneseq
    %v1500 = vshrl.u32 %v1499, 7
    %v1501 = vsub.s32 3, %v1500
    %v1502 = vrot.slane %v1452, %v1501
    %v1503 = vlaneseq
    %v1504 = vshrl.u32 %v1503, 7
    %v1505 = vsub.s32 4, %v1504
    %v1506 = vrot.slane %v1452, %v1505
    %v1507 = vlaneseq
    %v1508 = vshrl.u32 %v1507, 7
    %v1509 = vsub.s32 5, %v1508
    %v1510 = vrot.slane %v1452, %v1509
    %v1511 = vlaneseq
    %v1512 = vshrl.u32 %v1511, 7
    %v1513 = vsub.s32 6, %v1512
    %v1514 = vrot.slane %v1452, %v1513
    %v1515 = vlaneseq
    %v1516 = vshrl.u32 %v1515, 7
    %v1517 = vsub.s32 7, %v1516
    %v1518 = vrot.slane %v1452, %v1517
    %v2559 = vunpack.c.l.b16 %v427
    %v2560 = vunpack.c.h.b16 %v427
    %v2561 = vunpack.c.l.b16 %v428
    %v2562 = vunpack.c.h.b16 %v428
    %v2563 = vunpack.c.l.b16 %v429
    %v2564 = vunpack.c.h.b16 %v429
    %v2565 = vunpack.c.l.b16 %v430
    %v2566 = vunpack.c.h.b16 %v430
    %v2567 = vunpack.c.l.b16 %v431
    %v2568 = vunpack.c.h.b16 %v431
    %v2569 = vunpack.c.l.b16 %v432
    %v2570 = vunpack.c.h.b16 %v432
    %v2571 = vunpack.c.l.b16 %v433
    %v2572 = vunpack.c.h.b16 %v433
    %v2573 = vunpack.c.l.b16 %v434
    %v2574 = vunpack.c.h.b16 %v434
    %v2575 = vunpack.c.l.b16 %v435
    %v2576 = vunpack.c.h.b16 %v435
    %v2577 = vunpack.c.l.b16 %v436
    %v2578 = vunpack.c.h.b16 %v436
    %v2579 = vunpack.c.l.b16 %v437
    %v2580 = vunpack.c.h.b16 %v437
    %v2581 = vunpack.c.l.b16 %v438
    %v2582 = vunpack.c.h.b16 %v438
    %v2583 = vunpack.c.l.b16 %v439
    %v2584 = vunpack.c.h.b16 %v439
    %v2585 = vunpack.c.l.b16 %v440
    %v2586 = vunpack.c.h.b16 %v440
    %v2587 = vunpack.c.l.b16 %v441
    %v2588 = vunpack.c.h.b16 %v441
    %v2589 = vunpack.c.l.b16 %v442
    %v2590 = vunpack.c.h.b16 %v442
    %v2591 = vunpack.c.l.b16 %v443
    %v2592 = vunpack.c.h.b16 %v443
    %v2593 = vunpack.c.l.b16 %v444
    %v2594 = vunpack.c.h.b16 %v444
    %v2595 = vunpack.c.l.b16 %v445
    %v2596 = vunpack.c.h.b16 %v445
    %v2597 = vunpack.c.l.b16 %v446
    %v2598 = vunpack.c.h.b16 %v446
    %v2599 = vunpack.c.l.b16 %v447
    %v2600 = vunpack.c.h.b16 %v447
    %v2601 = vunpack.c.l.b16 %v448
    %v2602 = vunpack.c.h.b16 %v448
    %v2603 = vunpack.c.l.b16 %v449
    %v2604 = vunpack.c.h.b16 %v449
    %v2605 = vunpack.c.l.b16 %v450
    %v2606 = vunpack.c.h.b16 %v450
    %v2607 = vunpack.c.l.b16 %v451
    %v2608 = vunpack.c.h.b16 %v451
    %v2609 = vunpack.c.l.b16 %v452
    %v2610 = vunpack.c.h.b16 %v452
    %v2611 = vunpack.c.l.b16 %v453
    %v2612 = vunpack.c.h.b16 %v453
    %v2613 = vunpack.c.l.b16 %v454
    %v2614 = vunpack.c.h.b16 %v454
    %v2615 = vunpack.c.l.b16 %v455
    %v2616 = vunpack.c.h.b16 %v455
    %v2617 = vunpack.c.l.b16 %v456
    %v2618 = vunpack.c.h.b16 %v456
    %v2619 = vunpack.c.l.b16 %v457
    %v2620 = vunpack.c.h.b16 %v457
    %v2621 = vunpack.c.l.b16 %v458
    %v2622 = vunpack.c.h.b16 %v458
    %v2623 = vunpack.c.l.b16 %v459
    %v2624 = vunpack.c.h.b16 %v459
    %v2625 = vunpack.c.l.b16 %v460
    %v2626 = vunpack.c.h.b16 %v460
    %v2627 = vunpack.c.l.b16 %v461
    %v2628 = vunpack.c.h.b16 %v461
    %v2629 = vunpack.c.l.b16 %v462
    %v2630 = vunpack.c.h.b16 %v462
    %v2631 = vunpack.c.l.b16 %v463
    %v2632 = vunpack.c.h.b16 %v463
    %v2633 = vunpack.c.l.b16 %v464
    %v2634 = vunpack.c.h.b16 %v464
    %v2635 = vunpack.c.l.b16 %v465
    %v2636 = vunpack.c.h.b16 %v465
    %v2637 = vunpack.c.l.b16 %v466
    %v2638 = vunpack.c.h.b16 %v466
    %v2639 = vunpack.c.l.b16 %v467
    %v2640 = vunpack.c.h.b16 %v467
    %v2641 = vunpack.c.l.b16 %v468
    %v2642 = vunpack.c.h.b16 %v468
    %v2643 = vunpack.c.l.b16 %v469
    %v2644 = vunpack.c.h.b16 %v469
    %v2645 = vunpack.c.l.b16 %v470
    %v2646 = vunpack.c.h.b16 %v470
    %v2647 = vunpack.c.l.b16 %v471
    %v2648 = vunpack.c.h.b16 %v471
    %v2649 = vunpack.c.l.b16 %v472
    %v2650 = vunpack.c.h.b16 %v472
    %v2651 = vunpack.c.l.b16 %v473
    %v2652 = vunpack.c.h.b16 %v473
    %v2653 = vunpack.c.l.b16 %v474
    %v2654 = vunpack.c.h.b16 %v474
    %v2655 = vunpack.c.l.b16 %v475
    %v2656 = vunpack.c.h.b16 %v475
    %v2657 = vunpack.c.l.b16 %v476
    %v2658 = vunpack.c.h.b16 %v476
    %v2659 = vunpack.c.l.b16 %v477
    %v2660 = vunpack.c.h.b16 %v477
    %v2661 = vunpack.c.l.b16 %v478
    %v2662 = vunpack.c.h.b16 %v478
    %v2663 = vunpack.c.l.b16 %v479
    %v2664 = vunpack.c.h.b16 %v479
    %v2665 = vunpack.c.l.b16 %v480
    %v2666 = vunpack.c.h.b16 %v480
    %v2667 = vunpack.c.l.b16 %v481
    %v2668 = vunpack.c.h.b16 %v481
    %v2669 = vunpack.c.l.b16 %v482
    %v2670 = vunpack.c.h.b16 %v482
    %v2671 = vunpack.c.l.b16 %v483
    %v2672 = vunpack.c.h.b16 %v483
    %v2673 = vunpack.c.l.b16 %v484
    %v2674 = vunpack.c.h.b16 %v484
    %v2675 = vunpack.c.l.b16 %v485
    %v2676 = vunpack.c.h.b16 %v485
    %v2677 = vunpack.c.l.b16 %v486
    %v2678 = vunpack.c.h.b16 %v486
    %v2679 = vunpack.c.l.b16 %v487
    %v2680 = vunpack.c.h.b16 %v487
    %v2681 = vunpack.c.l.b16 %v488
    %v2682 = vunpack.c.h.b16 %v488
    %v2683 = vunpack.c.l.b16 %v489
    %v2684 = vunpack.c.h.b16 %v489
    %v2685 = vunpack.c.l.b16 %v490
    %v2686 = vunpack.c.h.b16 %v490
    %v2687 = vunpack.c.l.b16 %v491
    %v2688 = vunpack.c.h.b16 %v491
    %v2689 = vunpack.c.l.b16 %v492
    %v2690 = vunpack.c.h.b16 %v492
    %v2691 = vunpack.c.l.b16 %v493
    %v2692 = vunpack.c.h.b16 %v493
    %v2693 = vunpack.c.l.b16 %v494
    %v2694 = vunpack.c.h.b16 %v494
    %v2695 = vunpack.c.l.b16 %v495
    %v2696 = vunpack.c.h.b16 %v495
    %v2697 = vunpack.c.l.b16 %v496
    %v2698 = vunpack.c.h.b16 %v496
    %v2699 = vunpack.c.l.b16 %v497
    %v2700 = vunpack.c.h.b16 %v497
    %v2701 = vunpack.c.l.b16 %v498
    %v2702 = vunpack.c.h.b16 %v498
    %v2703 = vunpack.c.l.b16 %v499
    %v2704 = vunpack.c.h.b16 %v499
    %v2705 = vunpack.c.l.b16 %v500
    %v2706 = vunpack.c.h.b16 %v500
    %v2707 = vunpack.c.l.b16 %v501
    %v2708 = vunpack.c.h.b16 %v501
    %v2709 = vunpack.c.l.b16 %v502
    %v2710 = vunpack.c.h.b16 %v502
    %v2711 = vunpack.c.l.b16 %v503
    %v2712 = vunpack.c.h.b16 %v503
    %v2713 = vunpack.c.l.b16 %v504
    %v2714 = vunpack.c.h.b16 %v504
    %v2715 = vunpack.c.l.b16 %v505
    %v2716 = vunpack.c.h.b16 %v505
    %v2717 = vunpack.c.l.b16 %v506
    %v2718 = vunpack.c.h.b16 %v506
    %v2719 = vunpack.c.l.b16 %v507
    %v2720 = vunpack.c.h.b16 %v507
    %v2721 = vunpack.c.l.b16 %v508
    %v2722 = vunpack.c.h.b16 %v508
    %v2723 = vunpack.c.l.b16 %v509
    %v2724 = vunpack.c.h.b16 %v509
    %v2725 = vunpack.c.l.b16 %v510
    %v2726 = vunpack.c.h.b16 %v510
    %v2727 = vunpack.c.l.b16 %v511
    %v2728 = vunpack.c.h.b16 %v511
    %v2729 = vunpack.c.l.b16 %v512
    %v2730 = vunpack.c.h.b16 %v512
    %v2731 = vunpack.c.l.b16 %v513
    %v2732 = vunpack.c.h.b16 %v513
    %v2733 = vunpack.c.l.b16 %v514
    %v2734 = vunpack.c.h.b16 %v514
    %v2735 = vunpack.c.l.b16 %v515
    %v2736 = vunpack.c.h.b16 %v515
    %v2737 = vunpack.c.l.b16 %v516
    %v2738 = vunpack.c.h.b16 %v516
    %v2739 = vunpack.c.l.b16 %v517
    %v2740 = vunpack.c.h.b16 %v517
    %v2741 = vunpack.c.l.b16 %v518
    %v2742 = vunpack.c.h.b16 %v518
    %v2743 = vunpack.c.l.b16 %v519
    %v2744 = vunpack.c.h.b16 %v519
    %v2745 = vunpack.c.l.b16 %v520
    %v2746 = vunpack.c.h.b16 %v520
    %v2747 = vunpack.c.l.b16 %v521
    %v2748 = vunpack.c.h.b16 %v521
    %v2749 = vunpack.c.l.b16 %v522
    %v2750 = vunpack.c.h.b16 %v522
    %v2751 = vunpack.c.l.b16 %v523
    %v2752 = vunpack.c.h.b16 %v523
    %v2753 = vunpack.c.l.b16 %v524
    %v2754 = vunpack.c.h.b16 %v524
    %v2755 = vunpack.c.l.b16 %v525
    %v2756 = vunpack.c.h.b16 %v525
    %v2757 = vunpack.c.l.b16 %v526
    %v2758 = vunpack.c.h.b16 %v526
    %v2759 = vunpack.c.l.b16 %v527
    %v2760 = vunpack.c.h.b16 %v527
    %v2761 = vunpack.c.l.b16 %v528
    %v2762 = vunpack.c.h.b16 %v528
    %v2763 = vunpack.c.l.b16 %v529
    %v2764 = vunpack.c.h.b16 %v529
    %v2765 = vunpack.c.l.b16 %v530
    %v2766 = vunpack.c.h.b16 %v530
    %v2767 = vunpack.c.l.b16 %v531
    %v2768 = vunpack.c.h.b16 %v531
    %v2769 = vunpack.c.l.b16 %v532
    %v2770 = vunpack.c.h.b16 %v532
    %v2771 = vunpack.c.l.b16 %v533
    %v2772 = vunpack.c.h.b16 %v533
    %v2773 = vunpack.c.l.b16 %v534
    %v2774 = vunpack.c.h.b16 %v534
    %v2775 = vunpack.c.l.b16 %v535
    %v2776 = vunpack.c.h.b16 %v535
    %v2777 = vunpack.c.l.b16 %v536
    %v2778 = vunpack.c.h.b16 %v536
    %v2779 = vunpack.c.l.b16 %v537
    %v2780 = vunpack.c.h.b16 %v537
    %v2781 = vunpack.c.l.b16 %v538
    %v2782 = vunpack.c.h.b16 %v538
    %v2783 = vunpack.c.l.b16 %v539
    %v2784 = vunpack.c.h.b16 %v539
    %v2785 = vunpack.c.l.b16 %v540
    %v2786 = vunpack.c.h.b16 %v540
    %v2787 = vunpack.c.l.b16 %v541
    %v2788 = vunpack.c.h.b16 %v541
    %v2789 = vunpack.c.l.b16 %v542
    %v2790 = vunpack.c.h.b16 %v542
    %v2791 = vunpack.c.l.b16 %v543
    %v2792 = vunpack.c.h.b16 %v543
    %v2793 = vunpack.c.l.b16 %v544
    %v2794 = vunpack.c.h.b16 %v544
    %v2795 = vunpack.c.l.b16 %v545
    %v2796 = vunpack.c.h.b16 %v545
    %v2797 = vunpack.c.l.b16 %v546
    %v2798 = vunpack.c.h.b16 %v546
    %v2799 = vunpack.c.l.b16 %v547
    %v2800 = vunpack.c.h.b16 %v547
    %v2801 = vunpack.c.l.b16 %v548
    %v2802 = vunpack.c.h.b16 %v548
    %v2803 = vunpack.c.l.b16 %v549
    %v2804 = vunpack.c.h.b16 %v549
    %v2805 = vunpack.c.l.b16 %v550
    %v2806 = vunpack.c.h.b16 %v550
    %v2807 = vunpack.c.l.b16 %v551
    %v2808 = vunpack.c.h.b16 %v551
    %v2809 = vunpack.c.l.b16 %v552
    %v2810 = vunpack.c.h.b16 %v552
    %v2811 = vunpack.c.l.b16 %v553
    %v2812 = vunpack.c.h.b16 %v553
    %v2813 = vunpack.c.l.b16 %v554
    %v2814 = vunpack.c.h.b16 %v554
    %v2815 = vunpack.c.l.b16 %v555
    %v2816 = vunpack.c.h.b16 %v555
    %v2817 = vunpack.c.l.b16 %v556
    %v2818 = vunpack.c.h.b16 %v556
    %v2819 = vunpack.c.l.b16 %v557
    %v2820 = vunpack.c.h.b16 %v557
    %v2821 = vunpack.c.l.b16 %v558
    %v2822 = vunpack.c.h.b16 %v558
    %v2823 = vunpack.c.l.b16 %v559
    %v2824 = vunpack.c.h.b16 %v559
    %v2825 = vunpack.c.l.b16 %v560
    %v2826 = vunpack.c.h.b16 %v560
    %v2827 = vunpack.c.l.b16 %v561
    %v2828 = vunpack.c.h.b16 %v561
    %v2829 = vunpack.c.l.b16 %v562
    %v2830 = vunpack.c.h.b16 %v562
    %v2831 = vunpack.c.l.b16 %v563
    %v2832 = vunpack.c.h.b16 %v563
    %v2833 = vunpack.c.l.b16 %v564
    %v2834 = vunpack.c.h.b16 %v564
    %v2835 = vunpack.c.l.b16 %v565
    %v2836 = vunpack.c.h.b16 %v565
    %v2837 = vunpack.c.l.b16 %v566
    %v2838 = vunpack.c.h.b16 %v566
    %v2839 = vunpack.c.l.b16 %v567
    %v2840 = vunpack.c.h.b16 %v567
    %v2841 = vunpack.c.l.b16 %v568
    %v2842 = vunpack.c.h.b16 %v568
    %v2843 = vunpack.c.l.b16 %v569
    %v2844 = vunpack.c.h.b16 %v569
    %v2845 = vunpack.c.l.b16 %v570
    %v2846 = vunpack.c.h.b16 %v570
    %v2847 = vunpack.c.l.b16 %v571
    %v2848 = vunpack.c.h.b16 %v571
    %v2849 = vunpack.c.l.b16 %v572
    %v2850 = vunpack.c.h.b16 %v572
    %v2851 = vunpack.c.l.b16 %v573
    %v2852 = vunpack.c.h.b16 %v573
    %v2853 = vunpack.c.l.b16 %v574
    %v2854 = vunpack.c.h.b16 %v574
    %v2855 = vunpack.c.l.b16 %v575
    %v2856 = vunpack.c.h.b16 %v575
    %v2857 = vunpack.c.l.b16 %v576
    %v2858 = vunpack.c.h.b16 %v576
    %v2859 = vunpack.c.l.b16 %v577
    %v2860 = vunpack.c.h.b16 %v577
    %v2861 = vunpack.c.l.b16 %v578
    %v2862 = vunpack.c.h.b16 %v578
    %v2863 = vunpack.c.l.b16 %v579
    %v2864 = vunpack.c.h.b16 %v579
    %v2865 = vunpack.c.l.b16 %v580
    %v2866 = vunpack.c.h.b16 %v580
    %v2867 = vunpack.c.l.b16 %v581
    %v2868 = vunpack.c.h.b16 %v581
    %v2869 = vunpack.c.l.b16 %v582
    %v2870 = vunpack.c.h.b16 %v582
    %v2871 = vunpack.c.l.b16 %v583
    %v2872 = vunpack.c.h.b16 %v583
    %v2873 = vunpack.c.l.b16 %v584
    %v2874 = vunpack.c.h.b16 %v584
    %v2875 = vunpack.c.l.b16 %v585
    %v2876 = vunpack.c.h.b16 %v585
    %v2877 = vunpack.c.l.b16 %v586
    %v2878 = vunpack.c.h.b16 %v586
    %v2879 = vunpack.c.l.b16 %v587
    %v2880 = vunpack.c.h.b16 %v587
    %v2881 = vunpack.c.l.b16 %v588
    %v2882 = vunpack.c.h.b16 %v588
    %v2883 = vunpack.c.l.b16 %v589
    %v2884 = vunpack.c.h.b16 %v589
    %v2885 = vunpack.c.l.b16 %v590
    %v2886 = vunpack.c.h.b16 %v590
    %v2887 = vunpack.c.l.b16 %v591
    %v2888 = vunpack.c.h.b16 %v591
    %v2889 = vunpack.c.l.b16 %v592
    %v2890 = vunpack.c.h.b16 %v592
    %v2891 = vunpack.c.l.b16 %v593
    %v2892 = vunpack.c.h.b16 %v593
    %v2893 = vunpack.c.l.b16 %v594
    %v2894 = vunpack.c.h.b16 %v594
    %v2895 = vunpack.c.l.b16 %v595
    %v2896 = vunpack.c.h.b16 %v595
    %v2897 = vunpack.c.l.b16 %v596
    %v2898 = vunpack.c.h.b16 %v596
    %v2899 = vunpack.c.l.b16 %v597
    %v2900 = vunpack.c.h.b16 %v597
    %v2901 = vunpack.c.l.b16 %v598
    %v2902 = vunpack.c.h.b16 %v598
    %v2903 = vunpack.c.l.b16 %v599
    %v2904 = vunpack.c.h.b16 %v599
    %v2905 = vunpack.c.l.b16 %v600
    %v2906 = vunpack.c.h.b16 %v600
    %v2907 = vunpack.c.l.b16 %v601
    %v2908 = vunpack.c.h.b16 %v601
    %v2909 = vunpack.c.l.b16 %v602
    %v2910 = vunpack.c.h.b16 %v602
    %v2911 = vunpack.c.l.b16 %v603
    %v2912 = vunpack.c.h.b16 %v603
    %v2913 = vunpack.c.l.b16 %v604
    %v2914 = vunpack.c.h.b16 %v604
    %v2915 = vunpack.c.l.b16 %v605
    %v2916 = vunpack.c.h.b16 %v605
    %v2917 = vunpack.c.l.b16 %v606
    %v2918 = vunpack.c.h.b16 %v606
    %v2919 = vunpack.c.l.b16 %v607
    %v2920 = vunpack.c.h.b16 %v607
    %v2921 = vunpack.c.l.b16 %v608
    %v2922 = vunpack.c.h.b16 %v608
    %v2923 = vunpack.c.l.b16 %v609
    %v2924 = vunpack.c.h.b16 %v609
    %v2925 = vunpack.c.l.b16 %v610
    %v2926 = vunpack.c.h.b16 %v610
    %v2927 = vunpack.c.l.b16 %v611
    %v2928 = vunpack.c.h.b16 %v611
    %v2929 = vunpack.c.l.b16 %v612
    %v2930 = vunpack.c.h.b16 %v612
    %v2931 = vunpack.c.l.b16 %v613
    %v2932 = vunpack.c.h.b16 %v613
    %v2933 = vunpack.c.l.b16 %v614
    %v2934 = vunpack.c.h.b16 %v614
    %v2935 = vunpack.c.l.b16 %v615
    %v2936 = vunpack.c.h.b16 %v615
    %v2937 = vunpack.c.l.b16 %v616
    %v2938 = vunpack.c.h.b16 %v616
    %v2939 = vunpack.c.l.b16 %v617
    %v2940 = vunpack.c.h.b16 %v617
    %v2941 = vunpack.c.l.b16 %v618
    %v2942 = vunpack.c.h.b16 %v618
    %v2943 = vunpack.c.l.b16 %v619
    %v2944 = vunpack.c.h.b16 %v619
    %v2945 = vunpack.c.l.b16 %v620
    %v2946 = vunpack.c.h.b16 %v620
    %v2947 = vunpack.c.l.b16 %v621
    %v2948 = vunpack.c.h.b16 %v621
    %v2949 = vunpack.c.l.b16 %v622
    %v2950 = vunpack.c.h.b16 %v622
    %v2951 = vunpack.c.l.b16 %v623
    %v2952 = vunpack.c.h.b16 %v623
    %v2953 = vunpack.c.l.b16 %v624
    %v2954 = vunpack.c.h.b16 %v624
    %v2955 = vunpack.c.l.b16 %v625
    %v2956 = vunpack.c.h.b16 %v625
    %v2957 = vunpack.c.l.b16 %v626
    %v2958 = vunpack.c.h.b16 %v626
    %v2959 = vunpack.c.l.b16 %v627
    %v2960 = vunpack.c.h.b16 %v627
    %v2961 = vunpack.c.l.b16 %v628
    %v2962 = vunpack.c.h.b16 %v628
    %v2963 = vunpack.c.l.b16 %v629
    %v2964 = vunpack.c.h.b16 %v629
    %v2965 = vunpack.c.l.b16 %v630
    %v2966 = vunpack.c.h.b16 %v630
    %v2967 = vunpack.c.l.b16 %v631
    %v2968 = vunpack.c.h.b16 %v631
    %v2969 = vunpack.c.l.b16 %v632
    %v2970 = vunpack.c.h.b16 %v632
    %v2971 = vunpack.c.l.b16 %v633
    %v2972 = vunpack.c.h.b16 %v633
    %v2973 = vunpack.c.l.b16 %v634
    %v2974 = vunpack.c.h.b16 %v634
    %v2975 = vunpack.c.l.b16 %v635
    %v2976 = vunpack.c.h.b16 %v635
    %v2977 = vunpack.c.l.b16 %v636
    %v2978 = vunpack.c.h.b16 %v636
    %v2979 = vunpack.c.l.b16 %v637
    %v2980 = vunpack.c.h.b16 %v637
    %v2981 = vunpack.c.l.b16 %v638
    %v2982 = vunpack.c.h.b16 %v638
    %v2983 = vunpack.c.l.b16 %v639
    %v2984 = vunpack.c.h.b16 %v639
    %v2985 = vunpack.c.l.b16 %v640
    %v2986 = vunpack.c.h.b16 %v640
    %v2987 = vunpack.c.l.b16 %v641
    %v2988 = vunpack.c.h.b16 %v641
    %v2989 = vunpack.c.l.b16 %v642
    %v2990 = vunpack.c.h.b16 %v642
    %v2991 = vunpack.c.l.b16 %v643
    %v2992 = vunpack.c.h.b16 %v643
    %v2993 = vunpack.c.l.b16 %v644
    %v2994 = vunpack.c.h.b16 %v644
    %v2995 = vunpack.c.l.b16 %v645
    %v2996 = vunpack.c.h.b16 %v645
    %v2997 = vunpack.c.l.b16 %v646
    %v2998 = vunpack.c.h.b16 %v646
    %v2999 = vunpack.c.l.b16 %v647
    %v3000 = vunpack.c.h.b16 %v647
    %v3001 = vunpack.c.l.b16 %v648
    %v3002 = vunpack.c.h.b16 %v648
    %v3003 = vunpack.c.l.b16 %v649
    %v3004 = vunpack.c.h.b16 %v649
    %v3005 = vunpack.c.l.b16 %v650
    %v3006 = vunpack.c.h.b16 %v650
    %v3007 = vunpack.c.l.b16 %v651
    %v3008 = vunpack.c.h.b16 %v651
    %v3009 = vunpack.c.l.b16 %v652
    %v3010 = vunpack.c.h.b16 %v652
    %v3011 = vunpack.c.l.b16 %v653
    %v3012 = vunpack.c.h.b16 %v653
    %v3013 = vunpack.c.l.b16 %v654
    %v3014 = vunpack.c.h.b16 %v654
    %v3015 = vunpack.c.l.b16 %v655
    %v3016 = vunpack.c.h.b16 %v655
    %v3017 = vunpack.c.l.b16 %v656
    %v3018 = vunpack.c.h.b16 %v656
    %v3019 = vunpack.c.l.b16 %v657
    %v3020 = vunpack.c.h.b16 %v657
    %v3021 = vunpack.c.l.b16 %v658
    %v3022 = vunpack.c.h.b16 %v658
    %v3023 = vunpack.c.l.b16 %v659
    %v3024 = vunpack.c.h.b16 %v659
    %v3025 = vunpack.c.l.b16 %v660
    %v3026 = vunpack.c.h.b16 %v660
    %v3027 = vunpack.c.l.b16 %v661
    %v3028 = vunpack.c.h.b16 %v661
    %v3029 = vunpack.c.l.b16 %v662
    %v3030 = vunpack.c.h.b16 %v662
    %v3031 = vunpack.c.l.b16 %v663
    %v3032 = vunpack.c.h.b16 %v663
    %v3033 = vunpack.c.l.b16 %v664
    %v3034 = vunpack.c.h.b16 %v664
    %v3035 = vunpack.c.l.b16 %v665
    %v3036 = vunpack.c.h.b16 %v665
    %v3037 = vunpack.c.l.b16 %v666
    %v3038 = vunpack.c.h.b16 %v666
    %v3039 = vunpack.c.l.b16 %v667
    %v3040 = vunpack.c.h.b16 %v667
    %v3041 = vunpack.c.l.b16 %v668
    %v3042 = vunpack.c.h.b16 %v668
    %v3043 = vunpack.c.l.b16 %v669
    %v3044 = vunpack.c.h.b16 %v669
    %v3045 = vunpack.c.l.b16 %v670
    %v3046 = vunpack.c.h.b16 %v670
    %v3047 = vunpack.c.l.b16 %v671
    %v3048 = vunpack.c.h.b16 %v671
    %v3049 = vunpack.c.l.b16 %v672
    %v3050 = vunpack.c.h.b16 %v672
    %v3051 = vunpack.c.l.b16 %v673
    %v3052 = vunpack.c.h.b16 %v673
    %v3053 = vunpack.c.l.b16 %v674
    %v3054 = vunpack.c.h.b16 %v674
    %v3055 = vunpack.c.l.b16 %v675
    %v3056 = vunpack.c.h.b16 %v675
    %v3057 = vunpack.c.l.b16 %v676
    %v3058 = vunpack.c.h.b16 %v676
    %v3059 = vunpack.c.l.b16 %v677
    %v3060 = vunpack.c.h.b16 %v677
    %v3061 = vunpack.c.l.b16 %v678
    %v3062 = vunpack.c.h.b16 %v678
    %v3063 = vunpack.c.l.b16 %v679
    %v3064 = vunpack.c.h.b16 %v679
    %v3065 = vunpack.c.l.b16 %v680
    %v3066 = vunpack.c.h.b16 %v680
    %v3067 = vunpack.c.l.b16 %v681
    %v3068 = vunpack.c.h.b16 %v681
    %v3069 = vunpack.c.l.b16 %v682
    %v3070 = vunpack.c.h.b16 %v682
    %v3071 = vunpack.c.l.b16 %v683
    %v3072 = vunpack.c.h.b16 %v683
    %v3073 = vunpack.c.l.b16 %v684
    %v3074 = vunpack.c.h.b16 %v684
    %v3075 = vunpack.c.l.b16 %v685
    %v3076 = vunpack.c.h.b16 %v685
    %v3077 = vunpack.c.l.b16 %v686
    %v3078 = vunpack.c.h.b16 %v686
    %v3079 = vunpack.c.l.b16 %v687
    %v3080 = vunpack.c.h.b16 %v687
    %v3081 = vunpack.c.l.b16 %v688
    %v3082 = vunpack.c.h.b16 %v688
    %v3083 = vunpack.c.l.b16 %v689
    %v3084 = vunpack.c.h.b16 %v689
    %v3085 = vunpack.c.l.b16 %v690
    %v3086 = vunpack.c.h.b16 %v690
    %v3087 = vunpack.c.l.b16 %v691
    %v3088 = vunpack.c.h.b16 %v691
    %v3089 = vunpack.c.l.b16 %v692
    %v3090 = vunpack.c.h.b16 %v692
    %v3091 = vunpack.c.l.b16 %v693
    %v3092 = vunpack.c.h.b16 %v693
    %v3093 = vunpack.c.l.b16 %v694
    %v3094 = vunpack.c.h.b16 %v694
    %v3095 = vunpack.c.l.b16 %v695
    %v3096 = vunpack.c.h.b16 %v695
    %v3097 = vunpack.c.l.b16 %v696
    %v3098 = vunpack.c.h.b16 %v696
    %v3099 = vunpack.c.l.b16 %v697
    %v3100 = vunpack.c.h.b16 %v697
    %v3101 = vunpack.c.l.b16 %v698
    %v3102 = vunpack.c.h.b16 %v698
    %v3103 = vunpack.c.l.b16 %v699
    %v3104 = vunpack.c.h.b16 %v699
    %v3105 = vunpack.c.l.b16 %v700
    %v3106 = vunpack.c.h.b16 %v700
    %v3107 = vunpack.c.l.b16 %v701
    %v3108 = vunpack.c.h.b16 %v701
    %v3109 = vunpack.c.l.b16 %v702
    %v3110 = vunpack.c.h.b16 %v702
    %v3111 = vunpack.c.l.b16 %v703
    %v3112 = vunpack.c.h.b16 %v703
    %v3113 = vunpack.c.l.b16 %v704
    %v3114 = vunpack.c.h.b16 %v704
    %v3115 = vunpack.c.l.b16 %v705
    %v3116 = vunpack.c.h.b16 %v705
    %v3117 = vunpack.c.l.b16 %v706
    %v3118 = vunpack.c.h.b16 %v706
    %v3119 = vunpack.c.l.b16 %v707
    %v3120 = vunpack.c.h.b16 %v707
    %v3121 = vunpack.c.l.b16 %v708
    %v3122 = vunpack.c.h.b16 %v708
    %v3123 = vunpack.c.l.b16 %v709
    %v3124 = vunpack.c.h.b16 %v709
    %v3125 = vunpack.c.l.b16 %v710
    %v3126 = vunpack.c.h.b16 %v710
    %v3127 = vunpack.c.l.b16 %v711
    %v3128 = vunpack.c.h.b16 %v711
    %v3129 = vunpack.c.l.b16 %v712
    %v3130 = vunpack.c.h.b16 %v712
    %v3131 = vunpack.c.l.b16 %v713
    %v3132 = vunpack.c.h.b16 %v713
    %v3133 = vunpack.c.l.b16 %v714
    %v3134 = vunpack.c.h.b16 %v714
    %v3135 = vunpack.c.l.b16 %v715
    %v3136 = vunpack.c.h.b16 %v715
    %v3137 = vunpack.c.l.b16 %v716
    %v3138 = vunpack.c.h.b16 %v716
    %v3139 = vunpack.c.l.b16 %v717
    %v3140 = vunpack.c.h.b16 %v717
    %v3141 = vunpack.c.l.b16 %v718
    %v3142 = vunpack.c.h.b16 %v718
    %v3143 = vunpack.c.l.b16 %v719
    %v3144 = vunpack.c.h.b16 %v719
    %v3145 = vunpack.c.l.b16 %v720
    %v3146 = vunpack.c.h.b16 %v720
    %v3147 = vunpack.c.l.b16 %v721
    %v3148 = vunpack.c.h.b16 %v721
    %v3149 = vunpack.c.l.b16 %v722
    %v3150 = vunpack.c.h.b16 %v722
    %v3151 = vunpack.c.l.b16 %v723
    %v3152 = vunpack.c.h.b16 %v723
    %v3153 = vunpack.c.l.b16 %v724
    %v3154 = vunpack.c.h.b16 %v724
    %v3155 = vunpack.c.l.b16 %v725
    %v3156 = vunpack.c.h.b16 %v725
    %v3157 = vunpack.c.l.b16 %v726
    %v3158 = vunpack.c.h.b16 %v726
    %v3159 = vunpack.c.l.b16 %v727
    %v3160 = vunpack.c.h.b16 %v727
    %v3161 = vunpack.c.l.b16 %v728
    %v3162 = vunpack.c.h.b16 %v728
    %v3163 = vunpack.c.l.b16 %v729
    %v3164 = vunpack.c.h.b16 %v729
    %v3165 = vunpack.c.l.b16 %v730
    %v3166 = vunpack.c.h.b16 %v730
    %v3167 = vunpack.c.l.b16 %v731
    %v3168 = vunpack.c.h.b16 %v731
    %v3169 = vunpack.c.l.b16 %v732
    %v3170 = vunpack.c.h.b16 %v732
    %v3171 = vunpack.c.l.b16 %v733
    %v3172 = vunpack.c.h.b16 %v733
    %v3173 = vunpack.c.l.b16 %v734
    %v3174 = vunpack.c.h.b16 %v734
    %v3175 = vunpack.c.l.b16 %v735
    %v3176 = vunpack.c.h.b16 %v735
    %v3177 = vunpack.c.l.b16 %v736
    %v3178 = vunpack.c.h.b16 %v736
    %v3179 = vunpack.c.l.b16 %v737
    %v3180 = vunpack.c.h.b16 %v737
    %v3181 = vunpack.c.l.b16 %v738
    %v3182 = vunpack.c.h.b16 %v738
    %v3183 = vunpack.c.l.b16 %v739
    %v3184 = vunpack.c.h.b16 %v739
    %v3185 = vunpack.c.l.b16 %v740
    %v3186 = vunpack.c.h.b16 %v740
    %v3187 = vunpack.c.l.b16 %v741
    %v3188 = vunpack.c.h.b16 %v741
    %v3189 = vunpack.c.l.b16 %v742
    %v3190 = vunpack.c.h.b16 %v742
    %v3191 = vunpack.c.l.b16 %v743
    %v3192 = vunpack.c.h.b16 %v743
    %v3193 = vunpack.c.l.b16 %v744
    %v3194 = vunpack.c.h.b16 %v744
    %v3195 = vunpack.c.l.b16 %v745
    %v3196 = vunpack.c.h.b16 %v745
    %v3197 = vunpack.c.l.b16 %v746
    %v3198 = vunpack.c.h.b16 %v746
    %v3199 = vunpack.c.l.b16 %v747
    %v3200 = vunpack.c.h.b16 %v747
    %v3201 = vunpack.c.l.b16 %v748
    %v3202 = vunpack.c.h.b16 %v748
    %v3203 = vunpack.c.l.b16 %v749
    %v3204 = vunpack.c.h.b16 %v749
    %v3205 = vunpack.c.l.b16 %v750
    %v3206 = vunpack.c.h.b16 %v750
    %v3207 = vunpack.c.l.b16 %v751
    %v3208 = vunpack.c.h.b16 %v751
    %v3209 = vunpack.c.l.b16 %v752
    %v3210 = vunpack.c.h.b16 %v752
    %v3211 = vunpack.c.l.b16 %v753
    %v3212 = vunpack.c.h.b16 %v753
    %v3213 = vunpack.c.l.b16 %v754
    %v3214 = vunpack.c.h.b16 %v754
    %v3215 = vunpack.c.l.b16 %v755
    %v3216 = vunpack.c.h.b16 %v755
    %v3217 = vunpack.c.l.b16 %v756
    %v3218 = vunpack.c.h.b16 %v756
    %v3219 = vunpack.c.l.b16 %v757
    %v3220 = vunpack.c.h.b16 %v757
    %v3221 = vunpack.c.l.b16 %v758
    %v3222 = vunpack.c.h.b16 %v758
    %v3223 = vunpack.c.l.b16 %v759
    %v3224 = vunpack.c.h.b16 %v759
    %v3225 = vunpack.c.l.b16 %v760
    %v3226 = vunpack.c.h.b16 %v760
    %v3227 = vunpack.c.l.b16 %v761
    %v3228 = vunpack.c.h.b16 %v761
    %v3229 = vunpack.c.l.b16 %v762
    %v3230 = vunpack.c.h.b16 %v762
    %v3231 = vunpack.c.l.b16 %v763
    %v3232 = vunpack.c.h.b16 %v763
    %v3233 = vunpack.c.l.b16 %v764
    %v3234 = vunpack.c.h.b16 %v764
    %v3235 = vunpack.c.l.b16 %v765
    %v3236 = vunpack.c.h.b16 %v765
    %v3237 = vunpack.c.l.b16 %v766
    %v3238 = vunpack.c.h.b16 %v766
    %v3239 = vunpack.c.l.b16 %v767
    %v3240 = vunpack.c.h.b16 %v767
    %v3241 = vunpack.c.l.b16 %v768
    %v3242 = vunpack.c.h.b16 %v768
    %v3243 = vunpack.c.l.b16 %v769
    %v3244 = vunpack.c.h.b16 %v769
    %v3245 = vunpack.c.l.b16 %v770
    %v3246 = vunpack.c.h.b16 %v770
    %v3247 = vunpack.c.l.b16 %v771
    %v3248 = vunpack.c.h.b16 %v771
    %v3249 = vunpack.c.l.b16 %v772
    %v3250 = vunpack.c.h.b16 %v772
    %v3251 = vunpack.c.l.b16 %v773
    %v3252 = vunpack.c.h.b16 %v773
    %v3253 = vunpack.c.l.b16 %v774
    %v3254 = vunpack.c.h.b16 %v774
    %v3255 = vunpack.c.l.b16 %v775
    %v3256 = vunpack.c.h.b16 %v775
    %v3257 = vunpack.c.l.b16 %v776
    %v3258 = vunpack.c.h.b16 %v776
    %v3259 = vunpack.c.l.b16 %v777
    %v3260 = vunpack.c.h.b16 %v777
    %v3261 = vunpack.c.l.b16 %v778
    %v3262 = vunpack.c.h.b16 %v778
    %v3263 = vunpack.c.l.b16 %v779
    %v3264 = vunpack.c.h.b16 %v779
    %v3265 = vunpack.c.l.b16 %v780
    %v3266 = vunpack.c.h.b16 %v780
    %v3267 = vunpack.c.l.b16 %v781
    %v3268 = vunpack.c.h.b16 %v781
    %v3269 = vunpack.c.l.b16 %v782
    %v3270 = vunpack.c.h.b16 %v782
    %v3271 = vunpack.c.l.b16 %v783
    %v3272 = vunpack.c.h.b16 %v783
    %v3273 = vunpack.c.l.b16 %v784
    %v3274 = vunpack.c.h.b16 %v784
    %v3275 = vunpack.c.l.b16 %v785
    %v3276 = vunpack.c.h.b16 %v785
    %v3277 = vunpack.c.l.b16 %v786
    %v3278 = vunpack.c.h.b16 %v786
    %v3279 = vunpack.c.l.b16 %v787
    %v3280 = vunpack.c.h.b16 %v787
    %v3281 = vunpack.c.l.b16 %v788
    %v3282 = vunpack.c.h.b16 %v788
    %v3283 = vunpack.c.l.b16 %v789
    %v3284 = vunpack.c.h.b16 %v789
    %v3285 = vunpack.c.l.b16 %v790
    %v3286 = vunpack.c.h.b16 %v790
    %v3287 = vunpack.c.l.b16 %v791
    %v3288 = vunpack.c.h.b16 %v791
    %v3289 = vunpack.c.l.b16 %v792
    %v3290 = vunpack.c.h.b16 %v792
    %v3291 = vunpack.c.l.b16 %v793
    %v3292 = vunpack.c.h.b16 %v793
    %v3293 = vunpack.c.l.b16 %v794
    %v3294 = vunpack.c.h.b16 %v794
    %v3295 = vunpack.c.l.b16 %v795
    %v3296 = vunpack.c.h.b16 %v795
    %v3297 = vunpack.c.l.b16 %v796
    %v3298 = vunpack.c.h.b16 %v796
    %v3299 = vunpack.c.l.b16 %v797
    %v3300 = vunpack.c.h.b16 %v797
    %v3301 = vunpack.c.l.b16 %v798
    %v3302 = vunpack.c.h.b16 %v798
    %v3303 = vunpack.c.l.b16 %v799
    %v3304 = vunpack.c.h.b16 %v799
    %v3305 = vunpack.c.l.b16 %v800
    %v3306 = vunpack.c.h.b16 %v800
    %v3307 = vunpack.c.l.b16 %v801
    %v3308 = vunpack.c.h.b16 %v801
    %v3309 = vunpack.c.l.b16 %v802
    %v3310 = vunpack.c.h.b16 %v802
    %v3311 = vunpack.c.l.b16 %v803
    %v3312 = vunpack.c.h.b16 %v803
    %v3313 = vunpack.c.l.b16 %v804
    %v3314 = vunpack.c.h.b16 %v804
    %v3315 = vunpack.c.l.b16 %v805
    %v3316 = vunpack.c.h.b16 %v805
    %v3317 = vunpack.c.l.b16 %v806
    %v3318 = vunpack.c.h.b16 %v806
    %v3319 = vunpack.c.l.b16 %v807
    %v3320 = vunpack.c.h.b16 %v807
    %v3321 = vunpack.c.l.b16 %v808
    %v3322 = vunpack.c.h.b16 %v808
    %v3323 = vunpack.c.l.b16 %v809
    %v3324 = vunpack.c.h.b16 %v809
    %v3325 = vunpack.c.l.b16 %v810
    %v3326 = vunpack.c.h.b16 %v810
    %v3327 = vunpack.c.l.b16 %v811
    %v3328 = vunpack.c.h.b16 %v811
    %v3329 = vunpack.c.l.b16 %v812
    %v3330 = vunpack.c.h.b16 %v812
    %v3331 = vunpack.c.l.b16 %v813
    %v3332 = vunpack.c.h.b16 %v813
    %v3333 = vunpack.c.l.b16 %v814
    %v3334 = vunpack.c.h.b16 %v814
    %v3335 = vunpack.c.l.b16 %v815
    %v3336 = vunpack.c.h.b16 %v815
    %v3337 = vunpack.c.l.b16 %v816
    %v3338 = vunpack.c.h.b16 %v816
    %v3339 = vunpack.c.l.b16 %v817
    %v3340 = vunpack.c.h.b16 %v817
    %v3341 = vunpack.c.l.b16 %v818
    %v3342 = vunpack.c.h.b16 %v818
    %v3343 = vunpack.c.l.b16 %v819
    %v3344 = vunpack.c.h.b16 %v819
    %v3345 = vunpack.c.l.b16 %v820
    %v3346 = vunpack.c.h.b16 %v820
    %v3347 = vunpack.c.l.b16 %v821
    %v3348 = vunpack.c.h.b16 %v821
    %v3349 = vunpack.c.l.b16 %v822
    %v3350 = vunpack.c.h.b16 %v822
    %v3351 = vunpack.c.l.b16 %v823
    %v3352 = vunpack.c.h.b16 %v823
    %v3353 = vunpack.c.l.b16 %v824
    %v3354 = vunpack.c.h.b16 %v824
    %v3355 = vunpack.c.l.b16 %v825
    %v3356 = vunpack.c.h.b16 %v825
    %v3357 = vunpack.c.l.b16 %v826
    %v3358 = vunpack.c.h.b16 %v826
    %v3359 = vunpack.c.l.b16 %v827
    %v3360 = vunpack.c.h.b16 %v827
    %v3361 = vunpack.c.l.b16 %v828
    %v3362 = vunpack.c.h.b16 %v828
    %v3363 = vunpack.c.l.b16 %v829
    %v3364 = vunpack.c.h.b16 %v829
    %v3365 = vunpack.c.l.b16 %v830
    %v3366 = vunpack.c.h.b16 %v830
    %v3367 = vunpack.c.l.b16 %v831
    %v3368 = vunpack.c.h.b16 %v831
    %v3369 = vunpack.c.l.b16 %v832
    %v3370 = vunpack.c.h.b16 %v832
    %v3371 = vunpack.c.l.b16 %v833
    %v3372 = vunpack.c.h.b16 %v833
    %v3373 = vunpack.c.l.b16 %v834
    %v3374 = vunpack.c.h.b16 %v834
    %v3375 = vunpack.c.l.b16 %v835
    %v3376 = vunpack.c.h.b16 %v835
    %v3377 = vunpack.c.l.b16 %v836
    %v3378 = vunpack.c.h.b16 %v836
    %v3379 = vunpack.c.l.b16 %v837
    %v3380 = vunpack.c.h.b16 %v837
    %v3381 = vunpack.c.l.b16 %v838
    %v3382 = vunpack.c.h.b16 %v838
    %v3383 = vunpack.c.l.b16 %v839
    %v3384 = vunpack.c.h.b16 %v839
    %v3385 = vunpack.c.l.b16 %v840
    %v3386 = vunpack.c.h.b16 %v840
    %v3387 = vunpack.c.l.b16 %v841
    %v3388 = vunpack.c.h.b16 %v841
    %v3389 = vunpack.c.l.b16 %v842
    %v3390 = vunpack.c.h.b16 %v842
    %v3391 = vunpack.c.l.b16 %v843
    %v3392 = vunpack.c.h.b16 %v843
    %v3393 = vunpack.c.l.b16 %v844
    %v3394 = vunpack.c.h.b16 %v844
    %v3395 = vunpack.c.l.b16 %v845
    %v3396 = vunpack.c.h.b16 %v845
    %v3397 = vunpack.c.l.b16 %v846
    %v3398 = vunpack.c.h.b16 %v846
    %v3399 = vunpack.c.l.b16 %v847
    %v3400 = vunpack.c.h.b16 %v847
    %v3401 = vunpack.c.l.b16 %v848
    %v3402 = vunpack.c.h.b16 %v848
    %v3403 = vunpack.c.l.b16 %v849
    %v3404 = vunpack.c.h.b16 %v849
    %v3405 = vunpack.c.l.b16 %v850
    %v3406 = vunpack.c.h.b16 %v850
    %v3407 = vunpack.c.l.b16 %v851
    %v3408 = vunpack.c.h.b16 %v851
    %v3409 = vunpack.c.l.b16 %v852
    %v3410 = vunpack.c.h.b16 %v852
    %v3411 = vunpack.c.l.b16 %v853
    %v3412 = vunpack.c.h.b16 %v853
    %v3413 = vunpack.c.l.b16 %v854
    %v3414 = vunpack.c.h.b16 %v854
    %v3415 = vunpack.c.l.b16 %v855
    %v3416 = vunpack.c.h.b16 %v855
    %v3417 = vunpack.c.l.b16 %v856
    %v3418 = vunpack.c.h.b16 %v856
    %v3419 = vunpack.c.l.b16 %v857
    %v3420 = vunpack.c.h.b16 %v857
    %v3421 = vunpack.c.l.b16 %v858
    %v3422 = vunpack.c.h.b16 %v858
    %v3423 = vunpack.c.l.b16 %v859
    %v3424 = vunpack.c.h.b16 %v859
    %v3425 = vunpack.c.l.b16 %v860
    %v3426 = vunpack.c.h.b16 %v860
    %v3427 = vunpack.c.l.b16 %v861
    %v3428 = vunpack.c.h.b16 %v861
    %v3429 = vunpack.c.l.b16 %v862
    %v3430 = vunpack.c.h.b16 %v862
    %v3431 = vunpack.c.l.b16 %v863
    %v3432 = vunpack.c.h.b16 %v863
    %v3433 = vunpack.c.l.b16 %v864
    %v3434 = vunpack.c.h.b16 %v864
    %v3435 = vunpack.c.l.b16 %v865
    %v3436 = vunpack.c.h.b16 %v865
    %v3437 = vunpack.c.l.b16 %v866
    %v3438 = vunpack.c.h.b16 %v866
    %v3439 = vunpack.c.l.b16 %v867
    %v3440 = vunpack.c.h.b16 %v867
    %v3441 = vunpack.c.l.b16 %v868
    %v3442 = vunpack.c.h.b16 %v868
    %v3443 = vunpack.c.l.b16 %v869
    %v3444 = vunpack.c.h.b16 %v869
    %v3445 = vunpack.c.l.b16 %v870
    %v3446 = vunpack.c.h.b16 %v870
    %v3447 = vunpack.c.l.b16 %v871
    %v3448 = vunpack.c.h.b16 %v871
    %v3449 = vunpack.c.l.b16 %v872
    %v3450 = vunpack.c.h.b16 %v872
    %v3451 = vunpack.c.l.b16 %v873
    %v3452 = vunpack.c.h.b16 %v873
    %v3453 = vunpack.c.l.b16 %v874
    %v3454 = vunpack.c.h.b16 %v874
    %v3455 = vunpack.c.l.b16 %v875
    %v3456 = vunpack.c.h.b16 %v875
    %v3457 = vunpack.c.l.b16 %v876
    %v3458 = vunpack.c.h.b16 %v876
    %v3459 = vunpack.c.l.b16 %v877
    %v3460 = vunpack.c.h.b16 %v877
    %v3461 = vunpack.c.l.b16 %v878
    %v3462 = vunpack.c.h.b16 %v878
    %v3463 = vunpack.c.l.b16 %v879
    %v3464 = vunpack.c.h.b16 %v879
    %v3465 = vunpack.c.l.b16 %v880
    %v3466 = vunpack.c.h.b16 %v880
    %v3467 = vunpack.c.l.b16 %v881
    %v3468 = vunpack.c.h.b16 %v881
    %v3469 = vunpack.c.l.b16 %v882
    %v3470 = vunpack.c.h.b16 %v882
    %v3471 = vunpack.c.l.b16 %v883
    %v3472 = vunpack.c.h.b16 %v883
    %v3473 = vunpack.c.l.b16 %v884
    %v3474 = vunpack.c.h.b16 %v884
    %v3475 = vunpack.c.l.b16 %v885
    %v3476 = vunpack.c.h.b16 %v885
    %v3477 = vunpack.c.l.b16 %v886
    %v3478 = vunpack.c.h.b16 %v886
    %v3479 = vunpack.c.l.b16 %v887
    %v3480 = vunpack.c.h.b16 %v887
    %v3481 = vunpack.c.l.b16 %v888
    %v3482 = vunpack.c.h.b16 %v888
    %v3483 = vunpack.c.l.b16 %v889
    %v3484 = vunpack.c.h.b16 %v889
    %v3485 = vunpack.c.l.b16 %v890
    %v3486 = vunpack.c.h.b16 %v890
    %v3487 = vunpack.c.l.b16 %v891
    %v3488 = vunpack.c.h.b16 %v891
    %v3489 = vunpack.c.l.b16 %v892
    %v3490 = vunpack.c.h.b16 %v892
    %v3491 = vunpack.c.l.b16 %v893
    %v3492 = vunpack.c.h.b16 %v893
    %v3493 = vunpack.c.l.b16 %v894
    %v3494 = vunpack.c.h.b16 %v894
    %v3495 = vunpack.c.l.b16 %v895
    %v3496 = vunpack.c.h.b16 %v895
    %v3497 = vunpack.c.l.b16 %v896
    %v3498 = vunpack.c.h.b16 %v896
    %v3499 = vunpack.c.l.b16 %v897
    %v3500 = vunpack.c.h.b16 %v897
    %v3501 = vunpack.c.l.b16 %v898
    %v3502 = vunpack.c.h.b16 %v898
    %v3503 = vunpack.c.l.b16 %v899
    %v3504 = vunpack.c.h.b16 %v899
    %v3505 = vunpack.c.l.b16 %v900
    %v3506 = vunpack.c.h.b16 %v900
    %v3507 = vunpack.c.l.b16 %v901
    %v3508 = vunpack.c.h.b16 %v901
    %v3509 = vunpack.c.l.b16 %v902
    %v3510 = vunpack.c.h.b16 %v902
    %v3511 = vunpack.c.l.b16 %v903
    %v3512 = vunpack.c.h.b16 %v903
    %v3513 = vunpack.c.l.b16 %v904
    %v3514 = vunpack.c.h.b16 %v904
    %v3515 = vunpack.c.l.b16 %v905
    %v3516 = vunpack.c.h.b16 %v905
    %v3517 = vunpack.c.l.b16 %v906
    %v3518 = vunpack.c.h.b16 %v906
    %v3519 = vunpack.c.l.b16 %v907
    %v3520 = vunpack.c.h.b16 %v907
    %v3521 = vunpack.c.l.b16 %v908
    %v3522 = vunpack.c.h.b16 %v908
    %v3523 = vunpack.c.l.b16 %v909
    %v3524 = vunpack.c.h.b16 %v909
    %v3525 = vunpack.c.l.b16 %v910
    %v3526 = vunpack.c.h.b16 %v910
    %v3527 = vunpack.c.l.b16 %v911
    %v3528 = vunpack.c.h.b16 %v911
    %v3529 = vunpack.c.l.b16 %v912
    %v3530 = vunpack.c.h.b16 %v912
    %v3531 = vunpack.c.l.b16 %v913
    %v3532 = vunpack.c.h.b16 %v913
    %v3533 = vunpack.c.l.b16 %v914
    %v3534 = vunpack.c.h.b16 %v914
    %v3535 = vunpack.c.l.b16 %v915
    %v3536 = vunpack.c.h.b16 %v915
    %v3537 = vunpack.c.l.b16 %v916
    %v3538 = vunpack.c.h.b16 %v916
    %v3539 = vunpack.c.l.b16 %v917
    %v3540 = vunpack.c.h.b16 %v917
    %v3541 = vunpack.c.l.b16 %v918
    %v3542 = vunpack.c.h.b16 %v918
    %v3543 = vunpack.c.l.b16 %v919
    %v3544 = vunpack.c.h.b16 %v919
    %v3545 = vunpack.c.l.b16 %v920
    %v3546 = vunpack.c.h.b16 %v920
    %v3547 = vunpack.c.l.b16 %v921
    %v3548 = vunpack.c.h.b16 %v921
    %v3549 = vunpack.c.l.b16 %v922
    %v3550 = vunpack.c.h.b16 %v922
    %v3551 = vunpack.c.l.b16 %v923
    %v3552 = vunpack.c.h.b16 %v923
    %v3553 = vunpack.c.l.b16 %v924
    %v3554 = vunpack.c.h.b16 %v924
    %v3555 = vunpack.c.l.b16 %v925
    %v3556 = vunpack.c.h.b16 %v925
    %v3557 = vunpack.c.l.b16 %v926
    %v3558 = vunpack.c.h.b16 %v926
    %v3559 = vunpack.c.l.b16 %v927
    %v3560 = vunpack.c.h.b16 %v927
    %v3561 = vunpack.c.l.b16 %v928
    %v3562 = vunpack.c.h.b16 %v928
    %v3563 = vunpack.c.l.b16 %v929
    %v3564 = vunpack.c.h.b16 %v929
    %v3565 = vunpack.c.l.b16 %v930
    %v3566 = vunpack.c.h.b16 %v930
    %v3567 = vunpack.c.l.b16 %v931
    %v3568 = vunpack.c.h.b16 %v931
    %v3569 = vunpack.c.l.b16 %v932
    %v3570 = vunpack.c.h.b16 %v932
    %v3571 = vunpack.c.l.b16 %v933
    %v3572 = vunpack.c.h.b16 %v933
    %v3573 = vunpack.c.l.b16 %v934
    %v3574 = vunpack.c.h.b16 %v934
    %v3575 = vunpack.c.l.b16 %v935
    %v3576 = vunpack.c.h.b16 %v935
    %v3577 = vunpack.c.l.b16 %v936
    %v3578 = vunpack.c.h.b16 %v936
    %v3579 = vunpack.c.l.b16 %v937
    %v3580 = vunpack.c.h.b16 %v937
    %v3581 = vunpack.c.l.b16 %v938
    %v3582 = vunpack.c.h.b16 %v938
    %v3583 = vunpack.c.l.b16 %v939
    %v3584 = vunpack.c.h.b16 %v939
    %v3585 = vunpack.c.l.b16 %v940
    %v3586 = vunpack.c.h.b16 %v940
    %v3587 = vunpack.c.l.b16 %v941
    %v3588 = vunpack.c.h.b16 %v941
    %v3589 = vunpack.c.l.b16 %v942
    %v3590 = vunpack.c.h.b16 %v942
    %v3591 = vunpack.c.l.b16 %v943
    %v3592 = vunpack.c.h.b16 %v943
    %v3593 = vunpack.c.l.b16 %v944
    %v3594 = vunpack.c.h.b16 %v944
    %v3595 = vunpack.c.l.b16 %v945
    %v3596 = vunpack.c.h.b16 %v945
    %v3597 = vunpack.c.l.b16 %v946
    %v3598 = vunpack.c.h.b16 %v946
    %v3599 = vunpack.c.l.b16 %v947
    %v3600 = vunpack.c.h.b16 %v947
    %v3601 = vunpack.c.l.b16 %v948
    %v3602 = vunpack.c.h.b16 %v948
    %v3603 = vunpack.c.l.b16 %v949
    %v3604 = vunpack.c.h.b16 %v949
    %v3605 = vunpack.c.l.b16 %v950
    %v3606 = vunpack.c.h.b16 %v950
    %v3607 = vunpack.c.l.b16 %v951
    %v3608 = vunpack.c.h.b16 %v951
    %v3609 = vunpack.c.l.b16 %v952
    %v3610 = vunpack.c.h.b16 %v952
    %v3611 = vunpack.c.l.b16 %v953
    %v3612 = vunpack.c.h.b16 %v953
    %v3613 = vunpack.c.l.b16 %v954
    %v3614 = vunpack.c.h.b16 %v954
    %v3615 = vunpack.c.l.b16 %v955
    %v3616 = vunpack.c.h.b16 %v955
    %v3617 = vunpack.c.l.b16 %v956
    %v3618 = vunpack.c.h.b16 %v956
    %v3619 = vunpack.c.l.b16 %v957
    %v3620 = vunpack.c.h.b16 %v957
    %v3621 = vunpack.c.l.b16 %v958
    %v3622 = vunpack.c.h.b16 %v958
    %v3623 = vunpack.c.l.b16 %v959
    %v3624 = vunpack.c.h.b16 %v959
    %v3625 = vunpack.c.l.b16 %v960
    %v3626 = vunpack.c.h.b16 %v960
    %v3627 = vunpack.c.l.b16 %v961
    %v3628 = vunpack.c.h.b16 %v961
    %v3629 = vunpack.c.l.b16 %v962
    %v3630 = vunpack.c.h.b16 %v962
    %v3631 = vunpack.c.l.b16 %v963
    %v3632 = vunpack.c.h.b16 %v963
    %v3633 = vunpack.c.l.b16 %v964
    %v3634 = vunpack.c.h.b16 %v964
    %v3635 = vunpack.c.l.b16 %v965
    %v3636 = vunpack.c.h.b16 %v965
    %v3637 = vunpack.c.l.b16 %v966
    %v3638 = vunpack.c.h.b16 %v966
    %v3639 = vunpack.c.l.b16 %v967
    %v3640 = vunpack.c.h.b16 %v967
    %v3641 = vunpack.c.l.b16 %v968
    %v3642 = vunpack.c.h.b16 %v968
    %v3643 = vunpack.c.l.b16 %v969
    %v3644 = vunpack.c.h.b16 %v969
    %v3645 = vunpack.c.l.b16 %v970
    %v3646 = vunpack.c.h.b16 %v970
    %v3647 = vunpack.c.l.b16 %v971
    %v3648 = vunpack.c.h.b16 %v971
    %v3649 = vunpack.c.l.b16 %v972
    %v3650 = vunpack.c.h.b16 %v972
    %v3651 = vunpack.c.l.b16 %v973
    %v3652 = vunpack.c.h.b16 %v973
    %v3653 = vunpack.c.l.b16 %v974
    %v3654 = vunpack.c.h.b16 %v974
    %v3655 = vunpack.c.l.b16 %v975
    %v3656 = vunpack.c.h.b16 %v975
    %v3657 = vunpack.c.l.b16 %v976
    %v3658 = vunpack.c.h.b16 %v976
    %v3659 = vunpack.c.l.b16 %v977
    %v3660 = vunpack.c.h.b16 %v977
    %v3661 = vunpack.c.l.b16 %v978
    %v3662 = vunpack.c.h.b16 %v978
    %v3663 = vunpack.c.l.b16 %v979
    %v3664 = vunpack.c.h.b16 %v979
    %v3665 = vunpack.c.l.b16 %v980
    %v3666 = vunpack.c.h.b16 %v980
    %v3667 = vunpack.c.l.b16 %v981
    %v3668 = vunpack.c.h.b16 %v981
    %v3669 = vunpack.c.l.b16 %v982
    %v3670 = vunpack.c.h.b16 %v982
    %v3671 = vunpack.c.l.b16 %v983
    %v3672 = vunpack.c.h.b16 %v983
    %v3673 = vunpack.c.l.b16 %v984
    %v3674 = vunpack.c.h.b16 %v984
    %v3675 = vunpack.c.l.b16 %v985
    %v3676 = vunpack.c.h.b16 %v985
    %v3677 = vunpack.c.l.b16 %v986
    %v3678 = vunpack.c.h.b16 %v986
    %v3679 = vunpack.c.l.b16 %v987
    %v3680 = vunpack.c.h.b16 %v987
    %v3681 = vunpack.c.l.b16 %v988
    %v3682 = vunpack.c.h.b16 %v988
    %v3683 = vunpack.c.l.b16 %v989
    %v3684 = vunpack.c.h.b16 %v989
    %v3685 = vunpack.c.l.b16 %v990
    %v3686 = vunpack.c.h.b16 %v990
    %v3687 = vunpack.c.l.b16 %v991
    %v3688 = vunpack.c.h.b16 %v991
    %v3689 = vunpack.c.l.b16 %v992
    %v3690 = vunpack.c.h.b16 %v992
    %v3691 = vunpack.c.l.b16 %v993
    %v3692 = vunpack.c.h.b16 %v993
    %v3693 = vunpack.c.l.b16 %v994
    %v3694 = vunpack.c.h.b16 %v994
    %v3695 = vunpack.c.l.b16 %v995
    %v3696 = vunpack.c.h.b16 %v995
    %v3697 = vunpack.c.l.b16 %v996
    %v3698 = vunpack.c.h.b16 %v996
    %v3699 = vunpack.c.l.b16 %v997
    %v3700 = vunpack.c.h.b16 %v997
    %v3701 = vunpack.c.l.b16 %v998
    %v3702 = vunpack.c.h.b16 %v998
    %v3703 = vunpack.c.l.b16 %v999
    %v3704 = vunpack.c.h.b16 %v999
    %v3705 = vunpack.c.l.b16 %v1000
    %v3706 = vunpack.c.h.b16 %v1000
    %v3707 = vunpack.c.l.b16 %v1001
    %v3708 = vunpack.c.h.b16 %v1001
    %v3709 = vunpack.c.l.b16 %v1002
    %v3710 = vunpack.c.h.b16 %v1002
    %v3711 = vunpack.c.l.b16 %v1003
    %v3712 = vunpack.c.h.b16 %v1003
    %v3713 = vunpack.c.l.b16 %v1004
    %v3714 = vunpack.c.h.b16 %v1004
    %v3715 = vunpack.c.l.b16 %v1005
    %v3716 = vunpack.c.h.b16 %v1005
    %v3717 = vunpack.c.l.b16 %v1006
    %v3718 = vunpack.c.h.b16 %v1006
    %v3719 = vunpack.c.l.b16 %v1007
    %v3720 = vunpack.c.h.b16 %v1007
    %v3721 = vunpack.c.l.b16 %v1008
    %v3722 = vunpack.c.h.b16 %v1008
    %v3723 = vunpack.c.l.b16 %v1009
    %v3724 = vunpack.c.h.b16 %v1009
    %v3725 = vunpack.c.l.b16 %v1010
    %v3726 = vunpack.c.h.b16 %v1010
    %v3727 = vunpack.c.l.b16 %v1011
    %v3728 = vunpack.c.h.b16 %v1011
    %v3729 = vunpack.c.l.b16 %v1012
    %v3730 = vunpack.c.h.b16 %v1012
    %v3731 = vunpack.c.l.b16 %v1013
    %v3732 = vunpack.c.h.b16 %v1013
    %v3733 = vunpack.c.l.b16 %v1014
    %v3734 = vunpack.c.h.b16 %v1014
    %v3735 = vunpack.c.l.b16 %v1015
    %v3736 = vunpack.c.h.b16 %v1015
    %v3737 = vunpack.c.l.b16 %v1016
    %v3738 = vunpack.c.h.b16 %v1016
    %v3739 = vunpack.c.l.b16 %v1017
    %v3740 = vunpack.c.h.b16 %v1017
    %v3741 = vunpack.c.l.b16 %v1018
    %v3742 = vunpack.c.h.b16 %v1018
    %v3743 = vunpack.c.l.b16 %v1019
    %v3744 = vunpack.c.h.b16 %v1019
    %v3745 = vunpack.c.l.b16 %v1020
    %v3746 = vunpack.c.h.b16 %v1020
    %v3747 = vunpack.c.l.b16 %v1021
    %v3748 = vunpack.c.h.b16 %v1021
    %v3749 = vunpack.c.l.b16 %v1022
    %v3750 = vunpack.c.h.b16 %v1022
    %v3751 = vunpack.c.l.b16 %v1023
    %v3752 = vunpack.c.h.b16 %v1023
    %v3753 = vunpack.c.l.b16 %v1024
    %v3754 = vunpack.c.h.b16 %v1024
    %v3755 = vunpack.c.l.b16 %v1025
    %v3756 = vunpack.c.h.b16 %v1025
    %v3757 = vunpack.c.l.b16 %v1026
    %v3758 = vunpack.c.h.b16 %v1026
    %v3759 = vunpack.c.l.b16 %v1027
    %v3760 = vunpack.c.h.b16 %v1027
    %v3761 = vunpack.c.l.b16 %v1028
    %v3762 = vunpack.c.h.b16 %v1028
    %v3763 = vunpack.c.l.b16 %v1029
    %v3764 = vunpack.c.h.b16 %v1029
    %v3765 = vunpack.c.l.b16 %v1030
    %v3766 = vunpack.c.h.b16 %v1030
    %v3767 = vunpack.c.l.b16 %v1031
    %v3768 = vunpack.c.h.b16 %v1031
    %v3769 = vunpack.c.l.b16 %v1032
    %v3770 = vunpack.c.h.b16 %v1032
    %v3771 = vunpack.c.l.b16 %v1033
    %v3772 = vunpack.c.h.b16 %v1033
    %v3773 = vunpack.c.l.b16 %v1034
    %v3774 = vunpack.c.h.b16 %v1034
    %v3775 = vunpack.c.l.b16 %v1035
    %v3776 = vunpack.c.h.b16 %v1035
    %v3777 = vunpack.c.l.b16 %v1036
    %v3778 = vunpack.c.h.b16 %v1036
    %v3779 = vunpack.c.l.b16 %v1037
    %v3780 = vunpack.c.h.b16 %v1037
    %v3781 = vunpack.c.l.b16 %v1038
    %v3782 = vunpack.c.h.b16 %v1038
    %v3783 = vunpack.c.l.b16 %v1039
    %v3784 = vunpack.c.h.b16 %v1039
    %v3785 = vunpack.c.l.b16 %v1040
    %v3786 = vunpack.c.h.b16 %v1040
    %v3787 = vunpack.c.l.b16 %v1041
    %v3788 = vunpack.c.h.b16 %v1041
    %v3789 = vunpack.c.l.b16 %v1042
    %v3790 = vunpack.c.h.b16 %v1042
    %v3791 = vunpack.c.l.b16 %v1043
    %v3792 = vunpack.c.h.b16 %v1043
    %v3793 = vunpack.c.l.b16 %v1044
    %v3794 = vunpack.c.h.b16 %v1044
    %v3795 = vunpack.c.l.b16 %v1045
    %v3796 = vunpack.c.h.b16 %v1045
    %v3797 = vunpack.c.l.b16 %v1046
    %v3798 = vunpack.c.h.b16 %v1046
    %v3799 = vunpack.c.l.b16 %v1047
    %v3800 = vunpack.c.h.b16 %v1047
    %v3801 = vunpack.c.l.b16 %v1048
    %v3802 = vunpack.c.h.b16 %v1048
    %v3803 = vunpack.c.l.b16 %v1049
    %v3804 = vunpack.c.h.b16 %v1049
    %v3805 = vunpack.c.l.b16 %v1050
    %v3806 = vunpack.c.h.b16 %v1050
    %v3807 = vunpack.c.l.b16 %v1051
    %v3808 = vunpack.c.h.b16 %v1051
    %v3809 = vunpack.c.l.b16 %v1052
    %v3810 = vunpack.c.h.b16 %v1052
    %v3811 = vunpack.c.l.b16 %v1053
    %v3812 = vunpack.c.h.b16 %v1053
    %v3813 = vunpack.c.l.b16 %v1054
    %v3814 = vunpack.c.h.b16 %v1054
    %v3815 = vunpack.c.l.b16 %v1055
    %v3816 = vunpack.c.h.b16 %v1055
    %v3817 = vunpack.c.l.b16 %v1056
    %v3818 = vunpack.c.h.b16 %v1056
    %v3819 = vunpack.c.l.b16 %v1057
    %v3820 = vunpack.c.h.b16 %v1057
    %v3821 = vunpack.c.l.b16 %v1058
    %v3822 = vunpack.c.h.b16 %v1058
    %v3823 = vunpack.c.l.b16 %v1059
    %v3824 = vunpack.c.h.b16 %v1059
    %v3825 = vunpack.c.l.b16 %v1060
    %v3826 = vunpack.c.h.b16 %v1060
    %v3827 = vunpack.c.l.b16 %v1061
    %v3828 = vunpack.c.h.b16 %v1061
    %v3829 = vunpack.c.l.b16 %v1062
    %v3830 = vunpack.c.h.b16 %v1062
    %v3831 = vunpack.c.l.b16 %v1063
    %v3832 = vunpack.c.h.b16 %v1063
    %v3833 = vunpack.c.l.b16 %v1064
    %v3834 = vunpack.c.h.b16 %v1064
    %v3835 = vunpack.c.l.b16 %v1065
    %v3836 = vunpack.c.h.b16 %v1065
    %v3837 = vunpack.c.l.b16 %v1066
    %v3838 = vunpack.c.h.b16 %v1066
    %v3839 = vunpack.c.l.b16 %v1067
    %v3840 = vunpack.c.h.b16 %v1067
    %v3841 = vunpack.c.l.b16 %v1068
    %v3842 = vunpack.c.h.b16 %v1068
    %v3843 = vunpack.c.l.b16 %v1069
    %v3844 = vunpack.c.h.b16 %v1069
    %v3845 = vunpack.c.l.b16 %v1070
    %v3846 = vunpack.c.h.b16 %v1070
    %v3847 = vunpack.c.l.b16 %v1071
    %v3848 = vunpack.c.h.b16 %v1071
    %v3849 = vunpack.c.l.b16 %v1072
    %v3850 = vunpack.c.h.b16 %v1072
    %v3851 = vunpack.c.l.b16 %v1073
    %v3852 = vunpack.c.h.b16 %v1073
    %v3853 = vunpack.c.l.b16 %v1074
    %v3854 = vunpack.c.h.b16 %v1074
    %v3855 = vunpack.c.l.b16 %v1075
    %v3856 = vunpack.c.h.b16 %v1075
    %v3857 = vunpack.c.l.b16 %v1076
    %v3858 = vunpack.c.h.b16 %v1076
    %v3859 = vunpack.c.l.b16 %v1077
    %v3860 = vunpack.c.h.b16 %v1077
    %v3861 = vunpack.c.l.b16 %v1078
    %v3862 = vunpack.c.h.b16 %v1078
    %v3863 = vunpack.c.l.b16 %v1079
    %v3864 = vunpack.c.h.b16 %v1079
    %v3865 = vunpack.c.l.b16 %v1080
    %v3866 = vunpack.c.h.b16 %v1080
    %v3867 = vunpack.c.l.b16 %v1081
    %v3868 = vunpack.c.h.b16 %v1081
    %v3869 = vunpack.c.l.b16 %v1082
    %v3870 = vunpack.c.h.b16 %v1082
    %v3871 = vunpack.c.l.b16 %v1083
    %v3872 = vunpack.c.h.b16 %v1083
    %v3873 = vunpack.c.l.b16 %v1084
    %v3874 = vunpack.c.h.b16 %v1084
    %v3875 = vunpack.c.l.b16 %v1085
    %v3876 = vunpack.c.h.b16 %v1085
    %v3877 = vunpack.c.l.b16 %v1086
    %v3878 = vunpack.c.h.b16 %v1086
    %v3879 = vunpack.c.l.b16 %v1087
    %v3880 = vunpack.c.h.b16 %v1087
    %v3881 = vunpack.c.l.b16 %v1088
    %v3882 = vunpack.c.h.b16 %v1088
    %v3883 = vunpack.c.l.b16 %v1089
    %v3884 = vunpack.c.h.b16 %v1089
    %v3885 = vunpack.c.l.b16 %v1090
    %v3886 = vunpack.c.h.b16 %v1090
    %v3887 = vunpack.c.l.b16 %v1091
    %v3888 = vunpack.c.h.b16 %v1091
    %v3889 = vunpack.c.l.b16 %v1092
    %v3890 = vunpack.c.h.b16 %v1092
    %v3891 = vunpack.c.l.b16 %v1093
    %v3892 = vunpack.c.h.b16 %v1093
    %v3893 = vunpack.c.l.b16 %v1094
    %v3894 = vunpack.c.h.b16 %v1094
    %v3895 = vunpack.c.l.b16 %v1095
    %v3896 = vunpack.c.h.b16 %v1095
    %v3897 = vunpack.c.l.b16 %v1096
    %v3898 = vunpack.c.h.b16 %v1096
    %v3899 = vunpack.c.l.b16 %v1097
    %v3900 = vunpack.c.h.b16 %v1097
    %v3901 = vunpack.c.l.b16 %v1098
    %v3902 = vunpack.c.h.b16 %v1098
    %v3903 = vunpack.c.l.b16 %v1099
    %v3904 = vunpack.c.h.b16 %v1099
    %v3905 = vunpack.c.l.b16 %v1100
    %v3906 = vunpack.c.h.b16 %v1100
    %v3907 = vunpack.c.l.b16 %v1101
    %v3908 = vunpack.c.h.b16 %v1101
    %v3909 = vunpack.c.l.b16 %v1102
    %v3910 = vunpack.c.h.b16 %v1102
    %v3911 = vunpack.c.l.b16 %v1103
    %v3912 = vunpack.c.h.b16 %v1103
    %v3913 = vunpack.c.l.b16 %v1104
    %v3914 = vunpack.c.h.b16 %v1104
    %v3915 = vunpack.c.l.b16 %v1105
    %v3916 = vunpack.c.h.b16 %v1105
    %v3917 = vunpack.c.l.b16 %v1106
    %v3918 = vunpack.c.h.b16 %v1106
    %v3919 = vunpack.c.l.b16 %v1107
    %v3920 = vunpack.c.h.b16 %v1107
    %v3921 = vunpack.c.l.b16 %v1108
    %v3922 = vunpack.c.h.b16 %v1108
    %v3923 = vunpack.c.l.b16 %v1109
    %v3924 = vunpack.c.h.b16 %v1109
    %v3925 = vunpack.c.l.b16 %v1110
    %v3926 = vunpack.c.h.b16 %v1110
    %v3927 = vunpack.c.l.b16 %v1111
    %v3928 = vunpack.c.h.b16 %v1111
    %v3929 = vunpack.c.l.b16 %v1112
    %v3930 = vunpack.c.h.b16 %v1112
    %v3931 = vunpack.c.l.b16 %v1113
    %v3932 = vunpack.c.h.b16 %v1113
    %v3933 = vunpack.c.l.b16 %v1114
    %v3934 = vunpack.c.h.b16 %v1114
    %v3935 = vunpack.c.l.b16 %v1115
    %v3936 = vunpack.c.h.b16 %v1115
    %v3937 = vunpack.c.l.b16 %v1116
    %v3938 = vunpack.c.h.b16 %v1116
    %v3939 = vunpack.c.l.b16 %v1117
    %v3940 = vunpack.c.h.b16 %v1117
    %v3941 = vunpack.c.l.b16 %v1118
    %v3942 = vunpack.c.h.b16 %v1118
    %v3943 = vunpack.c.l.b16 %v1119
    %v3944 = vunpack.c.h.b16 %v1119
    %v3945 = vunpack.c.l.b16 %v1120
    %v3946 = vunpack.c.h.b16 %v1120
    %v3947 = vunpack.c.l.b16 %v1121
    %v3948 = vunpack.c.h.b16 %v1121
    %v3949 = vunpack.c.l.b16 %v1122
    %v3950 = vunpack.c.h.b16 %v1122
    %v3951 = vunpack.c.l.b16 %v1123
    %v3952 = vunpack.c.h.b16 %v1123
    %v3953 = vunpack.c.l.b16 %v1124
    %v3954 = vunpack.c.h.b16 %v1124
    %v3955 = vunpack.c.l.b16 %v1125
    %v3956 = vunpack.c.h.b16 %v1125
    %v3957 = vunpack.c.l.b16 %v1126
    %v3958 = vunpack.c.h.b16 %v1126
    %v3959 = vunpack.c.l.b16 %v1127
    %v3960 = vunpack.c.h.b16 %v1127
    %v3961 = vunpack.c.l.b16 %v1128
    %v3962 = vunpack.c.h.b16 %v1128
    %v3963 = vunpack.c.l.b16 %v1129
    %v3964 = vunpack.c.h.b16 %v1129
    %v3965 = vunpack.c.l.b16 %v1130
    %v3966 = vunpack.c.h.b16 %v1130
    %v3967 = vunpack.c.l.b16 %v1131
    %v3968 = vunpack.c.h.b16 %v1131
    %v3969 = vunpack.c.l.b16 %v1132
    %v3970 = vunpack.c.h.b16 %v1132
    %v3971 = vunpack.c.l.b16 %v1133
    %v3972 = vunpack.c.h.b16 %v1133
    %v3973 = vunpack.c.l.b16 %v1134
    %v3974 = vunpack.c.h.b16 %v1134
    %v3975 = vunpack.c.l.b16 %v1135
    %v3976 = vunpack.c.h.b16 %v1135
    %v3977 = vunpack.c.l.b16 %v1136
    %v3978 = vunpack.c.h.b16 %v1136
    %v3979 = vunpack.c.l.b16 %v1137
    %v3980 = vunpack.c.h.b16 %v1137
    %v3981 = vunpack.c.l.b16 %v1138
    %v3982 = vunpack.c.h.b16 %v1138
    %v3983 = vunpack.c.l.b16 %v1139
    %v3984 = vunpack.c.h.b16 %v1139
    %v3985 = vunpack.c.l.b16 %v1140
    %v3986 = vunpack.c.h.b16 %v1140
    %v3987 = vunpack.c.l.b16 %v1141
    %v3988 = vunpack.c.h.b16 %v1141
    %v3989 = vunpack.c.l.b16 %v1142
    %v3990 = vunpack.c.h.b16 %v1142
    %v3991 = vunpack.c.l.b16 %v1143
    %v3992 = vunpack.c.h.b16 %v1143
    %v3993 = vunpack.c.l.b16 %v1144
    %v3994 = vunpack.c.h.b16 %v1144
    %v3995 = vunpack.c.l.b16 %v1145
    %v3996 = vunpack.c.h.b16 %v1145
    %v3997 = vunpack.c.l.b16 %v1146
    %v3998 = vunpack.c.h.b16 %v1146
    %v3999 = vunpack.c.l.b16 %v1147
    %v4000 = vunpack.c.h.b16 %v1147
    %v4001 = vunpack.c.l.b16 %v1148
    %v4002 = vunpack.c.h.b16 %v1148
    %v4003 = vunpack.c.l.b16 %v1149
    %v4004 = vunpack.c.h.b16 %v1149
    %v4005 = vunpack.c.l.b16 %v1150
    %v4006 = vunpack.c.h.b16 %v1150
    %v4007 = vunpack.c.l.b16 %v1151
    %v4008 = vunpack.c.h.b16 %v1151
    %v4009 = vunpack.c.l.b16 %v1152
    %v4010 = vunpack.c.h.b16 %v1152
    %v4011 = vunpack.c.l.b16 %v1153
    %v4012 = vunpack.c.h.b16 %v1153
    %v4013 = vunpack.c.l.b16 %v1154
    %v4014 = vunpack.c.h.b16 %v1154
    %v4015 = vunpack.c.l.b16 %v1155
    %v4016 = vunpack.c.h.b16 %v1155
    %v4017 = vunpack.c.l.b16 %v1156
    %v4018 = vunpack.c.h.b16 %v1156
    %v4019 = vunpack.c.l.b16 %v1157
    %v4020 = vunpack.c.h.b16 %v1157
    %v4021 = vunpack.c.l.b16 %v1158
    %v4022 = vunpack.c.h.b16 %v1158
    %v4023 = vunpack.c.l.b16 %v1159
    %v4024 = vunpack.c.h.b16 %v1159
    %v4025 = vunpack.c.l.b16 %v1160
    %v4026 = vunpack.c.h.b16 %v1160
    %v4027 = vunpack.c.l.b16 %v1161
    %v4028 = vunpack.c.h.b16 %v1161
    %v4029 = vunpack.c.l.b16 %v1162
    %v4030 = vunpack.c.h.b16 %v1162
    %v4031 = vunpack.c.l.b16 %v1163
    %v4032 = vunpack.c.h.b16 %v1163
    %v4033 = vunpack.c.l.b16 %v1164
    %v4034 = vunpack.c.h.b16 %v1164
    %v4035 = vunpack.c.l.b16 %v1165
    %v4036 = vunpack.c.h.b16 %v1165
    %v4037 = vunpack.c.l.b16 %v1166
    %v4038 = vunpack.c.h.b16 %v1166
    %v4039 = vunpack.c.l.b16 %v1167
    %v4040 = vunpack.c.h.b16 %v1167
    %v4041 = vunpack.c.l.b16 %v1168
    %v4042 = vunpack.c.h.b16 %v1168
    %v4043 = vunpack.c.l.b16 %v1169
    %v4044 = vunpack.c.h.b16 %v1169
    %v4045 = vunpack.c.l.b16 %v1170
    %v4046 = vunpack.c.h.b16 %v1170
    %v4047 = vunpack.c.l.b16 %v1171
    %v4048 = vunpack.c.h.b16 %v1171
    %v4049 = vunpack.c.l.b16 %v1172
    %v4050 = vunpack.c.h.b16 %v1172
    %v4051 = vunpack.c.l.b16 %v1173
    %v4052 = vunpack.c.h.b16 %v1173
    %v4053 = vunpack.c.l.b16 %v1174
    %v4054 = vunpack.c.h.b16 %v1174
    %v4055 = vunpack.c.l.b16 %v1175
    %v4056 = vunpack.c.h.b16 %v1175
    %v4057 = vunpack.c.l.b16 %v1176
    %v4058 = vunpack.c.h.b16 %v1176
    %v4059 = vunpack.c.l.b16 %v1177
    %v4060 = vunpack.c.h.b16 %v1177
    %v4061 = vunpack.c.l.b16 %v1178
    %v4062 = vunpack.c.h.b16 %v1178
    %v4063 = vunpack.c.l.b16 %v1179
    %v4064 = vunpack.c.h.b16 %v1179
    %v4065 = vunpack.c.l.b16 %v1180
    %v4066 = vunpack.c.h.b16 %v1180
    %v4067 = vunpack.c.l.b16 %v1181
    %v4068 = vunpack.c.h.b16 %v1181
    %v4069 = vunpack.c.l.b16 %v1182
    %v4070 = vunpack.c.h.b16 %v1182
    %v4071 = vunpack.c.l.b16 %v1183
    %v4072 = vunpack.c.h.b16 %v1183
    %v4073 = vunpack.c.l.b16 %v1184
    %v4074 = vunpack.c.h.b16 %v1184
    %v4075 = vunpack.c.l.b16 %v1185
    %v4076 = vunpack.c.h.b16 %v1185
    %v4077 = vunpack.c.l.b16 %v1186
    %v4078 = vunpack.c.h.b16 %v1186
    %v4079 = vunpack.c.l.b16 %v1187
    %v4080 = vunpack.c.h.b16 %v1187
    %v4081 = vunpack.c.l.b16 %v1188
    %v4082 = vunpack.c.h.b16 %v1188
    %v4083 = vunpack.c.l.b16 %v1189
    %v4084 = vunpack.c.h.b16 %v1189
    %v4085 = vunpack.c.l.b16 %v1190
    %v4086 = vunpack.c.h.b16 %v1190
    %v4087 = vunpack.c.l.b16 %v1191
    %v4088 = vunpack.c.h.b16 %v1191
    %v4089 = vunpack.c.l.b16 %v1192
    %v4090 = vunpack.c.h.b16 %v1192
    %v4091 = vunpack.c.l.b16 %v1193
    %v4092 = vunpack.c.h.b16 %v1193
    %v4093 = vunpack.c.l.b16 %v1194
    %v4094 = vunpack.c.h.b16 %v1194
    %v4095 = vunpack.c.l.b16 %v1195
    %v4096 = vunpack.c.h.b16 %v1195
    %v4097 = vunpack.c.l.b16 %v1196
    %v4098 = vunpack.c.h.b16 %v1196
    %v4099 = vunpack.c.l.b16 %v1197
    %v4100 = vunpack.c.h.b16 %v1197
    %v4101 = vunpack.c.l.b16 %v1198
    %v4102 = vunpack.c.h.b16 %v1198
    %v4103 = vunpack.c.l.b16 %v1199
    %v4104 = vunpack.c.h.b16 %v1199
    %v4105 = vunpack.c.l.b16 %v1200
    %v4106 = vunpack.c.h.b16 %v1200
    %v4107 = vunpack.c.l.b16 %v1201
    %v4108 = vunpack.c.h.b16 %v1201
    %v4109 = vunpack.c.l.b16 %v1202
    %v4110 = vunpack.c.h.b16 %v1202
    %v4111 = vunpack.c.l.b16 %v1203
    %v4112 = vunpack.c.h.b16 %v1203
    %v4113 = vunpack.c.l.b16 %v1204
    %v4114 = vunpack.c.h.b16 %v1204
    %v4115 = vunpack.c.l.b16 %v1205
    %v4116 = vunpack.c.h.b16 %v1205
    %v4117 = vunpack.c.l.b16 %v1206
    %v4118 = vunpack.c.h.b16 %v1206
    %v4119 = vunpack.c.l.b16 %v1207
    %v4120 = vunpack.c.h.b16 %v1207
    %v4121 = vunpack.c.l.b16 %v1208
    %v4122 = vunpack.c.h.b16 %v1208
    %v4123 = vunpack.c.l.b16 %v1209
    %v4124 = vunpack.c.h.b16 %v1209
    %v4125 = vunpack.c.l.b16 %v1210
    %v4126 = vunpack.c.h.b16 %v1210
    %v4127 = vunpack.c.l.b16 %v1211
    %v4128 = vunpack.c.h.b16 %v1211
    %v4129 = vunpack.c.l.b16 %v1212
    %v4130 = vunpack.c.h.b16 %v1212
    %v4131 = vunpack.c.l.b16 %v1213
    %v4132 = vunpack.c.h.b16 %v1213
    %v4133 = vunpack.c.l.b16 %v1214
    %v4134 = vunpack.c.h.b16 %v1214
    %v4135 = vunpack.c.l.b16 %v1215
    %v4136 = vunpack.c.h.b16 %v1215
    %v4137 = vunpack.c.l.b16 %v1216
    %v4138 = vunpack.c.h.b16 %v1216
    %v4139 = vunpack.c.l.b16 %v1217
    %v4140 = vunpack.c.h.b16 %v1217
    %v4141 = vunpack.c.l.b16 %v1218
    %v4142 = vunpack.c.h.b16 %v1218
    %v4143 = vunpack.c.l.b16 %v1219
    %v4144 = vunpack.c.h.b16 %v1219
    %v4145 = vunpack.c.l.b16 %v1220
    %v4146 = vunpack.c.h.b16 %v1220
    %v4147 = vunpack.c.l.b16 %v1221
    %v4148 = vunpack.c.h.b16 %v1221
    %v4149 = vunpack.c.l.b16 %v1222
    %v4150 = vunpack.c.h.b16 %v1222
    %v4151 = vunpack.c.l.b16 %v1223
    %v4152 = vunpack.c.h.b16 %v1223
    %v4153 = vunpack.c.l.b16 %v1224
    %v4154 = vunpack.c.h.b16 %v1224
    %v4155 = vunpack.c.l.b16 %v1225
    %v4156 = vunpack.c.h.b16 %v1225
    %v4157 = vunpack.c.l.b16 %v1226
    %v4158 = vunpack.c.h.b16 %v1226
    %v4159 = vunpack.c.l.b16 %v1227
    %v4160 = vunpack.c.h.b16 %v1227
    %v4161 = vunpack.c.l.b16 %v1228
    %v4162 = vunpack.c.h.b16 %v1228
    %v4163 = vunpack.c.l.b16 %v1229
    %v4164 = vunpack.c.h.b16 %v1229
    %v4165 = vunpack.c.l.b16 %v1230
    %v4166 = vunpack.c.h.b16 %v1230
    %v4167 = vunpack.c.l.b16 %v1231
    %v4168 = vunpack.c.h.b16 %v1231
    %v4169 = vunpack.c.l.b16 %v1232
    %v4170 = vunpack.c.h.b16 %v1232
    %v4171 = vunpack.c.l.b16 %v1233
    %v4172 = vunpack.c.h.b16 %v1233
    %v4173 = vunpack.c.l.b16 %v1234
    %v4174 = vunpack.c.h.b16 %v1234
    %v4175 = vunpack.c.l.b16 %v1235
    %v4176 = vunpack.c.h.b16 %v1235
    %v4177 = vunpack.c.l.b16 %v1236
    %v4178 = vunpack.c.h.b16 %v1236
    %v4179 = vunpack.c.l.b16 %v1237
    %v4180 = vunpack.c.h.b16 %v1237
    %v4181 = vunpack.c.l.b16 %v1238
    %v4182 = vunpack.c.h.b16 %v1238
    %v4183 = vunpack.c.l.b16 %v1239
    %v4184 = vunpack.c.h.b16 %v1239
    %v4185 = vunpack.c.l.b16 %v1240
    %v4186 = vunpack.c.h.b16 %v1240
    %v4187 = vunpack.c.l.b16 %v1241
    %v4188 = vunpack.c.h.b16 %v1241
    %v4189 = vunpack.c.l.b16 %v1242
    %v4190 = vunpack.c.h.b16 %v1242
    %v4191 = vunpack.c.l.b16 %v1243
    %v4192 = vunpack.c.h.b16 %v1243
    %v4193 = vunpack.c.l.b16 %v1244
    %v4194 = vunpack.c.h.b16 %v1244
    %v4195 = vunpack.c.l.b16 %v1245
    %v4196 = vunpack.c.h.b16 %v1245
    %v4197 = vunpack.c.l.b16 %v1246
    %v4198 = vunpack.c.h.b16 %v1246
    %v4199 = vunpack.c.l.b16 %v1247
    %v4200 = vunpack.c.h.b16 %v1247
    %v4201 = vunpack.c.l.b16 %v1248
    %v4202 = vunpack.c.h.b16 %v1248
    %v4203 = vunpack.c.l.b16 %v1249
    %v4204 = vunpack.c.h.b16 %v1249
    %v4205 = vunpack.c.l.b16 %v1250
    %v4206 = vunpack.c.h.b16 %v1250
    %v4207 = vunpack.c.l.b16 %v1251
    %v4208 = vunpack.c.h.b16 %v1251
    %v4209 = vunpack.c.l.b16 %v1252
    %v4210 = vunpack.c.h.b16 %v1252
    %v4211 = vunpack.c.l.b16 %v1253
    %v4212 = vunpack.c.h.b16 %v1253
    %v4213 = vunpack.c.l.b16 %v1254
    %v4214 = vunpack.c.h.b16 %v1254
    %v4215 = vunpack.c.l.b16 %v1255
    %v4216 = vunpack.c.h.b16 %v1255
    %v4217 = vunpack.c.l.b16 %v1256
    %v4218 = vunpack.c.h.b16 %v1256
    %v4219 = vunpack.c.l.b16 %v1257
    %v4220 = vunpack.c.h.b16 %v1257
    %v4221 = vunpack.c.l.b16 %v1258
    %v4222 = vunpack.c.h.b16 %v1258
    %v4223 = vunpack.c.l.b16 %v1259
    %v4224 = vunpack.c.h.b16 %v1259
    %v4225 = vunpack.c.l.b16 %v1260
    %v4226 = vunpack.c.h.b16 %v1260
    %v4227 = vunpack.c.l.b16 %v1261
    %v4228 = vunpack.c.h.b16 %v1261
    %v4229 = vunpack.c.l.b16 %v1262
    %v4230 = vunpack.c.h.b16 %v1262
    %v4231 = vunpack.c.l.b16 %v1263
    %v4232 = vunpack.c.h.b16 %v1263
    %v4233 = vunpack.c.l.b16 %v1264
    %v4234 = vunpack.c.h.b16 %v1264
    %v4235 = vunpack.c.l.b16 %v1265
    %v4236 = vunpack.c.h.b16 %v1265
    %v4237 = vunpack.c.l.b16 %v1266
    %v4238 = vunpack.c.h.b16 %v1266
    %v4239 = vunpack.c.l.b16 %v1267
    %v4240 = vunpack.c.h.b16 %v1267
    %v4241 = vunpack.c.l.b16 %v1268
    %v4242 = vunpack.c.h.b16 %v1268
    %v4243 = vunpack.c.l.b16 %v1269
    %v4244 = vunpack.c.h.b16 %v1269
    %v4245 = vunpack.c.l.b16 %v1270
    %v4246 = vunpack.c.h.b16 %v1270
    %v4247 = vunpack.c.l.b16 %v1271
    %v4248 = vunpack.c.h.b16 %v1271
    %v4249 = vunpack.c.l.b16 %v1272
    %v4250 = vunpack.c.h.b16 %v1272
    %v4251 = vunpack.c.l.b16 %v1273
    %v4252 = vunpack.c.h.b16 %v1273
    %v4253 = vunpack.c.l.b16 %v1274
    %v4254 = vunpack.c.h.b16 %v1274
    %v4255 = vunpack.c.l.b16 %v1275
    %v4256 = vunpack.c.h.b16 %v1275
    %v4257 = vunpack.c.l.b16 %v1276
    %v4258 = vunpack.c.h.b16 %v1276
    %v4259 = vunpack.c.l.b16 %v1277
    %v4260 = vunpack.c.h.b16 %v1277
    %v4261 = vunpack.c.l.b16 %v1278
    %v4262 = vunpack.c.h.b16 %v1278
    %v4263 = vunpack.c.l.b16 %v1279
    %v4264 = vunpack.c.h.b16 %v1279
    %v4265 = vunpack.c.l.b16 %v1280
    %v4266 = vunpack.c.h.b16 %v1280
    %v4267 = vunpack.c.l.b16 %v1281
    %v4268 = vunpack.c.h.b16 %v1281
    %v4269 = vunpack.c.l.b16 %v1282
    %v4270 = vunpack.c.h.b16 %v1282
    %v4271 = vunpack.c.l.b16 %v1283
    %v4272 = vunpack.c.h.b16 %v1283
    %v4273 = vunpack.c.l.b16 %v1284
    %v4274 = vunpack.c.h.b16 %v1284
    %v4275 = vunpack.c.l.b16 %v1285
    %v4276 = vunpack.c.h.b16 %v1285
    %v4277 = vunpack.c.l.b16 %v1286
    %v4278 = vunpack.c.h.b16 %v1286
    %v4279 = vunpack.c.l.b16 %v1287
    %v4280 = vunpack.c.h.b16 %v1287
    %v4281 = vunpack.c.l.b16 %v1288
    %v4282 = vunpack.c.h.b16 %v1288
    %v4283 = vunpack.c.l.b16 %v1289
    %v4284 = vunpack.c.h.b16 %v1289
    %v4285 = vunpack.c.l.b16 %v1290
    %v4286 = vunpack.c.h.b16 %v1290
    %v4287 = vunpack.c.l.b16 %v1291
    %v4288 = vunpack.c.h.b16 %v1291
    %v4289 = vunpack.c.l.b16 %v1292
    %v4290 = vunpack.c.h.b16 %v1292
    %v4291 = vunpack.c.l.b16 %v1293
    %v4292 = vunpack.c.h.b16 %v1293
    %v4293 = vunpack.c.l.b16 %v1294
    %v4294 = vunpack.c.h.b16 %v1294
    %v4295 = vunpack.c.l.b16 %v1295
    %v4296 = vunpack.c.h.b16 %v1295
    %v4297 = vunpack.c.l.b16 %v1296
    %v4298 = vunpack.c.h.b16 %v1296
    %v4299 = vunpack.c.l.b16 %v1297
    %v4300 = vunpack.c.h.b16 %v1297
    %v4301 = vunpack.c.l.b16 %v1298
    %v4302 = vunpack.c.h.b16 %v1298
    %v4303 = vunpack.c.l.b16 %v1299
    %v4304 = vunpack.c.h.b16 %v1299
    %v4305 = vunpack.c.l.b16 %v1300
    %v4306 = vunpack.c.h.b16 %v1300
    %v4307 = vunpack.c.l.b16 %v1301
    %v4308 = vunpack.c.h.b16 %v1301
    %v4309 = vunpack.c.l.b16 %v1302
    %v4310 = vunpack.c.h.b16 %v1302
    %v4311 = vunpack.c.l.b16 %v1303
    %v4312 = vunpack.c.h.b16 %v1303
    %v4313 = vunpack.c.l.b16 %v1304
    %v4314 = vunpack.c.h.b16 %v1304
    %v4315 = vunpack.c.l.b16 %v1305
    %v4316 = vunpack.c.h.b16 %v1305
    %v4317 = vunpack.c.l.b16 %v1306
    %v4318 = vunpack.c.h.b16 %v1306
    %v4319 = vunpack.c.l.b16 %v1307
    %v4320 = vunpack.c.h.b16 %v1307
    %v4321 = vunpack.c.l.b16 %v1308
    %v4322 = vunpack.c.h.b16 %v1308
    %v4323 = vunpack.c.l.b16 %v1309
    %v4324 = vunpack.c.h.b16 %v1309
    %v4325 = vunpack.c.l.b16 %v1310
    %v4326 = vunpack.c.h.b16 %v1310
    %v4327 = vunpack.c.l.b16 %v1311
    %v4328 = vunpack.c.h.b16 %v1311
    %v4329 = vunpack.c.l.b16 %v1312
    %v4330 = vunpack.c.h.b16 %v1312
    %v4331 = vunpack.c.l.b16 %v1313
    %v4332 = vunpack.c.h.b16 %v1313
    %v4333 = vunpack.c.l.b16 %v1314
    %v4334 = vunpack.c.h.b16 %v1314
    %v4335 = vunpack.c.l.b16 %v1315
    %v4336 = vunpack.c.h.b16 %v1315
    %v4337 = vunpack.c.l.b16 %v1316
    %v4338 = vunpack.c.h.b16 %v1316
    %v4339 = vunpack.c.l.b16 %v1317
    %v4340 = vunpack.c.h.b16 %v1317
    %v4341 = vunpack.c.l.b16 %v1318
    %v4342 = vunpack.c.h.b16 %v1318
    %v4343 = vunpack.c.l.b16 %v1319
    %v4344 = vunpack.c.h.b16 %v1319
    %v4345 = vunpack.c.l.b16 %v1320
    %v4346 = vunpack.c.h.b16 %v1320
    %v4347 = vunpack.c.l.b16 %v1321
    %v4348 = vunpack.c.h.b16 %v1321
    %v4349 = vunpack.c.l.b16 %v1322
    %v4350 = vunpack.c.h.b16 %v1322
    %v4351 = vunpack.c.l.b16 %v1323
    %v4352 = vunpack.c.h.b16 %v1323
    %v4353 = vunpack.c.l.b16 %v1324
    %v4354 = vunpack.c.h.b16 %v1324
    %v4355 = vunpack.c.l.b16 %v1325
    %v4356 = vunpack.c.h.b16 %v1325
    %v4357 = vunpack.c.l.b16 %v1326
    %v4358 = vunpack.c.h.b16 %v1326
    %v4359 = vunpack.c.l.b16 %v1327
    %v4360 = vunpack.c.h.b16 %v1327
    %v4361 = vunpack.c.l.b16 %v1328
    %v4362 = vunpack.c.h.b16 %v1328
    %v4363 = vunpack.c.l.b16 %v1329
    %v4364 = vunpack.c.h.b16 %v1329
    %v4365 = vunpack.c.l.b16 %v1330
    %v4366 = vunpack.c.h.b16 %v1330
    %v4367 = vunpack.c.l.b16 %v1331
    %v4368 = vunpack.c.h.b16 %v1331
    %v4369 = vunpack.c.l.b16 %v1332
    %v4370 = vunpack.c.h.b16 %v1332
    %v4371 = vunpack.c.l.b16 %v1333
    %v4372 = vunpack.c.h.b16 %v1333
    %v4373 = vunpack.c.l.b16 %v1334
    %v4374 = vunpack.c.h.b16 %v1334
    %v4375 = vunpack.c.l.b16 %v1335
    %v4376 = vunpack.c.h.b16 %v1335
    %v4377 = vunpack.c.l.b16 %v1336
    %v4378 = vunpack.c.h.b16 %v1336
    %v4379 = vunpack.c.l.b16 %v1337
    %v4380 = vunpack.c.h.b16 %v1337
    %v4381 = vunpack.c.l.b16 %v1338
    %v4382 = vunpack.c.h.b16 %v1338
    %v4383 = vunpack.c.l.b16 %v1339
    %v4384 = vunpack.c.h.b16 %v1339
    %v4385 = vunpack.c.l.b16 %v1340
    %v4386 = vunpack.c.h.b16 %v1340
    %v4387 = vunpack.c.l.b16 %v1341
    %v4388 = vunpack.c.h.b16 %v1341
    %v4389 = vunpack.c.l.b16 %v1342
    %v4390 = vunpack.c.h.b16 %v1342
    %v4391 = vunpack.c.l.b16 %v1343
    %v4392 = vunpack.c.h.b16 %v1343
    %v4393 = vunpack.c.l.b16 %v1344
    %v4394 = vunpack.c.h.b16 %v1344
    %v4395 = vunpack.c.l.b16 %v1345
    %v4396 = vunpack.c.h.b16 %v1345
    %v4397 = vunpack.c.l.b16 %v1346
    %v4398 = vunpack.c.h.b16 %v1346
    %v4399 = vunpack.c.l.b16 %v1347
    %v4400 = vunpack.c.h.b16 %v1347
    %v4401 = vunpack.c.l.b16 %v1348
    %v4402 = vunpack.c.h.b16 %v1348
    %v4403 = vunpack.c.l.b16 %v1349
    %v4404 = vunpack.c.h.b16 %v1349
    %v4405 = vunpack.c.l.b16 %v1350
    %v4406 = vunpack.c.h.b16 %v1350
    %v4407 = vunpack.c.l.b16 %v1351
    %v4408 = vunpack.c.h.b16 %v1351
    %v4409 = vunpack.c.l.b16 %v1352
    %v4410 = vunpack.c.h.b16 %v1352
    %v4411 = vunpack.c.l.b16 %v1353
    %v4412 = vunpack.c.h.b16 %v1353
    %v4413 = vunpack.c.l.b16 %v1354
    %v4414 = vunpack.c.h.b16 %v1354
    %v4415 = vunpack.c.l.b16 %v1355
    %v4416 = vunpack.c.h.b16 %v1355
    %v4417 = vunpack.c.l.b16 %v1356
    %v4418 = vunpack.c.h.b16 %v1356
    %v4419 = vunpack.c.l.b16 %v1357
    %v4420 = vunpack.c.h.b16 %v1357
    %v4421 = vunpack.c.l.b16 %v1358
    %v4422 = vunpack.c.h.b16 %v1358
    %v4423 = vunpack.c.l.b16 %v1359
    %v4424 = vunpack.c.h.b16 %v1359
    %v4425 = vunpack.c.l.b16 %v1360
    %v4426 = vunpack.c.h.b16 %v1360
    %v4427 = vunpack.c.l.b16 %v1361
    %v4428 = vunpack.c.h.b16 %v1361
    %v4429 = vunpack.c.l.b16 %v1362
    %v4430 = vunpack.c.h.b16 %v1362
    %v4431 = vunpack.c.l.b16 %v1363
    %v4432 = vunpack.c.h.b16 %v1363
    %v4433 = vunpack.c.l.b16 %v1364
    %v4434 = vunpack.c.h.b16 %v1364
    %v4435 = vunpack.c.l.b16 %v1365
    %v4436 = vunpack.c.h.b16 %v1365
    %v4437 = vunpack.c.l.b16 %v1366
    %v4438 = vunpack.c.h.b16 %v1366
    %v4439 = vunpack.c.l.b16 %v1367
    %v4440 = vunpack.c.h.b16 %v1367
    %v4441 = vunpack.c.l.b16 %v1368
    %v4442 = vunpack.c.h.b16 %v1368
    %v4443 = vunpack.c.l.b16 %v1369
    %v4444 = vunpack.c.h.b16 %v1369
    %v4445 = vunpack.c.l.b16 %v1370
    %v4446 = vunpack.c.h.b16 %v1370
    %v4447 = vunpack.c.l.b16 %v1371
    %v4448 = vunpack.c.h.b16 %v1371
    %v4449 = vunpack.c.l.b16 %v1372
    %v4450 = vunpack.c.h.b16 %v1372
    %v4451 = vunpack.c.l.b16 %v1373
    %v4452 = vunpack.c.h.b16 %v1373
    %v4453 = vunpack.c.l.b16 %v1374
    %v4454 = vunpack.c.h.b16 %v1374
    %v4455 = vunpack.c.l.b16 %v1375
    %v4456 = vunpack.c.h.b16 %v1375
    %v4457 = vunpack.c.l.b16 %v1376
    %v4458 = vunpack.c.h.b16 %v1376
    %v4459 = vunpack.c.l.b16 %v1377
    %v4460 = vunpack.c.h.b16 %v1377
    %v4461 = vunpack.c.l.b16 %v1378
    %v4462 = vunpack.c.h.b16 %v1378
    %v4463 = vunpack.c.l.b16 %v1379
    %v4464 = vunpack.c.h.b16 %v1379
    %v4465 = vunpack.c.l.b16 %v1380
    %v4466 = vunpack.c.h.b16 %v1380
    %v4467 = vunpack.c.l.b16 %v1381
    %v4468 = vunpack.c.h.b16 %v1381
    %v4469 = vunpack.c.l.b16 %v1382
    %v4470 = vunpack.c.h.b16 %v1382
    %v4471 = vunpack.c.l.b16 %v1383
    %v4472 = vunpack.c.h.b16 %v1383
    %v4473 = vunpack.c.l.b16 %v1384
    %v4474 = vunpack.c.h.b16 %v1384
    %v4475 = vunpack.c.l.b16 %v1385
    %v4476 = vunpack.c.h.b16 %v1385
    %v4477 = vunpack.c.l.b16 %v1386
    %v4478 = vunpack.c.h.b16 %v1386
    %v4479 = vunpack.c.l.b16 %v1387
    %v4480 = vunpack.c.h.b16 %v1387
    %v4481 = vunpack.c.l.b16 %v1388
    %v4482 = vunpack.c.h.b16 %v1388
    %v4483 = vunpack.c.l.b16 %v1389
    %v4484 = vunpack.c.h.b16 %v1389
    %v4485 = vunpack.c.l.b16 %v1390
    %v4486 = vunpack.c.h.b16 %v1390
    %v4487 = vunpack.c.l.b16 %v1391
    %v4488 = vunpack.c.h.b16 %v1391
    %v4489 = vunpack.c.l.b16 %v1392
    %v4490 = vunpack.c.h.b16 %v1392
    %v4491 = vunpack.c.l.b16 %v1393
    %v4492 = vunpack.c.h.b16 %v1393
    %v4493 = vunpack.c.l.b16 %v1394
    %v4494 = vunpack.c.h.b16 %v1394
    %v4495 = vunpack.c.l.b16 %v1395
    %v4496 = vunpack.c.h.b16 %v1395
    %v4497 = vunpack.c.l.b16 %v1396
    %v4498 = vunpack.c.h.b16 %v1396
    %v4499 = vunpack.c.l.b16 %v1397
    %v4500 = vunpack.c.h.b16 %v1397
    %v4501 = vunpack.c.l.b16 %v1398
    %v4502 = vunpack.c.h.b16 %v1398
    %v4503 = vunpack.c.l.b16 %v1399
    %v4504 = vunpack.c.h.b16 %v1399
    %v4505 = vunpack.c.l.b16 %v1400
    %v4506 = vunpack.c.h.b16 %v1400
    %v4507 = vunpack.c.l.b16 %v1401
    %v4508 = vunpack.c.h.b16 %v1401
    %v4509 = vunpack.c.l.b16 %v1402
    %v4510 = vunpack.c.h.b16 %v1402
    %v4511 = vunpack.c.l.b16 %v1403
    %v4512 = vunpack.c.h.b16 %v1403
    %v4513 = vunpack.c.l.b16 %v1404
    %v4514 = vunpack.c.h.b16 %v1404
    %v4515 = vunpack.c.l.b16 %v1405
    %v4516 = vunpack.c.h.b16 %v1405
    %v4517 = vunpack.c.l.b16 %v1406
    %v4518 = vunpack.c.h.b16 %v1406
    %v4519 = vunpack.c.l.b16 %v1407
    %v4520 = vunpack.c.h.b16 %v1407
    %v4521 = vunpack.c.l.b16 %v1408
    %v4522 = vunpack.c.h.b16 %v1408
    %v4523 = vunpack.c.l.b16 %v1409
    %v4524 = vunpack.c.h.b16 %v1409
    %v4525 = vunpack.c.l.b16 %v1410
    %v4526 = vunpack.c.h.b16 %v1410
    %v4527 = vunpack.c.l.b16 %v1411
    %v4528 = vunpack.c.h.b16 %v1411
    %v4529 = vunpack.c.l.b16 %v1412
    %v4530 = vunpack.c.h.b16 %v1412
    %v4531 = vunpack.c.l.b16 %v1413
    %v4532 = vunpack.c.h.b16 %v1413
    %v4533 = vunpack.c.l.b16 %v1414
    %v4534 = vunpack.c.h.b16 %v1414
    %v4535 = vunpack.c.l.b16 %v1415
    %v4536 = vunpack.c.h.b16 %v1415
    %v4537 = vunpack.c.l.b16 %v1416
    %v4538 = vunpack.c.h.b16 %v1416
    %v4539 = vunpack.c.l.b16 %v1417
    %v4540 = vunpack.c.h.b16 %v1417
    %v4541 = vunpack.c.l.b16 %v1418
    %v4542 = vunpack.c.h.b16 %v1418
    %v4543 = vunpack.c.l.b16 %v1419
    %v4544 = vunpack.c.h.b16 %v1419
    %v4545 = vunpack.c.l.b16 %v1420
    %v4546 = vunpack.c.h.b16 %v1420
    %v4547 = vunpack.c.l.b16 %v1421
    %v4548 = vunpack.c.h.b16 %v1421
    %v4549 = vunpack.c.l.b16 %v1422
    %v4550 = vunpack.c.h.b16 %v1422
    %v4551 = vunpack.c.l.b16 %v1423
    %v4552 = vunpack.c.h.b16 %v1423
    %v4553 = vunpack.c.l.b16 %v1424
    %v4554 = vunpack.c.h.b16 %v1424
    %v4555 = vunpack.c.l.b16 %v1425
    %v4556 = vunpack.c.h.b16 %v1425
    %v4557 = vunpack.c.l.b16 %v1426
    %v4558 = vunpack.c.h.b16 %v1426
    %v4559 = vunpack.c.l.b16 %v1427
    %v4560 = vunpack.c.h.b16 %v1427
    %v4561 = vunpack.c.l.b16 %v1428
    %v4562 = vunpack.c.h.b16 %v1428
    %v4563 = vunpack.c.l.b16 %v1429
    %v4564 = vunpack.c.h.b16 %v1429
    %v4565 = vunpack.c.l.b16 %v1430
    %v4566 = vunpack.c.h.b16 %v1430
    %v4567 = vunpack.c.l.b16 %v1431
    %v4568 = vunpack.c.h.b16 %v1431
    %v4569 = vunpack.c.l.b16 %v1432
    %v4570 = vunpack.c.h.b16 %v1432
    %v4571 = vunpack.c.l.b16 %v1433
    %v4572 = vunpack.c.h.b16 %v1433
    %v4573 = vunpack.c.l.b16 %v1434
    %v4574 = vunpack.c.h.b16 %v1434
    %v4575 = vunpack.c.l.b16 %v1435
    %v4576 = vunpack.c.h.b16 %v1435
    %v4577 = vunpack.c.l.b16 %v1436
    %v4578 = vunpack.c.h.b16 %v1436
    %v4579 = vunpack.c.l.b16 %v1437
    %v4580 = vunpack.c.h.b16 %v1437
    %v4581 = vunpack.c.l.b16 %v1438
    %v4582 = vunpack.c.h.b16 %v1438
    %v4583 = vunpack.c.l.b16 %v1439
    %v4584 = vunpack.c.h.b16 %v1439
    %v4585 = vunpack.c.l.b16 %v1440
    %v4586 = vunpack.c.h.b16 %v1440
    %v4587 = vunpack.c.l.b16 %v1441
    %v4588 = vunpack.c.h.b16 %v1441
    %v4589 = vunpack.c.l.b16 %v1442
    %v4590 = vunpack.c.h.b16 %v1442
    %v4591 = vunpack.c.l.b16 %v1443
    %v4592 = vunpack.c.h.b16 %v1443
    %v4593 = vunpack.c.l.b16 %v1444
    %v4594 = vunpack.c.h.b16 %v1444
    %v4595 = vunpack.c.l.b16 %v1445
    %v4596 = vunpack.c.h.b16 %v1445
    %v4597 = vunpack.c.l.b16 %v1446
    %v4598 = vunpack.c.h.b16 %v1446
    %v4599 = vunpack.c.l.b16 %v1447
    %v4600 = vunpack.c.h.b16 %v1447
    %v4601 = vunpack.c.l.b16 %v1448
    %v4602 = vunpack.c.h.b16 %v1448
    %v4603 = vunpack.c.l.b16 %v1449
    %v4604 = vunpack.c.h.b16 %v1449
    %v4605 = vunpack.c.l.b16 %v1450
    %v4606 = vunpack.c.h.b16 %v1450
    %v4607 = vpack.c.b16 %v2575, %v2559
    %v4608 = vpack.c.b16 %v2576, %v2560
    %v4609 = vpack.c.b16 %v2577, %v2561
    %v4610 = vpack.c.b16 %v2578, %v2562
    %v4611 = vpack.c.b16 %v2579, %v2563
    %v4612 = vpack.c.b16 %v2580, %v2564
    %v4613 = vpack.c.b16 %v2581, %v2565
    %v4614 = vpack.c.b16 %v2582, %v2566
    %v4615 = vpack.c.b16 %v2583, %v2567
    %v4616 = vpack.c.b16 %v2584, %v2568
    %v4617 = vpack.c.b16 %v2585, %v2569
    %v4618 = vpack.c.b16 %v2586, %v2570
    %v4619 = vpack.c.b16 %v2587, %v2571
    %v4620 = vpack.c.b16 %v2588, %v2572
    %v4621 = vpack.c.b16 %v2589, %v2573
    %v4622 = vpack.c.b16 %v2590, %v2574
    %v4623 = vpack.c.b16 %v2607, %v2591
    %v4624 = vpack.c.b16 %v2608, %v2592
    %v4625 = vpack.c.b16 %v2609, %v2593
    %v4626 = vpack.c.b16 %v2610, %v2594
    %v4627 = vpack.c.b16 %v2611, %v2595
    %v4628 = vpack.c.b16 %v2612, %v2596
    %v4629 = vpack.c.b16 %v2613, %v2597
    %v4630 = vpack.c.b16 %v2614, %v2598
    %v4631 = vpack.c.b16 %v2615, %v2599
    %v4632 = vpack.c.b16 %v2616, %v2600
    %v4633 = vpack.c.b16 %v2617, %v2601
    %v4634 = vpack.c.b16 %v2618, %v2602
    %v4635 = vpack.c.b16 %v2619, %v2603
    %v4636 = vpack.c.b16 %v2620, %v2604
    %v4637 = vpack.c.b16 %v2621, %v2605
    %v4638 = vpack.c.b16 %v2622, %v2606
    %v4639 = vpack.c.b16 %v2639, %v2623
    %v4640 = vpack.c.b16 %v2640, %v2624
    %v4641 = vpack.c.b16 %v2641, %v2625
    %v4642 = vpack.c.b16 %v2642, %v2626
    %v4643 = vpack.c.b16 %v2643, %v2627
    %v4644 = vpack.c.b16 %v2644, %v2628
    %v4645 = vpack.c.b16 %v2645, %v2629
    %v4646 = vpack.c.b16 %v2646, %v2630
    %v4647 = vpack.c.b16 %v2647, %v2631
    %v4648 = vpack.c.b16 %v2648, %v2632
    %v4649 = vpack.c.b16 %v2649, %v2633
    %v4650 = vpack.c.b16 %v2650, %v2634
    %v4651 = vpack.c.b16 %v2651, %v2635
    %v4652 = vpack.c.b16 %v2652, %v2636
    %v4653 = vpack.c.b16 %v2653, %v2637
    %v4654 = vpack.c.b16 %v2654, %v2638
    %v4655 = vpack.c.b16 %v2671, %v2655
    %v4656 = vpack.c.b16 %v2672, %v2656
    %v4657 = vpack.c.b16 %v2673, %v2657
    %v4658 = vpack.c.b16 %v2674, %v2658
    %v4659 = vpack.c.b16 %v2675, %v2659
    %v4660 = vpack.c.b16 %v2676, %v2660
    %v4661 = vpack.c.b16 %v2677, %v2661
    %v4662 = vpack.c.b16 %v2678, %v2662
    %v4663 = vpack.c.b16 %v2679, %v2663
    %v4664 = vpack.c.b16 %v2680, %v2664
    %v4665 = vpack.c.b16 %v2681, %v2665
    %v4666 = vpack.c.b16 %v2682, %v2666
    %v4667 = vpack.c.b16 %v2683, %v2667
    %v4668 = vpack.c.b16 %v2684, %v2668
    %v4669 = vpack.c.b16 %v2685, %v2669
    %v4670 = vpack.c.b16 %v2686, %v2670
    %v4671 = vpack.c.b16 %v2703, %v2687
    %v4672 = vpack.c.b16 %v2704, %v2688
    %v4673 = vpack.c.b16 %v2705, %v2689
    %v4674 = vpack.c.b16 %v2706, %v2690
    %v4675 = vpack.c.b16 %v2707, %v2691
    %v4676 = vpack.c.b16 %v2708, %v2692
    %v4677 = vpack.c.b16 %v2709, %v2693
    %v4678 = vpack.c.b16 %v2710, %v2694
    %v4679 = vpack.c.b16 %v2711, %v2695
    %v4680 = vpack.c.b16 %v2712, %v2696
    %v4681 = vpack.c.b16 %v2713, %v2697
    %v4682 = vpack.c.b16 %v2714, %v2698
    %v4683 = vpack.c.b16 %v2715, %v2699
    %v4684 = vpack.c.b16 %v2716, %v2700
    %v4685 = vpack.c.b16 %v2717, %v2701
    %v4686 = vpack.c.b16 %v2718, %v2702
    %v4687 = vpack.c.b16 %v2735, %v2719
    %v4688 = vpack.c.b16 %v2736, %v2720
    %v4689 = vpack.c.b16 %v2737, %v2721
    %v4690 = vpack.c.b16 %v2738, %v2722
    %v4691 = vpack.c.b16 %v2739, %v2723
    %v4692 = vpack.c.b16 %v2740, %v2724
    %v4693 = vpack.c.b16 %v2741, %v2725
    %v4694 = vpack.c.b16 %v2742, %v2726
    %v4695 = vpack.c.b16 %v2743, %v2727
    %v4696 = vpack.c.b16 %v2744, %v2728
    %v4697 = vpack.c.b16 %v2745, %v2729
    %v4698 = vpack.c.b16 %v2746, %v2730
    %v4699 = vpack.c.b16 %v2747, %v2731
    %v4700 = vpack.c.b16 %v2748, %v2732
    %v4701 = vpack.c.b16 %v2749, %v2733
    %v4702 = vpack.c.b16 %v2750, %v2734
    %v4703 = vpack.c.b16 %v2767, %v2751
    %v4704 = vpack.c.b16 %v2768, %v2752
    %v4705 = vpack.c.b16 %v2769, %v2753
    %v4706 = vpack.c.b16 %v2770, %v2754
    %v4707 = vpack.c.b16 %v2771, %v2755
    %v4708 = vpack.c.b16 %v2772, %v2756
    %v4709 = vpack.c.b16 %v2773, %v2757
    %v4710 = vpack.c.b16 %v2774, %v2758
    %v4711 = vpack.c.b16 %v2775, %v2759
    %v4712 = vpack.c.b16 %v2776, %v2760
    %v4713 = vpack.c.b16 %v2777, %v2761
    %v4714 = vpack.c.b16 %v2778, %v2762
    %v4715 = vpack.c.b16 %v2779, %v2763
    %v4716 = vpack.c.b16 %v2780, %v2764
    %v4717 = vpack.c.b16 %v2781, %v2765
    %v4718 = vpack.c.b16 %v2782, %v2766
    %v4719 = vpack.c.b16 %v2799, %v2783
    %v4720 = vpack.c.b16 %v2800, %v2784
    %v4721 = vpack.c.b16 %v2801, %v2785
    %v4722 = vpack.c.b16 %v2802, %v2786
    %v4723 = vpack.c.b16 %v2803, %v2787
    %v4724 = vpack.c.b16 %v2804, %v2788
    %v4725 = vpack.c.b16 %v2805, %v2789
    %v4726 = vpack.c.b16 %v2806, %v2790
    %v4727 = vpack.c.b16 %v2807, %v2791
    %v4728 = vpack.c.b16 %v2808, %v2792
    %v4729 = vpack.c.b16 %v2809, %v2793
    %v4730 = vpack.c.b16 %v2810, %v2794
    %v4731 = vpack.c.b16 %v2811, %v2795
    %v4732 = vpack.c.b16 %v2812, %v2796
    %v4733 = vpack.c.b16 %v2813, %v2797
    %v4734 = vpack.c.b16 %v2814, %v2798
    %v4735 = vpack.c.b16 %v2831, %v2815
    %v4736 = vpack.c.b16 %v2832, %v2816
    %v4737 = vpack.c.b16 %v2833, %v2817
    %v4738 = vpack.c.b16 %v2834, %v2818
    %v4739 = vpack.c.b16 %v2835, %v2819
    %v4740 = vpack.c.b16 %v2836, %v2820
    %v4741 = vpack.c.b16 %v2837, %v2821
    %v4742 = vpack.c.b16 %v2838, %v2822
    %v4743 = vpack.c.b16 %v2839, %v2823
    %v4744 = vpack.c.b16 %v2840, %v2824
    %v4745 = vpack.c.b16 %v2841, %v2825
    %v4746 = vpack.c.b16 %v2842, %v2826
    %v4747 = vpack.c.b16 %v2843, %v2827
    %v4748 = vpack.c.b16 %v2844, %v2828
    %v4749 = vpack.c.b16 %v2845, %v2829
    %v4750 = vpack.c.b16 %v2846, %v2830
    %v4751 = vpack.c.b16 %v2863, %v2847
    %v4752 = vpack.c.b16 %v2864, %v2848
    %v4753 = vpack.c.b16 %v2865, %v2849
    %v4754 = vpack.c.b16 %v2866, %v2850
    %v4755 = vpack.c.b16 %v2867, %v2851
    %v4756 = vpack.c.b16 %v2868, %v2852
    %v4757 = vpack.c.b16 %v2869, %v2853
    %v4758 = vpack.c.b16 %v2870, %v2854
    %v4759 = vpack.c.b16 %v2871, %v2855
    %v4760 = vpack.c.b16 %v2872, %v2856
    %v4761 = vpack.c.b16 %v2873, %v2857
    %v4762 = vpack.c.b16 %v2874, %v2858
    %v4763 = vpack.c.b16 %v2875, %v2859
    %v4764 = vpack.c.b16 %v2876, %v2860
    %v4765 = vpack.c.b16 %v2877, %v2861
    %v4766 = vpack.c.b16 %v2878, %v2862
    %v4767 = vpack.c.b16 %v2895, %v2879
    %v4768 = vpack.c.b16 %v2896, %v2880
    %v4769 = vpack.c.b16 %v2897, %v2881
    %v4770 = vpack.c.b16 %v2898, %v2882
    %v4771 = vpack.c.b16 %v2899, %v2883
    %v4772 = vpack.c.b16 %v2900, %v2884
    %v4773 = vpack.c.b16 %v2901, %v2885
    %v4774 = vpack.c.b16 %v2902, %v2886
    %v4775 = vpack.c.b16 %v2903, %v2887
    %v4776 = vpack.c.b16 %v2904, %v2888
    %v4777 = vpack.c.b16 %v2905, %v2889
    %v4778 = vpack.c.b16 %v2906, %v2890
    %v4779 = vpack.c.b16 %v2907, %v2891
    %v4780 = vpack.c.b16 %v2908, %v2892
    %v4781 = vpack.c.b16 %v2909, %v2893
    %v4782 = vpack.c.b16 %v2910, %v2894
    %v4783 = vpack.c.b16 %v2927, %v2911
    %v4784 = vpack.c.b16 %v2928, %v2912
    %v4785 = vpack.c.b16 %v2929, %v2913
    %v4786 = vpack.c.b16 %v2930, %v2914
    %v4787 = vpack.c.b16 %v2931, %v2915
    %v4788 = vpack.c.b16 %v2932, %v2916
    %v4789 = vpack.c.b16 %v2933, %v2917
    %v4790 = vpack.c.b16 %v2934, %v2918
    %v4791 = vpack.c.b16 %v2935, %v2919
    %v4792 = vpack.c.b16 %v2936, %v2920
    %v4793 = vpack.c.b16 %v2937, %v2921
    %v4794 = vpack.c.b16 %v2938, %v2922
    %v4795 = vpack.c.b16 %v2939, %v2923
    %v4796 = vpack.c.b16 %v2940, %v2924
    %v4797 = vpack.c.b16 %v2941, %v2925
    %v4798 = vpack.c.b16 %v2942, %v2926
    %v4799 = vpack.c.b16 %v2959, %v2943
    %v4800 = vpack.c.b16 %v2960, %v2944
    %v4801 = vpack.c.b16 %v2961, %v2945
    %v4802 = vpack.c.b16 %v2962, %v2946
    %v4803 = vpack.c.b16 %v2963, %v2947
    %v4804 = vpack.c.b16 %v2964, %v2948
    %v4805 = vpack.c.b16 %v2965, %v2949
    %v4806 = vpack.c.b16 %v2966, %v2950
    %v4807 = vpack.c.b16 %v2967, %v2951
    %v4808 = vpack.c.b16 %v2968, %v2952
    %v4809 = vpack.c.b16 %v2969, %v2953
    %v4810 = vpack.c.b16 %v2970, %v2954
    %v4811 = vpack.c.b16 %v2971, %v2955
    %v4812 = vpack.c.b16 %v2972, %v2956
    %v4813 = vpack.c.b16 %v2973, %v2957
    %v4814 = vpack.c.b16 %v2974, %v2958
    %v4815 = vpack.c.b16 %v2991, %v2975
    %v4816 = vpack.c.b16 %v2992, %v2976
    %v4817 = vpack.c.b16 %v2993, %v2977
    %v4818 = vpack.c.b16 %v2994, %v2978
    %v4819 = vpack.c.b16 %v2995, %v2979
    %v4820 = vpack.c.b16 %v2996, %v2980
    %v4821 = vpack.c.b16 %v2997, %v2981
    %v4822 = vpack.c.b16 %v2998, %v2982
    %v4823 = vpack.c.b16 %v2999, %v2983
    %v4824 = vpack.c.b16 %v3000, %v2984
    %v4825 = vpack.c.b16 %v3001, %v2985
    %v4826 = vpack.c.b16 %v3002, %v2986
    %v4827 = vpack.c.b16 %v3003, %v2987
    %v4828 = vpack.c.b16 %v3004, %v2988
    %v4829 = vpack.c.b16 %v3005, %v2989
    %v4830 = vpack.c.b16 %v3006, %v2990
    %v4831 = vpack.c.b16 %v3023, %v3007
    %v4832 = vpack.c.b16 %v3024, %v3008
    %v4833 = vpack.c.b16 %v3025, %v3009
    %v4834 = vpack.c.b16 %v3026, %v3010
    %v4835 = vpack.c.b16 %v3027, %v3011
    %v4836 = vpack.c.b16 %v3028, %v3012
    %v4837 = vpack.c.b16 %v3029, %v3013
    %v4838 = vpack.c.b16 %v3030, %v3014
    %v4839 = vpack.c.b16 %v3031, %v3015
    %v4840 = vpack.c.b16 %v3032, %v3016
    %v4841 = vpack.c.b16 %v3033, %v3017
    %v4842 = vpack.c.b16 %v3034, %v3018
    %v4843 = vpack.c.b16 %v3035, %v3019
    %v4844 = vpack.c.b16 %v3036, %v3020
    %v4845 = vpack.c.b16 %v3037, %v3021
    %v4846 = vpack.c.b16 %v3038, %v3022
    %v4847 = vpack.c.b16 %v3055, %v3039
    %v4848 = vpack.c.b16 %v3056, %v3040
    %v4849 = vpack.c.b16 %v3057, %v3041
    %v4850 = vpack.c.b16 %v3058, %v3042
    %v4851 = vpack.c.b16 %v3059, %v3043
    %v4852 = vpack.c.b16 %v3060, %v3044
    %v4853 = vpack.c.b16 %v3061, %v3045
    %v4854 = vpack.c.b16 %v3062, %v3046
    %v4855 = vpack.c.b16 %v3063, %v3047
    %v4856 = vpack.c.b16 %v3064, %v3048
    %v4857 = vpack.c.b16 %v3065, %v3049
    %v4858 = vpack.c.b16 %v3066, %v3050
    %v4859 = vpack.c.b16 %v3067, %v3051
    %v4860 = vpack.c.b16 %v3068, %v3052
    %v4861 = vpack.c.b16 %v3069, %v3053
    %v4862 = vpack.c.b16 %v3070, %v3054
    %v4863 = vpack.c.b16 %v3087, %v3071
    %v4864 = vpack.c.b16 %v3088, %v3072
    %v4865 = vpack.c.b16 %v3089, %v3073
    %v4866 = vpack.c.b16 %v3090, %v3074
    %v4867 = vpack.c.b16 %v3091, %v3075
    %v4868 = vpack.c.b16 %v3092, %v3076
    %v4869 = vpack.c.b16 %v3093, %v3077
    %v4870 = vpack.c.b16 %v3094, %v3078
    %v4871 = vpack.c.b16 %v3095, %v3079
    %v4872 = vpack.c.b16 %v3096, %v3080
    %v4873 = vpack.c.b16 %v3097, %v3081
    %v4874 = vpack.c.b16 %v3098, %v3082
    %v4875 = vpack.c.b16 %v3099, %v3083
    %v4876 = vpack.c.b16 %v3100, %v3084
    %v4877 = vpack.c.b16 %v3101, %v3085
    %v4878 = vpack.c.b16 %v3102, %v3086
    %v4879 = vpack.c.b16 %v3119, %v3103
    %v4880 = vpack.c.b16 %v3120, %v3104
    %v4881 = vpack.c.b16 %v3121, %v3105
    %v4882 = vpack.c.b16 %v3122, %v3106
    %v4883 = vpack.c.b16 %v3123, %v3107
    %v4884 = vpack.c.b16 %v3124, %v3108
    %v4885 = vpack.c.b16 %v3125, %v3109
    %v4886 = vpack.c.b16 %v3126, %v3110
    %v4887 = vpack.c.b16 %v3127, %v3111
    %v4888 = vpack.c.b16 %v3128, %v3112
    %v4889 = vpack.c.b16 %v3129, %v3113
    %v4890 = vpack.c.b16 %v3130, %v3114
    %v4891 = vpack.c.b16 %v3131, %v3115
    %v4892 = vpack.c.b16 %v3132, %v3116
    %v4893 = vpack.c.b16 %v3133, %v3117
    %v4894 = vpack.c.b16 %v3134, %v3118
    %v4895 = vpack.c.b16 %v3151, %v3135
    %v4896 = vpack.c.b16 %v3152, %v3136
    %v4897 = vpack.c.b16 %v3153, %v3137
    %v4898 = vpack.c.b16 %v3154, %v3138
    %v4899 = vpack.c.b16 %v3155, %v3139
    %v4900 = vpack.c.b16 %v3156, %v3140
    %v4901 = vpack.c.b16 %v3157, %v3141
    %v4902 = vpack.c.b16 %v3158, %v3142
    %v4903 = vpack.c.b16 %v3159, %v3143
    %v4904 = vpack.c.b16 %v3160, %v3144
    %v4905 = vpack.c.b16 %v3161, %v3145
    %v4906 = vpack.c.b16 %v3162, %v3146
    %v4907 = vpack.c.b16 %v3163, %v3147
    %v4908 = vpack.c.b16 %v3164, %v3148
    %v4909 = vpack.c.b16 %v3165, %v3149
    %v4910 = vpack.c.b16 %v3166, %v3150
    %v4911 = vpack.c.b16 %v3183, %v3167
    %v4912 = vpack.c.b16 %v3184, %v3168
    %v4913 = vpack.c.b16 %v3185, %v3169
    %v4914 = vpack.c.b16 %v3186, %v3170
    %v4915 = vpack.c.b16 %v3187, %v3171
    %v4916 = vpack.c.b16 %v3188, %v3172
    %v4917 = vpack.c.b16 %v3189, %v3173
    %v4918 = vpack.c.b16 %v3190, %v3174
    %v4919 = vpack.c.b16 %v3191, %v3175
    %v4920 = vpack.c.b16 %v3192, %v3176
    %v4921 = vpack.c.b16 %v3193, %v3177
    %v4922 = vpack.c.b16 %v3194, %v3178
    %v4923 = vpack.c.b16 %v3195, %v3179
    %v4924 = vpack.c.b16 %v3196, %v3180
    %v4925 = vpack.c.b16 %v3197, %v3181
    %v4926 = vpack.c.b16 %v3198, %v3182
    %v4927 = vpack.c.b16 %v3215, %v3199
    %v4928 = vpack.c.b16 %v3216, %v3200
    %v4929 = vpack.c.b16 %v3217, %v3201
    %v4930 = vpack.c.b16 %v3218, %v3202
    %v4931 = vpack.c.b16 %v3219, %v3203
    %v4932 = vpack.c.b16 %v3220, %v3204
    %v4933 = vpack.c.b16 %v3221, %v3205
    %v4934 = vpack.c.b16 %v3222, %v3206
    %v4935 = vpack.c.b16 %v3223, %v3207
    %v4936 = vpack.c.b16 %v3224, %v3208
    %v4937 = vpack.c.b16 %v3225, %v3209
    %v4938 = vpack.c.b16 %v3226, %v3210
    %v4939 = vpack.c.b16 %v3227, %v3211
    %v4940 = vpack.c.b16 %v3228, %v3212
    %v4941 = vpack.c.b16 %v3229, %v3213
    %v4942 = vpack.c.b16 %v3230, %v3214
    %v4943 = vpack.c.b16 %v3247, %v3231
    %v4944 = vpack.c.b16 %v3248, %v3232
    %v4945 = vpack.c.b16 %v3249, %v3233
    %v4946 = vpack.c.b16 %v3250, %v3234
    %v4947 = vpack.c.b16 %v3251, %v3235
    %v4948 = vpack.c.b16 %v3252, %v3236
    %v4949 = vpack.c.b16 %v3253, %v3237
    %v4950 = vpack.c.b16 %v3254, %v3238
    %v4951 = vpack.c.b16 %v3255, %v3239
    %v4952 = vpack.c.b16 %v3256, %v3240
    %v4953 = vpack.c.b16 %v3257, %v3241
    %v4954 = vpack.c.b16 %v3258, %v3242
    %v4955 = vpack.c.b16 %v3259, %v3243
    %v4956 = vpack.c.b16 %v3260, %v3244
    %v4957 = vpack.c.b16 %v3261, %v3245
    %v4958 = vpack.c.b16 %v3262, %v3246
    %v4959 = vpack.c.b16 %v3279, %v3263
    %v4960 = vpack.c.b16 %v3280, %v3264
    %v4961 = vpack.c.b16 %v3281, %v3265
    %v4962 = vpack.c.b16 %v3282, %v3266
    %v4963 = vpack.c.b16 %v3283, %v3267
    %v4964 = vpack.c.b16 %v3284, %v3268
    %v4965 = vpack.c.b16 %v3285, %v3269
    %v4966 = vpack.c.b16 %v3286, %v3270
    %v4967 = vpack.c.b16 %v3287, %v3271
    %v4968 = vpack.c.b16 %v3288, %v3272
    %v4969 = vpack.c.b16 %v3289, %v3273
    %v4970 = vpack.c.b16 %v3290, %v3274
    %v4971 = vpack.c.b16 %v3291, %v3275
    %v4972 = vpack.c.b16 %v3292, %v3276
    %v4973 = vpack.c.b16 %v3293, %v3277
    %v4974 = vpack.c.b16 %v3294, %v3278
    %v4975 = vpack.c.b16 %v3311, %v3295
    %v4976 = vpack.c.b16 %v3312, %v3296
    %v4977 = vpack.c.b16 %v3313, %v3297
    %v4978 = vpack.c.b16 %v3314, %v3298
    %v4979 = vpack.c.b16 %v3315, %v3299
    %v4980 = vpack.c.b16 %v3316, %v3300
    %v4981 = vpack.c.b16 %v3317, %v3301
    %v4982 = vpack.c.b16 %v3318, %v3302
    %v4983 = vpack.c.b16 %v3319, %v3303
    %v4984 = vpack.c.b16 %v3320, %v3304
    %v4985 = vpack.c.b16 %v3321, %v3305
    %v4986 = vpack.c.b16 %v3322, %v3306
    %v4987 = vpack.c.b16 %v3323, %v3307
    %v4988 = vpack.c.b16 %v3324, %v3308
    %v4989 = vpack.c.b16 %v3325, %v3309
    %v4990 = vpack.c.b16 %v3326, %v3310
    %v4991 = vpack.c.b16 %v3343, %v3327
    %v4992 = vpack.c.b16 %v3344, %v3328
    %v4993 = vpack.c.b16 %v3345, %v3329
    %v4994 = vpack.c.b16 %v3346, %v3330
    %v4995 = vpack.c.b16 %v3347, %v3331
    %v4996 = vpack.c.b16 %v3348, %v3332
    %v4997 = vpack.c.b16 %v3349, %v3333
    %v4998 = vpack.c.b16 %v3350, %v3334
    %v4999 = vpack.c.b16 %v3351, %v3335
    %v5000 = vpack.c.b16 %v3352, %v3336
    %v5001 = vpack.c.b16 %v3353, %v3337
    %v5002 = vpack.c.b16 %v3354, %v3338
    %v5003 = vpack.c.b16 %v3355, %v3339
    %v5004 = vpack.c.b16 %v3356, %v3340
    %v5005 = vpack.c.b16 %v3357, %v3341
    %v5006 = vpack.c.b16 %v3358, %v3342
    %v5007 = vpack.c.b16 %v3375, %v3359
    %v5008 = vpack.c.b16 %v3376, %v3360
    %v5009 = vpack.c.b16 %v3377, %v3361
    %v5010 = vpack.c.b16 %v3378, %v3362
    %v5011 = vpack.c.b16 %v3379, %v3363
    %v5012 = vpack.c.b16 %v3380, %v3364
    %v5013 = vpack.c.b16 %v3381, %v3365
    %v5014 = vpack.c.b16 %v3382, %v3366
    %v5015 = vpack.c.b16 %v3383, %v3367
    %v5016 = vpack.c.b16 %v3384, %v3368
    %v5017 = vpack.c.b16 %v3385, %v3369
    %v5018 = vpack.c.b16 %v3386, %v3370
    %v5019 = vpack.c.b16 %v3387, %v3371
    %v5020 = vpack.c.b16 %v3388, %v3372
    %v5021 = vpack.c.b16 %v3389, %v3373
    %v5022 = vpack.c.b16 %v3390, %v3374
    %v5023 = vpack.c.b16 %v3407, %v3391
    %v5024 = vpack.c.b16 %v3408, %v3392
    %v5025 = vpack.c.b16 %v3409, %v3393
    %v5026 = vpack.c.b16 %v3410, %v3394
    %v5027 = vpack.c.b16 %v3411, %v3395
    %v5028 = vpack.c.b16 %v3412, %v3396
    %v5029 = vpack.c.b16 %v3413, %v3397
    %v5030 = vpack.c.b16 %v3414, %v3398
    %v5031 = vpack.c.b16 %v3415, %v3399
    %v5032 = vpack.c.b16 %v3416, %v3400
    %v5033 = vpack.c.b16 %v3417, %v3401
    %v5034 = vpack.c.b16 %v3418, %v3402
    %v5035 = vpack.c.b16 %v3419, %v3403
    %v5036 = vpack.c.b16 %v3420, %v3404
    %v5037 = vpack.c.b16 %v3421, %v3405
    %v5038 = vpack.c.b16 %v3422, %v3406
    %v5039 = vpack.c.b16 %v3439, %v3423
    %v5040 = vpack.c.b16 %v3440, %v3424
    %v5041 = vpack.c.b16 %v3441, %v3425
    %v5042 = vpack.c.b16 %v3442, %v3426
    %v5043 = vpack.c.b16 %v3443, %v3427
    %v5044 = vpack.c.b16 %v3444, %v3428
    %v5045 = vpack.c.b16 %v3445, %v3429
    %v5046 = vpack.c.b16 %v3446, %v3430
    %v5047 = vpack.c.b16 %v3447, %v3431
    %v5048 = vpack.c.b16 %v3448, %v3432
    %v5049 = vpack.c.b16 %v3449, %v3433
    %v5050 = vpack.c.b16 %v3450, %v3434
    %v5051 = vpack.c.b16 %v3451, %v3435
    %v5052 = vpack.c.b16 %v3452, %v3436
    %v5053 = vpack.c.b16 %v3453, %v3437
    %v5054 = vpack.c.b16 %v3454, %v3438
    %v5055 = vpack.c.b16 %v3471, %v3455
    %v5056 = vpack.c.b16 %v3472, %v3456
    %v5057 = vpack.c.b16 %v3473, %v3457
    %v5058 = vpack.c.b16 %v3474, %v3458
    %v5059 = vpack.c.b16 %v3475, %v3459
    %v5060 = vpack.c.b16 %v3476, %v3460
    %v5061 = vpack.c.b16 %v3477, %v3461
    %v5062 = vpack.c.b16 %v3478, %v3462
    %v5063 = vpack.c.b16 %v3479, %v3463
    %v5064 = vpack.c.b16 %v3480, %v3464
    %v5065 = vpack.c.b16 %v3481, %v3465
    %v5066 = vpack.c.b16 %v3482, %v3466
    %v5067 = vpack.c.b16 %v3483, %v3467
    %v5068 = vpack.c.b16 %v3484, %v3468
    %v5069 = vpack.c.b16 %v3485, %v3469
    %v5070 = vpack.c.b16 %v3486, %v3470
    %v5071 = vpack.c.b16 %v3503, %v3487
    %v5072 = vpack.c.b16 %v3504, %v3488
    %v5073 = vpack.c.b16 %v3505, %v3489
    %v5074 = vpack.c.b16 %v3506, %v3490
    %v5075 = vpack.c.b16 %v3507, %v3491
    %v5076 = vpack.c.b16 %v3508, %v3492
    %v5077 = vpack.c.b16 %v3509, %v3493
    %v5078 = vpack.c.b16 %v3510, %v3494
    %v5079 = vpack.c.b16 %v3511, %v3495
    %v5080 = vpack.c.b16 %v3512, %v3496
    %v5081 = vpack.c.b16 %v3513, %v3497
    %v5082 = vpack.c.b16 %v3514, %v3498
    %v5083 = vpack.c.b16 %v3515, %v3499
    %v5084 = vpack.c.b16 %v3516, %v3500
    %v5085 = vpack.c.b16 %v3517, %v3501
    %v5086 = vpack.c.b16 %v3518, %v3502
    %v5087 = vpack.c.b16 %v3535, %v3519
    %v5088 = vpack.c.b16 %v3536, %v3520
    %v5089 = vpack.c.b16 %v3537, %v3521
    %v5090 = vpack.c.b16 %v3538, %v3522
    %v5091 = vpack.c.b16 %v3539, %v3523
    %v5092 = vpack.c.b16 %v3540, %v3524
    %v5093 = vpack.c.b16 %v3541, %v3525
    %v5094 = vpack.c.b16 %v3542, %v3526
    %v5095 = vpack.c.b16 %v3543, %v3527
    %v5096 = vpack.c.b16 %v3544, %v3528
    %v5097 = vpack.c.b16 %v3545, %v3529
    %v5098 = vpack.c.b16 %v3546, %v3530
    %v5099 = vpack.c.b16 %v3547, %v3531
    %v5100 = vpack.c.b16 %v3548, %v3532
    %v5101 = vpack.c.b16 %v3549, %v3533
    %v5102 = vpack.c.b16 %v3550, %v3534
    %v5103 = vpack.c.b16 %v3567, %v3551
    %v5104 = vpack.c.b16 %v3568, %v3552
    %v5105 = vpack.c.b16 %v3569, %v3553
    %v5106 = vpack.c.b16 %v3570, %v3554
    %v5107 = vpack.c.b16 %v3571, %v3555
    %v5108 = vpack.c.b16 %v3572, %v3556
    %v5109 = vpack.c.b16 %v3573, %v3557
    %v5110 = vpack.c.b16 %v3574, %v3558
    %v5111 = vpack.c.b16 %v3575, %v3559
    %v5112 = vpack.c.b16 %v3576, %v3560
    %v5113 = vpack.c.b16 %v3577, %v3561
    %v5114 = vpack.c.b16 %v3578, %v3562
    %v5115 = vpack.c.b16 %v3579, %v3563
    %v5116 = vpack.c.b16 %v3580, %v3564
    %v5117 = vpack.c.b16 %v3581, %v3565
    %v5118 = vpack.c.b16 %v3582, %v3566
    %v5119 = vpack.c.b16 %v3599, %v3583
    %v5120 = vpack.c.b16 %v3600, %v3584
    %v5121 = vpack.c.b16 %v3601, %v3585
    %v5122 = vpack.c.b16 %v3602, %v3586
    %v5123 = vpack.c.b16 %v3603, %v3587
    %v5124 = vpack.c.b16 %v3604, %v3588
    %v5125 = vpack.c.b16 %v3605, %v3589
    %v5126 = vpack.c.b16 %v3606, %v3590
    %v5127 = vpack.c.b16 %v3607, %v3591
    %v5128 = vpack.c.b16 %v3608, %v3592
    %v5129 = vpack.c.b16 %v3609, %v3593
    %v5130 = vpack.c.b16 %v3610, %v3594
    %v5131 = vpack.c.b16 %v3611, %v3595
    %v5132 = vpack.c.b16 %v3612, %v3596
    %v5133 = vpack.c.b16 %v3613, %v3597
    %v5134 = vpack.c.b16 %v3614, %v3598
    %v5135 = vpack.c.b16 %v3631, %v3615
    %v5136 = vpack.c.b16 %v3632, %v3616
    %v5137 = vpack.c.b16 %v3633, %v3617
    %v5138 = vpack.c.b16 %v3634, %v3618
    %v5139 = vpack.c.b16 %v3635, %v3619
    %v5140 = vpack.c.b16 %v3636, %v3620
    %v5141 = vpack.c.b16 %v3637, %v3621
    %v5142 = vpack.c.b16 %v3638, %v3622
    %v5143 = vpack.c.b16 %v3639, %v3623
    %v5144 = vpack.c.b16 %v3640, %v3624
    %v5145 = vpack.c.b16 %v3641, %v3625
    %v5146 = vpack.c.b16 %v3642, %v3626
    %v5147 = vpack.c.b16 %v3643, %v3627
    %v5148 = vpack.c.b16 %v3644, %v3628
    %v5149 = vpack.c.b16 %v3645, %v3629
    %v5150 = vpack.c.b16 %v3646, %v3630
    %v5151 = vpack.c.b16 %v3663, %v3647
    %v5152 = vpack.c.b16 %v3664, %v3648
    %v5153 = vpack.c.b16 %v3665, %v3649
    %v5154 = vpack.c.b16 %v3666, %v3650
    %v5155 = vpack.c.b16 %v3667, %v3651
    %v5156 = vpack.c.b16 %v3668, %v3652
    %v5157 = vpack.c.b16 %v3669, %v3653
    %v5158 = vpack.c.b16 %v3670, %v3654
    %v5159 = vpack.c.b16 %v3671, %v3655
    %v5160 = vpack.c.b16 %v3672, %v3656
    %v5161 = vpack.c.b16 %v3673, %v3657
    %v5162 = vpack.c.b16 %v3674, %v3658
    %v5163 = vpack.c.b16 %v3675, %v3659
    %v5164 = vpack.c.b16 %v3676, %v3660
    %v5165 = vpack.c.b16 %v3677, %v3661
    %v5166 = vpack.c.b16 %v3678, %v3662
    %v5167 = vpack.c.b16 %v3695, %v3679
    %v5168 = vpack.c.b16 %v3696, %v3680
    %v5169 = vpack.c.b16 %v3697, %v3681
    %v5170 = vpack.c.b16 %v3698, %v3682
    %v5171 = vpack.c.b16 %v3699, %v3683
    %v5172 = vpack.c.b16 %v3700, %v3684
    %v5173 = vpack.c.b16 %v3701, %v3685
    %v5174 = vpack.c.b16 %v3702, %v3686
    %v5175 = vpack.c.b16 %v3703, %v3687
    %v5176 = vpack.c.b16 %v3704, %v3688
    %v5177 = vpack.c.b16 %v3705, %v3689
    %v5178 = vpack.c.b16 %v3706, %v3690
    %v5179 = vpack.c.b16 %v3707, %v3691
    %v5180 = vpack.c.b16 %v3708, %v3692
    %v5181 = vpack.c.b16 %v3709, %v3693
    %v5182 = vpack.c.b16 %v3710, %v3694
    %v5183 = vpack.c.b16 %v3727, %v3711
    %v5184 = vpack.c.b16 %v3728, %v3712
    %v5185 = vpack.c.b16 %v3729, %v3713
    %v5186 = vpack.c.b16 %v3730, %v3714
    %v5187 = vpack.c.b16 %v3731, %v3715
    %v5188 = vpack.c.b16 %v3732, %v3716
    %v5189 = vpack.c.b16 %v3733, %v3717
    %v5190 = vpack.c.b16 %v3734, %v3718
    %v5191 = vpack.c.b16 %v3735, %v3719
    %v5192 = vpack.c.b16 %v3736, %v3720
    %v5193 = vpack.c.b16 %v3737, %v3721
    %v5194 = vpack.c.b16 %v3738, %v3722
    %v5195 = vpack.c.b16 %v3739, %v3723
    %v5196 = vpack.c.b16 %v3740, %v3724
    %v5197 = vpack.c.b16 %v3741, %v3725
    %v5198 = vpack.c.b16 %v3742, %v3726
    %v5199 = vpack.c.b16 %v3759, %v3743
    %v5200 = vpack.c.b16 %v3760, %v3744
    %v5201 = vpack.c.b16 %v3761, %v3745
    %v5202 = vpack.c.b16 %v3762, %v3746
    %v5203 = vpack.c.b16 %v3763, %v3747
    %v5204 = vpack.c.b16 %v3764, %v3748
    %v5205 = vpack.c.b16 %v3765, %v3749
    %v5206 = vpack.c.b16 %v3766, %v3750
    %v5207 = vpack.c.b16 %v3767, %v3751
    %v5208 = vpack.c.b16 %v3768, %v3752
    %v5209 = vpack.c.b16 %v3769, %v3753
    %v5210 = vpack.c.b16 %v3770, %v3754
    %v5211 = vpack.c.b16 %v3771, %v3755
    %v5212 = vpack.c.b16 %v3772, %v3756
    %v5213 = vpack.c.b16 %v3773, %v3757
    %v5214 = vpack.c.b16 %v3774, %v3758
    %v5215 = vpack.c.b16 %v3791, %v3775
    %v5216 = vpack.c.b16 %v3792, %v3776
    %v5217 = vpack.c.b16 %v3793, %v3777
    %v5218 = vpack.c.b16 %v3794, %v3778
    %v5219 = vpack.c.b16 %v3795, %v3779
    %v5220 = vpack.c.b16 %v3796, %v3780
    %v5221 = vpack.c.b16 %v3797, %v3781
    %v5222 = vpack.c.b16 %v3798, %v3782
    %v5223 = vpack.c.b16 %v3799, %v3783
    %v5224 = vpack.c.b16 %v3800, %v3784
    %v5225 = vpack.c.b16 %v3801, %v3785
    %v5226 = vpack.c.b16 %v3802, %v3786
    %v5227 = vpack.c.b16 %v3803, %v3787
    %v5228 = vpack.c.b16 %v3804, %v3788
    %v5229 = vpack.c.b16 %v3805, %v3789
    %v5230 = vpack.c.b16 %v3806, %v3790
    %v5231 = vpack.c.b16 %v3823, %v3807
    %v5232 = vpack.c.b16 %v3824, %v3808
    %v5233 = vpack.c.b16 %v3825, %v3809
    %v5234 = vpack.c.b16 %v3826, %v3810
    %v5235 = vpack.c.b16 %v3827, %v3811
    %v5236 = vpack.c.b16 %v3828, %v3812
    %v5237 = vpack.c.b16 %v3829, %v3813
    %v5238 = vpack.c.b16 %v3830, %v3814
    %v5239 = vpack.c.b16 %v3831, %v3815
    %v5240 = vpack.c.b16 %v3832, %v3816
    %v5241 = vpack.c.b16 %v3833, %v3817
    %v5242 = vpack.c.b16 %v3834, %v3818
    %v5243 = vpack.c.b16 %v3835, %v3819
    %v5244 = vpack.c.b16 %v3836, %v3820
    %v5245 = vpack.c.b16 %v3837, %v3821
    %v5246 = vpack.c.b16 %v3838, %v3822
    %v5247 = vpack.c.b16 %v3855, %v3839
    %v5248 = vpack.c.b16 %v3856, %v3840
    %v5249 = vpack.c.b16 %v3857, %v3841
    %v5250 = vpack.c.b16 %v3858, %v3842
    %v5251 = vpack.c.b16 %v3859, %v3843
    %v5252 = vpack.c.b16 %v3860, %v3844
    %v5253 = vpack.c.b16 %v3861, %v3845
    %v5254 = vpack.c.b16 %v3862, %v3846
    %v5255 = vpack.c.b16 %v3863, %v3847
    %v5256 = vpack.c.b16 %v3864, %v3848
    %v5257 = vpack.c.b16 %v3865, %v3849
    %v5258 = vpack.c.b16 %v3866, %v3850
    %v5259 = vpack.c.b16 %v3867, %v3851
    %v5260 = vpack.c.b16 %v3868, %v3852
    %v5261 = vpack.c.b16 %v3869, %v3853
    %v5262 = vpack.c.b16 %v3870, %v3854
    %v5263 = vpack.c.b16 %v3887, %v3871
    %v5264 = vpack.c.b16 %v3888, %v3872
    %v5265 = vpack.c.b16 %v3889, %v3873
    %v5266 = vpack.c.b16 %v3890, %v3874
    %v5267 = vpack.c.b16 %v3891, %v3875
    %v5268 = vpack.c.b16 %v3892, %v3876
    %v5269 = vpack.c.b16 %v3893, %v3877
    %v5270 = vpack.c.b16 %v3894, %v3878
    %v5271 = vpack.c.b16 %v3895, %v3879
    %v5272 = vpack.c.b16 %v3896, %v3880
    %v5273 = vpack.c.b16 %v3897, %v3881
    %v5274 = vpack.c.b16 %v3898, %v3882
    %v5275 = vpack.c.b16 %v3899, %v3883
    %v5276 = vpack.c.b16 %v3900, %v3884
    %v5277 = vpack.c.b16 %v3901, %v3885
    %v5278 = vpack.c.b16 %v3902, %v3886
    %v5279 = vpack.c.b16 %v3919, %v3903
    %v5280 = vpack.c.b16 %v3920, %v3904
    %v5281 = vpack.c.b16 %v3921, %v3905
    %v5282 = vpack.c.b16 %v3922, %v3906
    %v5283 = vpack.c.b16 %v3923, %v3907
    %v5284 = vpack.c.b16 %v3924, %v3908
    %v5285 = vpack.c.b16 %v3925, %v3909
    %v5286 = vpack.c.b16 %v3926, %v3910
    %v5287 = vpack.c.b16 %v3927, %v3911
    %v5288 = vpack.c.b16 %v3928, %v3912
    %v5289 = vpack.c.b16 %v3929, %v3913
    %v5290 = vpack.c.b16 %v3930, %v3914
    %v5291 = vpack.c.b16 %v3931, %v3915
    %v5292 = vpack.c.b16 %v3932, %v3916
    %v5293 = vpack.c.b16 %v3933, %v3917
    %v5294 = vpack.c.b16 %v3934, %v3918
    %v5295 = vpack.c.b16 %v3951, %v3935
    %v5296 = vpack.c.b16 %v3952, %v3936
    %v5297 = vpack.c.b16 %v3953, %v3937
    %v5298 = vpack.c.b16 %v3954, %v3938
    %v5299 = vpack.c.b16 %v3955, %v3939
    %v5300 = vpack.c.b16 %v3956, %v3940
    %v5301 = vpack.c.b16 %v3957, %v3941
    %v5302 = vpack.c.b16 %v3958, %v3942
    %v5303 = vpack.c.b16 %v3959, %v3943
    %v5304 = vpack.c.b16 %v3960, %v3944
    %v5305 = vpack.c.b16 %v3961, %v3945
    %v5306 = vpack.c.b16 %v3962, %v3946
    %v5307 = vpack.c.b16 %v3963, %v3947
    %v5308 = vpack.c.b16 %v3964, %v3948
    %v5309 = vpack.c.b16 %v3965, %v3949
    %v5310 = vpack.c.b16 %v3966, %v3950
    %v5311 = vpack.c.b16 %v3983, %v3967
    %v5312 = vpack.c.b16 %v3984, %v3968
    %v5313 = vpack.c.b16 %v3985, %v3969
    %v5314 = vpack.c.b16 %v3986, %v3970
    %v5315 = vpack.c.b16 %v3987, %v3971
    %v5316 = vpack.c.b16 %v3988, %v3972
    %v5317 = vpack.c.b16 %v3989, %v3973
    %v5318 = vpack.c.b16 %v3990, %v3974
    %v5319 = vpack.c.b16 %v3991, %v3975
    %v5320 = vpack.c.b16 %v3992, %v3976
    %v5321 = vpack.c.b16 %v3993, %v3977
    %v5322 = vpack.c.b16 %v3994, %v3978
    %v5323 = vpack.c.b16 %v3995, %v3979
    %v5324 = vpack.c.b16 %v3996, %v3980
    %v5325 = vpack.c.b16 %v3997, %v3981
    %v5326 = vpack.c.b16 %v3998, %v3982
    %v5327 = vpack.c.b16 %v4015, %v3999
    %v5328 = vpack.c.b16 %v4016, %v4000
    %v5329 = vpack.c.b16 %v4017, %v4001
    %v5330 = vpack.c.b16 %v4018, %v4002
    %v5331 = vpack.c.b16 %v4019, %v4003
    %v5332 = vpack.c.b16 %v4020, %v4004
    %v5333 = vpack.c.b16 %v4021, %v4005
    %v5334 = vpack.c.b16 %v4022, %v4006
    %v5335 = vpack.c.b16 %v4023, %v4007
    %v5336 = vpack.c.b16 %v4024, %v4008
    %v5337 = vpack.c.b16 %v4025, %v4009
    %v5338 = vpack.c.b16 %v4026, %v4010
    %v5339 = vpack.c.b16 %v4027, %v4011
    %v5340 = vpack.c.b16 %v4028, %v4012
    %v5341 = vpack.c.b16 %v4029, %v4013
    %v5342 = vpack.c.b16 %v4030, %v4014
    %v5343 = vpack.c.b16 %v4047, %v4031
    %v5344 = vpack.c.b16 %v4048, %v4032
    %v5345 = vpack.c.b16 %v4049, %v4033
    %v5346 = vpack.c.b16 %v4050, %v4034
    %v5347 = vpack.c.b16 %v4051, %v4035
    %v5348 = vpack.c.b16 %v4052, %v4036
    %v5349 = vpack.c.b16 %v4053, %v4037
    %v5350 = vpack.c.b16 %v4054, %v4038
    %v5351 = vpack.c.b16 %v4055, %v4039
    %v5352 = vpack.c.b16 %v4056, %v4040
    %v5353 = vpack.c.b16 %v4057, %v4041
    %v5354 = vpack.c.b16 %v4058, %v4042
    %v5355 = vpack.c.b16 %v4059, %v4043
    %v5356 = vpack.c.b16 %v4060, %v4044
    %v5357 = vpack.c.b16 %v4061, %v4045
    %v5358 = vpack.c.b16 %v4062, %v4046
    %v5359 = vpack.c.b16 %v4079, %v4063
    %v5360 = vpack.c.b16 %v4080, %v4064
    %v5361 = vpack.c.b16 %v4081, %v4065
    %v5362 = vpack.c.b16 %v4082, %v4066
    %v5363 = vpack.c.b16 %v4083, %v4067
    %v5364 = vpack.c.b16 %v4084, %v4068
    %v5365 = vpack.c.b16 %v4085, %v4069
    %v5366 = vpack.c.b16 %v4086, %v4070
    %v5367 = vpack.c.b16 %v4087, %v4071
    %v5368 = vpack.c.b16 %v4088, %v4072
    %v5369 = vpack.c.b16 %v4089, %v4073
    %v5370 = vpack.c.b16 %v4090, %v4074
    %v5371 = vpack.c.b16 %v4091, %v4075
    %v5372 = vpack.c.b16 %v4092, %v4076
    %v5373 = vpack.c.b16 %v4093, %v4077
    %v5374 = vpack.c.b16 %v4094, %v4078
    %v5375 = vpack.c.b16 %v4111, %v4095
    %v5376 = vpack.c.b16 %v4112, %v4096
    %v5377 = vpack.c.b16 %v4113, %v4097
    %v5378 = vpack.c.b16 %v4114, %v4098
    %v5379 = vpack.c.b16 %v4115, %v4099
    %v5380 = vpack.c.b16 %v4116, %v4100
    %v5381 = vpack.c.b16 %v4117, %v4101
    %v5382 = vpack.c.b16 %v4118, %v4102
    %v5383 = vpack.c.b16 %v4119, %v4103
    %v5384 = vpack.c.b16 %v4120, %v4104
    %v5385 = vpack.c.b16 %v4121, %v4105
    %v5386 = vpack.c.b16 %v4122, %v4106
    %v5387 = vpack.c.b16 %v4123, %v4107
    %v5388 = vpack.c.b16 %v4124, %v4108
    %v5389 = vpack.c.b16 %v4125, %v4109
    %v5390 = vpack.c.b16 %v4126, %v4110
    %v5391 = vpack.c.b16 %v4143, %v4127
    %v5392 = vpack.c.b16 %v4144, %v4128
    %v5393 = vpack.c.b16 %v4145, %v4129
    %v5394 = vpack.c.b16 %v4146, %v4130
    %v5395 = vpack.c.b16 %v4147, %v4131
    %v5396 = vpack.c.b16 %v4148, %v4132
    %v5397 = vpack.c.b16 %v4149, %v4133
    %v5398 = vpack.c.b16 %v4150, %v4134
    %v5399 = vpack.c.b16 %v4151, %v4135
    %v5400 = vpack.c.b16 %v4152, %v4136
    %v5401 = vpack.c.b16 %v4153, %v4137
    %v5402 = vpack.c.b16 %v4154, %v4138
    %v5403 = vpack.c.b16 %v4155, %v4139
    %v5404 = vpack.c.b16 %v4156, %v4140
    %v5405 = vpack.c.b16 %v4157, %v4141
    %v5406 = vpack.c.b16 %v4158, %v4142
    %v5407 = vpack.c.b16 %v4175, %v4159
    %v5408 = vpack.c.b16 %v4176, %v4160
    %v5409 = vpack.c.b16 %v4177, %v4161
    %v5410 = vpack.c.b16 %v4178, %v4162
    %v5411 = vpack.c.b16 %v4179, %v4163
    %v5412 = vpack.c.b16 %v4180, %v4164
    %v5413 = vpack.c.b16 %v4181, %v4165
    %v5414 = vpack.c.b16 %v4182, %v4166
    %v5415 = vpack.c.b16 %v4183, %v4167
    %v5416 = vpack.c.b16 %v4184, %v4168
    %v5417 = vpack.c.b16 %v4185, %v4169
    %v5418 = vpack.c.b16 %v4186, %v4170
    %v5419 = vpack.c.b16 %v4187, %v4171
    %v5420 = vpack.c.b16 %v4188, %v4172
    %v5421 = vpack.c.b16 %v4189, %v4173
    %v5422 = vpack.c.b16 %v4190, %v4174
    %v5423 = vpack.c.b16 %v4207, %v4191
    %v5424 = vpack.c.b16 %v4208, %v4192
    %v5425 = vpack.c.b16 %v4209, %v4193
    %v5426 = vpack.c.b16 %v4210, %v4194
    %v5427 = vpack.c.b16 %v4211, %v4195
    %v5428 = vpack.c.b16 %v4212, %v4196
    %v5429 = vpack.c.b16 %v4213, %v4197
    %v5430 = vpack.c.b16 %v4214, %v4198
    %v5431 = vpack.c.b16 %v4215, %v4199
    %v5432 = vpack.c.b16 %v4216, %v4200
    %v5433 = vpack.c.b16 %v4217, %v4201
    %v5434 = vpack.c.b16 %v4218, %v4202
    %v5435 = vpack.c.b16 %v4219, %v4203
    %v5436 = vpack.c.b16 %v4220, %v4204
    %v5437 = vpack.c.b16 %v4221, %v4205
    %v5438 = vpack.c.b16 %v4222, %v4206
    %v5439 = vpack.c.b16 %v4239, %v4223
    %v5440 = vpack.c.b16 %v4240, %v4224
    %v5441 = vpack.c.b16 %v4241, %v4225
    %v5442 = vpack.c.b16 %v4242, %v4226
    %v5443 = vpack.c.b16 %v4243, %v4227
    %v5444 = vpack.c.b16 %v4244, %v4228
    %v5445 = vpack.c.b16 %v4245, %v4229
    %v5446 = vpack.c.b16 %v4246, %v4230
    %v5447 = vpack.c.b16 %v4247, %v4231
    %v5448 = vpack.c.b16 %v4248, %v4232
    %v5449 = vpack.c.b16 %v4249, %v4233
    %v5450 = vpack.c.b16 %v4250, %v4234
    %v5451 = vpack.c.b16 %v4251, %v4235
    %v5452 = vpack.c.b16 %v4252, %v4236
    %v5453 = vpack.c.b16 %v4253, %v4237
    %v5454 = vpack.c.b16 %v4254, %v4238
    %v5455 = vpack.c.b16 %v4271, %v4255
    %v5456 = vpack.c.b16 %v4272, %v4256
    %v5457 = vpack.c.b16 %v4273, %v4257
    %v5458 = vpack.c.b16 %v4274, %v4258
    %v5459 = vpack.c.b16 %v4275, %v4259
    %v5460 = vpack.c.b16 %v4276, %v4260
    %v5461 = vpack.c.b16 %v4277, %v4261
    %v5462 = vpack.c.b16 %v4278, %v4262
    %v5463 = vpack.c.b16 %v4279, %v4263
    %v5464 = vpack.c.b16 %v4280, %v4264
    %v5465 = vpack.c.b16 %v4281, %v4265
    %v5466 = vpack.c.b16 %v4282, %v4266
    %v5467 = vpack.c.b16 %v4283, %v4267
    %v5468 = vpack.c.b16 %v4284, %v4268
    %v5469 = vpack.c.b16 %v4285, %v4269
    %v5470 = vpack.c.b16 %v4286, %v4270
    %v5471 = vpack.c.b16 %v4303, %v4287
    %v5472 = vpack.c.b16 %v4304, %v4288
    %v5473 = vpack.c.b16 %v4305, %v4289
    %v5474 = vpack.c.b16 %v4306, %v4290
    %v5475 = vpack.c.b16 %v4307, %v4291
    %v5476 = vpack.c.b16 %v4308, %v4292
    %v5477 = vpack.c.b16 %v4309, %v4293
    %v5478 = vpack.c.b16 %v4310, %v4294
    %v5479 = vpack.c.b16 %v4311, %v4295
    %v5480 = vpack.c.b16 %v4312, %v4296
    %v5481 = vpack.c.b16 %v4313, %v4297
    %v5482 = vpack.c.b16 %v4314, %v4298
    %v5483 = vpack.c.b16 %v4315, %v4299
    %v5484 = vpack.c.b16 %v4316, %v4300
    %v5485 = vpack.c.b16 %v4317, %v4301
    %v5486 = vpack.c.b16 %v4318, %v4302
    %v5487 = vpack.c.b16 %v4335, %v4319
    %v5488 = vpack.c.b16 %v4336, %v4320
    %v5489 = vpack.c.b16 %v4337, %v4321
    %v5490 = vpack.c.b16 %v4338, %v4322
    %v5491 = vpack.c.b16 %v4339, %v4323
    %v5492 = vpack.c.b16 %v4340, %v4324
    %v5493 = vpack.c.b16 %v4341, %v4325
    %v5494 = vpack.c.b16 %v4342, %v4326
    %v5495 = vpack.c.b16 %v4343, %v4327
    %v5496 = vpack.c.b16 %v4344, %v4328
    %v5497 = vpack.c.b16 %v4345, %v4329
    %v5498 = vpack.c.b16 %v4346, %v4330
    %v5499 = vpack.c.b16 %v4347, %v4331
    %v5500 = vpack.c.b16 %v4348, %v4332
    %v5501 = vpack.c.b16 %v4349, %v4333
    %v5502 = vpack.c.b16 %v4350, %v4334
    %v5503 = vpack.c.b16 %v4367, %v4351
    %v5504 = vpack.c.b16 %v4368, %v4352
    %v5505 = vpack.c.b16 %v4369, %v4353
    %v5506 = vpack.c.b16 %v4370, %v4354
    %v5507 = vpack.c.b16 %v4371, %v4355
    %v5508 = vpack.c.b16 %v4372, %v4356
    %v5509 = vpack.c.b16 %v4373, %v4357
    %v5510 = vpack.c.b16 %v4374, %v4358
    %v5511 = vpack.c.b16 %v4375, %v4359
    %v5512 = vpack.c.b16 %v4376, %v4360
    %v5513 = vpack.c.b16 %v4377, %v4361
    %v5514 = vpack.c.b16 %v4378, %v4362
    %v5515 = vpack.c.b16 %v4379, %v4363
    %v5516 = vpack.c.b16 %v4380, %v4364
    %v5517 = vpack.c.b16 %v4381, %v4365
    %v5518 = vpack.c.b16 %v4382, %v4366
    %v5519 = vpack.c.b16 %v4399, %v4383
    %v5520 = vpack.c.b16 %v4400, %v4384
    %v5521 = vpack.c.b16 %v4401, %v4385
    %v5522 = vpack.c.b16 %v4402, %v4386
    %v5523 = vpack.c.b16 %v4403, %v4387
    %v5524 = vpack.c.b16 %v4404, %v4388
    %v5525 = vpack.c.b16 %v4405, %v4389
    %v5526 = vpack.c.b16 %v4406, %v4390
    %v5527 = vpack.c.b16 %v4407, %v4391
    %v5528 = vpack.c.b16 %v4408, %v4392
    %v5529 = vpack.c.b16 %v4409, %v4393
    %v5530 = vpack.c.b16 %v4410, %v4394
    %v5531 = vpack.c.b16 %v4411, %v4395
    %v5532 = vpack.c.b16 %v4412, %v4396
    %v5533 = vpack.c.b16 %v4413, %v4397
    %v5534 = vpack.c.b16 %v4414, %v4398
    %v5535 = vpack.c.b16 %v4431, %v4415
    %v5536 = vpack.c.b16 %v4432, %v4416
    %v5537 = vpack.c.b16 %v4433, %v4417
    %v5538 = vpack.c.b16 %v4434, %v4418
    %v5539 = vpack.c.b16 %v4435, %v4419
    %v5540 = vpack.c.b16 %v4436, %v4420
    %v5541 = vpack.c.b16 %v4437, %v4421
    %v5542 = vpack.c.b16 %v4438, %v4422
    %v5543 = vpack.c.b16 %v4439, %v4423
    %v5544 = vpack.c.b16 %v4440, %v4424
    %v5545 = vpack.c.b16 %v4441, %v4425
    %v5546 = vpack.c.b16 %v4442, %v4426
    %v5547 = vpack.c.b16 %v4443, %v4427
    %v5548 = vpack.c.b16 %v4444, %v4428
    %v5549 = vpack.c.b16 %v4445, %v4429
    %v5550 = vpack.c.b16 %v4446, %v4430
    %v5551 = vpack.c.b16 %v4463, %v4447
    %v5552 = vpack.c.b16 %v4464, %v4448
    %v5553 = vpack.c.b16 %v4465, %v4449
    %v5554 = vpack.c.b16 %v4466, %v4450
    %v5555 = vpack.c.b16 %v4467, %v4451
    %v5556 = vpack.c.b16 %v4468, %v4452
    %v5557 = vpack.c.b16 %v4469, %v4453
    %v5558 = vpack.c.b16 %v4470, %v4454
    %v5559 = vpack.c.b16 %v4471, %v4455
    %v5560 = vpack.c.b16 %v4472, %v4456
    %v5561 = vpack.c.b16 %v4473, %v4457
    %v5562 = vpack.c.b16 %v4474, %v4458
    %v5563 = vpack.c.b16 %v4475, %v4459
    %v5564 = vpack.c.b16 %v4476, %v4460
    %v5565 = vpack.c.b16 %v4477, %v4461
    %v5566 = vpack.c.b16 %v4478, %v4462
    %v5567 = vpack.c.b16 %v4495, %v4479
    %v5568 = vpack.c.b16 %v4496, %v4480
    %v5569 = vpack.c.b16 %v4497, %v4481
    %v5570 = vpack.c.b16 %v4498, %v4482
    %v5571 = vpack.c.b16 %v4499, %v4483
    %v5572 = vpack.c.b16 %v4500, %v4484
    %v5573 = vpack.c.b16 %v4501, %v4485
    %v5574 = vpack.c.b16 %v4502, %v4486
    %v5575 = vpack.c.b16 %v4503, %v4487
    %v5576 = vpack.c.b16 %v4504, %v4488
    %v5577 = vpack.c.b16 %v4505, %v4489
    %v5578 = vpack.c.b16 %v4506, %v4490
    %v5579 = vpack.c.b16 %v4507, %v4491
    %v5580 = vpack.c.b16 %v4508, %v4492
    %v5581 = vpack.c.b16 %v4509, %v4493
    %v5582 = vpack.c.b16 %v4510, %v4494
    %v5583 = vpack.c.b16 %v4527, %v4511
    %v5584 = vpack.c.b16 %v4528, %v4512
    %v5585 = vpack.c.b16 %v4529, %v4513
    %v5586 = vpack.c.b16 %v4530, %v4514
    %v5587 = vpack.c.b16 %v4531, %v4515
    %v5588 = vpack.c.b16 %v4532, %v4516
    %v5589 = vpack.c.b16 %v4533, %v4517
    %v5590 = vpack.c.b16 %v4534, %v4518
    %v5591 = vpack.c.b16 %v4535, %v4519
    %v5592 = vpack.c.b16 %v4536, %v4520
    %v5593 = vpack.c.b16 %v4537, %v4521
    %v5594 = vpack.c.b16 %v4538, %v4522
    %v5595 = vpack.c.b16 %v4539, %v4523
    %v5596 = vpack.c.b16 %v4540, %v4524
    %v5597 = vpack.c.b16 %v4541, %v4525
    %v5598 = vpack.c.b16 %v4542, %v4526
    %v5599 = vpack.c.b16 %v4559, %v4543
    %v5600 = vpack.c.b16 %v4560, %v4544
    %v5601 = vpack.c.b16 %v4561, %v4545
    %v5602 = vpack.c.b16 %v4562, %v4546
    %v5603 = vpack.c.b16 %v4563, %v4547
    %v5604 = vpack.c.b16 %v4564, %v4548
    %v5605 = vpack.c.b16 %v4565, %v4549
    %v5606 = vpack.c.b16 %v4566, %v4550
    %v5607 = vpack.c.b16 %v4567, %v4551
    %v5608 = vpack.c.b16 %v4568, %v4552
    %v5609 = vpack.c.b16 %v4569, %v4553
    %v5610 = vpack.c.b16 %v4570, %v4554
    %v5611 = vpack.c.b16 %v4571, %v4555
    %v5612 = vpack.c.b16 %v4572, %v4556
    %v5613 = vpack.c.b16 %v4573, %v4557
    %v5614 = vpack.c.b16 %v4574, %v4558
    %v5615 = vpack.c.b16 %v4591, %v4575
    %v5616 = vpack.c.b16 %v4592, %v4576
    %v5617 = vpack.c.b16 %v4593, %v4577
    %v5618 = vpack.c.b16 %v4594, %v4578
    %v5619 = vpack.c.b16 %v4595, %v4579
    %v5620 = vpack.c.b16 %v4596, %v4580
    %v5621 = vpack.c.b16 %v4597, %v4581
    %v5622 = vpack.c.b16 %v4598, %v4582
    %v5623 = vpack.c.b16 %v4599, %v4583
    %v5624 = vpack.c.b16 %v4600, %v4584
    %v5625 = vpack.c.b16 %v4601, %v4585
    %v5626 = vpack.c.b16 %v4602, %v4586
    %v5627 = vpack.c.b16 %v4603, %v4587
    %v5628 = vpack.c.b16 %v4604, %v4588
    %v5629 = vpack.c.b16 %v4605, %v4589
    %v5630 = vpack.c.b16 %v4606, %v4590
    %6655 = vmatprep.subr.bf16.mxu0 %v4720
    %6656 = vmatpush1.bf16.msra.mxu0 %v4719
    %6657 = vmatprep.subr.bf16.mxu0 %v4704
    %6658 = vmatpush1.bf16.msra.mxu0 %v4703
    %6659 = vmatprep.subr.bf16.mxu0 %v4688
    %6660 = vmatpush1.bf16.msra.mxu0 %v4687
    %6661 = vmatprep.subr.bf16.mxu0 %v4672
    %6662 = vmatpush1.bf16.msra.mxu0 %v4671
    %6663 = vmatprep.subr.bf16.mxu0 %v4656
    %6664 = vmatpush1.bf16.msra.mxu0 %v4655
    %6665 = vmatprep.subr.bf16.mxu0 %v4640
    %6666 = vmatpush1.bf16.msra.mxu0 %v4639
    %6667 = vmatprep.subr.bf16.mxu0 %v4624
    %6668 = vmatpush1.bf16.msra.mxu0 %v4623
    %6669 = vmatprep.subr.bf16.mxu0 %v4608
    %6670 = vmatpush1.bf16.msra.mxu0 %v4607
    %6671 = vmatprep.subr.bf16.mxu0 %v4848
    %6672 = vmatpush2.bf16.msra.mxu0 %v4847
    %6673 = vmatprep.subr.bf16.mxu0 %v4832
    %6674 = vmatpush2.bf16.msra.mxu0 %v4831
    %6675 = vmatprep.subr.bf16.mxu0 %v4816
    %6676 = vmatpush2.bf16.msra.mxu0 %v4815
    %6677 = vmatprep.subr.bf16.mxu0 %v4800
    %6678 = vmatpush2.bf16.msra.mxu0 %v4799
    %6679 = vmatprep.subr.bf16.mxu0 %v4784
    %6680 = vmatpush2.bf16.msra.mxu0 %v4783
    %6681 = vmatprep.subr.bf16.mxu0 %v4768
    %6682 = vmatpush2.bf16.msra.mxu0 %v4767
    %6683 = vmatprep.subr.bf16.mxu0 %v4752
    %6684 = vmatpush2.bf16.msra.mxu0 %v4751
    %6685 = vmatprep.subr.bf16.mxu0 %v4736
    %6686 = vmatpush2.bf16.msra.mxu0 %v4735
    %6687 = vmatprep.mubr.bf16.mxu0 %v420
    %6688 = vmatmul.mubr.bf16.gmra.mxu0 %v419
    %v6689 = vpop.f32.mrf.mxu0
    %v6690 = vadd.f32 %v1458, %v6689
    %v6691 = vpop.f32.mrf.mxu0
    %v6692 = vadd.f32 %v1462, %v6691
    %v6693 = vpop.f32.mrf.mxu0
    %v6694 = vpop.f32.mrf.mxu0
    %6695 = vdwg.mxu0
    %6696 = vmatprep.subr.bf16.mxu0 %v4976
    %6697 = vmatpush1.bf16.msra.mxu0 %v4975
    %6698 = vmatprep.subr.bf16.mxu0 %v4960
    %6699 = vmatpush1.bf16.msra.mxu0 %v4959
    %6700 = vmatprep.subr.bf16.mxu0 %v4944
    %6701 = vmatpush1.bf16.msra.mxu0 %v4943
    %6702 = vmatprep.subr.bf16.mxu0 %v4928
    %6703 = vmatpush1.bf16.msra.mxu0 %v4927
    %6704 = vmatprep.subr.bf16.mxu0 %v4912
    %6705 = vmatpush1.bf16.msra.mxu0 %v4911
    %6706 = vmatprep.subr.bf16.mxu0 %v4896
    %6707 = vmatpush1.bf16.msra.mxu0 %v4895
    %6708 = vmatprep.subr.bf16.mxu0 %v4880
    %6709 = vmatpush1.bf16.msra.mxu0 %v4879
    %6710 = vmatprep.subr.bf16.mxu0 %v4864
    %6711 = vmatpush1.bf16.msra.mxu0 %v4863
    %6712 = vmatprep.subr.bf16.mxu0 %v5104
    %6713 = vmatpush2.bf16.msra.mxu0 %v5103
    %6714 = vmatprep.subr.bf16.mxu0 %v5088
    %6715 = vmatpush2.bf16.msra.mxu0 %v5087
    %6716 = vmatprep.subr.bf16.mxu0 %v5072
    %6717 = vmatpush2.bf16.msra.mxu0 %v5071
    %6718 = vmatprep.subr.bf16.mxu0 %v5056
    %6719 = vmatpush2.bf16.msra.mxu0 %v5055
    %6720 = vmatprep.subr.bf16.mxu0 %v5040
    %6721 = vmatpush2.bf16.msra.mxu0 %v5039
    %6722 = vmatprep.subr.bf16.mxu0 %v5024
    %6723 = vmatpush2.bf16.msra.mxu0 %v5023
    %6724 = vmatprep.subr.bf16.mxu0 %v5008
    %6725 = vmatpush2.bf16.msra.mxu0 %v5007
    %6726 = vmatprep.subr.bf16.mxu0 %v4992
    %6727 = vmatpush2.bf16.msra.mxu0 %v4991
    %6728 = vmatprep.mubr.bf16.mxu0 %v422
    %6729 = vmatmul.mubr.bf16.gmra.mxu0 %v421
    %v6730 = vpop.f32.mrf.mxu0
    %v6731 = vadd.f32 %v6690, %v6730
    %v6732 = vpop.f32.mrf.mxu0
    %v6733 = vadd.f32 %v6692, %v6732
    %v6734 = vpop.f32.mrf.mxu0
    %v6735 = vpop.f32.mrf.mxu0
    %6736 = vdwg.mxu0
    %6737 = vmatprep.subr.bf16.mxu0 %v5232
    %6738 = vmatpush1.bf16.msra.mxu0 %v5231
    %6739 = vmatprep.subr.bf16.mxu0 %v5216
    %6740 = vmatpush1.bf16.msra.mxu0 %v5215
    %6741 = vmatprep.subr.bf16.mxu0 %v5200
    %6742 = vmatpush1.bf16.msra.mxu0 %v5199
    %6743 = vmatprep.subr.bf16.mxu0 %v5184
    %6744 = vmatpush1.bf16.msra.mxu0 %v5183
    %6745 = vmatprep.subr.bf16.mxu0 %v5168
    %6746 = vmatpush1.bf16.msra.mxu0 %v5167
    %6747 = vmatprep.subr.bf16.mxu0 %v5152
    %6748 = vmatpush1.bf16.msra.mxu0 %v5151
    %6749 = vmatprep.subr.bf16.mxu0 %v5136
    %6750 = vmatpush1.bf16.msra.mxu0 %v5135
    %6751 = vmatprep.subr.bf16.mxu0 %v5120
    %6752 = vmatpush1.bf16.msra.mxu0 %v5119
    %6753 = vmatprep.subr.bf16.mxu0 %v5360
    %6754 = vmatpush2.bf16.msra.mxu0 %v5359
    %6755 = vmatprep.subr.bf16.mxu0 %v5344
    %6756 = vmatpush2.bf16.msra.mxu0 %v5343
    %6757 = vmatprep.subr.bf16.mxu0 %v5328
    %6758 = vmatpush2.bf16.msra.mxu0 %v5327
    %6759 = vmatprep.subr.bf16.mxu0 %v5312
    %6760 = vmatpush2.bf16.msra.mxu0 %v5311
    %6761 = vmatprep.subr.bf16.mxu0 %v5296
    %6762 = vmatpush2.bf16.msra.mxu0 %v5295
    %6763 = vmatprep.subr.bf16.mxu0 %v5280
    %6764 = vmatpush2.bf16.msra.mxu0 %v5279
    %6765 = vmatprep.subr.bf16.mxu0 %v5264
    %6766 = vmatpush2.bf16.msra.mxu0 %v5263
    %6767 = vmatprep.subr.bf16.mxu0 %v5248
    %6768 = vmatpush2.bf16.msra.mxu0 %v5247
    %6769 = vmatprep.mubr.bf16.mxu0 %v424
    %6770 = vmatmul.mubr.bf16.gmra.mxu0 %v423
    %v6771 = vpop.f32.mrf.mxu0
    %v6772 = vadd.f32 %v6731, %v6771
    %v6773 = vpop.f32.mrf.mxu0
    %v6774 = vadd.f32 %v6733, %v6773
    %v6775 = vpop.f32.mrf.mxu0
    %v6776 = vpop.f32.mrf.mxu0
    %6777 = vdwg.mxu0
    %6778 = vmatprep.subr.bf16.mxu0 %v5488
    %6779 = vmatpush1.bf16.msra.mxu0 %v5487
    %6780 = vmatprep.subr.bf16.mxu0 %v5472
    %6781 = vmatpush1.bf16.msra.mxu0 %v5471
    %6782 = vmatprep.subr.bf16.mxu0 %v5456
    %6783 = vmatpush1.bf16.msra.mxu0 %v5455
    %6784 = vmatprep.subr.bf16.mxu0 %v5440
    %6785 = vmatpush1.bf16.msra.mxu0 %v5439
    %6786 = vmatprep.subr.bf16.mxu0 %v5424
    %6787 = vmatpush1.bf16.msra.mxu0 %v5423
    %6788 = vmatprep.subr.bf16.mxu0 %v5408
    %6789 = vmatpush1.bf16.msra.mxu0 %v5407
    %6790 = vmatprep.subr.bf16.mxu0 %v5392
    %6791 = vmatpush1.bf16.msra.mxu0 %v5391
    %6792 = vmatprep.subr.bf16.mxu0 %v5376
    %6793 = vmatpush1.bf16.msra.mxu0 %v5375
    %6794 = vmatprep.subr.bf16.mxu0 %v5616
    %6795 = vmatpush2.bf16.msra.mxu0 %v5615
    %6796 = vmatprep.subr.bf16.mxu0 %v5600
    %6797 = vmatpush2.bf16.msra.mxu0 %v5599
    %6798 = vmatprep.subr.bf16.mxu0 %v5584
    %6799 = vmatpush2.bf16.msra.mxu0 %v5583
    %6800 = vmatprep.subr.bf16.mxu0 %v5568
    %6801 = vmatpush2.bf16.msra.mxu0 %v5567
    %6802 = vmatprep.subr.bf16.mxu0 %v5552
    %6803 = vmatpush2.bf16.msra.mxu0 %v5551
    %6804 = vmatprep.subr.bf16.mxu0 %v5536
    %6805 = vmatpush2.bf16.msra.mxu0 %v5535
    %6806 = vmatprep.subr.bf16.mxu0 %v5520
    %6807 = vmatpush2.bf16.msra.mxu0 %v5519
    %6808 = vmatprep.subr.bf16.mxu0 %v5504
    %6809 = vmatpush2.bf16.msra.mxu0 %v5503
    %6810 = vmatprep.mubr.bf16.mxu0 %v426
    %6811 = vmatmul.mubr.bf16.gmra.mxu0 %v425
    %v6812 = vpop.f32.mrf.mxu0
    %v6813 = vadd.f32 %v6772, %v6812
    %v6814 = vpop.f32.mrf.mxu0
    %v6815 = vadd.f32 %v6774, %v6814
    %v6816 = vpop.f32.mrf.mxu0
    %v6817 = vpop.f32.mrf.mxu0
    %6818 = vdwg.mxu0
    %6819 = vmatprep.subr.bf16.mxu0 %v4722
    %6820 = vmatpush1.bf16.msra.mxu0 %v4721
    %6821 = vmatprep.subr.bf16.mxu0 %v4706
    %6822 = vmatpush1.bf16.msra.mxu0 %v4705
    %6823 = vmatprep.subr.bf16.mxu0 %v4690
    %6824 = vmatpush1.bf16.msra.mxu0 %v4689
    %6825 = vmatprep.subr.bf16.mxu0 %v4674
    %6826 = vmatpush1.bf16.msra.mxu0 %v4673
    %6827 = vmatprep.subr.bf16.mxu0 %v4658
    %6828 = vmatpush1.bf16.msra.mxu0 %v4657
    %6829 = vmatprep.subr.bf16.mxu0 %v4642
    %6830 = vmatpush1.bf16.msra.mxu0 %v4641
    %6831 = vmatprep.subr.bf16.mxu0 %v4626
    %6832 = vmatpush1.bf16.msra.mxu0 %v4625
    %6833 = vmatprep.subr.bf16.mxu0 %v4610
    %6834 = vmatpush1.bf16.msra.mxu0 %v4609
    %6835 = vmatprep.subr.bf16.mxu0 %v4850
    %6836 = vmatpush2.bf16.msra.mxu0 %v4849
    %6837 = vmatprep.subr.bf16.mxu0 %v4834
    %6838 = vmatpush2.bf16.msra.mxu0 %v4833
    %6839 = vmatprep.subr.bf16.mxu0 %v4818
    %6840 = vmatpush2.bf16.msra.mxu0 %v4817
    %6841 = vmatprep.subr.bf16.mxu0 %v4802
    %6842 = vmatpush2.bf16.msra.mxu0 %v4801
    %6843 = vmatprep.subr.bf16.mxu0 %v4786
    %6844 = vmatpush2.bf16.msra.mxu0 %v4785
    %6845 = vmatprep.subr.bf16.mxu0 %v4770
    %6846 = vmatpush2.bf16.msra.mxu0 %v4769
    %6847 = vmatprep.subr.bf16.mxu0 %v4754
    %6848 = vmatpush2.bf16.msra.mxu0 %v4753
    %6849 = vmatprep.subr.bf16.mxu0 %v4738
    %6850 = vmatpush2.bf16.msra.mxu0 %v4737
    %6851 = vmatprep.mubr.bf16.mxu0 %v420
    %6852 = vmatmul.mubr.bf16.gmra.mxu0 %v419
    %v6853 = vpop.f32.mrf.mxu0
    %v6854 = vadd.f32 %v1466, %v6853
    %v6855 = vpop.f32.mrf.mxu0
    %v6856 = vadd.f32 %v1470, %v6855
    %v6857 = vpop.f32.mrf.mxu0
    %v6858 = vpop.f32.mrf.mxu0
    %6859 = vdwg.mxu0
    %6860 = vmatprep.subr.bf16.mxu0 %v4978
    %6861 = vmatpush1.bf16.msra.mxu0 %v4977
    %6862 = vmatprep.subr.bf16.mxu0 %v4962
    %6863 = vmatpush1.bf16.msra.mxu0 %v4961
    %6864 = vmatprep.subr.bf16.mxu0 %v4946
    %6865 = vmatpush1.bf16.msra.mxu0 %v4945
    %6866 = vmatprep.subr.bf16.mxu0 %v4930
    %6867 = vmatpush1.bf16.msra.mxu0 %v4929
    %6868 = vmatprep.subr.bf16.mxu0 %v4914
    %6869 = vmatpush1.bf16.msra.mxu0 %v4913
    %6870 = vmatprep.subr.bf16.mxu0 %v4898
    %6871 = vmatpush1.bf16.msra.mxu0 %v4897
    %6872 = vmatprep.subr.bf16.mxu0 %v4882
    %6873 = vmatpush1.bf16.msra.mxu0 %v4881
    %6874 = vmatprep.subr.bf16.mxu0 %v4866
    %6875 = vmatpush1.bf16.msra.mxu0 %v4865
    %6876 = vmatprep.subr.bf16.mxu0 %v5106
    %6877 = vmatpush2.bf16.msra.mxu0 %v5105
    %6878 = vmatprep.subr.bf16.mxu0 %v5090
    %6879 = vmatpush2.bf16.msra.mxu0 %v5089
    %6880 = vmatprep.subr.bf16.mxu0 %v5074
    %6881 = vmatpush2.bf16.msra.mxu0 %v5073
    %6882 = vmatprep.subr.bf16.mxu0 %v5058
    %6883 = vmatpush2.bf16.msra.mxu0 %v5057
    %6884 = vmatprep.subr.bf16.mxu0 %v5042
    %6885 = vmatpush2.bf16.msra.mxu0 %v5041
    %6886 = vmatprep.subr.bf16.mxu0 %v5026
    %6887 = vmatpush2.bf16.msra.mxu0 %v5025
    %6888 = vmatprep.subr.bf16.mxu0 %v5010
    %6889 = vmatpush2.bf16.msra.mxu0 %v5009
    %6890 = vmatprep.subr.bf16.mxu0 %v4994
    %6891 = vmatpush2.bf16.msra.mxu0 %v4993
    %6892 = vmatprep.mubr.bf16.mxu0 %v422
    %6893 = vmatmul.mubr.bf16.gmra.mxu0 %v421
    %v6894 = vpop.f32.mrf.mxu0
    %v6895 = vadd.f32 %v6854, %v6894
    %v6896 = vpop.f32.mrf.mxu0
    %v6897 = vadd.f32 %v6856, %v6896
    %v6898 = vpop.f32.mrf.mxu0
    %v6899 = vpop.f32.mrf.mxu0
    %6900 = vdwg.mxu0
    %6901 = vmatprep.subr.bf16.mxu0 %v5234
    %6902 = vmatpush1.bf16.msra.mxu0 %v5233
    %6903 = vmatprep.subr.bf16.mxu0 %v5218
    %6904 = vmatpush1.bf16.msra.mxu0 %v5217
    %6905 = vmatprep.subr.bf16.mxu0 %v5202
    %6906 = vmatpush1.bf16.msra.mxu0 %v5201
    %6907 = vmatprep.subr.bf16.mxu0 %v5186
    %6908 = vmatpush1.bf16.msra.mxu0 %v5185
    %6909 = vmatprep.subr.bf16.mxu0 %v5170
    %6910 = vmatpush1.bf16.msra.mxu0 %v5169
    %6911 = vmatprep.subr.bf16.mxu0 %v5154
    %6912 = vmatpush1.bf16.msra.mxu0 %v5153
    %6913 = vmatprep.subr.bf16.mxu0 %v5138
    %6914 = vmatpush1.bf16.msra.mxu0 %v5137
    %6915 = vmatprep.subr.bf16.mxu0 %v5122
    %6916 = vmatpush1.bf16.msra.mxu0 %v5121
    %6917 = vmatprep.subr.bf16.mxu0 %v5362
    %6918 = vmatpush2.bf16.msra.mxu0 %v5361
    %6919 = vmatprep.subr.bf16.mxu0 %v5346
    %6920 = vmatpush2.bf16.msra.mxu0 %v5345
    %6921 = vmatprep.subr.bf16.mxu0 %v5330
    %6922 = vmatpush2.bf16.msra.mxu0 %v5329
    %6923 = vmatprep.subr.bf16.mxu0 %v5314
    %6924 = vmatpush2.bf16.msra.mxu0 %v5313
    %6925 = vmatprep.subr.bf16.mxu0 %v5298
    %6926 = vmatpush2.bf16.msra.mxu0 %v5297
    %6927 = vmatprep.subr.bf16.mxu0 %v5282
    %6928 = vmatpush2.bf16.msra.mxu0 %v5281
    %6929 = vmatprep.subr.bf16.mxu0 %v5266
    %6930 = vmatpush2.bf16.msra.mxu0 %v5265
    %6931 = vmatprep.subr.bf16.mxu0 %v5250
    %6932 = vmatpush2.bf16.msra.mxu0 %v5249
    %6933 = vmatprep.mubr.bf16.mxu0 %v424
    %6934 = vmatmul.mubr.bf16.gmra.mxu0 %v423
    %v6935 = vpop.f32.mrf.mxu0
    %v6936 = vadd.f32 %v6895, %v6935
    %v6937 = vpop.f32.mrf.mxu0
    %v6938 = vadd.f32 %v6897, %v6937
    %v6939 = vpop.f32.mrf.mxu0
    %v6940 = vpop.f32.mrf.mxu0
    %6941 = vdwg.mxu0
    %6942 = vmatprep.subr.bf16.mxu0 %v5490
    %6943 = vmatpush1.bf16.msra.mxu0 %v5489
    %6944 = vmatprep.subr.bf16.mxu0 %v5474
    %6945 = vmatpush1.bf16.msra.mxu0 %v5473
    %6946 = vmatprep.subr.bf16.mxu0 %v5458
    %6947 = vmatpush1.bf16.msra.mxu0 %v5457
    %6948 = vmatprep.subr.bf16.mxu0 %v5442
    %6949 = vmatpush1.bf16.msra.mxu0 %v5441
    %6950 = vmatprep.subr.bf16.mxu0 %v5426
    %6951 = vmatpush1.bf16.msra.mxu0 %v5425
    %6952 = vmatprep.subr.bf16.mxu0 %v5410
    %6953 = vmatpush1.bf16.msra.mxu0 %v5409
    %6954 = vmatprep.subr.bf16.mxu0 %v5394
    %6955 = vmatpush1.bf16.msra.mxu0 %v5393
    %6956 = vmatprep.subr.bf16.mxu0 %v5378
    %6957 = vmatpush1.bf16.msra.mxu0 %v5377
    %6958 = vmatprep.subr.bf16.mxu0 %v5618
    %6959 = vmatpush2.bf16.msra.mxu0 %v5617
    %6960 = vmatprep.subr.bf16.mxu0 %v5602
    %6961 = vmatpush2.bf16.msra.mxu0 %v5601
    %6962 = vmatprep.subr.bf16.mxu0 %v5586
    %6963 = vmatpush2.bf16.msra.mxu0 %v5585
    %6964 = vmatprep.subr.bf16.mxu0 %v5570
    %6965 = vmatpush2.bf16.msra.mxu0 %v5569
    %6966 = vmatprep.subr.bf16.mxu0 %v5554
    %6967 = vmatpush2.bf16.msra.mxu0 %v5553
    %6968 = vmatprep.subr.bf16.mxu0 %v5538
    %6969 = vmatpush2.bf16.msra.mxu0 %v5537
    %6970 = vmatprep.subr.bf16.mxu0 %v5522
    %6971 = vmatpush2.bf16.msra.mxu0 %v5521
    %6972 = vmatprep.subr.bf16.mxu0 %v5506
    %6973 = vmatpush2.bf16.msra.mxu0 %v5505
    %6974 = vmatprep.mubr.bf16.mxu0 %v426
    %6975 = vmatmul.mubr.bf16.gmra.mxu0 %v425
    %v6976 = vpop.f32.mrf.mxu0
    %v6977 = vadd.f32 %v6936, %v6976
    %v6978 = vpop.f32.mrf.mxu0
    %v6979 = vadd.f32 %v6938, %v6978
    %v6980 = vpop.f32.mrf.mxu0
    %v6981 = vpop.f32.mrf.mxu0
    %6982 = vdwg.mxu0
    %6983 = vmatprep.subr.bf16.mxu0 %v4724
    %6984 = vmatpush1.bf16.msra.mxu0 %v4723
    %6985 = vmatprep.subr.bf16.mxu0 %v4708
    %6986 = vmatpush1.bf16.msra.mxu0 %v4707
    %6987 = vmatprep.subr.bf16.mxu0 %v4692
    %6988 = vmatpush1.bf16.msra.mxu0 %v4691
    %6989 = vmatprep.subr.bf16.mxu0 %v4676
    %6990 = vmatpush1.bf16.msra.mxu0 %v4675
    %6991 = vmatprep.subr.bf16.mxu0 %v4660
    %6992 = vmatpush1.bf16.msra.mxu0 %v4659
    %6993 = vmatprep.subr.bf16.mxu0 %v4644
    %6994 = vmatpush1.bf16.msra.mxu0 %v4643
    %6995 = vmatprep.subr.bf16.mxu0 %v4628
    %6996 = vmatpush1.bf16.msra.mxu0 %v4627
    %6997 = vmatprep.subr.bf16.mxu0 %v4612
    %6998 = vmatpush1.bf16.msra.mxu0 %v4611
    %6999 = vmatprep.subr.bf16.mxu0 %v4852
    %7000 = vmatpush2.bf16.msra.mxu0 %v4851
    %7001 = vmatprep.subr.bf16.mxu0 %v4836
    %7002 = vmatpush2.bf16.msra.mxu0 %v4835
    %7003 = vmatprep.subr.bf16.mxu0 %v4820
    %7004 = vmatpush2.bf16.msra.mxu0 %v4819
    %7005 = vmatprep.subr.bf16.mxu0 %v4804
    %7006 = vmatpush2.bf16.msra.mxu0 %v4803
    %7007 = vmatprep.subr.bf16.mxu0 %v4788
    %7008 = vmatpush2.bf16.msra.mxu0 %v4787
    %7009 = vmatprep.subr.bf16.mxu0 %v4772
    %7010 = vmatpush2.bf16.msra.mxu0 %v4771
    %7011 = vmatprep.subr.bf16.mxu0 %v4756
    %7012 = vmatpush2.bf16.msra.mxu0 %v4755
    %7013 = vmatprep.subr.bf16.mxu0 %v4740
    %7014 = vmatpush2.bf16.msra.mxu0 %v4739
    %7015 = vmatprep.mubr.bf16.mxu0 %v420
    %7016 = vmatmul.mubr.bf16.gmra.mxu0 %v419
    %v7017 = vpop.f32.mrf.mxu0
    %v7018 = vadd.f32 %v1474, %v7017
    %v7019 = vpop.f32.mrf.mxu0
    %v7020 = vadd.f32 %v1478, %v7019
    %v7021 = vpop.f32.mrf.mxu0
    %v7022 = vpop.f32.mrf.mxu0
    %7023 = vdwg.mxu0
    %7024 = vmatprep.subr.bf16.mxu0 %v4980
    %7025 = vmatpush1.bf16.msra.mxu0 %v4979
    %7026 = vmatprep.subr.bf16.mxu0 %v4964
    %7027 = vmatpush1.bf16.msra.mxu0 %v4963
    %7028 = vmatprep.subr.bf16.mxu0 %v4948
    %7029 = vmatpush1.bf16.msra.mxu0 %v4947
    %7030 = vmatprep.subr.bf16.mxu0 %v4932
    %7031 = vmatpush1.bf16.msra.mxu0 %v4931
    %7032 = vmatprep.subr.bf16.mxu0 %v4916
    %7033 = vmatpush1.bf16.msra.mxu0 %v4915
    %7034 = vmatprep.subr.bf16.mxu0 %v4900
    %7035 = vmatpush1.bf16.msra.mxu0 %v4899
    %7036 = vmatprep.subr.bf16.mxu0 %v4884
    %7037 = vmatpush1.bf16.msra.mxu0 %v4883
    %7038 = vmatprep.subr.bf16.mxu0 %v4868
    %7039 = vmatpush1.bf16.msra.mxu0 %v4867
    %7040 = vmatprep.subr.bf16.mxu0 %v5108
    %7041 = vmatpush2.bf16.msra.mxu0 %v5107
    %7042 = vmatprep.subr.bf16.mxu0 %v5092
    %7043 = vmatpush2.bf16.msra.mxu0 %v5091
    %7044 = vmatprep.subr.bf16.mxu0 %v5076
    %7045 = vmatpush2.bf16.msra.mxu0 %v5075
    %7046 = vmatprep.subr.bf16.mxu0 %v5060
    %7047 = vmatpush2.bf16.msra.mxu0 %v5059
    %7048 = vmatprep.subr.bf16.mxu0 %v5044
    %7049 = vmatpush2.bf16.msra.mxu0 %v5043
    %7050 = vmatprep.subr.bf16.mxu0 %v5028
    %7051 = vmatpush2.bf16.msra.mxu0 %v5027
    %7052 = vmatprep.subr.bf16.mxu0 %v5012
    %7053 = vmatpush2.bf16.msra.mxu0 %v5011
    %7054 = vmatprep.subr.bf16.mxu0 %v4996
    %7055 = vmatpush2.bf16.msra.mxu0 %v4995
    %7056 = vmatprep.mubr.bf16.mxu0 %v422
    %7057 = vmatmul.mubr.bf16.gmra.mxu0 %v421
    %v7058 = vpop.f32.mrf.mxu0
    %v7059 = vadd.f32 %v7018, %v7058
    %v7060 = vpop.f32.mrf.mxu0
    %v7061 = vadd.f32 %v7020, %v7060
    %v7062 = vpop.f32.mrf.mxu0
    %v7063 = vpop.f32.mrf.mxu0
    %7064 = vdwg.mxu0
    %7065 = vmatprep.subr.bf16.mxu0 %v5236
    %7066 = vmatpush1.bf16.msra.mxu0 %v5235
    %7067 = vmatprep.subr.bf16.mxu0 %v5220
    %7068 = vmatpush1.bf16.msra.mxu0 %v5219
    %7069 = vmatprep.subr.bf16.mxu0 %v5204
    %7070 = vmatpush1.bf16.msra.mxu0 %v5203
    %7071 = vmatprep.subr.bf16.mxu0 %v5188
    %7072 = vmatpush1.bf16.msra.mxu0 %v5187
    %7073 = vmatprep.subr.bf16.mxu0 %v5172
    %7074 = vmatpush1.bf16.msra.mxu0 %v5171
    %7075 = vmatprep.subr.bf16.mxu0 %v5156
    %7076 = vmatpush1.bf16.msra.mxu0 %v5155
    %7077 = vmatprep.subr.bf16.mxu0 %v5140
    %7078 = vmatpush1.bf16.msra.mxu0 %v5139
    %7079 = vmatprep.subr.bf16.mxu0 %v5124
    %7080 = vmatpush1.bf16.msra.mxu0 %v5123
    %7081 = vmatprep.subr.bf16.mxu0 %v5364
    %7082 = vmatpush2.bf16.msra.mxu0 %v5363
    %7083 = vmatprep.subr.bf16.mxu0 %v5348
    %7084 = vmatpush2.bf16.msra.mxu0 %v5347
    %7085 = vmatprep.subr.bf16.mxu0 %v5332
    %7086 = vmatpush2.bf16.msra.mxu0 %v5331
    %7087 = vmatprep.subr.bf16.mxu0 %v5316
    %7088 = vmatpush2.bf16.msra.mxu0 %v5315
    %7089 = vmatprep.subr.bf16.mxu0 %v5300
    %7090 = vmatpush2.bf16.msra.mxu0 %v5299
    %7091 = vmatprep.subr.bf16.mxu0 %v5284
    %7092 = vmatpush2.bf16.msra.mxu0 %v5283
    %7093 = vmatprep.subr.bf16.mxu0 %v5268
    %7094 = vmatpush2.bf16.msra.mxu0 %v5267
    %7095 = vmatprep.subr.bf16.mxu0 %v5252
    %7096 = vmatpush2.bf16.msra.mxu0 %v5251
    %7097 = vmatprep.mubr.bf16.mxu0 %v424
    %7098 = vmatmul.mubr.bf16.gmra.mxu0 %v423
    %v7099 = vpop.f32.mrf.mxu0
    %v7100 = vadd.f32 %v7059, %v7099
    %v7101 = vpop.f32.mrf.mxu0
    %v7102 = vadd.f32 %v7061, %v7101
    %v7103 = vpop.f32.mrf.mxu0
    %v7104 = vpop.f32.mrf.mxu0
    %7105 = vdwg.mxu0
    %7106 = vmatprep.subr.bf16.mxu0 %v5492
    %7107 = vmatpush1.bf16.msra.mxu0 %v5491
    %7108 = vmatprep.subr.bf16.mxu0 %v5476
    %7109 = vmatpush1.bf16.msra.mxu0 %v5475
    %7110 = vmatprep.subr.bf16.mxu0 %v5460
    %7111 = vmatpush1.bf16.msra.mxu0 %v5459
    %7112 = vmatprep.subr.bf16.mxu0 %v5444
    %7113 = vmatpush1.bf16.msra.mxu0 %v5443
    %7114 = vmatprep.subr.bf16.mxu0 %v5428
    %7115 = vmatpush1.bf16.msra.mxu0 %v5427
    %7116 = vmatprep.subr.bf16.mxu0 %v5412
    %7117 = vmatpush1.bf16.msra.mxu0 %v5411
    %7118 = vmatprep.subr.bf16.mxu0 %v5396
    %7119 = vmatpush1.bf16.msra.mxu0 %v5395
    %7120 = vmatprep.subr.bf16.mxu0 %v5380
    %7121 = vmatpush1.bf16.msra.mxu0 %v5379
    %7122 = vmatprep.subr.bf16.mxu0 %v5620
    %7123 = vmatpush2.bf16.msra.mxu0 %v5619
    %7124 = vmatprep.subr.bf16.mxu0 %v5604
    %7125 = vmatpush2.bf16.msra.mxu0 %v5603
    %7126 = vmatprep.subr.bf16.mxu0 %v5588
    %7127 = vmatpush2.bf16.msra.mxu0 %v5587
    %7128 = vmatprep.subr.bf16.mxu0 %v5572
    %7129 = vmatpush2.bf16.msra.mxu0 %v5571
    %7130 = vmatprep.subr.bf16.mxu0 %v5556
    %7131 = vmatpush2.bf16.msra.mxu0 %v5555
    %7132 = vmatprep.subr.bf16.mxu0 %v5540
    %7133 = vmatpush2.bf16.msra.mxu0 %v5539
    %7134 = vmatprep.subr.bf16.mxu0 %v5524
    %7135 = vmatpush2.bf16.msra.mxu0 %v5523
    %7136 = vmatprep.subr.bf16.mxu0 %v5508
    %7137 = vmatpush2.bf16.msra.mxu0 %v5507
    %7138 = vmatprep.mubr.bf16.mxu0 %v426
    %7139 = vmatmul.mubr.bf16.gmra.mxu0 %v425
    %v7140 = vpop.f32.mrf.mxu0
    %v7141 = vadd.f32 %v7100, %v7140
    %v7142 = vpop.f32.mrf.mxu0
    %v7143 = vadd.f32 %v7102, %v7142
    %v7144 = vpop.f32.mrf.mxu0
    %v7145 = vpop.f32.mrf.mxu0
    %7146 = vdwg.mxu0
    %7147 = vmatprep.subr.bf16.mxu0 %v4726
    %7148 = vmatpush1.bf16.msra.mxu0 %v4725
    %7149 = vmatprep.subr.bf16.mxu0 %v4710
    %7150 = vmatpush1.bf16.msra.mxu0 %v4709
    %7151 = vmatprep.subr.bf16.mxu0 %v4694
    %7152 = vmatpush1.bf16.msra.mxu0 %v4693
    %7153 = vmatprep.subr.bf16.mxu0 %v4678
    %7154 = vmatpush1.bf16.msra.mxu0 %v4677
    %7155 = vmatprep.subr.bf16.mxu0 %v4662
    %7156 = vmatpush1.bf16.msra.mxu0 %v4661
    %7157 = vmatprep.subr.bf16.mxu0 %v4646
    %7158 = vmatpush1.bf16.msra.mxu0 %v4645
    %7159 = vmatprep.subr.bf16.mxu0 %v4630
    %7160 = vmatpush1.bf16.msra.mxu0 %v4629
    %7161 = vmatprep.subr.bf16.mxu0 %v4614
    %7162 = vmatpush1.bf16.msra.mxu0 %v4613
    %7163 = vmatprep.subr.bf16.mxu0 %v4854
    %7164 = vmatpush2.bf16.msra.mxu0 %v4853
    %7165 = vmatprep.subr.bf16.mxu0 %v4838
    %7166 = vmatpush2.bf16.msra.mxu0 %v4837
    %7167 = vmatprep.subr.bf16.mxu0 %v4822
    %7168 = vmatpush2.bf16.msra.mxu0 %v4821
    %7169 = vmatprep.subr.bf16.mxu0 %v4806
    %7170 = vmatpush2.bf16.msra.mxu0 %v4805
    %7171 = vmatprep.subr.bf16.mxu0 %v4790
    %7172 = vmatpush2.bf16.msra.mxu0 %v4789
    %7173 = vmatprep.subr.bf16.mxu0 %v4774
    %7174 = vmatpush2.bf16.msra.mxu0 %v4773
    %7175 = vmatprep.subr.bf16.mxu0 %v4758
    %7176 = vmatpush2.bf16.msra.mxu0 %v4757
    %7177 = vmatprep.subr.bf16.mxu0 %v4742
    %7178 = vmatpush2.bf16.msra.mxu0 %v4741
    %7179 = vmatprep.mubr.bf16.mxu0 %v420
    %7180 = vmatmul.mubr.bf16.gmra.mxu0 %v419
    %v7181 = vpop.f32.mrf.mxu0
    %v7182 = vadd.f32 %v1482, %v7181
    %v7183 = vpop.f32.mrf.mxu0
    %v7184 = vadd.f32 %v1486, %v7183
    %v7185 = vpop.f32.mrf.mxu0
    %v7186 = vpop.f32.mrf.mxu0
    %7187 = vdwg.mxu0
    %7188 = vmatprep.subr.bf16.mxu0 %v4982
    %7189 = vmatpush1.bf16.msra.mxu0 %v4981
    %7190 = vmatprep.subr.bf16.mxu0 %v4966
    %7191 = vmatpush1.bf16.msra.mxu0 %v4965
    %7192 = vmatprep.subr.bf16.mxu0 %v4950
    %7193 = vmatpush1.bf16.msra.mxu0 %v4949
    %7194 = vmatprep.subr.bf16.mxu0 %v4934
    %7195 = vmatpush1.bf16.msra.mxu0 %v4933
    %7196 = vmatprep.subr.bf16.mxu0 %v4918
    %7197 = vmatpush1.bf16.msra.mxu0 %v4917
    %7198 = vmatprep.subr.bf16.mxu0 %v4902
    %7199 = vmatpush1.bf16.msra.mxu0 %v4901
    %7200 = vmatprep.subr.bf16.mxu0 %v4886
    %7201 = vmatpush1.bf16.msra.mxu0 %v4885
    %7202 = vmatprep.subr.bf16.mxu0 %v4870
    %7203 = vmatpush1.bf16.msra.mxu0 %v4869
    %7204 = vmatprep.subr.bf16.mxu0 %v5110
    %7205 = vmatpush2.bf16.msra.mxu0 %v5109
    %7206 = vmatprep.subr.bf16.mxu0 %v5094
    %7207 = vmatpush2.bf16.msra.mxu0 %v5093
    %7208 = vmatprep.subr.bf16.mxu0 %v5078
    %7209 = vmatpush2.bf16.msra.mxu0 %v5077
    %7210 = vmatprep.subr.bf16.mxu0 %v5062
    %7211 = vmatpush2.bf16.msra.mxu0 %v5061
    %7212 = vmatprep.subr.bf16.mxu0 %v5046
    %7213 = vmatpush2.bf16.msra.mxu0 %v5045
    %7214 = vmatprep.subr.bf16.mxu0 %v5030
    %7215 = vmatpush2.bf16.msra.mxu0 %v5029
    %7216 = vmatprep.subr.bf16.mxu0 %v5014
    %7217 = vmatpush2.bf16.msra.mxu0 %v5013
    %7218 = vmatprep.subr.bf16.mxu0 %v4998
    %7219 = vmatpush2.bf16.msra.mxu0 %v4997
    %7220 = vmatprep.mubr.bf16.mxu0 %v422
    %7221 = vmatmul.mubr.bf16.gmra.mxu0 %v421
    %v7222 = vpop.f32.mrf.mxu0
    %v7223 = vadd.f32 %v7182, %v7222
    %v7224 = vpop.f32.mrf.mxu0
    %v7225 = vadd.f32 %v7184, %v7224
    %v7226 = vpop.f32.mrf.mxu0
    %v7227 = vpop.f32.mrf.mxu0
    %7228 = vdwg.mxu0
    %7229 = vmatprep.subr.bf16.mxu0 %v5238
    %7230 = vmatpush1.bf16.msra.mxu0 %v5237
    %7231 = vmatprep.subr.bf16.mxu0 %v5222
    %7232 = vmatpush1.bf16.msra.mxu0 %v5221
    %7233 = vmatprep.subr.bf16.mxu0 %v5206
    %7234 = vmatpush1.bf16.msra.mxu0 %v5205
    %7235 = vmatprep.subr.bf16.mxu0 %v5190
    %7236 = vmatpush1.bf16.msra.mxu0 %v5189
    %7237 = vmatprep.subr.bf16.mxu0 %v5174
    %7238 = vmatpush1.bf16.msra.mxu0 %v5173
    %7239 = vmatprep.subr.bf16.mxu0 %v5158
    %7240 = vmatpush1.bf16.msra.mxu0 %v5157
    %7241 = vmatprep.subr.bf16.mxu0 %v5142
    %7242 = vmatpush1.bf16.msra.mxu0 %v5141
    %7243 = vmatprep.subr.bf16.mxu0 %v5126
    %7244 = vmatpush1.bf16.msra.mxu0 %v5125
    %7245 = vmatprep.subr.bf16.mxu0 %v5366
    %7246 = vmatpush2.bf16.msra.mxu0 %v5365
    %7247 = vmatprep.subr.bf16.mxu0 %v5350
    %7248 = vmatpush2.bf16.msra.mxu0 %v5349
    %7249 = vmatprep.subr.bf16.mxu0 %v5334
    %7250 = vmatpush2.bf16.msra.mxu0 %v5333
    %7251 = vmatprep.subr.bf16.mxu0 %v5318
    %7252 = vmatpush2.bf16.msra.mxu0 %v5317
    %7253 = vmatprep.subr.bf16.mxu0 %v5302
    %7254 = vmatpush2.bf16.msra.mxu0 %v5301
    %7255 = vmatprep.subr.bf16.mxu0 %v5286
    %7256 = vmatpush2.bf16.msra.mxu0 %v5285
    %7257 = vmatprep.subr.bf16.mxu0 %v5270
    %7258 = vmatpush2.bf16.msra.mxu0 %v5269
    %7259 = vmatprep.subr.bf16.mxu0 %v5254
    %7260 = vmatpush2.bf16.msra.mxu0 %v5253
    %7261 = vmatprep.mubr.bf16.mxu0 %v424
    %7262 = vmatmul.mubr.bf16.gmra.mxu0 %v423
    %v7263 = vpop.f32.mrf.mxu0
    %v7264 = vadd.f32 %v7223, %v7263
    %v7265 = vpop.f32.mrf.mxu0
    %v7266 = vadd.f32 %v7225, %v7265
    %v7267 = vpop.f32.mrf.mxu0
    %v7268 = vpop.f32.mrf.mxu0
    %7269 = vdwg.mxu0
    %7270 = vmatprep.subr.bf16.mxu0 %v5494
    %7271 = vmatpush1.bf16.msra.mxu0 %v5493
    %7272 = vmatprep.subr.bf16.mxu0 %v5478
    %7273 = vmatpush1.bf16.msra.mxu0 %v5477
    %7274 = vmatprep.subr.bf16.mxu0 %v5462
    %7275 = vmatpush1.bf16.msra.mxu0 %v5461
    %7276 = vmatprep.subr.bf16.mxu0 %v5446
    %7277 = vmatpush1.bf16.msra.mxu0 %v5445
    %7278 = vmatprep.subr.bf16.mxu0 %v5430
    %7279 = vmatpush1.bf16.msra.mxu0 %v5429
    %7280 = vmatprep.subr.bf16.mxu0 %v5414
    %7281 = vmatpush1.bf16.msra.mxu0 %v5413
    %7282 = vmatprep.subr.bf16.mxu0 %v5398
    %7283 = vmatpush1.bf16.msra.mxu0 %v5397
    %7284 = vmatprep.subr.bf16.mxu0 %v5382
    %7285 = vmatpush1.bf16.msra.mxu0 %v5381
    %7286 = vmatprep.subr.bf16.mxu0 %v5622
    %7287 = vmatpush2.bf16.msra.mxu0 %v5621
    %7288 = vmatprep.subr.bf16.mxu0 %v5606
    %7289 = vmatpush2.bf16.msra.mxu0 %v5605
    %7290 = vmatprep.subr.bf16.mxu0 %v5590
    %7291 = vmatpush2.bf16.msra.mxu0 %v5589
    %7292 = vmatprep.subr.bf16.mxu0 %v5574
    %7293 = vmatpush2.bf16.msra.mxu0 %v5573
    %7294 = vmatprep.subr.bf16.mxu0 %v5558
    %7295 = vmatpush2.bf16.msra.mxu0 %v5557
    %7296 = vmatprep.subr.bf16.mxu0 %v5542
    %7297 = vmatpush2.bf16.msra.mxu0 %v5541
    %7298 = vmatprep.subr.bf16.mxu0 %v5526
    %7299 = vmatpush2.bf16.msra.mxu0 %v5525
    %7300 = vmatprep.subr.bf16.mxu0 %v5510
    %7301 = vmatpush2.bf16.msra.mxu0 %v5509
    %7302 = vmatprep.mubr.bf16.mxu0 %v426
    %7303 = vmatmul.mubr.bf16.gmra.mxu0 %v425
    %v7304 = vpop.f32.mrf.mxu0
    %v7305 = vadd.f32 %v7264, %v7304
    %v7306 = vpop.f32.mrf.mxu0
    %v7307 = vadd.f32 %v7266, %v7306
    %v7308 = vpop.f32.mrf.mxu0
    %v7309 = vpop.f32.mrf.mxu0
    %7310 = vdwg.mxu0
    %7311 = vmatprep.subr.bf16.mxu0 %v4728
    %7312 = vmatpush1.bf16.msra.mxu0 %v4727
    %7313 = vmatprep.subr.bf16.mxu0 %v4712
    %7314 = vmatpush1.bf16.msra.mxu0 %v4711
    %7315 = vmatprep.subr.bf16.mxu0 %v4696
    %7316 = vmatpush1.bf16.msra.mxu0 %v4695
    %7317 = vmatprep.subr.bf16.mxu0 %v4680
    %7318 = vmatpush1.bf16.msra.mxu0 %v4679
    %7319 = vmatprep.subr.bf16.mxu0 %v4664
    %7320 = vmatpush1.bf16.msra.mxu0 %v4663
    %7321 = vmatprep.subr.bf16.mxu0 %v4648
    %7322 = vmatpush1.bf16.msra.mxu0 %v4647
    %7323 = vmatprep.subr.bf16.mxu0 %v4632
    %7324 = vmatpush1.bf16.msra.mxu0 %v4631
    %7325 = vmatprep.subr.bf16.mxu0 %v4616
    %7326 = vmatpush1.bf16.msra.mxu0 %v4615
    %7327 = vmatprep.subr.bf16.mxu0 %v4856
    %7328 = vmatpush2.bf16.msra.mxu0 %v4855
    %7329 = vmatprep.subr.bf16.mxu0 %v4840
    %7330 = vmatpush2.bf16.msra.mxu0 %v4839
    %7331 = vmatprep.subr.bf16.mxu0 %v4824
    %7332 = vmatpush2.bf16.msra.mxu0 %v4823
    %7333 = vmatprep.subr.bf16.mxu0 %v4808
    %7334 = vmatpush2.bf16.msra.mxu0 %v4807
    %7335 = vmatprep.subr.bf16.mxu0 %v4792
    %7336 = vmatpush2.bf16.msra.mxu0 %v4791
    %7337 = vmatprep.subr.bf16.mxu0 %v4776
    %7338 = vmatpush2.bf16.msra.mxu0 %v4775
    %7339 = vmatprep.subr.bf16.mxu0 %v4760
    %7340 = vmatpush2.bf16.msra.mxu0 %v4759
    %7341 = vmatprep.subr.bf16.mxu0 %v4744
    %7342 = vmatpush2.bf16.msra.mxu0 %v4743
    %7343 = vmatprep.mubr.bf16.mxu0 %v420
    %7344 = vmatmul.mubr.bf16.gmra.mxu0 %v419
    %v7345 = vpop.f32.mrf.mxu0
    %v7346 = vadd.f32 %v1490, %v7345
    %v7347 = vpop.f32.mrf.mxu0
    %v7348 = vadd.f32 %v1494, %v7347
    %v7349 = vpop.f32.mrf.mxu0
    %v7350 = vpop.f32.mrf.mxu0
    %7351 = vdwg.mxu0
    %7352 = vmatprep.subr.bf16.mxu0 %v4984
    %7353 = vmatpush1.bf16.msra.mxu0 %v4983
    %7354 = vmatprep.subr.bf16.mxu0 %v4968
    %7355 = vmatpush1.bf16.msra.mxu0 %v4967
    %7356 = vmatprep.subr.bf16.mxu0 %v4952
    %7357 = vmatpush1.bf16.msra.mxu0 %v4951
    %7358 = vmatprep.subr.bf16.mxu0 %v4936
    %7359 = vmatpush1.bf16.msra.mxu0 %v4935
    %7360 = vmatprep.subr.bf16.mxu0 %v4920
    %7361 = vmatpush1.bf16.msra.mxu0 %v4919
    %7362 = vmatprep.subr.bf16.mxu0 %v4904
    %7363 = vmatpush1.bf16.msra.mxu0 %v4903
    %7364 = vmatprep.subr.bf16.mxu0 %v4888
    %7365 = vmatpush1.bf16.msra.mxu0 %v4887
    %7366 = vmatprep.subr.bf16.mxu0 %v4872
    %7367 = vmatpush1.bf16.msra.mxu0 %v4871
    %7368 = vmatprep.subr.bf16.mxu0 %v5112
    %7369 = vmatpush2.bf16.msra.mxu0 %v5111
    %7370 = vmatprep.subr.bf16.mxu0 %v5096
    %7371 = vmatpush2.bf16.msra.mxu0 %v5095
    %7372 = vmatprep.subr.bf16.mxu0 %v5080
    %7373 = vmatpush2.bf16.msra.mxu0 %v5079
    %7374 = vmatprep.subr.bf16.mxu0 %v5064
    %7375 = vmatpush2.bf16.msra.mxu0 %v5063
    %7376 = vmatprep.subr.bf16.mxu0 %v5048
    %7377 = vmatpush2.bf16.msra.mxu0 %v5047
    %7378 = vmatprep.subr.bf16.mxu0 %v5032
    %7379 = vmatpush2.bf16.msra.mxu0 %v5031
    %7380 = vmatprep.subr.bf16.mxu0 %v5016
    %7381 = vmatpush2.bf16.msra.mxu0 %v5015
    %7382 = vmatprep.subr.bf16.mxu0 %v5000
    %7383 = vmatpush2.bf16.msra.mxu0 %v4999
    %7384 = vmatprep.mubr.bf16.mxu0 %v422
    %7385 = vmatmul.mubr.bf16.gmra.mxu0 %v421
    %v7386 = vpop.f32.mrf.mxu0
    %v7387 = vadd.f32 %v7346, %v7386
    %v7388 = vpop.f32.mrf.mxu0
    %v7389 = vadd.f32 %v7348, %v7388
    %v7390 = vpop.f32.mrf.mxu0
    %v7391 = vpop.f32.mrf.mxu0
    %7392 = vdwg.mxu0
    %7393 = vmatprep.subr.bf16.mxu0 %v5240
    %7394 = vmatpush1.bf16.msra.mxu0 %v5239
    %7395 = vmatprep.subr.bf16.mxu0 %v5224
    %7396 = vmatpush1.bf16.msra.mxu0 %v5223
    %7397 = vmatprep.subr.bf16.mxu0 %v5208
    %7398 = vmatpush1.bf16.msra.mxu0 %v5207
    %7399 = vmatprep.subr.bf16.mxu0 %v5192
    %7400 = vmatpush1.bf16.msra.mxu0 %v5191
    %7401 = vmatprep.subr.bf16.mxu0 %v5176
    %7402 = vmatpush1.bf16.msra.mxu0 %v5175
    %7403 = vmatprep.subr.bf16.mxu0 %v5160
    %7404 = vmatpush1.bf16.msra.mxu0 %v5159
    %7405 = vmatprep.subr.bf16.mxu0 %v5144
    %7406 = vmatpush1.bf16.msra.mxu0 %v5143
    %7407 = vmatprep.subr.bf16.mxu0 %v5128
    %7408 = vmatpush1.bf16.msra.mxu0 %v5127
    %7409 = vmatprep.subr.bf16.mxu0 %v5368
    %7410 = vmatpush2.bf16.msra.mxu0 %v5367
    %7411 = vmatprep.subr.bf16.mxu0 %v5352
    %7412 = vmatpush2.bf16.msra.mxu0 %v5351
    %7413 = vmatprep.subr.bf16.mxu0 %v5336
    %7414 = vmatpush2.bf16.msra.mxu0 %v5335
    %7415 = vmatprep.subr.bf16.mxu0 %v5320
    %7416 = vmatpush2.bf16.msra.mxu0 %v5319
    %7417 = vmatprep.subr.bf16.mxu0 %v5304
    %7418 = vmatpush2.bf16.msra.mxu0 %v5303
    %7419 = vmatprep.subr.bf16.mxu0 %v5288
    %7420 = vmatpush2.bf16.msra.mxu0 %v5287
    %7421 = vmatprep.subr.bf16.mxu0 %v5272
    %7422 = vmatpush2.bf16.msra.mxu0 %v5271
    %7423 = vmatprep.subr.bf16.mxu0 %v5256
    %7424 = vmatpush2.bf16.msra.mxu0 %v5255
    %7425 = vmatprep.mubr.bf16.mxu0 %v424
    %7426 = vmatmul.mubr.bf16.gmra.mxu0 %v423
    %v7427 = vpop.f32.mrf.mxu0
    %v7428 = vadd.f32 %v7387, %v7427
    %v7429 = vpop.f32.mrf.mxu0
    %v7430 = vadd.f32 %v7389, %v7429
    %v7431 = vpop.f32.mrf.mxu0
    %v7432 = vpop.f32.mrf.mxu0
    %7433 = vdwg.mxu0
    %7434 = vmatprep.subr.bf16.mxu0 %v5496
    %7435 = vmatpush1.bf16.msra.mxu0 %v5495
    %7436 = vmatprep.subr.bf16.mxu0 %v5480
    %7437 = vmatpush1.bf16.msra.mxu0 %v5479
    %7438 = vmatprep.subr.bf16.mxu0 %v5464
    %7439 = vmatpush1.bf16.msra.mxu0 %v5463
    %7440 = vmatprep.subr.bf16.mxu0 %v5448
    %7441 = vmatpush1.bf16.msra.mxu0 %v5447
    %7442 = vmatprep.subr.bf16.mxu0 %v5432
    %7443 = vmatpush1.bf16.msra.mxu0 %v5431
    %7444 = vmatprep.subr.bf16.mxu0 %v5416
    %7445 = vmatpush1.bf16.msra.mxu0 %v5415
    %7446 = vmatprep.subr.bf16.mxu0 %v5400
    %7447 = vmatpush1.bf16.msra.mxu0 %v5399
    %7448 = vmatprep.subr.bf16.mxu0 %v5384
    %7449 = vmatpush1.bf16.msra.mxu0 %v5383
    %7450 = vmatprep.subr.bf16.mxu0 %v5624
    %7451 = vmatpush2.bf16.msra.mxu0 %v5623
    %7452 = vmatprep.subr.bf16.mxu0 %v5608
    %7453 = vmatpush2.bf16.msra.mxu0 %v5607
    %7454 = vmatprep.subr.bf16.mxu0 %v5592
    %7455 = vmatpush2.bf16.msra.mxu0 %v5591
    %7456 = vmatprep.subr.bf16.mxu0 %v5576
    %7457 = vmatpush2.bf16.msra.mxu0 %v5575
    %7458 = vmatprep.subr.bf16.mxu0 %v5560
    %7459 = vmatpush2.bf16.msra.mxu0 %v5559
    %7460 = vmatprep.subr.bf16.mxu0 %v5544
    %7461 = vmatpush2.bf16.msra.mxu0 %v5543
    %7462 = vmatprep.subr.bf16.mxu0 %v5528
    %7463 = vmatpush2.bf16.msra.mxu0 %v5527
    %7464 = vmatprep.subr.bf16.mxu0 %v5512
    %7465 = vmatpush2.bf16.msra.mxu0 %v5511
    %7466 = vmatprep.mubr.bf16.mxu0 %v426
    %7467 = vmatmul.mubr.bf16.gmra.mxu0 %v425
    %v7468 = vpop.f32.mrf.mxu0
    %v7469 = vadd.f32 %v7428, %v7468
    %v7470 = vpop.f32.mrf.mxu0
    %v7471 = vadd.f32 %v7430, %v7470
    %v7472 = vpop.f32.mrf.mxu0
    %v7473 = vpop.f32.mrf.mxu0
    %7474 = vdwg.mxu0
    %7475 = vmatprep.subr.bf16.mxu0 %v4730
    %7476 = vmatpush1.bf16.msra.mxu0 %v4729
    %7477 = vmatprep.subr.bf16.mxu0 %v4714
    %7478 = vmatpush1.bf16.msra.mxu0 %v4713
    %7479 = vmatprep.subr.bf16.mxu0 %v4698
    %7480 = vmatpush1.bf16.msra.mxu0 %v4697
    %7481 = vmatprep.subr.bf16.mxu0 %v4682
    %7482 = vmatpush1.bf16.msra.mxu0 %v4681
    %7483 = vmatprep.subr.bf16.mxu0 %v4666
    %7484 = vmatpush1.bf16.msra.mxu0 %v4665
    %7485 = vmatprep.subr.bf16.mxu0 %v4650
    %7486 = vmatpush1.bf16.msra.mxu0 %v4649
    %7487 = vmatprep.subr.bf16.mxu0 %v4634
    %7488 = vmatpush1.bf16.msra.mxu0 %v4633
    %7489 = vmatprep.subr.bf16.mxu0 %v4618
    %7490 = vmatpush1.bf16.msra.mxu0 %v4617
    %7491 = vmatprep.subr.bf16.mxu0 %v4858
    %7492 = vmatpush2.bf16.msra.mxu0 %v4857
    %7493 = vmatprep.subr.bf16.mxu0 %v4842
    %7494 = vmatpush2.bf16.msra.mxu0 %v4841
    %7495 = vmatprep.subr.bf16.mxu0 %v4826
    %7496 = vmatpush2.bf16.msra.mxu0 %v4825
    %7497 = vmatprep.subr.bf16.mxu0 %v4810
    %7498 = vmatpush2.bf16.msra.mxu0 %v4809
    %7499 = vmatprep.subr.bf16.mxu0 %v4794
    %7500 = vmatpush2.bf16.msra.mxu0 %v4793
    %7501 = vmatprep.subr.bf16.mxu0 %v4778
    %7502 = vmatpush2.bf16.msra.mxu0 %v4777
    %7503 = vmatprep.subr.bf16.mxu0 %v4762
    %7504 = vmatpush2.bf16.msra.mxu0 %v4761
    %7505 = vmatprep.subr.bf16.mxu0 %v4746
    %7506 = vmatpush2.bf16.msra.mxu0 %v4745
    %7507 = vmatprep.mubr.bf16.mxu0 %v420
    %7508 = vmatmul.mubr.bf16.gmra.mxu0 %v419
    %v7509 = vpop.f32.mrf.mxu0
    %v7510 = vadd.f32 %v1498, %v7509
    %v7511 = vpop.f32.mrf.mxu0
    %v7512 = vadd.f32 %v1502, %v7511
    %v7513 = vpop.f32.mrf.mxu0
    %v7514 = vpop.f32.mrf.mxu0
    %7515 = vdwg.mxu0
    %7516 = vmatprep.subr.bf16.mxu0 %v4986
    %7517 = vmatpush1.bf16.msra.mxu0 %v4985
    %7518 = vmatprep.subr.bf16.mxu0 %v4970
    %7519 = vmatpush1.bf16.msra.mxu0 %v4969
    %7520 = vmatprep.subr.bf16.mxu0 %v4954
    %7521 = vmatpush1.bf16.msra.mxu0 %v4953
    %7522 = vmatprep.subr.bf16.mxu0 %v4938
    %7523 = vmatpush1.bf16.msra.mxu0 %v4937
    %7524 = vmatprep.subr.bf16.mxu0 %v4922
    %7525 = vmatpush1.bf16.msra.mxu0 %v4921
    %7526 = vmatprep.subr.bf16.mxu0 %v4906
    %7527 = vmatpush1.bf16.msra.mxu0 %v4905
    %7528 = vmatprep.subr.bf16.mxu0 %v4890
    %7529 = vmatpush1.bf16.msra.mxu0 %v4889
    %7530 = vmatprep.subr.bf16.mxu0 %v4874
    %7531 = vmatpush1.bf16.msra.mxu0 %v4873
    %7532 = vmatprep.subr.bf16.mxu0 %v5114
    %7533 = vmatpush2.bf16.msra.mxu0 %v5113
    %7534 = vmatprep.subr.bf16.mxu0 %v5098
    %7535 = vmatpush2.bf16.msra.mxu0 %v5097
    %7536 = vmatprep.subr.bf16.mxu0 %v5082
    %7537 = vmatpush2.bf16.msra.mxu0 %v5081
    %7538 = vmatprep.subr.bf16.mxu0 %v5066
    %7539 = vmatpush2.bf16.msra.mxu0 %v5065
    %7540 = vmatprep.subr.bf16.mxu0 %v5050
    %7541 = vmatpush2.bf16.msra.mxu0 %v5049
    %7542 = vmatprep.subr.bf16.mxu0 %v5034
    %7543 = vmatpush2.bf16.msra.mxu0 %v5033
    %7544 = vmatprep.subr.bf16.mxu0 %v5018
    %7545 = vmatpush2.bf16.msra.mxu0 %v5017
    %7546 = vmatprep.subr.bf16.mxu0 %v5002
    %7547 = vmatpush2.bf16.msra.mxu0 %v5001
    %7548 = vmatprep.mubr.bf16.mxu0 %v422
    %7549 = vmatmul.mubr.bf16.gmra.mxu0 %v421
    %v7550 = vpop.f32.mrf.mxu0
    %v7551 = vadd.f32 %v7510, %v7550
    %v7552 = vpop.f32.mrf.mxu0
    %v7553 = vadd.f32 %v7512, %v7552
    %v7554 = vpop.f32.mrf.mxu0
    %v7555 = vpop.f32.mrf.mxu0
    %7556 = vdwg.mxu0
    %7557 = vmatprep.subr.bf16.mxu0 %v5242
    %7558 = vmatpush1.bf16.msra.mxu0 %v5241
    %7559 = vmatprep.subr.bf16.mxu0 %v5226
    %7560 = vmatpush1.bf16.msra.mxu0 %v5225
    %7561 = vmatprep.subr.bf16.mxu0 %v5210
    %7562 = vmatpush1.bf16.msra.mxu0 %v5209
    %7563 = vmatprep.subr.bf16.mxu0 %v5194
    %7564 = vmatpush1.bf16.msra.mxu0 %v5193
    %7565 = vmatprep.subr.bf16.mxu0 %v5178
    %7566 = vmatpush1.bf16.msra.mxu0 %v5177
    %7567 = vmatprep.subr.bf16.mxu0 %v5162
    %7568 = vmatpush1.bf16.msra.mxu0 %v5161
    %7569 = vmatprep.subr.bf16.mxu0 %v5146
    %7570 = vmatpush1.bf16.msra.mxu0 %v5145
    %7571 = vmatprep.subr.bf16.mxu0 %v5130
    %7572 = vmatpush1.bf16.msra.mxu0 %v5129
    %7573 = vmatprep.subr.bf16.mxu0 %v5370
    %7574 = vmatpush2.bf16.msra.mxu0 %v5369
    %7575 = vmatprep.subr.bf16.mxu0 %v5354
    %7576 = vmatpush2.bf16.msra.mxu0 %v5353
    %7577 = vmatprep.subr.bf16.mxu0 %v5338
    %7578 = vmatpush2.bf16.msra.mxu0 %v5337
    %7579 = vmatprep.subr.bf16.mxu0 %v5322
    %7580 = vmatpush2.bf16.msra.mxu0 %v5321
    %7581 = vmatprep.subr.bf16.mxu0 %v5306
    %7582 = vmatpush2.bf16.msra.mxu0 %v5305
    %7583 = vmatprep.subr.bf16.mxu0 %v5290
    %7584 = vmatpush2.bf16.msra.mxu0 %v5289
    %7585 = vmatprep.subr.bf16.mxu0 %v5274
    %7586 = vmatpush2.bf16.msra.mxu0 %v5273
    %7587 = vmatprep.subr.bf16.mxu0 %v5258
    %7588 = vmatpush2.bf16.msra.mxu0 %v5257
    %7589 = vmatprep.mubr.bf16.mxu0 %v424
    %7590 = vmatmul.mubr.bf16.gmra.mxu0 %v423
    %v7591 = vpop.f32.mrf.mxu0
    %v7592 = vadd.f32 %v7551, %v7591
    %v7593 = vpop.f32.mrf.mxu0
    %v7594 = vadd.f32 %v7553, %v7593
    %v7595 = vpop.f32.mrf.mxu0
    %v7596 = vpop.f32.mrf.mxu0
    %7597 = vdwg.mxu0
    %7598 = vmatprep.subr.bf16.mxu0 %v5498
    %7599 = vmatpush1.bf16.msra.mxu0 %v5497
    %7600 = vmatprep.subr.bf16.mxu0 %v5482
    %7601 = vmatpush1.bf16.msra.mxu0 %v5481
    %7602 = vmatprep.subr.bf16.mxu0 %v5466
    %7603 = vmatpush1.bf16.msra.mxu0 %v5465
    %7604 = vmatprep.subr.bf16.mxu0 %v5450
    %7605 = vmatpush1.bf16.msra.mxu0 %v5449
    %7606 = vmatprep.subr.bf16.mxu0 %v5434
    %7607 = vmatpush1.bf16.msra.mxu0 %v5433
    %7608 = vmatprep.subr.bf16.mxu0 %v5418
    %7609 = vmatpush1.bf16.msra.mxu0 %v5417
    %7610 = vmatprep.subr.bf16.mxu0 %v5402
    %7611 = vmatpush1.bf16.msra.mxu0 %v5401
    %7612 = vmatprep.subr.bf16.mxu0 %v5386
    %7613 = vmatpush1.bf16.msra.mxu0 %v5385
    %7614 = vmatprep.subr.bf16.mxu0 %v5626
    %7615 = vmatpush2.bf16.msra.mxu0 %v5625
    %7616 = vmatprep.subr.bf16.mxu0 %v5610
    %7617 = vmatpush2.bf16.msra.mxu0 %v5609
    %7618 = vmatprep.subr.bf16.mxu0 %v5594
    %7619 = vmatpush2.bf16.msra.mxu0 %v5593
    %7620 = vmatprep.subr.bf16.mxu0 %v5578
    %7621 = vmatpush2.bf16.msra.mxu0 %v5577
    %7622 = vmatprep.subr.bf16.mxu0 %v5562
    %7623 = vmatpush2.bf16.msra.mxu0 %v5561
    %7624 = vmatprep.subr.bf16.mxu0 %v5546
    %7625 = vmatpush2.bf16.msra.mxu0 %v5545
    %7626 = vmatprep.subr.bf16.mxu0 %v5530
    %7627 = vmatpush2.bf16.msra.mxu0 %v5529
    %7628 = vmatprep.subr.bf16.mxu0 %v5514
    %7629 = vmatpush2.bf16.msra.mxu0 %v5513
    %7630 = vmatprep.mubr.bf16.mxu0 %v426
    %7631 = vmatmul.mubr.bf16.gmra.mxu0 %v425
    %v7632 = vpop.f32.mrf.mxu0
    %v7633 = vadd.f32 %v7592, %v7632
    %v7634 = vpop.f32.mrf.mxu0
    %v7635 = vadd.f32 %v7594, %v7634
    %v7636 = vpop.f32.mrf.mxu0
    %v7637 = vpop.f32.mrf.mxu0
    %7638 = vdwg.mxu0
    %7639 = vmatprep.subr.bf16.mxu0 %v4732
    %7640 = vmatpush1.bf16.msra.mxu0 %v4731
    %7641 = vmatprep.subr.bf16.mxu0 %v4716
    %7642 = vmatpush1.bf16.msra.mxu0 %v4715
    %7643 = vmatprep.subr.bf16.mxu0 %v4700
    %7644 = vmatpush1.bf16.msra.mxu0 %v4699
    %7645 = vmatprep.subr.bf16.mxu0 %v4684
    %7646 = vmatpush1.bf16.msra.mxu0 %v4683
    %7647 = vmatprep.subr.bf16.mxu0 %v4668
    %7648 = vmatpush1.bf16.msra.mxu0 %v4667
    %7649 = vmatprep.subr.bf16.mxu0 %v4652
    %7650 = vmatpush1.bf16.msra.mxu0 %v4651
    %7651 = vmatprep.subr.bf16.mxu0 %v4636
    %7652 = vmatpush1.bf16.msra.mxu0 %v4635
    %7653 = vmatprep.subr.bf16.mxu0 %v4620
    %7654 = vmatpush1.bf16.msra.mxu0 %v4619
    %7655 = vmatprep.subr.bf16.mxu0 %v4860
    %7656 = vmatpush2.bf16.msra.mxu0 %v4859
    %7657 = vmatprep.subr.bf16.mxu0 %v4844
    %7658 = vmatpush2.bf16.msra.mxu0 %v4843
    %7659 = vmatprep.subr.bf16.mxu0 %v4828
    %7660 = vmatpush2.bf16.msra.mxu0 %v4827
    %7661 = vmatprep.subr.bf16.mxu0 %v4812
    %7662 = vmatpush2.bf16.msra.mxu0 %v4811
    %7663 = vmatprep.subr.bf16.mxu0 %v4796
    %7664 = vmatpush2.bf16.msra.mxu0 %v4795
    %7665 = vmatprep.subr.bf16.mxu0 %v4780
    %7666 = vmatpush2.bf16.msra.mxu0 %v4779
    %7667 = vmatprep.subr.bf16.mxu0 %v4764
    %7668 = vmatpush2.bf16.msra.mxu0 %v4763
    %7669 = vmatprep.subr.bf16.mxu0 %v4748
    %7670 = vmatpush2.bf16.msra.mxu0 %v4747
    %7671 = vmatprep.mubr.bf16.mxu0 %v420
    %7672 = vmatmul.mubr.bf16.gmra.mxu0 %v419
    %v7673 = vpop.f32.mrf.mxu0
    %v7674 = vadd.f32 %v1506, %v7673
    %v7675 = vpop.f32.mrf.mxu0
    %v7676 = vadd.f32 %v1510, %v7675
    %v7677 = vpop.f32.mrf.mxu0
    %v7678 = vpop.f32.mrf.mxu0
    %7679 = vdwg.mxu0
    %7680 = vmatprep.subr.bf16.mxu0 %v4988
    %7681 = vmatpush1.bf16.msra.mxu0 %v4987
    %7682 = vmatprep.subr.bf16.mxu0 %v4972
    %7683 = vmatpush1.bf16.msra.mxu0 %v4971
    %7684 = vmatprep.subr.bf16.mxu0 %v4956
    %7685 = vmatpush1.bf16.msra.mxu0 %v4955
    %7686 = vmatprep.subr.bf16.mxu0 %v4940
    %7687 = vmatpush1.bf16.msra.mxu0 %v4939
    %7688 = vmatprep.subr.bf16.mxu0 %v4924
    %7689 = vmatpush1.bf16.msra.mxu0 %v4923
    %7690 = vmatprep.subr.bf16.mxu0 %v4908
    %7691 = vmatpush1.bf16.msra.mxu0 %v4907
    %7692 = vmatprep.subr.bf16.mxu0 %v4892
    %7693 = vmatpush1.bf16.msra.mxu0 %v4891
    %7694 = vmatprep.subr.bf16.mxu0 %v4876
    %7695 = vmatpush1.bf16.msra.mxu0 %v4875
    %7696 = vmatprep.subr.bf16.mxu0 %v5116
    %7697 = vmatpush2.bf16.msra.mxu0 %v5115
    %7698 = vmatprep.subr.bf16.mxu0 %v5100
    %7699 = vmatpush2.bf16.msra.mxu0 %v5099
    %7700 = vmatprep.subr.bf16.mxu0 %v5084
    %7701 = vmatpush2.bf16.msra.mxu0 %v5083
    %7702 = vmatprep.subr.bf16.mxu0 %v5068
    %7703 = vmatpush2.bf16.msra.mxu0 %v5067
    %7704 = vmatprep.subr.bf16.mxu0 %v5052
    %7705 = vmatpush2.bf16.msra.mxu0 %v5051
    %7706 = vmatprep.subr.bf16.mxu0 %v5036
    %7707 = vmatpush2.bf16.msra.mxu0 %v5035
    %7708 = vmatprep.subr.bf16.mxu0 %v5020
    %7709 = vmatpush2.bf16.msra.mxu0 %v5019
    %7710 = vmatprep.subr.bf16.mxu0 %v5004
    %7711 = vmatpush2.bf16.msra.mxu0 %v5003
    %7712 = vmatprep.mubr.bf16.mxu0 %v422
    %7713 = vmatmul.mubr.bf16.gmra.mxu0 %v421
    %v7714 = vpop.f32.mrf.mxu0
    %v7715 = vadd.f32 %v7674, %v7714
    %v7716 = vpop.f32.mrf.mxu0
    %v7717 = vadd.f32 %v7676, %v7716
    %v7718 = vpop.f32.mrf.mxu0
    %v7719 = vpop.f32.mrf.mxu0
    %7720 = vdwg.mxu0
    %7721 = vmatprep.subr.bf16.mxu0 %v5244
    %7722 = vmatpush1.bf16.msra.mxu0 %v5243
    %7723 = vmatprep.subr.bf16.mxu0 %v5228
    %7724 = vmatpush1.bf16.msra.mxu0 %v5227
    %7725 = vmatprep.subr.bf16.mxu0 %v5212
    %7726 = vmatpush1.bf16.msra.mxu0 %v5211
    %7727 = vmatprep.subr.bf16.mxu0 %v5196
    %7728 = vmatpush1.bf16.msra.mxu0 %v5195
    %7729 = vmatprep.subr.bf16.mxu0 %v5180
    %7730 = vmatpush1.bf16.msra.mxu0 %v5179
    %7731 = vmatprep.subr.bf16.mxu0 %v5164
    %7732 = vmatpush1.bf16.msra.mxu0 %v5163
    %7733 = vmatprep.subr.bf16.mxu0 %v5148
    %7734 = vmatpush1.bf16.msra.mxu0 %v5147
    %7735 = vmatprep.subr.bf16.mxu0 %v5132
    %7736 = vmatpush1.bf16.msra.mxu0 %v5131
    %7737 = vmatprep.subr.bf16.mxu0 %v5372
    %7738 = vmatpush2.bf16.msra.mxu0 %v5371
    %7739 = vmatprep.subr.bf16.mxu0 %v5356
    %7740 = vmatpush2.bf16.msra.mxu0 %v5355
    %7741 = vmatprep.subr.bf16.mxu0 %v5340
    %7742 = vmatpush2.bf16.msra.mxu0 %v5339
    %7743 = vmatprep.subr.bf16.mxu0 %v5324
    %7744 = vmatpush2.bf16.msra.mxu0 %v5323
    %7745 = vmatprep.subr.bf16.mxu0 %v5308
    %7746 = vmatpush2.bf16.msra.mxu0 %v5307
    %7747 = vmatprep.subr.bf16.mxu0 %v5292
    %7748 = vmatpush2.bf16.msra.mxu0 %v5291
    %7749 = vmatprep.subr.bf16.mxu0 %v5276
    %7750 = vmatpush2.bf16.msra.mxu0 %v5275
    %7751 = vmatprep.subr.bf16.mxu0 %v5260
    %7752 = vmatpush2.bf16.msra.mxu0 %v5259
    %7753 = vmatprep.mubr.bf16.mxu0 %v424
    %7754 = vmatmul.mubr.bf16.gmra.mxu0 %v423
    %v7755 = vpop.f32.mrf.mxu0
    %v7756 = vadd.f32 %v7715, %v7755
    %v7757 = vpop.f32.mrf.mxu0
    %v7758 = vadd.f32 %v7717, %v7757
    %v7759 = vpop.f32.mrf.mxu0
    %v7760 = vpop.f32.mrf.mxu0
    %7761 = vdwg.mxu0
    %7762 = vmatprep.subr.bf16.mxu0 %v5500
    %7763 = vmatpush1.bf16.msra.mxu0 %v5499
    %7764 = vmatprep.subr.bf16.mxu0 %v5484
    %7765 = vmatpush1.bf16.msra.mxu0 %v5483
    %7766 = vmatprep.subr.bf16.mxu0 %v5468
    %7767 = vmatpush1.bf16.msra.mxu0 %v5467
    %7768 = vmatprep.subr.bf16.mxu0 %v5452
    %7769 = vmatpush1.bf16.msra.mxu0 %v5451
    %7770 = vmatprep.subr.bf16.mxu0 %v5436
    %7771 = vmatpush1.bf16.msra.mxu0 %v5435
    %7772 = vmatprep.subr.bf16.mxu0 %v5420
    %7773 = vmatpush1.bf16.msra.mxu0 %v5419
    %7774 = vmatprep.subr.bf16.mxu0 %v5404
    %7775 = vmatpush1.bf16.msra.mxu0 %v5403
    %7776 = vmatprep.subr.bf16.mxu0 %v5388
    %7777 = vmatpush1.bf16.msra.mxu0 %v5387
    %7778 = vmatprep.subr.bf16.mxu0 %v5628
    %7779 = vmatpush2.bf16.msra.mxu0 %v5627
    %7780 = vmatprep.subr.bf16.mxu0 %v5612
    %7781 = vmatpush2.bf16.msra.mxu0 %v5611
    %7782 = vmatprep.subr.bf16.mxu0 %v5596
    %7783 = vmatpush2.bf16.msra.mxu0 %v5595
    %7784 = vmatprep.subr.bf16.mxu0 %v5580
    %7785 = vmatpush2.bf16.msra.mxu0 %v5579
    %7786 = vmatprep.subr.bf16.mxu0 %v5564
    %7787 = vmatpush2.bf16.msra.mxu0 %v5563
    %7788 = vmatprep.subr.bf16.mxu0 %v5548
    %7789 = vmatpush2.bf16.msra.mxu0 %v5547
    %7790 = vmatprep.subr.bf16.mxu0 %v5532
    %7791 = vmatpush2.bf16.msra.mxu0 %v5531
    %7792 = vmatprep.subr.bf16.mxu0 %v5516
    %7793 = vmatpush2.bf16.msra.mxu0 %v5515
    %7794 = vmatprep.mubr.bf16.mxu0 %v426
    %7795 = vmatmul.mubr.bf16.gmra.mxu0 %v425
    %v7796 = vpop.f32.mrf.mxu0
    %v7797 = vadd.f32 %v7756, %v7796
    %v7798 = vpop.f32.mrf.mxu0
    %v7799 = vadd.f32 %v7758, %v7798
    %v7800 = vpop.f32.mrf.mxu0
    %v7801 = vpop.f32.mrf.mxu0
    %7802 = vdwg.mxu0
    %7803 = vmatprep.subr.bf16.mxu0 %v4734
    %7804 = vmatpush1.bf16.msra.mxu0 %v4733
    %7805 = vmatprep.subr.bf16.mxu0 %v4718
    %7806 = vmatpush1.bf16.msra.mxu0 %v4717
    %7807 = vmatprep.subr.bf16.mxu0 %v4702
    %7808 = vmatpush1.bf16.msra.mxu0 %v4701
    %7809 = vmatprep.subr.bf16.mxu0 %v4686
    %7810 = vmatpush1.bf16.msra.mxu0 %v4685
    %7811 = vmatprep.subr.bf16.mxu0 %v4670
    %7812 = vmatpush1.bf16.msra.mxu0 %v4669
    %7813 = vmatprep.subr.bf16.mxu0 %v4654
    %7814 = vmatpush1.bf16.msra.mxu0 %v4653
    %7815 = vmatprep.subr.bf16.mxu0 %v4638
    %7816 = vmatpush1.bf16.msra.mxu0 %v4637
    %7817 = vmatprep.subr.bf16.mxu0 %v4622
    %7818 = vmatpush1.bf16.msra.mxu0 %v4621
    %7819 = vmatprep.subr.bf16.mxu0 %v4862
    %7820 = vmatpush2.bf16.msra.mxu0 %v4861
    %7821 = vmatprep.subr.bf16.mxu0 %v4846
    %7822 = vmatpush2.bf16.msra.mxu0 %v4845
    %7823 = vmatprep.subr.bf16.mxu0 %v4830
    %7824 = vmatpush2.bf16.msra.mxu0 %v4829
    %7825 = vmatprep.subr.bf16.mxu0 %v4814
    %7826 = vmatpush2.bf16.msra.mxu0 %v4813
    %7827 = vmatprep.subr.bf16.mxu0 %v4798
    %7828 = vmatpush2.bf16.msra.mxu0 %v4797
    %7829 = vmatprep.subr.bf16.mxu0 %v4782
    %7830 = vmatpush2.bf16.msra.mxu0 %v4781
    %7831 = vmatprep.subr.bf16.mxu0 %v4766
    %7832 = vmatpush2.bf16.msra.mxu0 %v4765
    %7833 = vmatprep.subr.bf16.mxu0 %v4750
    %7834 = vmatpush2.bf16.msra.mxu0 %v4749
    %7835 = vmatprep.mubr.bf16.mxu0 %v420
    %7836 = vmatmul.mubr.bf16.gmra.mxu0 %v419
    %v7837 = vpop.f32.mrf.mxu0
    %v7838 = vadd.f32 %v1514, %v7837
    %v7839 = vpop.f32.mrf.mxu0
    %v7840 = vadd.f32 %v1518, %v7839
    %v7841 = vpop.f32.mrf.mxu0
    %v7842 = vpop.f32.mrf.mxu0
    %7843 = vdwg.mxu0
    %7844 = vmatprep.subr.bf16.mxu0 %v4990
    %7845 = vmatpush1.bf16.msra.mxu0 %v4989
    %7846 = vmatprep.subr.bf16.mxu0 %v4974
    %7847 = vmatpush1.bf16.msra.mxu0 %v4973
    %7848 = vmatprep.subr.bf16.mxu0 %v4958
    %7849 = vmatpush1.bf16.msra.mxu0 %v4957
    %7850 = vmatprep.subr.bf16.mxu0 %v4942
    %7851 = vmatpush1.bf16.msra.mxu0 %v4941
    %7852 = vmatprep.subr.bf16.mxu0 %v4926
    %7853 = vmatpush1.bf16.msra.mxu0 %v4925
    %7854 = vmatprep.subr.bf16.mxu0 %v4910
    %7855 = vmatpush1.bf16.msra.mxu0 %v4909
    %7856 = vmatprep.subr.bf16.mxu0 %v4894
    %7857 = vmatpush1.bf16.msra.mxu0 %v4893
    %7858 = vmatprep.subr.bf16.mxu0 %v4878
    %7859 = vmatpush1.bf16.msra.mxu0 %v4877
    %7860 = vmatprep.subr.bf16.mxu0 %v5118
    %7861 = vmatpush2.bf16.msra.mxu0 %v5117
    %7862 = vmatprep.subr.bf16.mxu0 %v5102
    %7863 = vmatpush2.bf16.msra.mxu0 %v5101
    %7864 = vmatprep.subr.bf16.mxu0 %v5086
    %7865 = vmatpush2.bf16.msra.mxu0 %v5085
    %7866 = vmatprep.subr.bf16.mxu0 %v5070
    %7867 = vmatpush2.bf16.msra.mxu0 %v5069
    %7868 = vmatprep.subr.bf16.mxu0 %v5054
    %7869 = vmatpush2.bf16.msra.mxu0 %v5053
    %7870 = vmatprep.subr.bf16.mxu0 %v5038
    %7871 = vmatpush2.bf16.msra.mxu0 %v5037
    %7872 = vmatprep.subr.bf16.mxu0 %v5022
    %7873 = vmatpush2.bf16.msra.mxu0 %v5021
    %7874 = vmatprep.subr.bf16.mxu0 %v5006
    %7875 = vmatpush2.bf16.msra.mxu0 %v5005
    %7876 = vmatprep.mubr.bf16.mxu0 %v422
    %7877 = vmatmul.mubr.bf16.gmra.mxu0 %v421
    %v7878 = vpop.f32.mrf.mxu0
    %v7879 = vadd.f32 %v7838, %v7878
    %v7880 = vpop.f32.mrf.mxu0
    %v7881 = vadd.f32 %v7840, %v7880
    %v7882 = vpop.f32.mrf.mxu0
    %v7883 = vpop.f32.mrf.mxu0
    %7884 = vdwg.mxu0
    %7885 = vmatprep.subr.bf16.mxu0 %v5246
    %7886 = vmatpush1.bf16.msra.mxu0 %v5245
    %7887 = vmatprep.subr.bf16.mxu0 %v5230
    %7888 = vmatpush1.bf16.msra.mxu0 %v5229
    %7889 = vmatprep.subr.bf16.mxu0 %v5214
    %7890 = vmatpush1.bf16.msra.mxu0 %v5213
    %7891 = vmatprep.subr.bf16.mxu0 %v5198
    %7892 = vmatpush1.bf16.msra.mxu0 %v5197
    %7893 = vmatprep.subr.bf16.mxu0 %v5182
    %7894 = vmatpush1.bf16.msra.mxu0 %v5181
    %7895 = vmatprep.subr.bf16.mxu0 %v5166
    %7896 = vmatpush1.bf16.msra.mxu0 %v5165
    %7897 = vmatprep.subr.bf16.mxu0 %v5150
    %7898 = vmatpush1.bf16.msra.mxu0 %v5149
    %7899 = vmatprep.subr.bf16.mxu0 %v5134
    %7900 = vmatpush1.bf16.msra.mxu0 %v5133
    %7901 = vmatprep.subr.bf16.mxu0 %v5374
    %7902 = vmatpush2.bf16.msra.mxu0 %v5373
    %7903 = vmatprep.subr.bf16.mxu0 %v5358
    %7904 = vmatpush2.bf16.msra.mxu0 %v5357
    %7905 = vmatprep.subr.bf16.mxu0 %v5342
    %7906 = vmatpush2.bf16.msra.mxu0 %v5341
    %7907 = vmatprep.subr.bf16.mxu0 %v5326
    %7908 = vmatpush2.bf16.msra.mxu0 %v5325
    %7909 = vmatprep.subr.bf16.mxu0 %v5310
    %7910 = vmatpush2.bf16.msra.mxu0 %v5309
    %7911 = vmatprep.subr.bf16.mxu0 %v5294
    %7912 = vmatpush2.bf16.msra.mxu0 %v5293
    %7913 = vmatprep.subr.bf16.mxu0 %v5278
    %7914 = vmatpush2.bf16.msra.mxu0 %v5277
    %7915 = vmatprep.subr.bf16.mxu0 %v5262
    %7916 = vmatpush2.bf16.msra.mxu0 %v5261
    %7917 = vmatprep.mubr.bf16.mxu0 %v424
    %7918 = vmatmul.mubr.bf16.gmra.mxu0 %v423
    %v7919 = vpop.f32.mrf.mxu0
    %v7920 = vadd.f32 %v7879, %v7919
    %v7921 = vpop.f32.mrf.mxu0
    %v7922 = vadd.f32 %v7881, %v7921
    %v7923 = vpop.f32.mrf.mxu0
    %v7924 = vpop.f32.mrf.mxu0
    %7925 = vdwg.mxu0
    %7926 = vmatprep.subr.bf16.mxu0 %v5502
    %7927 = vmatpush1.bf16.msra.mxu0 %v5501
    %7928 = vmatprep.subr.bf16.mxu0 %v5486
    %7929 = vmatpush1.bf16.msra.mxu0 %v5485
    %7930 = vmatprep.subr.bf16.mxu0 %v5470
    %7931 = vmatpush1.bf16.msra.mxu0 %v5469
    %7932 = vmatprep.subr.bf16.mxu0 %v5454
    %7933 = vmatpush1.bf16.msra.mxu0 %v5453
    %7934 = vmatprep.subr.bf16.mxu0 %v5438
    %7935 = vmatpush1.bf16.msra.mxu0 %v5437
    %7936 = vmatprep.subr.bf16.mxu0 %v5422
    %7937 = vmatpush1.bf16.msra.mxu0 %v5421
    %7938 = vmatprep.subr.bf16.mxu0 %v5406
    %7939 = vmatpush1.bf16.msra.mxu0 %v5405
    %7940 = vmatprep.subr.bf16.mxu0 %v5390
    %7941 = vmatpush1.bf16.msra.mxu0 %v5389
    %7942 = vmatprep.subr.bf16.mxu0 %v5630
    %7943 = vmatpush2.bf16.msra.mxu0 %v5629
    %7944 = vmatprep.subr.bf16.mxu0 %v5614
    %7945 = vmatpush2.bf16.msra.mxu0 %v5613
    %7946 = vmatprep.subr.bf16.mxu0 %v5598
    %7947 = vmatpush2.bf16.msra.mxu0 %v5597
    %7948 = vmatprep.subr.bf16.mxu0 %v5582
    %7949 = vmatpush2.bf16.msra.mxu0 %v5581
    %7950 = vmatprep.subr.bf16.mxu0 %v5566
    %7951 = vmatpush2.bf16.msra.mxu0 %v5565
    %7952 = vmatprep.subr.bf16.mxu0 %v5550
    %7953 = vmatpush2.bf16.msra.mxu0 %v5549
    %7954 = vmatprep.subr.bf16.mxu0 %v5534
    %7955 = vmatpush2.bf16.msra.mxu0 %v5533
    %7956 = vmatprep.subr.bf16.mxu0 %v5518
    %7957 = vmatpush2.bf16.msra.mxu0 %v5517
    %7958 = vmatprep.mubr.bf16.mxu0 %v426
    %7959 = vmatmul.mubr.bf16.gmra.mxu0 %v425
    %v7960 = vpop.f32.mrf.mxu0
    %v7961 = vadd.f32 %v7920, %v7960
    %v7962 = vpop.f32.mrf.mxu0
    %v7963 = vadd.f32 %v7922, %v7962
    %v7964 = vpop.f32.mrf.mxu0
    %v7965 = vpop.f32.mrf.mxu0
    %7966 = vdwg.mxu0
    %v7967 = vmax.f32 %v6813, 0.0
    %v7968 = vmax.f32 %v6815, 0.0
    %v7969 = vmax.f32 %v6977, 0.0
    %v7970 = vmax.f32 %v6979, 0.0
    %v7971 = vmax.f32 %v7141, 0.0
    %v7972 = vmax.f32 %v7143, 0.0
    %v7973 = vmax.f32 %v7305, 0.0
    %v7974 = vmax.f32 %v7307, 0.0
    %v7975 = vmax.f32 %v7469, 0.0
    %v7976 = vmax.f32 %v7471, 0.0
    %v7977 = vmax.f32 %v7633, 0.0
    %v7978 = vmax.f32 %v7635, 0.0
    %v7979 = vmax.f32 %v7797, 0.0
    %v7980 = vmax.f32 %v7799, 0.0
    %v7981 = vmax.f32 %v7961, 0.0
    %v7982 = vmax.f32 %v7963, 0.0
    %v7983 = vpack.c.bf16 %v7967, %v7967
    %v7984 = vpack.c.bf16 %v7968, %v7968
    %v7985 = vpack.c.bf16 %v7969, %v7969
    %v7986 = vpack.c.bf16 %v7970, %v7970
    %v7987 = vpack.c.bf16 %v7971, %v7971
    %v7988 = vpack.c.bf16 %v7972, %v7972
    %v7989 = vpack.c.bf16 %v7973, %v7973
    %v7990 = vpack.c.bf16 %v7974, %v7974
    %v7991 = vpack.c.bf16 %v7975, %v7975
    %v7992 = vpack.c.bf16 %v7976, %v7976
    %v7993 = vpack.c.bf16 %v7977, %v7977
    %v7994 = vpack.c.bf16 %v7978, %v7978
    %v7995 = vpack.c.bf16 %v7979, %v7979
    %v7996 = vpack.c.bf16 %v7980, %v7980
    %v7997 = vpack.c.bf16 %v7981, %v7981
    %v7998 = vpack.c.bf16 %v7982, %v7982
    %v7999 = vld [vmem:[#allocation10] sm:$0xff]
    %v8000 = vld [vmem:[#allocation10 + $0x8] sm:$0xff]
    %v8001 = vld [vmem:[#allocation10 + $0x10] sm:$0xff]
    %v8002 = vld [vmem:[#allocation10 + $0x18] sm:$0xff]
    %v8003 = vld [vmem:[#allocation10 + $0x20] sm:$0xff]
    %v8004 = vld [vmem:[#allocation10 + $0x28] sm:$0xff]
    %v8005 = vld [vmem:[#allocation10 + $0x30] sm:$0xff]
    %v8006 = vld [vmem:[#allocation10 + $0x38] sm:$0xff]
    %v8007 = vld [vmem:[#allocation10 + $0x40] sm:$0xff]
    %v8008 = vld [vmem:[#allocation10 + $0x48] sm:$0xff]
    %v8009 = vld [vmem:[#allocation10 + $0x50] sm:$0xff]
    %v8010 = vld [vmem:[#allocation10 + $0x58] sm:$0xff]
    %v8011 = vld [vmem:[#allocation10 + $0x60] sm:$0xff]
    %v8012 = vld [vmem:[#allocation10 + $0x68] sm:$0xff]
    %v8013 = vld [vmem:[#allocation10 + $0x70] sm:$0xff]
    %v8014 = vld [vmem:[#allocation10 + $0x78] sm:$0xff]
    %v8015 = vld [vmem:[#allocation10 + $0x80] sm:$0xff]
    %v8016 = vld [vmem:[#allocation10 + $0x88] sm:$0xff]
    %v8017 = vld [vmem:[#allocation10 + $0x90] sm:$0xff]
    %v8018 = vld [vmem:[#allocation10 + $0x98] sm:$0xff]
    %v8019 = vld [vmem:[#allocation10 + $0xa0] sm:$0xff]
    %v8020 = vld [vmem:[#allocation10 + $0xa8] sm:$0xff]
    %v8021 = vld [vmem:[#allocation10 + $0xb0] sm:$0xff]
    %v8022 = vld [vmem:[#allocation10 + $0xb8] sm:$0xff]
    %v8023 = vld [vmem:[#allocation10 + $0xc0] sm:$0xff]
    %v8024 = vld [vmem:[#allocation10 + $0xc8] sm:$0xff]
    %v8025 = vld [vmem:[#allocation10 + $0xd0] sm:$0xff]
    %v8026 = vld [vmem:[#allocation10 + $0xd8] sm:$0xff]
    %v8027 = vld [vmem:[#allocation10 + $0xe0] sm:$0xff]
    %v8028 = vld [vmem:[#allocation10 + $0xe8] sm:$0xff]
    %v8029 = vld [vmem:[#allocation10 + $0xf0] sm:$0xff]
    %v8030 = vld [vmem:[#allocation10 + $0xf8] sm:$0xff]
    %v8031 = vld [vmem:[#allocation10 + $0x100] sm:$0xff]
    %v8032 = vld [vmem:[#allocation10 + $0x108] sm:$0xff]
    %v8033 = vld [vmem:[#allocation10 + $0x110] sm:$0xff]
    %v8034 = vld [vmem:[#allocation10 + $0x118] sm:$0xff]
    %v8035 = vld [vmem:[#allocation10 + $0x120] sm:$0xff]
    %v8036 = vld [vmem:[#allocation10 + $0x128] sm:$0xff]
    %v8037 = vld [vmem:[#allocation10 + $0x130] sm:$0xff]
    %v8038 = vld [vmem:[#allocation10 + $0x138] sm:$0xff]
    %v8039 = vld [vmem:[#allocation10 + $0x140] sm:$0xff]
    %v8040 = vld [vmem:[#allocation10 + $0x148] sm:$0xff]
    %v8041 = vld [vmem:[#allocation10 + $0x150] sm:$0xff]
    %v8042 = vld [vmem:[#allocation10 + $0x158] sm:$0xff]
    %v8043 = vld [vmem:[#allocation10 + $0x160] sm:$0xff]
    %v8044 = vld [vmem:[#allocation10 + $0x168] sm:$0xff]
    %v8045 = vld [vmem:[#allocation10 + $0x170] sm:$0xff]
    %v8046 = vld [vmem:[#allocation10 + $0x178] sm:$0xff]
    %v8047 = vld [vmem:[#allocation10 + $0x180] sm:$0xff]
    %v8048 = vld [vmem:[#allocation10 + $0x188] sm:$0xff]
    %v8049 = vld [vmem:[#allocation10 + $0x190] sm:$0xff]
    %v8050 = vld [vmem:[#allocation10 + $0x198] sm:$0xff]
    %v8051 = vld [vmem:[#allocation10 + $0x1a0] sm:$0xff]
    %v8052 = vld [vmem:[#allocation10 + $0x1a8] sm:$0xff]
    %v8053 = vld [vmem:[#allocation10 + $0x1b0] sm:$0xff]
    %v8054 = vld [vmem:[#allocation10 + $0x1b8] sm:$0xff]
    %v8055 = vld [vmem:[#allocation10 + $0x1c0] sm:$0xff]
    %v8056 = vld [vmem:[#allocation10 + $0x1c8] sm:$0xff]
    %v8057 = vld [vmem:[#allocation10 + $0x1d0] sm:$0xff]
    %v8058 = vld [vmem:[#allocation10 + $0x1d8] sm:$0xff]
    %v8059 = vld [vmem:[#allocation10 + $0x1e0] sm:$0xff]
    %v8060 = vld [vmem:[#allocation10 + $0x1e8] sm:$0xff]
    %v8061 = vld [vmem:[#allocation10 + $0x1f0] sm:$0xff]
    %v8062 = vld [vmem:[#allocation10 + $0x1f8] sm:$0xff]
    %v8063 = vld [vmem:[#allocation10 + $0x200] sm:$0xff]
    %v8064 = vld [vmem:[#allocation10 + $0x208] sm:$0xff]
    %v8065 = vld [vmem:[#allocation10 + $0x210] sm:$0xff]
    %v8066 = vld [vmem:[#allocation10 + $0x218] sm:$0xff]
    %v8067 = vld [vmem:[#allocation10 + $0x220] sm:$0xff]
    %v8068 = vld [vmem:[#allocation10 + $0x228] sm:$0xff]
    %v8069 = vld [vmem:[#allocation10 + $0x230] sm:$0xff]
    %v8070 = vld [vmem:[#allocation10 + $0x238] sm:$0xff]
    %v8071 = vld [vmem:[#allocation10 + $0x240] sm:$0xff]
    %v8072 = vld [vmem:[#allocation10 + $0x248] sm:$0xff]
    %v8073 = vld [vmem:[#allocation10 + $0x250] sm:$0xff]
    %v8074 = vld [vmem:[#allocation10 + $0x258] sm:$0xff]
    %v8075 = vld [vmem:[#allocation10 + $0x260] sm:$0xff]
    %v8076 = vld [vmem:[#allocation10 + $0x268] sm:$0xff]
    %v8077 = vld [vmem:[#allocation10 + $0x270] sm:$0xff]
    %v8078 = vld [vmem:[#allocation10 + $0x278] sm:$0xff]
    %v8079 = vld [vmem:[#allocation10 + $0x280] sm:$0xff]
    %v8080 = vld [vmem:[#allocation10 + $0x288] sm:$0xff]
    %v8081 = vld [vmem:[#allocation10 + $0x290] sm:$0xff]
    %v8082 = vld [vmem:[#allocation10 + $0x298] sm:$0xff]
    %v8083 = vld [vmem:[#allocation10 + $0x2a0] sm:$0xff]
    %v8084 = vld [vmem:[#allocation10 + $0x2a8] sm:$0xff]
    %v8085 = vld [vmem:[#allocation10 + $0x2b0] sm:$0xff]
    %v8086 = vld [vmem:[#allocation10 + $0x2b8] sm:$0xff]
    %v8087 = vld [vmem:[#allocation10 + $0x2c0] sm:$0xff]
    %v8088 = vld [vmem:[#allocation10 + $0x2c8] sm:$0xff]
    %v8089 = vld [vmem:[#allocation10 + $0x2d0] sm:$0xff]
    %v8090 = vld [vmem:[#allocation10 + $0x2d8] sm:$0xff]
    %v8091 = vld [vmem:[#allocation10 + $0x2e0] sm:$0xff]
    %v8092 = vld [vmem:[#allocation10 + $0x2e8] sm:$0xff]
    %v8093 = vld [vmem:[#allocation10 + $0x2f0] sm:$0xff]
    %v8094 = vld [vmem:[#allocation10 + $0x2f8] sm:$0xff]
    %v8095 = vld [vmem:[#allocation10 + $0x300] sm:$0xff]
    %v8096 = vld [vmem:[#allocation10 + $0x308] sm:$0xff]
    %v8097 = vld [vmem:[#allocation10 + $0x310] sm:$0xff]
    %v8098 = vld [vmem:[#allocation10 + $0x318] sm:$0xff]
    %v8099 = vld [vmem:[#allocation10 + $0x320] sm:$0xff]
    %v8100 = vld [vmem:[#allocation10 + $0x328] sm:$0xff]
    %v8101 = vld [vmem:[#allocation10 + $0x330] sm:$0xff]
    %v8102 = vld [vmem:[#allocation10 + $0x338] sm:$0xff]
    %v8103 = vld [vmem:[#allocation10 + $0x340] sm:$0xff]
    %v8104 = vld [vmem:[#allocation10 + $0x348] sm:$0xff]
    %v8105 = vld [vmem:[#allocation10 + $0x350] sm:$0xff]
    %v8106 = vld [vmem:[#allocation10 + $0x358] sm:$0xff]
    %v8107 = vld [vmem:[#allocation10 + $0x360] sm:$0xff]
    %v8108 = vld [vmem:[#allocation10 + $0x368] sm:$0xff]
    %v8109 = vld [vmem:[#allocation10 + $0x370] sm:$0xff]
    %v8110 = vld [vmem:[#allocation10 + $0x378] sm:$0xff]
    %v8111 = vld [vmem:[#allocation10 + $0x380] sm:$0xff]
    %v8112 = vld [vmem:[#allocation10 + $0x388] sm:$0xff]
    %v8113 = vld [vmem:[#allocation10 + $0x390] sm:$0xff]
    %v8114 = vld [vmem:[#allocation10 + $0x398] sm:$0xff]
    %v8115 = vld [vmem:[#allocation10 + $0x3a0] sm:$0xff]
    %v8116 = vld [vmem:[#allocation10 + $0x3a8] sm:$0xff]
    %v8117 = vld [vmem:[#allocation10 + $0x3b0] sm:$0xff]
    %v8118 = vld [vmem:[#allocation10 + $0x3b8] sm:$0xff]
    %v8119 = vld [vmem:[#allocation10 + $0x3c0] sm:$0xff]
    %v8120 = vld [vmem:[#allocation10 + $0x3c8] sm:$0xff]
    %v8121 = vld [vmem:[#allocation10 + $0x3d0] sm:$0xff]
    %v8122 = vld [vmem:[#allocation10 + $0x3d8] sm:$0xff]
    %v8123 = vld [vmem:[#allocation10 + $0x3e0] sm:$0xff]
    %v8124 = vld [vmem:[#allocation10 + $0x3e8] sm:$0xff]
    %v8125 = vld [vmem:[#allocation10 + $0x3f0] sm:$0xff]
    %v8126 = vld [vmem:[#allocation10 + $0x3f8] sm:$0xff]
    %v8127 = vld [vmem:[#allocation10 + $0x400] sm:$0xff]
    %v8128 = vld [vmem:[#allocation10 + $0x408] sm:$0xff]
    %v8129 = vld [vmem:[#allocation10 + $0x410] sm:$0xff]
    %v8130 = vld [vmem:[#allocation10 + $0x418] sm:$0xff]
    %v8131 = vld [vmem:[#allocation10 + $0x420] sm:$0xff]
    %v8132 = vld [vmem:[#allocation10 + $0x428] sm:$0xff]
    %v8133 = vld [vmem:[#allocation10 + $0x430] sm:$0xff]
    %v8134 = vld [vmem:[#allocation10 + $0x438] sm:$0xff]
    %v8135 = vld [vmem:[#allocation10 + $0x440] sm:$0xff]
    %v8136 = vld [vmem:[#allocation10 + $0x448] sm:$0xff]
    %v8137 = vld [vmem:[#allocation10 + $0x450] sm:$0xff]
    %v8138 = vld [vmem:[#allocation10 + $0x458] sm:$0xff]
    %v8139 = vld [vmem:[#allocation10 + $0x460] sm:$0xff]
    %v8140 = vld [vmem:[#allocation10 + $0x468] sm:$0xff]
    %v8141 = vld [vmem:[#allocation10 + $0x470] sm:$0xff]
    %v8142 = vld [vmem:[#allocation10 + $0x478] sm:$0xff]
    %v8143 = vld [vmem:[#allocation10 + $0x480] sm:$0xff]
    %v8144 = vld [vmem:[#allocation10 + $0x488] sm:$0xff]
    %v8145 = vld [vmem:[#allocation10 + $0x490] sm:$0xff]
    %v8146 = vld [vmem:[#allocation10 + $0x498] sm:$0xff]
    %v8147 = vld [vmem:[#allocation10 + $0x4a0] sm:$0xff]
    %v8148 = vld [vmem:[#allocation10 + $0x4a8] sm:$0xff]
    %v8149 = vld [vmem:[#allocation10 + $0x4b0] sm:$0xff]
    %v8150 = vld [vmem:[#allocation10 + $0x4b8] sm:$0xff]
    %v8151 = vld [vmem:[#allocation10 + $0x4c0] sm:$0xff]
    %v8152 = vld [vmem:[#allocation10 + $0x4c8] sm:$0xff]
    %v8153 = vld [vmem:[#allocation10 + $0x4d0] sm:$0xff]
    %v8154 = vld [vmem:[#allocation10 + $0x4d8] sm:$0xff]
    %v8155 = vld [vmem:[#allocation10 + $0x4e0] sm:$0xff]
    %v8156 = vld [vmem:[#allocation10 + $0x4e8] sm:$0xff]
    %v8157 = vld [vmem:[#allocation10 + $0x4f0] sm:$0xff]
    %v8158 = vld [vmem:[#allocation10 + $0x4f8] sm:$0xff]
    %v8159 = vld [vmem:[#allocation10 + $0x500] sm:$0xff]
    %v8160 = vld [vmem:[#allocation10 + $0x508] sm:$0xff]
    %v8161 = vld [vmem:[#allocation10 + $0x510] sm:$0xff]
    %v8162 = vld [vmem:[#allocation10 + $0x518] sm:$0xff]
    %v8163 = vld [vmem:[#allocation10 + $0x520] sm:$0xff]
    %v8164 = vld [vmem:[#allocation10 + $0x528] sm:$0xff]
    %v8165 = vld [vmem:[#allocation10 + $0x530] sm:$0xff]
    %v8166 = vld [vmem:[#allocation10 + $0x538] sm:$0xff]
    %v8167 = vld [vmem:[#allocation10 + $0x540] sm:$0xff]
    %v8168 = vld [vmem:[#allocation10 + $0x548] sm:$0xff]
    %v8169 = vld [vmem:[#allocation10 + $0x550] sm:$0xff]
    %v8170 = vld [vmem:[#allocation10 + $0x558] sm:$0xff]
    %v8171 = vld [vmem:[#allocation10 + $0x560] sm:$0xff]
    %v8172 = vld [vmem:[#allocation10 + $0x568] sm:$0xff]
    %v8173 = vld [vmem:[#allocation10 + $0x570] sm:$0xff]
    %v8174 = vld [vmem:[#allocation10 + $0x578] sm:$0xff]
    %v8175 = vld [vmem:[#allocation10 + $0x580] sm:$0xff]
    %v8176 = vld [vmem:[#allocation10 + $0x588] sm:$0xff]
    %v8177 = vld [vmem:[#allocation10 + $0x590] sm:$0xff]
    %v8178 = vld [vmem:[#allocation10 + $0x598] sm:$0xff]
    %v8179 = vld [vmem:[#allocation10 + $0x5a0] sm:$0xff]
    %v8180 = vld [vmem:[#allocation10 + $0x5a8] sm:$0xff]
    %v8181 = vld [vmem:[#allocation10 + $0x5b0] sm:$0xff]
    %v8182 = vld [vmem:[#allocation10 + $0x5b8] sm:$0xff]
    %v8183 = vld [vmem:[#allocation10 + $0x5c0] sm:$0xff]
    %v8184 = vld [vmem:[#allocation10 + $0x5c8] sm:$0xff]
    %v8185 = vld [vmem:[#allocation10 + $0x5d0] sm:$0xff]
    %v8186 = vld [vmem:[#allocation10 + $0x5d8] sm:$0xff]
    %v8187 = vld [vmem:[#allocation10 + $0x5e0] sm:$0xff]
    %v8188 = vld [vmem:[#allocation10 + $0x5e8] sm:$0xff]
    %v8189 = vld [vmem:[#allocation10 + $0x5f0] sm:$0xff]
    %v8190 = vld [vmem:[#allocation10 + $0x5f8] sm:$0xff]
    %v8191 = vld [vmem:[#allocation10 + $0x600] sm:$0xff]
    %v8192 = vld [vmem:[#allocation10 + $0x608] sm:$0xff]
    %v8193 = vld [vmem:[#allocation10 + $0x610] sm:$0xff]
    %v8194 = vld [vmem:[#allocation10 + $0x618] sm:$0xff]
    %v8195 = vld [vmem:[#allocation10 + $0x620] sm:$0xff]
    %v8196 = vld [vmem:[#allocation10 + $0x628] sm:$0xff]
    %v8197 = vld [vmem:[#allocation10 + $0x630] sm:$0xff]
    %v8198 = vld [vmem:[#allocation10 + $0x638] sm:$0xff]
    %v8199 = vld [vmem:[#allocation10 + $0x640] sm:$0xff]
    %v8200 = vld [vmem:[#allocation10 + $0x648] sm:$0xff]
    %v8201 = vld [vmem:[#allocation10 + $0x650] sm:$0xff]
    %v8202 = vld [vmem:[#allocation10 + $0x658] sm:$0xff]
    %v8203 = vld [vmem:[#allocation10 + $0x660] sm:$0xff]
    %v8204 = vld [vmem:[#allocation10 + $0x668] sm:$0xff]
    %v8205 = vld [vmem:[#allocation10 + $0x670] sm:$0xff]
    %v8206 = vld [vmem:[#allocation10 + $0x678] sm:$0xff]
    %v8207 = vld [vmem:[#allocation10 + $0x680] sm:$0xff]
    %v8208 = vld [vmem:[#allocation10 + $0x688] sm:$0xff]
    %v8209 = vld [vmem:[#allocation10 + $0x690] sm:$0xff]
    %v8210 = vld [vmem:[#allocation10 + $0x698] sm:$0xff]
    %v8211 = vld [vmem:[#allocation10 + $0x6a0] sm:$0xff]
    %v8212 = vld [vmem:[#allocation10 + $0x6a8] sm:$0xff]
    %v8213 = vld [vmem:[#allocation10 + $0x6b0] sm:$0xff]
    %v8214 = vld [vmem:[#allocation10 + $0x6b8] sm:$0xff]
    %v8215 = vld [vmem:[#allocation10 + $0x6c0] sm:$0xff]
    %v8216 = vld [vmem:[#allocation10 + $0x6c8] sm:$0xff]
    %v8217 = vld [vmem:[#allocation10 + $0x6d0] sm:$0xff]
    %v8218 = vld [vmem:[#allocation10 + $0x6d8] sm:$0xff]
    %v8219 = vld [vmem:[#allocation10 + $0x6e0] sm:$0xff]
    %v8220 = vld [vmem:[#allocation10 + $0x6e8] sm:$0xff]
    %v8221 = vld [vmem:[#allocation10 + $0x6f0] sm:$0xff]
    %v8222 = vld [vmem:[#allocation10 + $0x6f8] sm:$0xff]
    %v8223 = vld [vmem:[#allocation10 + $0x700] sm:$0xff]
    %v8224 = vld [vmem:[#allocation10 + $0x708] sm:$0xff]
    %v8225 = vld [vmem:[#allocation10 + $0x710] sm:$0xff]
    %v8226 = vld [vmem:[#allocation10 + $0x718] sm:$0xff]
    %v8227 = vld [vmem:[#allocation10 + $0x720] sm:$0xff]
    %v8228 = vld [vmem:[#allocation10 + $0x728] sm:$0xff]
    %v8229 = vld [vmem:[#allocation10 + $0x730] sm:$0xff]
    %v8230 = vld [vmem:[#allocation10 + $0x738] sm:$0xff]
    %v8231 = vld [vmem:[#allocation10 + $0x740] sm:$0xff]
    %v8232 = vld [vmem:[#allocation10 + $0x748] sm:$0xff]
    %v8233 = vld [vmem:[#allocation10 + $0x750] sm:$0xff]
    %v8234 = vld [vmem:[#allocation10 + $0x758] sm:$0xff]
    %v8235 = vld [vmem:[#allocation10 + $0x760] sm:$0xff]
    %v8236 = vld [vmem:[#allocation10 + $0x768] sm:$0xff]
    %v8237 = vld [vmem:[#allocation10 + $0x770] sm:$0xff]
    %v8238 = vld [vmem:[#allocation10 + $0x778] sm:$0xff]
    %v8239 = vld [vmem:[#allocation10 + $0x780] sm:$0xff]
    %v8240 = vld [vmem:[#allocation10 + $0x788] sm:$0xff]
    %v8241 = vld [vmem:[#allocation10 + $0x790] sm:$0xff]
    %v8242 = vld [vmem:[#allocation10 + $0x798] sm:$0xff]
    %v8243 = vld [vmem:[#allocation10 + $0x7a0] sm:$0xff]
    %v8244 = vld [vmem:[#allocation10 + $0x7a8] sm:$0xff]
    %v8245 = vld [vmem:[#allocation10 + $0x7b0] sm:$0xff]
    %v8246 = vld [vmem:[#allocation10 + $0x7b8] sm:$0xff]
    %v8247 = vld [vmem:[#allocation10 + $0x7c0] sm:$0xff]
    %v8248 = vld [vmem:[#allocation10 + $0x7c8] sm:$0xff]
    %v8249 = vld [vmem:[#allocation10 + $0x7d0] sm:$0xff]
    %v8250 = vld [vmem:[#allocation10 + $0x7d8] sm:$0xff]
    %v8251 = vld [vmem:[#allocation10 + $0x7e0] sm:$0xff]
    %v8252 = vld [vmem:[#allocation10 + $0x7e8] sm:$0xff]
    %v8253 = vld [vmem:[#allocation10 + $0x7f0] sm:$0xff]
    %v8254 = vld [vmem:[#allocation10 + $0x7f8] sm:$0xff]
    %v8255 = vld [vmem:[%s6] sm:$0x3]
    %v8257 = vlaneseq
    %v8258 = vshrl.u32 %v8257, 7
    %v8259 = vsub.s32 0, %v8258
    %v8260 = vrot.slane %v8255, %v8259
    %v8261 = vlaneseq
    %v8262 = vshrl.u32 %v8261, 7
    %v8263 = vsub.s32 1, %v8262
    %v8264 = vrot.slane %v8255, %v8263
    %v8523 = vunpack.c.l.b16 %v7999
    %v8524 = vunpack.c.h.b16 %v7999
    %v8525 = vunpack.c.l.b16 %v8000
    %v8526 = vunpack.c.h.b16 %v8000
    %v8527 = vunpack.c.l.b16 %v8001
    %v8528 = vunpack.c.h.b16 %v8001
    %v8529 = vunpack.c.l.b16 %v8002
    %v8530 = vunpack.c.h.b16 %v8002
    %v8531 = vunpack.c.l.b16 %v8003
    %v8532 = vunpack.c.h.b16 %v8003
    %v8533 = vunpack.c.l.b16 %v8004
    %v8534 = vunpack.c.h.b16 %v8004
    %v8535 = vunpack.c.l.b16 %v8005
    %v8536 = vunpack.c.h.b16 %v8005
    %v8537 = vunpack.c.l.b16 %v8006
    %v8538 = vunpack.c.h.b16 %v8006
    %v8539 = vunpack.c.l.b16 %v8007
    %v8540 = vunpack.c.h.b16 %v8007
    %v8541 = vunpack.c.l.b16 %v8008
    %v8542 = vunpack.c.h.b16 %v8008
    %v8543 = vunpack.c.l.b16 %v8009
    %v8544 = vunpack.c.h.b16 %v8009
    %v8545 = vunpack.c.l.b16 %v8010
    %v8546 = vunpack.c.h.b16 %v8010
    %v8547 = vunpack.c.l.b16 %v8011
    %v8548 = vunpack.c.h.b16 %v8011
    %v8549 = vunpack.c.l.b16 %v8012
    %v8550 = vunpack.c.h.b16 %v8012
    %v8551 = vunpack.c.l.b16 %v8013
    %v8552 = vunpack.c.h.b16 %v8013
    %v8553 = vunpack.c.l.b16 %v8014
    %v8554 = vunpack.c.h.b16 %v8014
    %v8555 = vunpack.c.l.b16 %v8015
    %v8556 = vunpack.c.h.b16 %v8015
    %v8557 = vunpack.c.l.b16 %v8016
    %v8558 = vunpack.c.h.b16 %v8016
    %v8559 = vunpack.c.l.b16 %v8017
    %v8560 = vunpack.c.h.b16 %v8017
    %v8561 = vunpack.c.l.b16 %v8018
    %v8562 = vunpack.c.h.b16 %v8018
    %v8563 = vunpack.c.l.b16 %v8019
    %v8564 = vunpack.c.h.b16 %v8019
    %v8565 = vunpack.c.l.b16 %v8020
    %v8566 = vunpack.c.h.b16 %v8020
    %v8567 = vunpack.c.l.b16 %v8021
    %v8568 = vunpack.c.h.b16 %v8021
    %v8569 = vunpack.c.l.b16 %v8022
    %v8570 = vunpack.c.h.b16 %v8022
    %v8571 = vunpack.c.l.b16 %v8023
    %v8572 = vunpack.c.h.b16 %v8023
    %v8573 = vunpack.c.l.b16 %v8024
    %v8574 = vunpack.c.h.b16 %v8024
    %v8575 = vunpack.c.l.b16 %v8025
    %v8576 = vunpack.c.h.b16 %v8025
    %v8577 = vunpack.c.l.b16 %v8026
    %v8578 = vunpack.c.h.b16 %v8026
    %v8579 = vunpack.c.l.b16 %v8027
    %v8580 = vunpack.c.h.b16 %v8027
    %v8581 = vunpack.c.l.b16 %v8028
    %v8582 = vunpack.c.h.b16 %v8028
    %v8583 = vunpack.c.l.b16 %v8029
    %v8584 = vunpack.c.h.b16 %v8029
    %v8585 = vunpack.c.l.b16 %v8030
    %v8586 = vunpack.c.h.b16 %v8030
    %v8587 = vunpack.c.l.b16 %v8031
    %v8588 = vunpack.c.h.b16 %v8031
    %v8589 = vunpack.c.l.b16 %v8032
    %v8590 = vunpack.c.h.b16 %v8032
    %v8591 = vunpack.c.l.b16 %v8033
    %v8592 = vunpack.c.h.b16 %v8033
    %v8593 = vunpack.c.l.b16 %v8034
    %v8594 = vunpack.c.h.b16 %v8034
    %v8595 = vunpack.c.l.b16 %v8035
    %v8596 = vunpack.c.h.b16 %v8035
    %v8597 = vunpack.c.l.b16 %v8036
    %v8598 = vunpack.c.h.b16 %v8036
    %v8599 = vunpack.c.l.b16 %v8037
    %v8600 = vunpack.c.h.b16 %v8037
    %v8601 = vunpack.c.l.b16 %v8038
    %v8602 = vunpack.c.h.b16 %v8038
    %v8603 = vunpack.c.l.b16 %v8039
    %v8604 = vunpack.c.h.b16 %v8039
    %v8605 = vunpack.c.l.b16 %v8040
    %v8606 = vunpack.c.h.b16 %v8040
    %v8607 = vunpack.c.l.b16 %v8041
    %v8608 = vunpack.c.h.b16 %v8041
    %v8609 = vunpack.c.l.b16 %v8042
    %v8610 = vunpack.c.h.b16 %v8042
    %v8611 = vunpack.c.l.b16 %v8043
    %v8612 = vunpack.c.h.b16 %v8043
    %v8613 = vunpack.c.l.b16 %v8044
    %v8614 = vunpack.c.h.b16 %v8044
    %v8615 = vunpack.c.l.b16 %v8045
    %v8616 = vunpack.c.h.b16 %v8045
    %v8617 = vunpack.c.l.b16 %v8046
    %v8618 = vunpack.c.h.b16 %v8046
    %v8619 = vunpack.c.l.b16 %v8047
    %v8620 = vunpack.c.h.b16 %v8047
    %v8621 = vunpack.c.l.b16 %v8048
    %v8622 = vunpack.c.h.b16 %v8048
    %v8623 = vunpack.c.l.b16 %v8049
    %v8624 = vunpack.c.h.b16 %v8049
    %v8625 = vunpack.c.l.b16 %v8050
    %v8626 = vunpack.c.h.b16 %v8050
    %v8627 = vunpack.c.l.b16 %v8051
    %v8628 = vunpack.c.h.b16 %v8051
    %v8629 = vunpack.c.l.b16 %v8052
    %v8630 = vunpack.c.h.b16 %v8052
    %v8631 = vunpack.c.l.b16 %v8053
    %v8632 = vunpack.c.h.b16 %v8053
    %v8633 = vunpack.c.l.b16 %v8054
    %v8634 = vunpack.c.h.b16 %v8054
    %v8635 = vunpack.c.l.b16 %v8055
    %v8636 = vunpack.c.h.b16 %v8055
    %v8637 = vunpack.c.l.b16 %v8056
    %v8638 = vunpack.c.h.b16 %v8056
    %v8639 = vunpack.c.l.b16 %v8057
    %v8640 = vunpack.c.h.b16 %v8057
    %v8641 = vunpack.c.l.b16 %v8058
    %v8642 = vunpack.c.h.b16 %v8058
    %v8643 = vunpack.c.l.b16 %v8059
    %v8644 = vunpack.c.h.b16 %v8059
    %v8645 = vunpack.c.l.b16 %v8060
    %v8646 = vunpack.c.h.b16 %v8060
    %v8647 = vunpack.c.l.b16 %v8061
    %v8648 = vunpack.c.h.b16 %v8061
    %v8649 = vunpack.c.l.b16 %v8062
    %v8650 = vunpack.c.h.b16 %v8062
    %v8651 = vunpack.c.l.b16 %v8063
    %v8652 = vunpack.c.h.b16 %v8063
    %v8653 = vunpack.c.l.b16 %v8064
    %v8654 = vunpack.c.h.b16 %v8064
    %v8655 = vunpack.c.l.b16 %v8065
    %v8656 = vunpack.c.h.b16 %v8065
    %v8657 = vunpack.c.l.b16 %v8066
    %v8658 = vunpack.c.h.b16 %v8066
    %v8659 = vunpack.c.l.b16 %v8067
    %v8660 = vunpack.c.h.b16 %v8067
    %v8661 = vunpack.c.l.b16 %v8068
    %v8662 = vunpack.c.h.b16 %v8068
    %v8663 = vunpack.c.l.b16 %v8069
    %v8664 = vunpack.c.h.b16 %v8069
    %v8665 = vunpack.c.l.b16 %v8070
    %v8666 = vunpack.c.h.b16 %v8070
    %v8667 = vunpack.c.l.b16 %v8071
    %v8668 = vunpack.c.h.b16 %v8071
    %v8669 = vunpack.c.l.b16 %v8072
    %v8670 = vunpack.c.h.b16 %v8072
    %v8671 = vunpack.c.l.b16 %v8073
    %v8672 = vunpack.c.h.b16 %v8073
    %v8673 = vunpack.c.l.b16 %v8074
    %v8674 = vunpack.c.h.b16 %v8074
    %v8675 = vunpack.c.l.b16 %v8075
    %v8676 = vunpack.c.h.b16 %v8075
    %v8677 = vunpack.c.l.b16 %v8076
    %v8678 = vunpack.c.h.b16 %v8076
    %v8679 = vunpack.c.l.b16 %v8077
    %v8680 = vunpack.c.h.b16 %v8077
    %v8681 = vunpack.c.l.b16 %v8078
    %v8682 = vunpack.c.h.b16 %v8078
    %v8683 = vunpack.c.l.b16 %v8079
    %v8684 = vunpack.c.h.b16 %v8079
    %v8685 = vunpack.c.l.b16 %v8080
    %v8686 = vunpack.c.h.b16 %v8080
    %v8687 = vunpack.c.l.b16 %v8081
    %v8688 = vunpack.c.h.b16 %v8081
    %v8689 = vunpack.c.l.b16 %v8082
    %v8690 = vunpack.c.h.b16 %v8082
    %v8691 = vunpack.c.l.b16 %v8083
    %v8692 = vunpack.c.h.b16 %v8083
    %v8693 = vunpack.c.l.b16 %v8084
    %v8694 = vunpack.c.h.b16 %v8084
    %v8695 = vunpack.c.l.b16 %v8085
    %v8696 = vunpack.c.h.b16 %v8085
    %v8697 = vunpack.c.l.b16 %v8086
    %v8698 = vunpack.c.h.b16 %v8086
    %v8699 = vunpack.c.l.b16 %v8087
    %v8700 = vunpack.c.h.b16 %v8087
    %v8701 = vunpack.c.l.b16 %v8088
    %v8702 = vunpack.c.h.b16 %v8088
    %v8703 = vunpack.c.l.b16 %v8089
    %v8704 = vunpack.c.h.b16 %v8089
    %v8705 = vunpack.c.l.b16 %v8090
    %v8706 = vunpack.c.h.b16 %v8090
    %v8707 = vunpack.c.l.b16 %v8091
    %v8708 = vunpack.c.h.b16 %v8091
    %v8709 = vunpack.c.l.b16 %v8092
    %v8710 = vunpack.c.h.b16 %v8092
    %v8711 = vunpack.c.l.b16 %v8093
    %v8712 = vunpack.c.h.b16 %v8093
    %v8713 = vunpack.c.l.b16 %v8094
    %v8714 = vunpack.c.h.b16 %v8094
    %v8715 = vunpack.c.l.b16 %v8095
    %v8716 = vunpack.c.h.b16 %v8095
    %v8717 = vunpack.c.l.b16 %v8096
    %v8718 = vunpack.c.h.b16 %v8096
    %v8719 = vunpack.c.l.b16 %v8097
    %v8720 = vunpack.c.h.b16 %v8097
    %v8721 = vunpack.c.l.b16 %v8098
    %v8722 = vunpack.c.h.b16 %v8098
    %v8723 = vunpack.c.l.b16 %v8099
    %v8724 = vunpack.c.h.b16 %v8099
    %v8725 = vunpack.c.l.b16 %v8100
    %v8726 = vunpack.c.h.b16 %v8100
    %v8727 = vunpack.c.l.b16 %v8101
    %v8728 = vunpack.c.h.b16 %v8101
    %v8729 = vunpack.c.l.b16 %v8102
    %v8730 = vunpack.c.h.b16 %v8102
    %v8731 = vunpack.c.l.b16 %v8103
    %v8732 = vunpack.c.h.b16 %v8103
    %v8733 = vunpack.c.l.b16 %v8104
    %v8734 = vunpack.c.h.b16 %v8104
    %v8735 = vunpack.c.l.b16 %v8105
    %v8736 = vunpack.c.h.b16 %v8105
    %v8737 = vunpack.c.l.b16 %v8106
    %v8738 = vunpack.c.h.b16 %v8106
    %v8739 = vunpack.c.l.b16 %v8107
    %v8740 = vunpack.c.h.b16 %v8107
    %v8741 = vunpack.c.l.b16 %v8108
    %v8742 = vunpack.c.h.b16 %v8108
    %v8743 = vunpack.c.l.b16 %v8109
    %v8744 = vunpack.c.h.b16 %v8109
    %v8745 = vunpack.c.l.b16 %v8110
    %v8746 = vunpack.c.h.b16 %v8110
    %v8747 = vunpack.c.l.b16 %v8111
    %v8748 = vunpack.c.h.b16 %v8111
    %v8749 = vunpack.c.l.b16 %v8112
    %v8750 = vunpack.c.h.b16 %v8112
    %v8751 = vunpack.c.l.b16 %v8113
    %v8752 = vunpack.c.h.b16 %v8113
    %v8753 = vunpack.c.l.b16 %v8114
    %v8754 = vunpack.c.h.b16 %v8114
    %v8755 = vunpack.c.l.b16 %v8115
    %v8756 = vunpack.c.h.b16 %v8115
    %v8757 = vunpack.c.l.b16 %v8116
    %v8758 = vunpack.c.h.b16 %v8116
    %v8759 = vunpack.c.l.b16 %v8117
    %v8760 = vunpack.c.h.b16 %v8117
    %v8761 = vunpack.c.l.b16 %v8118
    %v8762 = vunpack.c.h.b16 %v8118
    %v8763 = vunpack.c.l.b16 %v8119
    %v8764 = vunpack.c.h.b16 %v8119
    %v8765 = vunpack.c.l.b16 %v8120
    %v8766 = vunpack.c.h.b16 %v8120
    %v8767 = vunpack.c.l.b16 %v8121
    %v8768 = vunpack.c.h.b16 %v8121
    %v8769 = vunpack.c.l.b16 %v8122
    %v8770 = vunpack.c.h.b16 %v8122
    %v8771 = vunpack.c.l.b16 %v8123
    %v8772 = vunpack.c.h.b16 %v8123
    %v8773 = vunpack.c.l.b16 %v8124
    %v8774 = vunpack.c.h.b16 %v8124
    %v8775 = vunpack.c.l.b16 %v8125
    %v8776 = vunpack.c.h.b16 %v8125
    %v8777 = vunpack.c.l.b16 %v8126
    %v8778 = vunpack.c.h.b16 %v8126
    %v8779 = vunpack.c.l.b16 %v8127
    %v8780 = vunpack.c.h.b16 %v8127
    %v8781 = vunpack.c.l.b16 %v8128
    %v8782 = vunpack.c.h.b16 %v8128
    %v8783 = vunpack.c.l.b16 %v8129
    %v8784 = vunpack.c.h.b16 %v8129
    %v8785 = vunpack.c.l.b16 %v8130
    %v8786 = vunpack.c.h.b16 %v8130
    %v8787 = vunpack.c.l.b16 %v8131
    %v8788 = vunpack.c.h.b16 %v8131
    %v8789 = vunpack.c.l.b16 %v8132
    %v8790 = vunpack.c.h.b16 %v8132
    %v8791 = vunpack.c.l.b16 %v8133
    %v8792 = vunpack.c.h.b16 %v8133
    %v8793 = vunpack.c.l.b16 %v8134
    %v8794 = vunpack.c.h.b16 %v8134
    %v8795 = vunpack.c.l.b16 %v8135
    %v8796 = vunpack.c.h.b16 %v8135
    %v8797 = vunpack.c.l.b16 %v8136
    %v8798 = vunpack.c.h.b16 %v8136
    %v8799 = vunpack.c.l.b16 %v8137
    %v8800 = vunpack.c.h.b16 %v8137
    %v8801 = vunpack.c.l.b16 %v8138
    %v8802 = vunpack.c.h.b16 %v8138
    %v8803 = vunpack.c.l.b16 %v8139
    %v8804 = vunpack.c.h.b16 %v8139
    %v8805 = vunpack.c.l.b16 %v8140
    %v8806 = vunpack.c.h.b16 %v8140
    %v8807 = vunpack.c.l.b16 %v8141
    %v8808 = vunpack.c.h.b16 %v8141
    %v8809 = vunpack.c.l.b16 %v8142
    %v8810 = vunpack.c.h.b16 %v8142
    %v8811 = vunpack.c.l.b16 %v8143
    %v8812 = vunpack.c.h.b16 %v8143
    %v8813 = vunpack.c.l.b16 %v8144
    %v8814 = vunpack.c.h.b16 %v8144
    %v8815 = vunpack.c.l.b16 %v8145
    %v8816 = vunpack.c.h.b16 %v8145
    %v8817 = vunpack.c.l.b16 %v8146
    %v8818 = vunpack.c.h.b16 %v8146
    %v8819 = vunpack.c.l.b16 %v8147
    %v8820 = vunpack.c.h.b16 %v8147
    %v8821 = vunpack.c.l.b16 %v8148
    %v8822 = vunpack.c.h.b16 %v8148
    %v8823 = vunpack.c.l.b16 %v8149
    %v8824 = vunpack.c.h.b16 %v8149
    %v8825 = vunpack.c.l.b16 %v8150
    %v8826 = vunpack.c.h.b16 %v8150
    %v8827 = vunpack.c.l.b16 %v8151
    %v8828 = vunpack.c.h.b16 %v8151
    %v8829 = vunpack.c.l.b16 %v8152
    %v8830 = vunpack.c.h.b16 %v8152
    %v8831 = vunpack.c.l.b16 %v8153
    %v8832 = vunpack.c.h.b16 %v8153
    %v8833 = vunpack.c.l.b16 %v8154
    %v8834 = vunpack.c.h.b16 %v8154
    %v8835 = vunpack.c.l.b16 %v8155
    %v8836 = vunpack.c.h.b16 %v8155
    %v8837 = vunpack.c.l.b16 %v8156
    %v8838 = vunpack.c.h.b16 %v8156
    %v8839 = vunpack.c.l.b16 %v8157
    %v8840 = vunpack.c.h.b16 %v8157
    %v8841 = vunpack.c.l.b16 %v8158
    %v8842 = vunpack.c.h.b16 %v8158
    %v8843 = vunpack.c.l.b16 %v8159
    %v8844 = vunpack.c.h.b16 %v8159
    %v8845 = vunpack.c.l.b16 %v8160
    %v8846 = vunpack.c.h.b16 %v8160
    %v8847 = vunpack.c.l.b16 %v8161
    %v8848 = vunpack.c.h.b16 %v8161
    %v8849 = vunpack.c.l.b16 %v8162
    %v8850 = vunpack.c.h.b16 %v8162
    %v8851 = vunpack.c.l.b16 %v8163
    %v8852 = vunpack.c.h.b16 %v8163
    %v8853 = vunpack.c.l.b16 %v8164
    %v8854 = vunpack.c.h.b16 %v8164
    %v8855 = vunpack.c.l.b16 %v8165
    %v8856 = vunpack.c.h.b16 %v8165
    %v8857 = vunpack.c.l.b16 %v8166
    %v8858 = vunpack.c.h.b16 %v8166
    %v8859 = vunpack.c.l.b16 %v8167
    %v8860 = vunpack.c.h.b16 %v8167
    %v8861 = vunpack.c.l.b16 %v8168
    %v8862 = vunpack.c.h.b16 %v8168
    %v8863 = vunpack.c.l.b16 %v8169
    %v8864 = vunpack.c.h.b16 %v8169
    %v8865 = vunpack.c.l.b16 %v8170
    %v8866 = vunpack.c.h.b16 %v8170
    %v8867 = vunpack.c.l.b16 %v8171
    %v8868 = vunpack.c.h.b16 %v8171
    %v8869 = vunpack.c.l.b16 %v8172
    %v8870 = vunpack.c.h.b16 %v8172
    %v8871 = vunpack.c.l.b16 %v8173
    %v8872 = vunpack.c.h.b16 %v8173
    %v8873 = vunpack.c.l.b16 %v8174
    %v8874 = vunpack.c.h.b16 %v8174
    %v8875 = vunpack.c.l.b16 %v8175
    %v8876 = vunpack.c.h.b16 %v8175
    %v8877 = vunpack.c.l.b16 %v8176
    %v8878 = vunpack.c.h.b16 %v8176
    %v8879 = vunpack.c.l.b16 %v8177
    %v8880 = vunpack.c.h.b16 %v8177
    %v8881 = vunpack.c.l.b16 %v8178
    %v8882 = vunpack.c.h.b16 %v8178
    %v8883 = vunpack.c.l.b16 %v8179
    %v8884 = vunpack.c.h.b16 %v8179
    %v8885 = vunpack.c.l.b16 %v8180
    %v8886 = vunpack.c.h.b16 %v8180
    %v8887 = vunpack.c.l.b16 %v8181
    %v8888 = vunpack.c.h.b16 %v8181
    %v8889 = vunpack.c.l.b16 %v8182
    %v8890 = vunpack.c.h.b16 %v8182
    %v8891 = vunpack.c.l.b16 %v8183
    %v8892 = vunpack.c.h.b16 %v8183
    %v8893 = vunpack.c.l.b16 %v8184
    %v8894 = vunpack.c.h.b16 %v8184
    %v8895 = vunpack.c.l.b16 %v8185
    %v8896 = vunpack.c.h.b16 %v8185
    %v8897 = vunpack.c.l.b16 %v8186
    %v8898 = vunpack.c.h.b16 %v8186
    %v8899 = vunpack.c.l.b16 %v8187
    %v8900 = vunpack.c.h.b16 %v8187
    %v8901 = vunpack.c.l.b16 %v8188
    %v8902 = vunpack.c.h.b16 %v8188
    %v8903 = vunpack.c.l.b16 %v8189
    %v8904 = vunpack.c.h.b16 %v8189
    %v8905 = vunpack.c.l.b16 %v8190
    %v8906 = vunpack.c.h.b16 %v8190
    %v8907 = vunpack.c.l.b16 %v8191
    %v8908 = vunpack.c.h.b16 %v8191
    %v8909 = vunpack.c.l.b16 %v8192
    %v8910 = vunpack.c.h.b16 %v8192
    %v8911 = vunpack.c.l.b16 %v8193
    %v8912 = vunpack.c.h.b16 %v8193
    %v8913 = vunpack.c.l.b16 %v8194
    %v8914 = vunpack.c.h.b16 %v8194
    %v8915 = vunpack.c.l.b16 %v8195
    %v8916 = vunpack.c.h.b16 %v8195
    %v8917 = vunpack.c.l.b16 %v8196
    %v8918 = vunpack.c.h.b16 %v8196
    %v8919 = vunpack.c.l.b16 %v8197
    %v8920 = vunpack.c.h.b16 %v8197
    %v8921 = vunpack.c.l.b16 %v8198
    %v8922 = vunpack.c.h.b16 %v8198
    %v8923 = vunpack.c.l.b16 %v8199
    %v8924 = vunpack.c.h.b16 %v8199
    %v8925 = vunpack.c.l.b16 %v8200
    %v8926 = vunpack.c.h.b16 %v8200
    %v8927 = vunpack.c.l.b16 %v8201
    %v8928 = vunpack.c.h.b16 %v8201
    %v8929 = vunpack.c.l.b16 %v8202
    %v8930 = vunpack.c.h.b16 %v8202
    %v8931 = vunpack.c.l.b16 %v8203
    %v8932 = vunpack.c.h.b16 %v8203
    %v8933 = vunpack.c.l.b16 %v8204
    %v8934 = vunpack.c.h.b16 %v8204
    %v8935 = vunpack.c.l.b16 %v8205
    %v8936 = vunpack.c.h.b16 %v8205
    %v8937 = vunpack.c.l.b16 %v8206
    %v8938 = vunpack.c.h.b16 %v8206
    %v8939 = vunpack.c.l.b16 %v8207
    %v8940 = vunpack.c.h.b16 %v8207
    %v8941 = vunpack.c.l.b16 %v8208
    %v8942 = vunpack.c.h.b16 %v8208
    %v8943 = vunpack.c.l.b16 %v8209
    %v8944 = vunpack.c.h.b16 %v8209
    %v8945 = vunpack.c.l.b16 %v8210
    %v8946 = vunpack.c.h.b16 %v8210
    %v8947 = vunpack.c.l.b16 %v8211
    %v8948 = vunpack.c.h.b16 %v8211
    %v8949 = vunpack.c.l.b16 %v8212
    %v8950 = vunpack.c.h.b16 %v8212
    %v8951 = vunpack.c.l.b16 %v8213
    %v8952 = vunpack.c.h.b16 %v8213
    %v8953 = vunpack.c.l.b16 %v8214
    %v8954 = vunpack.c.h.b16 %v8214
    %v8955 = vunpack.c.l.b16 %v8215
    %v8956 = vunpack.c.h.b16 %v8215
    %v8957 = vunpack.c.l.b16 %v8216
    %v8958 = vunpack.c.h.b16 %v8216
    %v8959 = vunpack.c.l.b16 %v8217
    %v8960 = vunpack.c.h.b16 %v8217
    %v8961 = vunpack.c.l.b16 %v8218
    %v8962 = vunpack.c.h.b16 %v8218
    %v8963 = vunpack.c.l.b16 %v8219
    %v8964 = vunpack.c.h.b16 %v8219
    %v8965 = vunpack.c.l.b16 %v8220
    %v8966 = vunpack.c.h.b16 %v8220
    %v8967 = vunpack.c.l.b16 %v8221
    %v8968 = vunpack.c.h.b16 %v8221
    %v8969 = vunpack.c.l.b16 %v8222
    %v8970 = vunpack.c.h.b16 %v8222
    %v8971 = vunpack.c.l.b16 %v8223
    %v8972 = vunpack.c.h.b16 %v8223
    %v8973 = vunpack.c.l.b16 %v8224
    %v8974 = vunpack.c.h.b16 %v8224
    %v8975 = vunpack.c.l.b16 %v8225
    %v8976 = vunpack.c.h.b16 %v8225
    %v8977 = vunpack.c.l.b16 %v8226
    %v8978 = vunpack.c.h.b16 %v8226
    %v8979 = vunpack.c.l.b16 %v8227
    %v8980 = vunpack.c.h.b16 %v8227
    %v8981 = vunpack.c.l.b16 %v8228
    %v8982 = vunpack.c.h.b16 %v8228
    %v8983 = vunpack.c.l.b16 %v8229
    %v8984 = vunpack.c.h.b16 %v8229
    %v8985 = vunpack.c.l.b16 %v8230
    %v8986 = vunpack.c.h.b16 %v8230
    %v8987 = vunpack.c.l.b16 %v8231
    %v8988 = vunpack.c.h.b16 %v8231
    %v8989 = vunpack.c.l.b16 %v8232
    %v8990 = vunpack.c.h.b16 %v8232
    %v8991 = vunpack.c.l.b16 %v8233
    %v8992 = vunpack.c.h.b16 %v8233
    %v8993 = vunpack.c.l.b16 %v8234
    %v8994 = vunpack.c.h.b16 %v8234
    %v8995 = vunpack.c.l.b16 %v8235
    %v8996 = vunpack.c.h.b16 %v8235
    %v8997 = vunpack.c.l.b16 %v8236
    %v8998 = vunpack.c.h.b16 %v8236
    %v8999 = vunpack.c.l.b16 %v8237
    %v9000 = vunpack.c.h.b16 %v8237
    %v9001 = vunpack.c.l.b16 %v8238
    %v9002 = vunpack.c.h.b16 %v8238
    %v9003 = vunpack.c.l.b16 %v8239
    %v9004 = vunpack.c.h.b16 %v8239
    %v9005 = vunpack.c.l.b16 %v8240
    %v9006 = vunpack.c.h.b16 %v8240
    %v9007 = vunpack.c.l.b16 %v8241
    %v9008 = vunpack.c.h.b16 %v8241
    %v9009 = vunpack.c.l.b16 %v8242
    %v9010 = vunpack.c.h.b16 %v8242
    %v9011 = vunpack.c.l.b16 %v8243
    %v9012 = vunpack.c.h.b16 %v8243
    %v9013 = vunpack.c.l.b16 %v8244
    %v9014 = vunpack.c.h.b16 %v8244
    %v9015 = vunpack.c.l.b16 %v8245
    %v9016 = vunpack.c.h.b16 %v8245
    %v9017 = vunpack.c.l.b16 %v8246
    %v9018 = vunpack.c.h.b16 %v8246
    %v9019 = vunpack.c.l.b16 %v8247
    %v9020 = vunpack.c.h.b16 %v8247
    %v9021 = vunpack.c.l.b16 %v8248
    %v9022 = vunpack.c.h.b16 %v8248
    %v9023 = vunpack.c.l.b16 %v8249
    %v9024 = vunpack.c.h.b16 %v8249
    %v9025 = vunpack.c.l.b16 %v8250
    %v9026 = vunpack.c.h.b16 %v8250
    %v9027 = vunpack.c.l.b16 %v8251
    %v9028 = vunpack.c.h.b16 %v8251
    %v9029 = vunpack.c.l.b16 %v8252
    %v9030 = vunpack.c.h.b16 %v8252
    %v9031 = vunpack.c.l.b16 %v8253
    %v9032 = vunpack.c.h.b16 %v8253
    %v9033 = vunpack.c.l.b16 %v8254
    %v9034 = vunpack.c.h.b16 %v8254
    %v9035 = vpack.c.b16 %v8525, %v8523
    %v9036 = vpack.c.b16 %v8526, %v8524
    %v9037 = vpack.c.b16 %v8529, %v8527
    %v9038 = vpack.c.b16 %v8530, %v8528
    %v9039 = vpack.c.b16 %v8533, %v8531
    %v9040 = vpack.c.b16 %v8534, %v8532
    %v9041 = vpack.c.b16 %v8537, %v8535
    %v9042 = vpack.c.b16 %v8538, %v8536
    %v9043 = vpack.c.b16 %v8541, %v8539
    %v9044 = vpack.c.b16 %v8542, %v8540
    %v9045 = vpack.c.b16 %v8545, %v8543
    %v9046 = vpack.c.b16 %v8546, %v8544
    %v9047 = vpack.c.b16 %v8549, %v8547
    %v9048 = vpack.c.b16 %v8550, %v8548
    %v9049 = vpack.c.b16 %v8553, %v8551
    %v9050 = vpack.c.b16 %v8554, %v8552
    %v9051 = vpack.c.b16 %v8557, %v8555
    %v9052 = vpack.c.b16 %v8558, %v8556
    %v9053 = vpack.c.b16 %v8561, %v8559
    %v9054 = vpack.c.b16 %v8562, %v8560
    %v9055 = vpack.c.b16 %v8565, %v8563
    %v9056 = vpack.c.b16 %v8566, %v8564
    %v9057 = vpack.c.b16 %v8569, %v8567
    %v9058 = vpack.c.b16 %v8570, %v8568
    %v9059 = vpack.c.b16 %v8573, %v8571
    %v9060 = vpack.c.b16 %v8574, %v8572
    %v9061 = vpack.c.b16 %v8577, %v8575
    %v9062 = vpack.c.b16 %v8578, %v8576
    %v9063 = vpack.c.b16 %v8581, %v8579
    %v9064 = vpack.c.b16 %v8582, %v8580
    %v9065 = vpack.c.b16 %v8585, %v8583
    %v9066 = vpack.c.b16 %v8586, %v8584
    %v9067 = vpack.c.b16 %v8589, %v8587
    %v9068 = vpack.c.b16 %v8590, %v8588
    %v9069 = vpack.c.b16 %v8593, %v8591
    %v9070 = vpack.c.b16 %v8594, %v8592
    %v9071 = vpack.c.b16 %v8597, %v8595
    %v9072 = vpack.c.b16 %v8598, %v8596
    %v9073 = vpack.c.b16 %v8601, %v8599
    %v9074 = vpack.c.b16 %v8602, %v8600
    %v9075 = vpack.c.b16 %v8605, %v8603
    %v9076 = vpack.c.b16 %v8606, %v8604
    %v9077 = vpack.c.b16 %v8609, %v8607
    %v9078 = vpack.c.b16 %v8610, %v8608
    %v9079 = vpack.c.b16 %v8613, %v8611
    %v9080 = vpack.c.b16 %v8614, %v8612
    %v9081 = vpack.c.b16 %v8617, %v8615
    %v9082 = vpack.c.b16 %v8618, %v8616
    %v9083 = vpack.c.b16 %v8621, %v8619
    %v9084 = vpack.c.b16 %v8622, %v8620
    %v9085 = vpack.c.b16 %v8625, %v8623
    %v9086 = vpack.c.b16 %v8626, %v8624
    %v9087 = vpack.c.b16 %v8629, %v8627
    %v9088 = vpack.c.b16 %v8630, %v8628
    %v9089 = vpack.c.b16 %v8633, %v8631
    %v9090 = vpack.c.b16 %v8634, %v8632
    %v9091 = vpack.c.b16 %v8637, %v8635
    %v9092 = vpack.c.b16 %v8638, %v8636
    %v9093 = vpack.c.b16 %v8641, %v8639
    %v9094 = vpack.c.b16 %v8642, %v8640
    %v9095 = vpack.c.b16 %v8645, %v8643
    %v9096 = vpack.c.b16 %v8646, %v8644
    %v9097 = vpack.c.b16 %v8649, %v8647
    %v9098 = vpack.c.b16 %v8650, %v8648
    %v9099 = vpack.c.b16 %v8653, %v8651
    %v9100 = vpack.c.b16 %v8654, %v8652
    %v9101 = vpack.c.b16 %v8657, %v8655
    %v9102 = vpack.c.b16 %v8658, %v8656
    %v9103 = vpack.c.b16 %v8661, %v8659
    %v9104 = vpack.c.b16 %v8662, %v8660
    %v9105 = vpack.c.b16 %v8665, %v8663
    %v9106 = vpack.c.b16 %v8666, %v8664
    %v9107 = vpack.c.b16 %v8669, %v8667
    %v9108 = vpack.c.b16 %v8670, %v8668
    %v9109 = vpack.c.b16 %v8673, %v8671
    %v9110 = vpack.c.b16 %v8674, %v8672
    %v9111 = vpack.c.b16 %v8677, %v8675
    %v9112 = vpack.c.b16 %v8678, %v8676
    %v9113 = vpack.c.b16 %v8681, %v8679
    %v9114 = vpack.c.b16 %v8682, %v8680
    %v9115 = vpack.c.b16 %v8685, %v8683
    %v9116 = vpack.c.b16 %v8686, %v8684
    %v9117 = vpack.c.b16 %v8689, %v8687
    %v9118 = vpack.c.b16 %v8690, %v8688
    %v9119 = vpack.c.b16 %v8693, %v8691
    %v9120 = vpack.c.b16 %v8694, %v8692
    %v9121 = vpack.c.b16 %v8697, %v8695
    %v9122 = vpack.c.b16 %v8698, %v8696
    %v9123 = vpack.c.b16 %v8701, %v8699
    %v9124 = vpack.c.b16 %v8702, %v8700
    %v9125 = vpack.c.b16 %v8705, %v8703
    %v9126 = vpack.c.b16 %v8706, %v8704
    %v9127 = vpack.c.b16 %v8709, %v8707
    %v9128 = vpack.c.b16 %v8710, %v8708
    %v9129 = vpack.c.b16 %v8713, %v8711
    %v9130 = vpack.c.b16 %v8714, %v8712
    %v9131 = vpack.c.b16 %v8717, %v8715
    %v9132 = vpack.c.b16 %v8718, %v8716
    %v9133 = vpack.c.b16 %v8721, %v8719
    %v9134 = vpack.c.b16 %v8722, %v8720
    %v9135 = vpack.c.b16 %v8725, %v8723
    %v9136 = vpack.c.b16 %v8726, %v8724
    %v9137 = vpack.c.b16 %v8729, %v8727
    %v9138 = vpack.c.b16 %v8730, %v8728
    %v9139 = vpack.c.b16 %v8733, %v8731
    %v9140 = vpack.c.b16 %v8734, %v8732
    %v9141 = vpack.c.b16 %v8737, %v8735
    %v9142 = vpack.c.b16 %v8738, %v8736
    %v9143 = vpack.c.b16 %v8741, %v8739
    %v9144 = vpack.c.b16 %v8742, %v8740
    %v9145 = vpack.c.b16 %v8745, %v8743
    %v9146 = vpack.c.b16 %v8746, %v8744
    %v9147 = vpack.c.b16 %v8749, %v8747
    %v9148 = vpack.c.b16 %v8750, %v8748
    %v9149 = vpack.c.b16 %v8753, %v8751
    %v9150 = vpack.c.b16 %v8754, %v8752
    %v9151 = vpack.c.b16 %v8757, %v8755
    %v9152 = vpack.c.b16 %v8758, %v8756
    %v9153 = vpack.c.b16 %v8761, %v8759
    %v9154 = vpack.c.b16 %v8762, %v8760
    %v9155 = vpack.c.b16 %v8765, %v8763
    %v9156 = vpack.c.b16 %v8766, %v8764
    %v9157 = vpack.c.b16 %v8769, %v8767
    %v9158 = vpack.c.b16 %v8770, %v8768
    %v9159 = vpack.c.b16 %v8773, %v8771
    %v9160 = vpack.c.b16 %v8774, %v8772
    %v9161 = vpack.c.b16 %v8777, %v8775
    %v9162 = vpack.c.b16 %v8778, %v8776
    %v9163 = vpack.c.b16 %v8781, %v8779
    %v9164 = vpack.c.b16 %v8782, %v8780
    %v9165 = vpack.c.b16 %v8785, %v8783
    %v9166 = vpack.c.b16 %v8786, %v8784
    %v9167 = vpack.c.b16 %v8789, %v8787
    %v9168 = vpack.c.b16 %v8790, %v8788
    %v9169 = vpack.c.b16 %v8793, %v8791
    %v9170 = vpack.c.b16 %v8794, %v8792
    %v9171 = vpack.c.b16 %v8797, %v8795
    %v9172 = vpack.c.b16 %v8798, %v8796
    %v9173 = vpack.c.b16 %v8801, %v8799
    %v9174 = vpack.c.b16 %v8802, %v8800
    %v9175 = vpack.c.b16 %v8805, %v8803
    %v9176 = vpack.c.b16 %v8806, %v8804
    %v9177 = vpack.c.b16 %v8809, %v8807
    %v9178 = vpack.c.b16 %v8810, %v8808
    %v9179 = vpack.c.b16 %v8813, %v8811
    %v9180 = vpack.c.b16 %v8814, %v8812
    %v9181 = vpack.c.b16 %v8817, %v8815
    %v9182 = vpack.c.b16 %v8818, %v8816
    %v9183 = vpack.c.b16 %v8821, %v8819
    %v9184 = vpack.c.b16 %v8822, %v8820
    %v9185 = vpack.c.b16 %v8825, %v8823
    %v9186 = vpack.c.b16 %v8826, %v8824
    %v9187 = vpack.c.b16 %v8829, %v8827
    %v9188 = vpack.c.b16 %v8830, %v8828
    %v9189 = vpack.c.b16 %v8833, %v8831
    %v9190 = vpack.c.b16 %v8834, %v8832
    %v9191 = vpack.c.b16 %v8837, %v8835
    %v9192 = vpack.c.b16 %v8838, %v8836
    %v9193 = vpack.c.b16 %v8841, %v8839
    %v9194 = vpack.c.b16 %v8842, %v8840
    %v9195 = vpack.c.b16 %v8845, %v8843
    %v9196 = vpack.c.b16 %v8846, %v8844
    %v9197 = vpack.c.b16 %v8849, %v8847
    %v9198 = vpack.c.b16 %v8850, %v8848
    %v9199 = vpack.c.b16 %v8853, %v8851
    %v9200 = vpack.c.b16 %v8854, %v8852
    %v9201 = vpack.c.b16 %v8857, %v8855
    %v9202 = vpack.c.b16 %v8858, %v8856
    %v9203 = vpack.c.b16 %v8861, %v8859
    %v9204 = vpack.c.b16 %v8862, %v8860
    %v9205 = vpack.c.b16 %v8865, %v8863
    %v9206 = vpack.c.b16 %v8866, %v8864
    %v9207 = vpack.c.b16 %v8869, %v8867
    %v9208 = vpack.c.b16 %v8870, %v8868
    %v9209 = vpack.c.b16 %v8873, %v8871
    %v9210 = vpack.c.b16 %v8874, %v8872
    %v9211 = vpack.c.b16 %v8877, %v8875
    %v9212 = vpack.c.b16 %v8878, %v8876
    %v9213 = vpack.c.b16 %v8881, %v8879
    %v9214 = vpack.c.b16 %v8882, %v8880
    %v9215 = vpack.c.b16 %v8885, %v8883
    %v9216 = vpack.c.b16 %v8886, %v8884
    %v9217 = vpack.c.b16 %v8889, %v8887
    %v9218 = vpack.c.b16 %v8890, %v8888
    %v9219 = vpack.c.b16 %v8893, %v8891
    %v9220 = vpack.c.b16 %v8894, %v8892
    %v9221 = vpack.c.b16 %v8897, %v8895
    %v9222 = vpack.c.b16 %v8898, %v8896
    %v9223 = vpack.c.b16 %v8901, %v8899
    %v9224 = vpack.c.b16 %v8902, %v8900
    %v9225 = vpack.c.b16 %v8905, %v8903
    %v9226 = vpack.c.b16 %v8906, %v8904
    %v9227 = vpack.c.b16 %v8909, %v8907
    %v9228 = vpack.c.b16 %v8910, %v8908
    %v9229 = vpack.c.b16 %v8913, %v8911
    %v9230 = vpack.c.b16 %v8914, %v8912
    %v9231 = vpack.c.b16 %v8917, %v8915
    %v9232 = vpack.c.b16 %v8918, %v8916
    %v9233 = vpack.c.b16 %v8921, %v8919
    %v9234 = vpack.c.b16 %v8922, %v8920
    %v9235 = vpack.c.b16 %v8925, %v8923
    %v9236 = vpack.c.b16 %v8926, %v8924
    %v9237 = vpack.c.b16 %v8929, %v8927
    %v9238 = vpack.c.b16 %v8930, %v8928
    %v9239 = vpack.c.b16 %v8933, %v8931
    %v9240 = vpack.c.b16 %v8934, %v8932
    %v9241 = vpack.c.b16 %v8937, %v8935
    %v9242 = vpack.c.b16 %v8938, %v8936
    %v9243 = vpack.c.b16 %v8941, %v8939
    %v9244 = vpack.c.b16 %v8942, %v8940
    %v9245 = vpack.c.b16 %v8945, %v8943
    %v9246 = vpack.c.b16 %v8946, %v8944
    %v9247 = vpack.c.b16 %v8949, %v8947
    %v9248 = vpack.c.b16 %v8950, %v8948
    %v9249 = vpack.c.b16 %v8953, %v8951
    %v9250 = vpack.c.b16 %v8954, %v8952
    %v9251 = vpack.c.b16 %v8957, %v8955
    %v9252 = vpack.c.b16 %v8958, %v8956
    %v9253 = vpack.c.b16 %v8961, %v8959
    %v9254 = vpack.c.b16 %v8962, %v8960
    %v9255 = vpack.c.b16 %v8965, %v8963
    %v9256 = vpack.c.b16 %v8966, %v8964
    %v9257 = vpack.c.b16 %v8969, %v8967
    %v9258 = vpack.c.b16 %v8970, %v8968
    %v9259 = vpack.c.b16 %v8973, %v8971
    %v9260 = vpack.c.b16 %v8974, %v8972
    %v9261 = vpack.c.b16 %v8977, %v8975
    %v9262 = vpack.c.b16 %v8978, %v8976
    %v9263 = vpack.c.b16 %v8981, %v8979
    %v9264 = vpack.c.b16 %v8982, %v8980
    %v9265 = vpack.c.b16 %v8985, %v8983
    %v9266 = vpack.c.b16 %v8986, %v8984
    %v9267 = vpack.c.b16 %v8989, %v8987
    %v9268 = vpack.c.b16 %v8990, %v8988
    %v9269 = vpack.c.b16 %v8993, %v8991
    %v9270 = vpack.c.b16 %v8994, %v8992
    %v9271 = vpack.c.b16 %v8997, %v8995
    %v9272 = vpack.c.b16 %v8998, %v8996
    %v9273 = vpack.c.b16 %v9001, %v8999
    %v9274 = vpack.c.b16 %v9002, %v9000
    %v9275 = vpack.c.b16 %v9005, %v9003
    %v9276 = vpack.c.b16 %v9006, %v9004
    %v9277 = vpack.c.b16 %v9009, %v9007
    %v9278 = vpack.c.b16 %v9010, %v9008
    %v9279 = vpack.c.b16 %v9013, %v9011
    %v9280 = vpack.c.b16 %v9014, %v9012
    %v9281 = vpack.c.b16 %v9017, %v9015
    %v9282 = vpack.c.b16 %v9018, %v9016
    %v9283 = vpack.c.b16 %v9021, %v9019
    %v9284 = vpack.c.b16 %v9022, %v9020
    %v9285 = vpack.c.b16 %v9025, %v9023
    %v9286 = vpack.c.b16 %v9026, %v9024
    %v9287 = vpack.c.b16 %v9029, %v9027
    %v9288 = vpack.c.b16 %v9030, %v9028
    %v9289 = vpack.c.b16 %v9033, %v9031
    %v9290 = vpack.c.b16 %v9034, %v9032
    %9547 = vmatprep.subr.bf16.mxu0 %v9050
    %9548 = vmatpush1.bf16.msra.mxu0 %v9049
    %9549 = vmatprep.subr.bf16.mxu0 %v9048
    %9550 = vmatpush1.bf16.msra.mxu0 %v9047
    %9551 = vmatprep.subr.bf16.mxu0 %v9046
    %9552 = vmatpush1.bf16.msra.mxu0 %v9045
    %9553 = vmatprep.subr.bf16.mxu0 %v9044
    %9554 = vmatpush1.bf16.msra.mxu0 %v9043
    %9555 = vmatprep.subr.bf16.mxu0 %v9042
    %9556 = vmatpush1.bf16.msra.mxu0 %v9041
    %9557 = vmatprep.subr.bf16.mxu0 %v9040
    %9558 = vmatpush1.bf16.msra.mxu0 %v9039
    %9559 = vmatprep.subr.bf16.mxu0 %v9038
    %9560 = vmatpush1.bf16.msra.mxu0 %v9037
    %9561 = vmatprep.subr.bf16.mxu0 %v9036
    %9562 = vmatpush1.bf16.msra.mxu0 %v9035
    %9563 = vmatprep.subr.bf16.mxu0 %v9066
    %9564 = vmatpush2.bf16.msra.mxu0 %v9065
    %9565 = vmatprep.subr.bf16.mxu0 %v9064
    %9566 = vmatpush2.bf16.msra.mxu0 %v9063
    %9567 = vmatprep.subr.bf16.mxu0 %v9062
    %9568 = vmatpush2.bf16.msra.mxu0 %v9061
    %9569 = vmatprep.subr.bf16.mxu0 %v9060
    %9570 = vmatpush2.bf16.msra.mxu0 %v9059
    %9571 = vmatprep.subr.bf16.mxu0 %v9058
    %9572 = vmatpush2.bf16.msra.mxu0 %v9057
    %9573 = vmatprep.subr.bf16.mxu0 %v9056
    %9574 = vmatpush2.bf16.msra.mxu0 %v9055
    %9575 = vmatprep.subr.bf16.mxu0 %v9054
    %9576 = vmatpush2.bf16.msra.mxu0 %v9053
    %9577 = vmatprep.subr.bf16.mxu0 %v9052
    %9578 = vmatpush2.bf16.msra.mxu0 %v9051
    %9579 = vmatprep.mubr.bf16.mxu0 %v7984
    %9580 = vmatmul.mubr.bf16.gmra.mxu0 %v7983
    %v9581 = vpop.f32.mrf.mxu0
    %v9582 = vadd.f32 %v8260, %v9581
    %v9583 = vpop.f32.mrf.mxu0
    %v9584 = vadd.f32 %v8264, %v9583
    %v9585 = vpop.f32.mrf.mxu0
    %v9586 = vpop.f32.mrf.mxu0
    %9587 = vdwg.mxu0
    %9588 = vmatprep.subr.bf16.mxu0 %v9082
    %9589 = vmatpush1.bf16.msra.mxu0 %v9081
    %9590 = vmatprep.subr.bf16.mxu0 %v9080
    %9591 = vmatpush1.bf16.msra.mxu0 %v9079
    %9592 = vmatprep.subr.bf16.mxu0 %v9078
    %9593 = vmatpush1.bf16.msra.mxu0 %v9077
    %9594 = vmatprep.subr.bf16.mxu0 %v9076
    %9595 = vmatpush1.bf16.msra.mxu0 %v9075
    %9596 = vmatprep.subr.bf16.mxu0 %v9074
    %9597 = vmatpush1.bf16.msra.mxu0 %v9073
    %9598 = vmatprep.subr.bf16.mxu0 %v9072
    %9599 = vmatpush1.bf16.msra.mxu0 %v9071
    %9600 = vmatprep.subr.bf16.mxu0 %v9070
    %9601 = vmatpush1.bf16.msra.mxu0 %v9069
    %9602 = vmatprep.subr.bf16.mxu0 %v9068
    %9603 = vmatpush1.bf16.msra.mxu0 %v9067
    %9604 = vmatprep.subr.bf16.mxu0 %v9098
    %9605 = vmatpush2.bf16.msra.mxu0 %v9097
    %9606 = vmatprep.subr.bf16.mxu0 %v9096
    %9607 = vmatpush2.bf16.msra.mxu0 %v9095
    %9608 = vmatprep.subr.bf16.mxu0 %v9094
    %9609 = vmatpush2.bf16.msra.mxu0 %v9093
    %9610 = vmatprep.subr.bf16.mxu0 %v9092
    %9611 = vmatpush2.bf16.msra.mxu0 %v9091
    %9612 = vmatprep.subr.bf16.mxu0 %v9090
    %9613 = vmatpush2.bf16.msra.mxu0 %v9089
    %9614 = vmatprep.subr.bf16.mxu0 %v9088
    %9615 = vmatpush2.bf16.msra.mxu0 %v9087
    %9616 = vmatprep.subr.bf16.mxu0 %v9086
    %9617 = vmatpush2.bf16.msra.mxu0 %v9085
    %9618 = vmatprep.subr.bf16.mxu0 %v9084
    %9619 = vmatpush2.bf16.msra.mxu0 %v9083
    %9620 = vmatprep.mubr.bf16.mxu0 %v7986
    %9621 = vmatmul.mubr.bf16.gmra.mxu0 %v7985
    %v9622 = vpop.f32.mrf.mxu0
    %v9623 = vadd.f32 %v9582, %v9622
    %v9624 = vpop.f32.mrf.mxu0
    %v9625 = vadd.f32 %v9584, %v9624
    %v9626 = vpop.f32.mrf.mxu0
    %v9627 = vpop.f32.mrf.mxu0
    %9628 = vdwg.mxu0
    %9629 = vmatprep.subr.bf16.mxu0 %v9114
    %9630 = vmatpush1.bf16.msra.mxu0 %v9113
    %9631 = vmatprep.subr.bf16.mxu0 %v9112
    %9632 = vmatpush1.bf16.msra.mxu0 %v9111
    %9633 = vmatprep.subr.bf16.mxu0 %v9110
    %9634 = vmatpush1.bf16.msra.mxu0 %v9109
    %9635 = vmatprep.subr.bf16.mxu0 %v9108
    %9636 = vmatpush1.bf16.msra.mxu0 %v9107
    %9637 = vmatprep.subr.bf16.mxu0 %v9106
    %9638 = vmatpush1.bf16.msra.mxu0 %v9105
    %9639 = vmatprep.subr.bf16.mxu0 %v9104
    %9640 = vmatpush1.bf16.msra.mxu0 %v9103
    %9641 = vmatprep.subr.bf16.mxu0 %v9102
    %9642 = vmatpush1.bf16.msra.mxu0 %v9101
    %9643 = vmatprep.subr.bf16.mxu0 %v9100
    %9644 = vmatpush1.bf16.msra.mxu0 %v9099
    %9645 = vmatprep.subr.bf16.mxu0 %v9130
    %9646 = vmatpush2.bf16.msra.mxu0 %v9129
    %9647 = vmatprep.subr.bf16.mxu0 %v9128
    %9648 = vmatpush2.bf16.msra.mxu0 %v9127
    %9649 = vmatprep.subr.bf16.mxu0 %v9126
    %9650 = vmatpush2.bf16.msra.mxu0 %v9125
    %9651 = vmatprep.subr.bf16.mxu0 %v9124
    %9652 = vmatpush2.bf16.msra.mxu0 %v9123
    %9653 = vmatprep.subr.bf16.mxu0 %v9122
    %9654 = vmatpush2.bf16.msra.mxu0 %v9121
    %9655 = vmatprep.subr.bf16.mxu0 %v9120
    %9656 = vmatpush2.bf16.msra.mxu0 %v9119
    %9657 = vmatprep.subr.bf16.mxu0 %v9118
    %9658 = vmatpush2.bf16.msra.mxu0 %v9117
    %9659 = vmatprep.subr.bf16.mxu0 %v9116
    %9660 = vmatpush2.bf16.msra.mxu0 %v9115
    %9661 = vmatprep.mubr.bf16.mxu0 %v7988
    %9662 = vmatmul.mubr.bf16.gmra.mxu0 %v7987
    %v9663 = vpop.f32.mrf.mxu0
    %v9664 = vadd.f32 %v9623, %v9663
    %v9665 = vpop.f32.mrf.mxu0
    %v9666 = vadd.f32 %v9625, %v9665
    %v9667 = vpop.f32.mrf.mxu0
    %v9668 = vpop.f32.mrf.mxu0
    %9669 = vdwg.mxu0
    %9670 = vmatprep.subr.bf16.mxu0 %v9146
    %9671 = vmatpush1.bf16.msra.mxu0 %v9145
    %9672 = vmatprep.subr.bf16.mxu0 %v9144
    %9673 = vmatpush1.bf16.msra.mxu0 %v9143
    %9674 = vmatprep.subr.bf16.mxu0 %v9142
    %9675 = vmatpush1.bf16.msra.mxu0 %v9141
    %9676 = vmatprep.subr.bf16.mxu0 %v9140
    %9677 = vmatpush1.bf16.msra.mxu0 %v9139
    %9678 = vmatprep.subr.bf16.mxu0 %v9138
    %9679 = vmatpush1.bf16.msra.mxu0 %v9137
    %9680 = vmatprep.subr.bf16.mxu0 %v9136
    %9681 = vmatpush1.bf16.msra.mxu0 %v9135
    %9682 = vmatprep.subr.bf16.mxu0 %v9134
    %9683 = vmatpush1.bf16.msra.mxu0 %v9133
    %9684 = vmatprep.subr.bf16.mxu0 %v9132
    %9685 = vmatpush1.bf16.msra.mxu0 %v9131
    %9686 = vmatprep.subr.bf16.mxu0 %v9162
    %9687 = vmatpush2.bf16.msra.mxu0 %v9161
    %9688 = vmatprep.subr.bf16.mxu0 %v9160
    %9689 = vmatpush2.bf16.msra.mxu0 %v9159
    %9690 = vmatprep.subr.bf16.mxu0 %v9158
    %9691 = vmatpush2.bf16.msra.mxu0 %v9157
    %9692 = vmatprep.subr.bf16.mxu0 %v9156
    %9693 = vmatpush2.bf16.msra.mxu0 %v9155
    %9694 = vmatprep.subr.bf16.mxu0 %v9154
    %9695 = vmatpush2.bf16.msra.mxu0 %v9153
    %9696 = vmatprep.subr.bf16.mxu0 %v9152
    %9697 = vmatpush2.bf16.msra.mxu0 %v9151
    %9698 = vmatprep.subr.bf16.mxu0 %v9150
    %9699 = vmatpush2.bf16.msra.mxu0 %v9149
    %9700 = vmatprep.subr.bf16.mxu0 %v9148
    %9701 = vmatpush2.bf16.msra.mxu0 %v9147
    %9702 = vmatprep.mubr.bf16.mxu0 %v7990
    %9703 = vmatmul.mubr.bf16.gmra.mxu0 %v7989
    %v9704 = vpop.f32.mrf.mxu0
    %v9705 = vadd.f32 %v9664, %v9704
    %v9706 = vpop.f32.mrf.mxu0
    %v9707 = vadd.f32 %v9666, %v9706
    %v9708 = vpop.f32.mrf.mxu0
    %v9709 = vpop.f32.mrf.mxu0
    %9710 = vdwg.mxu0
    %9711 = vmatprep.subr.bf16.mxu0 %v9178
    %9712 = vmatpush1.bf16.msra.mxu0 %v9177
    %9713 = vmatprep.subr.bf16.mxu0 %v9176
    %9714 = vmatpush1.bf16.msra.mxu0 %v9175
    %9715 = vmatprep.subr.bf16.mxu0 %v9174
    %9716 = vmatpush1.bf16.msra.mxu0 %v9173
    %9717 = vmatprep.subr.bf16.mxu0 %v9172
    %9718 = vmatpush1.bf16.msra.mxu0 %v9171
    %9719 = vmatprep.subr.bf16.mxu0 %v9170
    %9720 = vmatpush1.bf16.msra.mxu0 %v9169
    %9721 = vmatprep.subr.bf16.mxu0 %v9168
    %9722 = vmatpush1.bf16.msra.mxu0 %v9167
    %9723 = vmatprep.subr.bf16.mxu0 %v9166
    %9724 = vmatpush1.bf16.msra.mxu0 %v9165
    %9725 = vmatprep.subr.bf16.mxu0 %v9164
    %9726 = vmatpush1.bf16.msra.mxu0 %v9163
    %9727 = vmatprep.subr.bf16.mxu0 %v9194
    %9728 = vmatpush2.bf16.msra.mxu0 %v9193
    %9729 = vmatprep.subr.bf16.mxu0 %v9192
    %9730 = vmatpush2.bf16.msra.mxu0 %v9191
    %9731 = vmatprep.subr.bf16.mxu0 %v9190
    %9732 = vmatpush2.bf16.msra.mxu0 %v9189
    %9733 = vmatprep.subr.bf16.mxu0 %v9188
    %9734 = vmatpush2.bf16.msra.mxu0 %v9187
    %9735 = vmatprep.subr.bf16.mxu0 %v9186
    %9736 = vmatpush2.bf16.msra.mxu0 %v9185
    %9737 = vmatprep.subr.bf16.mxu0 %v9184
    %9738 = vmatpush2.bf16.msra.mxu0 %v9183
    %9739 = vmatprep.subr.bf16.mxu0 %v9182
    %9740 = vmatpush2.bf16.msra.mxu0 %v9181
    %9741 = vmatprep.subr.bf16.mxu0 %v9180
    %9742 = vmatpush2.bf16.msra.mxu0 %v9179
    %9743 = vmatprep.mubr.bf16.mxu0 %v7992
    %9744 = vmatmul.mubr.bf16.gmra.mxu0 %v7991
    %v9745 = vpop.f32.mrf.mxu0
    %v9746 = vadd.f32 %v9705, %v9745
    %v9747 = vpop.f32.mrf.mxu0
    %v9748 = vadd.f32 %v9707, %v9747
    %v9749 = vpop.f32.mrf.mxu0
    %v9750 = vpop.f32.mrf.mxu0
    %9751 = vdwg.mxu0
    %9752 = vmatprep.subr.bf16.mxu0 %v9210
    %9753 = vmatpush1.bf16.msra.mxu0 %v9209
    %9754 = vmatprep.subr.bf16.mxu0 %v9208
    %9755 = vmatpush1.bf16.msra.mxu0 %v9207
    %9756 = vmatprep.subr.bf16.mxu0 %v9206
    %9757 = vmatpush1.bf16.msra.mxu0 %v9205
    %9758 = vmatprep.subr.bf16.mxu0 %v9204
    %9759 = vmatpush1.bf16.msra.mxu0 %v9203
    %9760 = vmatprep.subr.bf16.mxu0 %v9202
    %9761 = vmatpush1.bf16.msra.mxu0 %v9201
    %9762 = vmatprep.subr.bf16.mxu0 %v9200
    %9763 = vmatpush1.bf16.msra.mxu0 %v9199
    %9764 = vmatprep.subr.bf16.mxu0 %v9198
    %9765 = vmatpush1.bf16.msra.mxu0 %v9197
    %9766 = vmatprep.subr.bf16.mxu0 %v9196
    %9767 = vmatpush1.bf16.msra.mxu0 %v9195
    %9768 = vmatprep.subr.bf16.mxu0 %v9226
    %9769 = vmatpush2.bf16.msra.mxu0 %v9225
    %9770 = vmatprep.subr.bf16.mxu0 %v9224
    %9771 = vmatpush2.bf16.msra.mxu0 %v9223
    %9772 = vmatprep.subr.bf16.mxu0 %v9222
    %9773 = vmatpush2.bf16.msra.mxu0 %v9221
    %9774 = vmatprep.subr.bf16.mxu0 %v9220
    %9775 = vmatpush2.bf16.msra.mxu0 %v9219
    %9776 = vmatprep.subr.bf16.mxu0 %v9218
    %9777 = vmatpush2.bf16.msra.mxu0 %v9217
    %9778 = vmatprep.subr.bf16.mxu0 %v9216
    %9779 = vmatpush2.bf16.msra.mxu0 %v9215
    %9780 = vmatprep.subr.bf16.mxu0 %v9214
    %9781 = vmatpush2.bf16.msra.mxu0 %v9213
    %9782 = vmatprep.subr.bf16.mxu0 %v9212
    %9783 = vmatpush2.bf16.msra.mxu0 %v9211
    %9784 = vmatprep.mubr.bf16.mxu0 %v7994
    %9785 = vmatmul.mubr.bf16.gmra.mxu0 %v7993
    %v9786 = vpop.f32.mrf.mxu0
    %v9787 = vadd.f32 %v9746, %v9786
    %v9788 = vpop.f32.mrf.mxu0
    %v9789 = vadd.f32 %v9748, %v9788
    %v9790 = vpop.f32.mrf.mxu0
    %v9791 = vpop.f32.mrf.mxu0
    %9792 = vdwg.mxu0
    %9793 = vmatprep.subr.bf16.mxu0 %v9242
    %9794 = vmatpush1.bf16.msra.mxu0 %v9241
    %9795 = vmatprep.subr.bf16.mxu0 %v9240
    %9796 = vmatpush1.bf16.msra.mxu0 %v9239
    %9797 = vmatprep.subr.bf16.mxu0 %v9238
    %9798 = vmatpush1.bf16.msra.mxu0 %v9237
    %9799 = vmatprep.subr.bf16.mxu0 %v9236
    %9800 = vmatpush1.bf16.msra.mxu0 %v9235
    %9801 = vmatprep.subr.bf16.mxu0 %v9234
    %9802 = vmatpush1.bf16.msra.mxu0 %v9233
    %9803 = vmatprep.subr.bf16.mxu0 %v9232
    %9804 = vmatpush1.bf16.msra.mxu0 %v9231
    %9805 = vmatprep.subr.bf16.mxu0 %v9230
    %9806 = vmatpush1.bf16.msra.mxu0 %v9229
    %9807 = vmatprep.subr.bf16.mxu0 %v9228
    %9808 = vmatpush1.bf16.msra.mxu0 %v9227
    %9809 = vmatprep.subr.bf16.mxu0 %v9258
    %9810 = vmatpush2.bf16.msra.mxu0 %v9257
    %9811 = vmatprep.subr.bf16.mxu0 %v9256
    %9812 = vmatpush2.bf16.msra.mxu0 %v9255
    %9813 = vmatprep.subr.bf16.mxu0 %v9254
    %9814 = vmatpush2.bf16.msra.mxu0 %v9253
    %9815 = vmatprep.subr.bf16.mxu0 %v9252
    %9816 = vmatpush2.bf16.msra.mxu0 %v9251
    %9817 = vmatprep.subr.bf16.mxu0 %v9250
    %9818 = vmatpush2.bf16.msra.mxu0 %v9249
    %9819 = vmatprep.subr.bf16.mxu0 %v9248
    %9820 = vmatpush2.bf16.msra.mxu0 %v9247
    %9821 = vmatprep.subr.bf16.mxu0 %v9246
    %9822 = vmatpush2.bf16.msra.mxu0 %v9245
    %9823 = vmatprep.subr.bf16.mxu0 %v9244
    %9824 = vmatpush2.bf16.msra.mxu0 %v9243
    %9825 = vmatprep.mubr.bf16.mxu0 %v7996
    %9826 = vmatmul.mubr.bf16.gmra.mxu0 %v7995
    %v9827 = vpop.f32.mrf.mxu0
    %v9828 = vadd.f32 %v9787, %v9827
    %v9829 = vpop.f32.mrf.mxu0
    %v9830 = vadd.f32 %v9789, %v9829
    %v9831 = vpop.f32.mrf.mxu0
    %v9832 = vpop.f32.mrf.mxu0
    %9833 = vdwg.mxu0
    %9834 = vmatprep.subr.bf16.mxu0 %v9274
    %9835 = vmatpush1.bf16.msra.mxu0 %v9273
    %9836 = vmatprep.subr.bf16.mxu0 %v9272
    %9837 = vmatpush1.bf16.msra.mxu0 %v9271
    %9838 = vmatprep.subr.bf16.mxu0 %v9270
    %9839 = vmatpush1.bf16.msra.mxu0 %v9269
    %9840 = vmatprep.subr.bf16.mxu0 %v9268
    %9841 = vmatpush1.bf16.msra.mxu0 %v9267
    %9842 = vmatprep.subr.bf16.mxu0 %v9266
    %9843 = vmatpush1.bf16.msra.mxu0 %v9265
    %9844 = vmatprep.subr.bf16.mxu0 %v9264
    %9845 = vmatpush1.bf16.msra.mxu0 %v9263
    %9846 = vmatprep.subr.bf16.mxu0 %v9262
    %9847 = vmatpush1.bf16.msra.mxu0 %v9261
    %9848 = vmatprep.subr.bf16.mxu0 %v9260
    %9849 = vmatpush1.bf16.msra.mxu0 %v9259
    %9850 = vmatprep.subr.bf16.mxu0 %v9290
    %9851 = vmatpush2.bf16.msra.mxu0 %v9289
    %9852 = vmatprep.subr.bf16.mxu0 %v9288
    %9853 = vmatpush2.bf16.msra.mxu0 %v9287
    %9854 = vmatprep.subr.bf16.mxu0 %v9286
    %9855 = vmatpush2.bf16.msra.mxu0 %v9285
    %9856 = vmatprep.subr.bf16.mxu0 %v9284
    %9857 = vmatpush2.bf16.msra.mxu0 %v9283
    %9858 = vmatprep.subr.bf16.mxu0 %v9282
    %9859 = vmatpush2.bf16.msra.mxu0 %v9281
    %9860 = vmatprep.subr.bf16.mxu0 %v9280
    %9861 = vmatpush2.bf16.msra.mxu0 %v9279
    %9862 = vmatprep.subr.bf16.mxu0 %v9278
    %9863 = vmatpush2.bf16.msra.mxu0 %v9277
    %9864 = vmatprep.subr.bf16.mxu0 %v9276
    %9865 = vmatpush2.bf16.msra.mxu0 %v9275
    %9866 = vmatprep.mubr.bf16.mxu0 %v7998
    %9867 = vmatmul.mubr.bf16.gmra.mxu0 %v7997
    %v9868 = vpop.f32.mrf.mxu0
    %v9869 = vadd.f32 %v9828, %v9868
    %v9870 = vpop.f32.mrf.mxu0
    %v9871 = vadd.f32 %v9830, %v9870
    %v9872 = vpop.f32.mrf.mxu0
    %v9873 = vpop.f32.mrf.mxu0
    %9874 = vdwg.mxu0
    %v9875 = vtanh.pop %v9869
    %v9876 = vtanh.pop %v9871
    %v9879 = vcombine.low %v9875, %v9876
    %v9881 = vunpack.c.l.s4 1983009808
    %v9882 = vunpack.c.0.s8 %v9881
    %v9883 = vlaneseq
    %v9884 = vshrl.u32 %v9883, 7
    %v9885 = vsub.s32 %v9882, %v9884
    %v9886 = vrot.slane %v9879, %v9885
    %9888 = vst [vmem:[%s7] sm:$0xf] %v9886
    // Predicated region
    $region54: #{generator_forward.1} parent=1 // pred_check
      _
    $region55: #{generator_forward.1} parent=1 // pred_check_branch
      %9890 = sbr.rel (0) target = $region57
    $region56: #{generator_forward.1} parent=1 // pred_region
      _
    $region57: #{generator_forward.1} parent=1 // pred_fallthru
      _
    // Predicated region
    $region58: #{generator_forward.1} parent=1 // pred_check
      _
    $region59: #{generator_forward.1} parent=1 // pred_check_branch
      %9892 = sbr.rel (0) target = $region61
    $region60: #{generator_forward.1} parent=1 // pred_region
      _
    $region61: #{generator_forward.1} parent=1 // pred_fallthru
      _
    %9893 = vsyncpa [#allocation3], 1
    %9894 = vsyncpa [#allocation5], 1
    %9895 = vsyncpa [#allocation8], 1
    %9896 = vsyncpa [#allocation11], 1

</llo_original>
